<compile_context>
chip_gen: v5e
topology: v5e:2x2
jax: 0.10.0
libtpu: 0.0.40
codegen_flags: <defaults>
</compile_context>

<pallas_src>
import functools

import jax
import jax.numpy as jnp
from jax.experimental import pallas as pl
from jax.experimental.pallas import tpu as pltpu

_EPS = 1e-5          # PyTorch BatchNorm2d default eps
_LRELU_SLOPE = 0.2


def _round_up(x, m):
    return (x + m - 1) // m * m


def _pick_m_tile(m):
    """Pick (tm, m_pad): bf16-sublane aligned (mult. of 16 when splitting),
    >= 2 M blocks when M is large enough (v7x megacore), a single merged block
    for tiny M (no wasted MXU rows), up to 1024 rows at training-scale M."""
    if m < 128:
        tm = _round_up(m, 8)                 # single block
    elif m <= 512:
        tm = _round_up(m, 32) // 2           # two parallel blocks, mult. of 16
    elif m <= 2048:
        tm = 256
    else:
        tm = 1024 if m % 1024 == 0 else 512
    return tm, _round_up(m, tm)


# ------------------------------ Pallas kernels --------------------------------

def _conv_mm_kernel(a_ref, w_ref, o_ref, *, activation):
    # Single K block: write the f32 MXU result straight out (no acc scratch).
    y = jnp.dot(a_ref[...], w_ref[...], preferred_element_type=jnp.float32)
    if activation == "lrelu":
        y = jnp.where(y >= 0.0, y, _LRELU_SLOPE * y)   # f32 epilogue (v5e-safe)
    o_ref[...] = y.astype(o_ref.dtype)


def pallas_conv_matmul(a, w, *, activation="none", out_dtype=jnp.bfloat16):
    """(M,K)@(K,N) im2col-conv matmul with fused activation epilogue.

    K and N are multiples of 128 (weights padded once at init), so K is a
    single block and both grid axes are 'parallel' (v7x shards M and N).
    """
    m, k = a.shape
    k_w, n = w.shape
    assert k == k_w and k % 128 == 0 and n % 128 == 0
    tm, m_pad = _pick_m_tile(m)
    tn = 128
    if m_pad != m:               # only a tiny tail pad (e.g. M=2 -> 8 for the head)
        a = jnp.pad(a, ((0, m_pad - m), (0, 0)))

    kernel = functools.partial(_conv_mm_kernel, activation=activation)
    return pl.pallas_call(
        kernel,
        out_shape=jax.ShapeDtypeStruct((m_pad, n), out_dtype),
        grid_spec=pltpu.PrefetchScalarGridSpec(
            num_scalar_prefetch=0,
            grid=(m_pad // tm, n // tn),
            in_specs=[pl.BlockSpec((tm, k), lambda i, j: (i, 0)),
                      pl.BlockSpec((k, tn), lambda i, j: (0, j))],
            out_specs=pl.BlockSpec((tm, tn), lambda i, j: (i, j))),
        compiler_params=pltpu.CompilerParams(
            dimension_semantics=("parallel", "parallel")),
    )(a, w)


def _conv_mm_bn_lrelu_kernel(a_ref, w_ref, g_ref, b_ref, o_ref, *, valid_m):
    # conv (matmul) + BatchNorm(batch stats) + LeakyReLU fused in one pass.
    # The whole M extent is in this block, so per-channel batch mean/variance
    # are computed from the f32 MXU result and applied immediately; the stored
    # activation is post-BN+LReLU, so the next layer's im2col zero-padding has
    # exactly the reference semantics.
    y = jnp.dot(a_ref[...], w_ref[...], preferred_element_type=jnp.float32)
    rows = y.shape[0]
    if valid_m is not None and valid_m < rows:
        row_idx = jax.lax.broadcasted_iota(jnp.int32, y.shape, 0)
        yv = jnp.where(row_idx < valid_m, y, 0.0)      # exclude padded rows
        inv_n = 1.0 / float(valid_m)
    else:
        yv = y
        inv_n = 1.0 / float(rows)
    mean = jnp.sum(yv, axis=0, keepdims=True) * inv_n
    var = jnp.maximum(jnp.sum(yv * yv, axis=0, keepdims=True) * inv_n
                      - mean * mean, 0.0)              # biased variance
    scale = g_ref[...] * jax.lax.rsqrt(var + _EPS)     # EUP rsqrt
    bias = b_ref[...] - mean * scale
    z = y * scale + bias
    o_ref[...] = jnp.where(z >= 0.0, z, _LRELU_SLOPE * z).astype(o_ref.dtype)


def pallas_conv_bn_lrelu(a, w, gamma, beta, *, out_dtype=jnp.bfloat16):
    """Conv (im2col matmul) + BatchNorm2d (training batch stats) + LeakyReLU."""
    m, k = a.shape
    k_w, n = w.shape
    assert k == k_w and k % 128 == 0 and n % 128 == 0
    m_pad = _round_up(m, 8)
    if m_pad != m:
        a = jnp.pad(a, ((0, m_pad - m), (0, 0)))
    tn = 128
    # TODO(synk): for very large batch*spatial (single-block A no longer fits
    # VMEM, e.g. on v7x) fall back to a two-pass partial-stats pipeline; the
    # single-M-block form is optimal at these shapes.
    kernel = functools.partial(_conv_mm_bn_lrelu_kernel,
                               valid_m=m if m_pad != m else None)
    return pl.pallas_call(
        kernel,
        out_shape=jax.ShapeDtypeStruct((m_pad, n), out_dtype),
        grid_spec=pltpu.PrefetchScalarGridSpec(
            num_scalar_prefetch=0,
            grid=(n // tn,),
            in_specs=[pl.BlockSpec((m_pad, k), lambda j: (0, 0)),
                      pl.BlockSpec((k, tn), lambda j: (0, j)),
                      pl.BlockSpec((1, tn), lambda j: (0, j)),
                      pl.BlockSpec((1, tn), lambda j: (0, j))],
            out_specs=pl.BlockSpec((m_pad, tn), lambda j: (0, j))),
        compiler_params=pltpu.CompilerParams(
            dimension_semantics=("parallel",)),
    )(a, w, gamma.reshape(1, n).astype(jnp.float32),
      beta.reshape(1, n).astype(jnp.float32))


# --------------------------------- glue (JAX) ---------------------------------

def im2col(x, kh, kw, stride, pad):
    # x: (N, H, W, C) NHWC bf16 -> (N*Ho*Wo, KH*KW*C); K ordered as (kh, kw, C).
    # TODO(synk): fuse this patch extraction into the matmul grid (shifted
    # strided NHWC window reads) to avoid materializing the patch matrix in HBM.
    n, h, w, c = x.shape
    if pad:
        x = jnp.pad(x, ((0, 0), (pad, pad), (pad, pad), (0, 0)))
    ho = (h + 2 * pad - kh) // stride + 1
    wo = (w + 2 * pad - kw) // stride + 1
    cols = []
    for i in range(kh):
        for j in range(kw):
            cols.append(x[:, i:i + ho * stride:stride, j:j + wo * stride:stride, :])
    p = jnp.stack(cols, axis=3)  # (N, Ho, Wo, KH*KW, C)
    return p.reshape(n * ho * wo, kh * kw * c), (n, ho, wo)


def prepare_conv_weight(w, cin_pad=None):
    # PyTorch layout (C_out, C_in, KH, KW) -> (K, C_out_pad) bf16 matrix, once
    # at init.  Optionally pad C_in (so the activation's channel padding can be
    # done at the source and K is a multiple of 128 with no patch re-pad).
    cout, cin, kh, kw = w.shape
    if cin_pad is not None and cin_pad > cin:
        w = jnp.pad(w, ((0, 0), (0, cin_pad - cin), (0, 0), (0, 0)))
        cin = cin_pad
    k = kh * kw * cin
    w_mat = jnp.transpose(w, (2, 3, 1, 0)).reshape(k, cout)
    k_pad = _round_up(k, 128)
    n_pad = _round_up(cout, 128)
    w_mat = jnp.pad(w_mat, ((0, k_pad - k), (0, n_pad - cout)))
    return w_mat.astype(jnp.bfloat16)


def discriminator_forward(x_nchw, params):
    x = jnp.transpose(x_nchw, (0, 2, 3, 1))              # NHWC
    # Pad input channels (3 -> 8) at the source so layer-1 K = 4*4*8 = 128.
    c = x.shape[-1]
    c_pad = _round_up(c, 8)
    if c_pad != c:
        x = jnp.pad(x, ((0, 0), (0, 0), (0, 0), (0, c_pad - c)))
    x = x.astype(jnp.bfloat16)

    # Conv(3->64, k4 s2 p1) + LeakyReLU(0.2)   (epilogue fused)
    patches, (n, ho, wo) = im2col(x, 4, 4, 2, 1)
    m = patches.shape[0]
    y = pallas_conv_matmul(patches, params["w1"], activation="lrelu")
    x = y[:m, :64].reshape(n, ho, wo, 64)

    # Conv(64->128, k4 s2 p1) + BN(batch stats) + LeakyReLU(0.2)   (one kernel)
    patches, (n, ho, wo) = im2col(x, 4, 4, 2, 1)
    m = patches.shape[0]
    y = pallas_conv_bn_lrelu(patches, params["w2"], params["g2"], params["b2"])
    x = y[:m, :].reshape(n, ho, wo, 128)

    # Conv(128->256, k4 s2 p1) + BN(batch stats) + LeakyReLU(0.2)  (one kernel)
    patches, (n, ho, wo) = im2col(x, 4, 4, 2, 1)
    m = patches.shape[0]
    y = pallas_conv_bn_lrelu(patches, params["w3"], params["g3"], params["b3"])
    x = y[:m, :].reshape(n, ho, wo, 256)

    # Conv(256->1, k4 s1 p0) -> logits; prob = tanh(logits)
    patches, (n, ho, wo) = im2col(x, 4, 4, 1, 0)
    m = patches.shape[0]
    out = pallas_conv_matmul(patches, params["w4"], activation="none",
                             out_dtype=jnp.float32)
    logits = jnp.transpose(out[:m, :1].reshape(n, ho, wo, 1), (0, 3, 1, 2))
    prob = jnp.tanh(logits)
    return logits, prob


def init_params(key, channels=3):
    # Deterministic synthetic init (DCGAN-style normal(0, 0.02), unit gamma,
    # zero beta).  Weight matrices prepared (transpose/pad/bf16) once here.
    ks = jax.random.split(key, 4)
    std = 0.02
    w1 = std * jax.random.normal(ks[0], (64, channels, 4, 4), jnp.float32)
    w2 = std * jax.random.normal(ks[1], (128, 64, 4, 4), jnp.float32)
    w3 = std * jax.random.normal(ks[2], (256, 128, 4, 4), jnp.float32)
    w4 = std * jax.random.normal(ks[3], (1, 256, 4, 4), jnp.float32)
    return dict(
        w1=prepare_conv_weight(w1, cin_pad=_round_up(channels, 8)),
        w2=prepare_conv_weight(w2),
        w3=prepare_conv_weight(w3),
        w4=prepare_conv_weight(w4),
        g2=jnp.ones((128,), jnp.float32), b2=jnp.zeros((128,), jnp.float32),
        g3=jnp.ones((256,), jnp.float32), b3=jnp.zeros((256,), jnp.float32),
    )


if __name__ == "__main__":
    key = jax.random.PRNGKey(0)
    pkey, xkey = jax.random.split(key)
    params = init_params(pkey, channels=3)
    # 32x32 input is required for the 4-conv stack to reach 1x1 logits.
    x = jax.random.normal(xkey, (2, 3, 32, 32), jnp.float32)  # NCHW, like PyTorch
    fwd = jax.jit(discriminator_forward)
    logits, prob = fwd(x, params)
    jax.block_until_ready((logits, prob))
    assert logits.shape == (2, 1, 1, 1) and prob.shape == (2, 1, 1, 1)
    assert bool(jnp.all(jnp.isfinite(logits))) and bool(jnp.all(jnp.isfinite(prob)))
    print("KERNEL_OK")
</pallas_src>

<mosaic_0001>
module attributes {stable_mosaic.version = 11 : i64} {
  func.func @_conv_mm_kernel(%arg0: i32, %arg1: i32, %arg2: memref<256x128xbf16, #tpu.memory_space<vmem>>, %arg3: memref<128x128xbf16, #tpu.memory_space<vmem>>, %arg4: memref<256x128xbf16, #tpu.memory_space<vmem>>) attributes {dimension_semantics = [#tpu.dimension_semantics<parallel>, #tpu.dimension_semantics<parallel>], iteration_bounds = array<i64: 2, 1>, scalar_prefetch = 0 : i64, scratch_operands = 0 : i64, tpu.core_type = #tpu.core_type<tc>, window_params = [{transform_indices = @transform_0, window_bounds = array<i64: 256, 128>}, {transform_indices = @transform_1, window_bounds = array<i64: 128, 128>}, {transform_indices = @transform_2, window_bounds = array<i64: 256, 128>}]} {
    %c0 = arith.constant 0 : index
    %c0_0 = arith.constant 0 : index
    %0 = vector.load %arg2[%c0, %c0_0] : memref<256x128xbf16, #tpu.memory_space<vmem>>, vector<256x128xbf16>
    %c0_1 = arith.constant 0 : index
    %c0_2 = arith.constant 0 : index
    %1 = vector.load %arg3[%c0_1, %c0_2] : memref<128x128xbf16, #tpu.memory_space<vmem>>, vector<128x128xbf16>
    %cst = arith.constant dense<0.000000e+00> : vector<256x128xf32>
    %2 = tpu.matmul %0, %1, %cst {dimension_numbers = #tpu.dot_dimension_numbers<[1], [0], [0], [1], [0, 0, 1, 1], [], []>} : vector<256x128xbf16>, vector<128x128xbf16>, vector<256x128xf32> -> vector<256x128xf32>
    %cst_3 = arith.constant 0.000000e+00 : f32
    %3 = vector.broadcast %cst_3 : f32 to vector<256x128xf32>
    %4 = arith.cmpf oge, %2, %3 : vector<256x128xf32>
    %cst_4 = arith.constant 2.000000e-01 : f32
    %5 = vector.broadcast %cst_4 : f32 to vector<256x128xf32>
    %6 = arith.mulf %5, %2 : vector<256x128xf32>
    %7 = arith.select %4, %2, %6 : vector<256x128xi1>, vector<256x128xf32>
    %8 = arith.truncf %7 : vector<256x128xf32> to vector<256x128xbf16>
    %c0_5 = arith.constant 0 : index
    %c0_6 = arith.constant 0 : index
    %9 = vector.load %arg4[%c0_5, %c0_6] : memref<256x128xbf16, #tpu.memory_space<vmem>>, vector<256x128xbf16>
    tpu.vector_store %arg4[%c0_5, %c0_6], %8 {strides = array<i32>} : memref<256x128xbf16, #tpu.memory_space<vmem>>, vector<256x128xbf16>,
    return
  }
  func.func @transform_0(%arg0: i32, %arg1: i32) -> (i32, i32) {
    %c0_i32 = arith.constant 0 : i32
    %c0_i32_0 = arith.constant 0 : i32
    return %arg0, %c0_i32 : i32, i32
  }
  func.func @transform_1(%arg0: i32, %arg1: i32) -> (i32, i32) {
    %c0_i32 = arith.constant 0 : i32
    %c0_i32_0 = arith.constant 0 : i32
    return %c0_i32, %arg1 : i32, i32
  }
  func.func @transform_2(%arg0: i32, %arg1: i32) -> (i32, i32) {
    %c0_i32 = arith.constant 0 : i32
    return %arg0, %arg1 : i32, i32
  }
}

module attributes {stable_mosaic.version = 11 : i64} {
  func.func @_conv_mm_bn_lrelu_kernel(%arg0: i32, %arg1: memref<128x1024xbf16, #tpu.memory_space<vmem>>, %arg2: memref<1024x128xbf16, #tpu.memory_space<vmem>>, %arg3: memref<1x128xf32, #tpu.memory_space<vmem>>, %arg4: memref<1x128xf32, #tpu.memory_space<vmem>>, %arg5: memref<128x128xbf16, #tpu.memory_space<vmem>>) attributes {dimension_semantics = [#tpu.dimension_semantics<parallel>], iteration_bounds = array<i64: 1>, scalar_prefetch = 0 : i64, scratch_operands = 0 : i64, tpu.core_type = #tpu.core_type<tc>, window_params = [{pipeline_mode = #tpu.pipeline_mode<synchronous>, transform_indices = @transform_0, window_bounds = array<i64: 128, 1024>}, {transform_indices = @transform_1, window_bounds = array<i64: 1024, 128>}, {transform_indices = @transform_2, window_bounds = array<i64: 1, 128>}, {transform_indices = @transform_3, window_bounds = array<i64: 1, 128>}, {transform_indices = @transform_4, window_bounds = array<i64: 128, 128>}]} {
    %c0 = arith.constant 0 : index
    %c0_0 = arith.constant 0 : index
    %0 = vector.load %arg1[%c0, %c0_0] : memref<128x1024xbf16, #tpu.memory_space<vmem>>, vector<128x1024xbf16>
    %c0_1 = arith.constant 0 : index
    %c0_2 = arith.constant 0 : index
    %1 = vector.load %arg2[%c0_1, %c0_2] : memref<1024x128xbf16, #tpu.memory_space<vmem>>, vector<1024x128xbf16>
    %cst = arith.constant dense<0.000000e+00> : vector<128x128xf32>
    %2 = tpu.matmul %0, %1, %cst {dimension_numbers = #tpu.dot_dimension_numbers<[1], [0], [0], [1], [0, 0, 1, 1], [], []>} : vector<128x1024xbf16>, vector<1024x128xbf16>, vector<128x128xf32> -> vector<128x128xf32>
    %cst_3 = arith.constant dense<0.000000e+00> : vector<128xf32>
    %3 = vector.multi_reduction <add>, %2, %cst_3 [0] : vector<128x128xf32> to vector<128xf32>
    %4 = vector.shape_cast %3 : vector<128xf32> to vector<1x128xf32>
    %cst_4 = arith.constant 7.812500e-03 : f32
    %5 = vector.broadcast %cst_4 : f32 to vector<1x128xf32>
    %6 = arith.mulf %4, %5 : vector<1x128xf32>
    %7 = arith.mulf %2, %2 : vector<128x128xf32>
    %cst_5 = arith.constant dense<0.000000e+00> : vector<128xf32>
    %8 = vector.multi_reduction <add>, %7, %cst_5 [0] : vector<128x128xf32> to vector<128xf32>
    %9 = vector.shape_cast %8 : vector<128xf32> to vector<1x128xf32>
    %cst_6 = arith.constant 7.812500e-03 : f32
    %10 = vector.broadcast %cst_6 : f32 to vector<1x128xf32>
    %11 = arith.mulf %9, %10 : vector<1x128xf32>
    %12 = arith.mulf %6, %6 : vector<1x128xf32>
    %13 = arith.subf %11, %12 : vector<1x128xf32>
    %cst_7 = arith.constant 0.000000e+00 : f32
    %14 = vector.broadcast %cst_7 : f32 to vector<1x128xf32>
    %15 = arith.maximumf %13, %14 : vector<1x128xf32>
    %c0_8 = arith.constant 0 : index
    %c0_9 = arith.constant 0 : index
    %16 = vector.load %arg3[%c0_8, %c0_9] : memref<1x128xf32, #tpu.memory_space<vmem>>, vector<1x128xf32>
    %cst_10 = arith.constant 9.99999974E-6 : f32
    %17 = vector.broadcast %cst_10 : f32 to vector<1x128xf32>
    %18 = arith.addf %15, %17 : vector<1x128xf32>
    %19 = math.rsqrt %18 : vector<1x128xf32>
    %20 = arith.mulf %16, %19 : vector<1x128xf32>
    %c0_11 = arith.constant 0 : index
    %c0_12 = arith.constant 0 : index
    %21 = vector.load %arg4[%c0_11, %c0_12] : memref<1x128xf32, #tpu.memory_space<vmem>>, vector<1x128xf32>
    %22 = arith.mulf %6, %20 : vector<1x128xf32>
    %23 = arith.subf %21, %22 : vector<1x128xf32>
    %24 = vector.broadcast %20 : vector<1x128xf32> to vector<128x128xf32>
    %25 = arith.mulf %2, %24 : vector<128x128xf32>
    %26 = vector.broadcast %23 : vector<1x128xf32> to vector<128x128xf32>
    %27 = arith.addf %25, %26 : vector<128x128xf32>
    %cst_13 = arith.constant 0.000000e+00 : f32
    %28 = vector.broadcast %cst_13 : f32 to vector<128x128xf32>
    %29 = arith.cmpf oge, %27, %28 : vector<128x128xf32>
    %cst_14 = arith.constant 2.000000e-01 : f32
    %30 = vector.broadcast %cst_14 : f32 to vector<128x128xf32>
    %31 = arith.mulf %30, %27 : vector<128x128xf32>
    %32 = arith.select %29, %27, %31 : vector<128x128xi1>, vector<128x128xf32>
    %33 = arith.truncf %32 : vector<128x128xf32> to vector<128x128xbf16>
    %c0_15 = arith.constant 0 : index
    %c0_16 = arith.constant 0 : index
    %34 = vector.load %arg5[%c0_15, %c0_16] : memref<128x128xbf16, #tpu.memory_space<vmem>>, vector<128x128xbf16>
    tpu.vector_store %arg5[%c0_15, %c0_16], %33 {strides = array<i32>} : memref<128x128xbf16, #tpu.memory_space<vmem>>, vector<128x128xbf16>,
    return
  }
  func.func @transform_0(%arg0: i32) -> (i32, i32) {
    %c0_i32 = arith.constant 0 : i32
    %c0_i32_0 = arith.constant 0 : i32
    %c0_i32_1 = arith.constant 0 : i32
    return %c0_i32, %c0_i32_0 : i32, i32
  }
  func.func @transform_1(%arg0: i32) -> (i32, i32) {
    %c0_i32 = arith.constant 0 : i32
    %c0_i32_0 = arith.constant 0 : i32
    return %c0_i32, %arg0 : i32, i32
  }
  func.func @transform_2(%arg0: i32) -> (i32, i32) {
    %c0_i32 = arith.constant 0 : i32
    %c0_i32_0 = arith.constant 0 : i32
    return %c0_i32, %arg0 : i32, i32
  }
  func.func @transform_3(%arg0: i32) -> (i32, i32) {
    %c0_i32 = arith.constant 0 : i32
    %c0_i32_0 = arith.constant 0 : i32
    return %c0_i32, %arg0 : i32, i32
  }
  func.func @transform_4(%arg0: i32) -> (i32, i32) {
    %c0_i32 = arith.constant 0 : i32
    %c0_i32_0 = arith.constant 0 : i32
    return %c0_i32, %arg0 : i32, i32
  }
}

module attributes {stable_mosaic.version = 11 : i64} {
  func.func @_conv_mm_bn_lrelu_kernel(%arg0: i32, %arg1: memref<32x2048xbf16, #tpu.memory_space<vmem>>, %arg2: memref<2048x128xbf16, #tpu.memory_space<vmem>>, %arg3: memref<1x128xf32, #tpu.memory_space<vmem>>, %arg4: memref<1x128xf32, #tpu.memory_space<vmem>>, %arg5: memref<32x128xbf16, #tpu.memory_space<vmem>>) attributes {dimension_semantics = [#tpu.dimension_semantics<parallel>], iteration_bounds = array<i64: 2>, scalar_prefetch = 0 : i64, scratch_operands = 0 : i64, tpu.core_type = #tpu.core_type<tc>, window_params = [{pipeline_mode = #tpu.pipeline_mode<synchronous>, transform_indices = @transform_0, window_bounds = array<i64: 32, 2048>}, {transform_indices = @transform_1, window_bounds = array<i64: 2048, 128>}, {transform_indices = @transform_2, window_bounds = array<i64: 1, 128>}, {transform_indices = @transform_3, window_bounds = array<i64: 1, 128>}, {transform_indices = @transform_4, window_bounds = array<i64: 32, 128>}]} {
    %c0 = arith.constant 0 : index
    %c0_0 = arith.constant 0 : index
    %0 = vector.load %arg1[%c0, %c0_0] : memref<32x2048xbf16, #tpu.memory_space<vmem>>, vector<32x2048xbf16>
    %c0_1 = arith.constant 0 : index
    %c0_2 = arith.constant 0 : index
    %1 = vector.load %arg2[%c0_1, %c0_2] : memref<2048x128xbf16, #tpu.memory_space<vmem>>, vector<2048x128xbf16>
    %cst = arith.constant dense<0.000000e+00> : vector<32x128xf32>
    %2 = tpu.matmul %0, %1, %cst {dimension_numbers = #tpu.dot_dimension_numbers<[1], [0], [0], [1], [0, 0, 1, 1], [], []>} : vector<32x2048xbf16>, vector<2048x128xbf16>, vector<32x128xf32> -> vector<32x128xf32>
    %cst_3 = arith.constant dense<0.000000e+00> : vector<128xf32>
    %3 = vector.multi_reduction <add>, %2, %cst_3 [0] : vector<32x128xf32> to vector<128xf32>
    %4 = vector.shape_cast %3 : vector<128xf32> to vector<1x128xf32>
    %cst_4 = arith.constant 3.125000e-02 : f32
    %5 = vector.broadcast %cst_4 : f32 to vector<1x128xf32>
    %6 = arith.mulf %4, %5 : vector<1x128xf32>
    %7 = arith.mulf %2, %2 : vector<32x128xf32>
    %cst_5 = arith.constant dense<0.000000e+00> : vector<128xf32>
    %8 = vector.multi_reduction <add>, %7, %cst_5 [0] : vector<32x128xf32> to vector<128xf32>
    %9 = vector.shape_cast %8 : vector<128xf32> to vector<1x128xf32>
    %cst_6 = arith.constant 3.125000e-02 : f32
    %10 = vector.broadcast %cst_6 : f32 to vector<1x128xf32>
    %11 = arith.mulf %9, %10 : vector<1x128xf32>
    %12 = arith.mulf %6, %6 : vector<1x128xf32>
    %13 = arith.subf %11, %12 : vector<1x128xf32>
    %cst_7 = arith.constant 0.000000e+00 : f32
    %14 = vector.broadcast %cst_7 : f32 to vector<1x128xf32>
    %15 = arith.maximumf %13, %14 : vector<1x128xf32>
    %c0_8 = arith.constant 0 : index
    %c0_9 = arith.constant 0 : index
    %16 = vector.load %arg3[%c0_8, %c0_9] : memref<1x128xf32, #tpu.memory_space<vmem>>, vector<1x128xf32>
    %cst_10 = arith.constant 9.99999974E-6 : f32
    %17 = vector.broadcast %cst_10 : f32 to vector<1x128xf32>
    %18 = arith.addf %15, %17 : vector<1x128xf32>
    %19 = math.rsqrt %18 : vector<1x128xf32>
    %20 = arith.mulf %16, %19 : vector<1x128xf32>
    %c0_11 = arith.constant 0 : index
    %c0_12 = arith.constant 0 : index
    %21 = vector.load %arg4[%c0_11, %c0_12] : memref<1x128xf32, #tpu.memory_space<vmem>>, vector<1x128xf32>
    %22 = arith.mulf %6, %20 : vector<1x128xf32>
    %23 = arith.subf %21, %22 : vector<1x128xf32>
    %24 = vector.broadcast %20 : vector<1x128xf32> to vector<32x128xf32>
    %25 = arith.mulf %2, %24 : vector<32x128xf32>
    %26 = vector.broadcast %23 : vector<1x128xf32> to vector<32x128xf32>
    %27 = arith.addf %25, %26 : vector<32x128xf32>
    %cst_13 = arith.constant 0.000000e+00 : f32
    %28 = vector.broadcast %cst_13 : f32 to vector<32x128xf32>
    %29 = arith.cmpf oge, %27, %28 : vector<32x128xf32>
    %cst_14 = arith.constant 2.000000e-01 : f32
    %30 = vector.broadcast %cst_14 : f32 to vector<32x128xf32>
    %31 = arith.mulf %30, %27 : vector<32x128xf32>
    %32 = arith.select %29, %27, %31 : vector<32x128xi1>, vector<32x128xf32>
    %33 = arith.truncf %32 : vector<32x128xf32> to vector<32x128xbf16>
    %c0_15 = arith.constant 0 : index
    %c0_16 = arith.constant 0 : index
    %34 = vector.load %arg5[%c0_15, %c0_16] : memref<32x128xbf16, #tpu.memory_space<vmem>>, vector<32x128xbf16>
    tpu.vector_store %arg5[%c0_15, %c0_16], %33 {strides = array<i32>} : memref<32x128xbf16, #tpu.memory_space<vmem>>, vector<32x128xbf16>,
    return
  }
  func.func @transform_0(%arg0: i32) -> (i32, i32) {
    %c0_i32 = arith.constant 0 : i32
    %c0_i32_0 = arith.constant 0 : i32
    %c0_i32_1 = arith.constant 0 : i32
    return %c0_i32, %c0_i32_0 : i32, i32
  }
  func.func @transform_1(%arg0: i32) -> (i32, i32) {
    %c0_i32 = arith.constant 0 : i32
    %c0_i32_0 = arith.constant 0 : i32
    return %c0_i32, %arg0 : i32, i32
  }
  func.func @transform_2(%arg0: i32) -> (i32, i32) {
    %c0_i32 = arith.constant 0 : i32
    %c0_i32_0 = arith.constant 0 : i32
    return %c0_i32, %arg0 : i32, i32
  }
  func.func @transform_3(%arg0: i32) -> (i32, i32) {
    %c0_i32 = arith.constant 0 : i32
    %c0_i32_0 = arith.constant 0 : i32
    return %c0_i32, %arg0 : i32, i32
  }
  func.func @transform_4(%arg0: i32) -> (i32, i32) {
    %c0_i32 = arith.constant 0 : i32
    %c0_i32_0 = arith.constant 0 : i32
    return %c0_i32, %arg0 : i32, i32
  }
}

module attributes {stable_mosaic.version = 11 : i64} {
  func.func @_conv_mm_kernel(%arg0: i32, %arg1: i32, %arg2: memref<8x4096xbf16, #tpu.memory_space<vmem>>, %arg3: memref<4096x128xbf16, #tpu.memory_space<vmem>>, %arg4: memref<8x128xf32, #tpu.memory_space<vmem>>) attributes {dimension_semantics = [#tpu.dimension_semantics<parallel>, #tpu.dimension_semantics<parallel>], iteration_bounds = array<i64: 1, 1>, scalar_prefetch = 0 : i64, scratch_operands = 0 : i64, tpu.core_type = #tpu.core_type<tc>, window_params = [{transform_indices = @transform_0, window_bounds = array<i64: 8, 4096>}, {transform_indices = @transform_1, window_bounds = array<i64: 4096, 128>}, {transform_indices = @transform_2, window_bounds = array<i64: 8, 128>}]} {
    %c0 = arith.constant 0 : index
    %c0_0 = arith.constant 0 : index
    %0 = vector.load %arg2[%c0, %c0_0] : memref<8x4096xbf16, #tpu.memory_space<vmem>>, vector<8x4096xbf16>
    %c0_1 = arith.constant 0 : index
    %c0_2 = arith.constant 0 : index
    %1 = vector.load %arg3[%c0_1, %c0_2] : memref<4096x128xbf16, #tpu.memory_space<vmem>>, vector<4096x128xbf16>
    %cst = arith.constant dense<0.000000e+00> : vector<8x128xf32>
    %2 = tpu.matmul %0, %1, %cst {dimension_numbers = #tpu.dot_dimension_numbers<[1], [0], [0], [1], [0, 0, 1, 1], [], []>} : vector<8x4096xbf16>, vector<4096x128xbf16>, vector<8x128xf32> -> vector<8x128xf32>
    %c0_3 = arith.constant 0 : index
    %c0_4 = arith.constant 0 : index
    %3 = vector.load %arg4[%c0_3, %c0_4] : memref<8x128xf32, #tpu.memory_space<vmem>>, vector<8x128xf32>
    tpu.vector_store %arg4[%c0_3, %c0_4], %2 {strides = array<i32>} : memref<8x128xf32, #tpu.memory_space<vmem>>, vector<8x128xf32>,
    return
  }
  func.func @transform_0(%arg0: i32, %arg1: i32) -> (i32, i32) {
    %c0_i32 = arith.constant 0 : i32
    %c0_i32_0 = arith.constant 0 : i32
    return %arg0, %c0_i32 : i32, i32
  }
  func.func @transform_1(%arg0: i32, %arg1: i32) -> (i32, i32) {
    %c0_i32 = arith.constant 0 : i32
    %c0_i32_0 = arith.constant 0 : i32
    return %c0_i32, %arg1 : i32, i32
  }
  func.func @transform_2(%arg0: i32, %arg1: i32) -> (i32, i32) {
    %c0_i32 = arith.constant 0 : i32
    return %arg0, %arg1 : i32, i32
  }
}

</mosaic_0001>

<llo_original>
// kernel: discriminator_forward.4
$region0: #{discriminator_forward.4}
  #allocation0 [shape = 'u32[]', space=smem, size = 0x4, offset = 0x4, fixed_abs, tag = 'smem constant byte address 0x4 - core index']
  #allocation1 [shape = 'u32[72,128]{1,0:T(1,128)}', space=vmem, size = 0x9000, scoped, tag = 'internal scratch']
  %s0 = inlined_call_operand.vmem [shape: bf16[512,128], index: 0, kind: input, shape index: {}]
  %s1 = inlined_call_operand.vmem [shape: bf16[128,128], index: 1, kind: input, shape index: {}]
  %s2 = inlined_call_operand.vmem [shape: bf16[512,128], index: 2, kind: output, shape index: {}]
  %s3 = sld [smem:[#allocation0]]
  $region41: #{discriminator_forward.4} parent=0
    _
  %s5 = ssub.s32 1, %s3
  %s6 = scalar_select 0, %s5, %s3
  loop: start=0, step=1, limit=4
  $region2: #{discriminator_forward.4} parent=0 // loop_pre_header
    _
  $region3: #{discriminator_forward.4} parent=0 // loop_header
    %s8 = sphi 0, %s12
    %p9 = scmp.ge.s32.totalorder %s8, 4
    %s15 = sphi 0, %s27
    %s16 = sphi 0, %s23
    %s17 = sphi 0, %s15
    %s18 = sphi 0, %s16
    %s19 = sphi 0, %s17
    %s20 = sphi 0, %s18
    %s30 = sphi 0, %s32
    %s33 = sphi 0, %s30
    %s34 = sphi 0, %s33
    %s50 = sphi 0, %s34
    %s56 = sphi 0, %s58
    %s59 = sphi 0, %s56
    %s60 = sphi 0, %s59
    %s76 = sphi 0, %s60
    %s84 = sphi 0, %s86
    %s87 = sphi 0, %s84
    %s88 = sphi 0, %s87
    %s104 = sphi 0, %s88
  $region4: #{discriminator_forward.4} parent=0 // loop_header_branch
    %11 = sbr.rel (%p9) target = $region8
  $region5: #{discriminator_forward.4} parent=0 // loop_body
    %s13 = ssub.s32 %s8, 1
    %s14 = ssub.s32 %s8, 2
    %s21 = sadd.s32 1, %s16
    %p22 = scmp.ge.s32.totalorder %s21, 1
    %s23 = scalar_select %p22, 0, %s21
    %s24 = sadd.s32 1, %s15
    %s25 = scalar_select %p22, %s24, %s15
    %p26 = scmp.ge.s32.totalorder %s25, 2
    %s27 = scalar_select %p26, 0, %s25
    %s28 = ssub.s32 %s15, %s27
    %p29 = scmp.eq.s32.totalorder %s28, 0
    %s31 = sadd.s32 %s30, 1
    %s32 = scalar_select %p29, %s30, %s31
    %p35 = pneg %p29
    %p36 = scmp.eq.s32.totalorder %s8, 1
    %p37 = por %p35, %p36
    %p38 = scmp.ne.s32.totalorder %s30, %s33
    %p39 = scmp.eq.s32.totalorder %s8, 0
    %p40 = por %p38, %p39
    %p41 = scmp.ne.s32.totalorder %s30, %s33
    %p42 = scmp.eq.s32.totalorder %s13, 1
    %p43 = por %p41, %p42
    %p44 = scmp.ne.s32.totalorder %s33, %s34
    %p45 = scmp.eq.s32.totalorder %s13, 0
    %p46 = por %p44, %p45
    %p47 = scmp.ne.s32.totalorder %s33, %s34
    %p48 = scmp.eq.s32.totalorder %s14, 1
    %p49 = por %p47, %p48
    %p51 = scmp.ne.s32.totalorder %s34, %s50
    %p52 = scmp.eq.s32.totalorder %s14, 0
    %p53 = por %p51, %p52
    %s54 = ssub.s32 %s16, %s23
    %p55 = scmp.eq.s32.totalorder %s54, 0
    %s57 = sadd.s32 %s56, 1
    %s58 = scalar_select %p55, %s56, %s57
    %p61 = pneg %p55
    %p62 = scmp.eq.s32.totalorder %s8, 1
    %p63 = por %p61, %p62
    %p64 = scmp.ne.s32.totalorder %s56, %s59
    %p65 = scmp.eq.s32.totalorder %s8, 0
    %p66 = por %p64, %p65
    %p67 = scmp.ne.s32.totalorder %s56, %s59
    %p68 = scmp.eq.s32.totalorder %s13, 1
    %p69 = por %p67, %p68
    %p70 = scmp.ne.s32.totalorder %s59, %s60
    %p71 = scmp.eq.s32.totalorder %s13, 0
    %p72 = por %p70, %p71
    %p73 = scmp.ne.s32.totalorder %s59, %s60
    %p74 = scmp.eq.s32.totalorder %s14, 1
    %p75 = por %p73, %p74
    %p77 = scmp.ne.s32.totalorder %s60, %s76
    %p78 = scmp.eq.s32.totalorder %s14, 0
    %p79 = por %p77, %p78
    %s80 = ssub.s32 %s15, %s27
    %s81 = ssub.s32 %s16, %s23
    %s82 = sor.u32 %s80, %s81
    %p83 = scmp.eq.s32.totalorder %s82, 0
    %s85 = sadd.s32 %s84, 1
    %s86 = scalar_select %p83, %s84, %s85
    %p89 = pneg %p83
    %p90 = scmp.eq.s32.totalorder %s8, 1
    %p91 = por %p89, %p90
    %p92 = scmp.ne.s32.totalorder %s84, %s87
    %p93 = scmp.eq.s32.totalorder %s8, 0
    %p94 = por %p92, %p93
    %p95 = scmp.ne.s32.totalorder %s84, %s87
    %p96 = scmp.eq.s32.totalorder %s13, 1
    %p97 = por %p95, %p96
    %p98 = scmp.ne.s32.totalorder %s87, %s88
    %p99 = scmp.eq.s32.totalorder %s13, 0
    %p100 = por %p98, %p99
    %p101 = scmp.ne.s32.totalorder %s87, %s88
    %p102 = scmp.eq.s32.totalorder %s14, 1
    %p103 = por %p101, %p102
    %p105 = scmp.ne.s32.totalorder %s88, %s104
    %p106 = scmp.eq.s32.totalorder %s14, 0
    %p107 = por %p105, %p106
    %p108 = scmp.le.s32.totalorder 1, %s8
    %p109 = scmp.lt.s32.totalorder %s8, 3
    %p110 = pnand %p108, %p109
    %p111 = pneg %p110
    // Predicated region
    $region9: #{discriminator_forward.4} parent=5 // pred_check
      _
    $region10: #{discriminator_forward.4} parent=5 // pred_check_branch
      %113 = sbr.rel (%p110) target = $region12
    $region11: #{discriminator_forward.4} parent=5 // pred_region
      %s114 = ssub.s32 %s8, 1
      // Predicated region
      $region13: #{discriminator_forward.4} parent=11 // pred_check
        %p115 = pneg %p72
      $region14: #{discriminator_forward.4} parent=11 // pred_check_branch
        %117 = sbr.rel (%p115) target = $region16
      $region15: #{discriminator_forward.4} parent=11 // pred_region
        %p118 = scmp.lt.s32.totalorder %s18, 0
        %s119 = scalar_select %p118, %s18, 0
        %s120 = smul.addr %s119, 4
        %s121 = scalar_lea.vmem %s1, %s120
      $region16: #{discriminator_forward.4} parent=11 // pred_fallthru
        _
    $region12: #{discriminator_forward.4} parent=5 // pred_fallthru
      _
    %p122 = scmp.lt.s32.totalorder %s8, 2
    // Predicated region
    $region17: #{discriminator_forward.4} parent=5 // pred_check
      %p123 = pneg %p122
    $region18: #{discriminator_forward.4} parent=5 // pred_check_branch
      %125 = sbr.rel (%p123) target = $region20
    $region19: #{discriminator_forward.4} parent=5 // pred_region
      // Predicated region
      $region21: #{discriminator_forward.4} parent=19 // pred_check
        %p126 = pneg %p40
      $region22: #{discriminator_forward.4} parent=19 // pred_check_branch
        %128 = sbr.rel (%p126) target = $region24
      $region23: #{discriminator_forward.4} parent=19 // pred_region
        %s129 = smul.u32 32, %s15
        %p130 = scmp.lt.s32.totalorder %s129, 63
        %s131 = scalar_select %p130, %s129, 63
        %s132 = smul.addr %s131, 4
        %s133 = scalar_lea.vmem %s0, %s132
        %s134 = smul.u32 32, %s15
      $region24: #{discriminator_forward.4} parent=19 // pred_fallthru
        _
    $region20: #{discriminator_forward.4} parent=5 // pred_fallthru
      _
    %p135 = scmp.le.s32.totalorder 1, %s8
    %p136 = scmp.lt.s32.totalorder %s8, 3
    %p137 = pnand %p135, %p136
    %p138 = pneg %p137
    // Predicated region
    $region25: #{discriminator_forward.4} parent=5 // pred_check
      _
    $region26: #{discriminator_forward.4} parent=5 // pred_check_branch
      %140 = sbr.rel (%p137) target = $region28
    $region27: #{discriminator_forward.4} parent=5 // pred_region
      %s141 = ssub.s32 %s8, 1
      %s142 = smul.u32 32, %s17
      %p143 = scmp.lt.s32.totalorder %s142, 63
      %s144 = scalar_select %p143, %s142, 63
      %s145 = smul.addr %s144, 4
      %s146 = scalar_lea.vmem %s0, %s145
      %p147 = pneg %p46
      %p148 = pneg %p43
      %p149 = scmp.lt.s32.totalorder %s18, 0
      %s150 = scalar_select %p149, %s18, 0
      %s151 = smul.addr %s150, 4
      %s152 = scalar_lea.vmem %s1, %s151
      %p153 = pneg %p72
      %p154 = pneg %p69
      %p155 = pneg %p100
      %p156 = pneg %p97
      %s157 = smul.u32 32, %s17
      %p158 = scmp.lt.s32.totalorder %s157, 63
      %s159 = scalar_select %p158, %s157, 63
      %p160 = scmp.lt.s32.totalorder %s18, 0
      %s161 = scalar_select %p160, %s18, 0
      %s162 = sadd.s32 %s161, %s159
      %s163 = smul.addr %s162, 4
      %s164 = scalar_lea.vmem %s2, %s163
      %s165 = smul.u32 32, %s17
      %p166 = scmp.lt.s32.totalorder %s165, 63
      %s167 = scalar_select %p166, %s165, 63
      %s168 = smul.addr %s167, 4
      %s169 = scalar_lea.vmem %s0, %s168
      %s170 = smul.u32 32, %s17
      %p171 = scmp.lt.s32.totalorder %s18, 0
      %s172 = scalar_select %p171, %s18, 0
      %s173 = smul.addr %s172, 4
      %s174 = scalar_lea.vmem %s1, %s173
      %s175 = smul.u32 32, %s17
      %p176 = scmp.lt.s32.totalorder %s175, 63
      %s177 = scalar_select %p176, %s175, 63
      %p178 = scmp.lt.s32.totalorder %s18, 0
      %s179 = scalar_select %p178, %s18, 0
      %s180 = sadd.s32 %s179, %s177
      %s181 = smul.addr %s180, 4
      %s182 = scalar_lea.vmem %s2, %s181
      %s183 = smul.u32 32, %s17
      %v184 = vld [vmem:[%s169] sm:$0xf]
      %v185 = vld [vmem:[%s169 + $0x4] sm:$0xf]
      %v186 = vld [vmem:[%s169 + $0x8] sm:$0xf]
      %v187 = vld [vmem:[%s169 + $0xc] sm:$0xf]
      %v188 = vld [vmem:[%s169 + $0x10] sm:$0xf]
      %v189 = vld [vmem:[%s169 + $0x14] sm:$0xf]
      %v190 = vld [vmem:[%s169 + $0x18] sm:$0xf]
      %v191 = vld [vmem:[%s169 + $0x1c] sm:$0xf]
      %v192 = vld [vmem:[%s169 + $0x20] sm:$0xf]
      %v193 = vld [vmem:[%s169 + $0x24] sm:$0xf]
      %v194 = vld [vmem:[%s169 + $0x28] sm:$0xf]
      %v195 = vld [vmem:[%s169 + $0x2c] sm:$0xf]
      %v196 = vld [vmem:[%s169 + $0x30] sm:$0xf]
      %v197 = vld [vmem:[%s169 + $0x34] sm:$0xf]
      %v198 = vld [vmem:[%s169 + $0x38] sm:$0xf]
      %v199 = vld [vmem:[%s169 + $0x3c] sm:$0xf]
      %v200 = vld [vmem:[%s169 + $0x40] sm:$0xf]
      %v201 = vld [vmem:[%s169 + $0x44] sm:$0xf]
      %v202 = vld [vmem:[%s169 + $0x48] sm:$0xf]
      %v203 = vld [vmem:[%s169 + $0x4c] sm:$0xf]
      %v204 = vld [vmem:[%s169 + $0x50] sm:$0xf]
      %v205 = vld [vmem:[%s169 + $0x54] sm:$0xf]
      %v206 = vld [vmem:[%s169 + $0x58] sm:$0xf]
      %v207 = vld [vmem:[%s169 + $0x5c] sm:$0xf]
      %v208 = vld [vmem:[%s169 + $0x60] sm:$0xf]
      %v209 = vld [vmem:[%s169 + $0x64] sm:$0xf]
      %v210 = vld [vmem:[%s169 + $0x68] sm:$0xf]
      %v211 = vld [vmem:[%s169 + $0x6c] sm:$0xf]
      %v212 = vld [vmem:[%s169 + $0x70] sm:$0xf]
      %v213 = vld [vmem:[%s169 + $0x74] sm:$0xf]
      %v214 = vld [vmem:[%s169 + $0x78] sm:$0xf]
      %v215 = vld [vmem:[%s169 + $0x7c] sm:$0xf]
      %v216 = vld [vmem:[%s174] sm:$0xf]
      %v217 = vld [vmem:[%s174 + $0x4] sm:$0xf]
      %v218 = vld [vmem:[%s174 + $0x8] sm:$0xf]
      %v219 = vld [vmem:[%s174 + $0xc] sm:$0xf]
      %v220 = vld [vmem:[%s174 + $0x10] sm:$0xf]
      %v221 = vld [vmem:[%s174 + $0x14] sm:$0xf]
      %v222 = vld [vmem:[%s174 + $0x18] sm:$0xf]
      %v223 = vld [vmem:[%s174 + $0x1c] sm:$0xf]
      %v224 = vld [vmem:[%s174 + $0x20] sm:$0xf]
      %v225 = vld [vmem:[%s174 + $0x24] sm:$0xf]
      %v226 = vld [vmem:[%s174 + $0x28] sm:$0xf]
      %v227 = vld [vmem:[%s174 + $0x2c] sm:$0xf]
      %v228 = vld [vmem:[%s174 + $0x30] sm:$0xf]
      %v229 = vld [vmem:[%s174 + $0x34] sm:$0xf]
      %v230 = vld [vmem:[%s174 + $0x38] sm:$0xf]
      %v231 = vld [vmem:[%s174 + $0x3c] sm:$0xf]
      %v264 = vunpack.c.l.b16 %v184
      %v265 = vunpack.c.l.b16 %v185
      %v266 = vunpack.c.l.b16 %v186
      %v267 = vunpack.c.l.b16 %v187
      %v268 = vunpack.c.l.b16 %v188
      %v269 = vunpack.c.l.b16 %v189
      %v270 = vunpack.c.l.b16 %v190
      %v271 = vunpack.c.l.b16 %v191
      %v272 = vunpack.c.l.b16 %v192
      %v273 = vunpack.c.l.b16 %v193
      %v274 = vunpack.c.l.b16 %v194
      %v275 = vunpack.c.l.b16 %v195
      %v276 = vunpack.c.l.b16 %v196
      %v277 = vunpack.c.l.b16 %v197
      %v278 = vunpack.c.l.b16 %v198
      %v279 = vunpack.c.l.b16 %v199
      %v280 = vunpack.c.l.b16 %v200
      %v281 = vunpack.c.l.b16 %v201
      %v282 = vunpack.c.l.b16 %v202
      %v283 = vunpack.c.l.b16 %v203
      %v284 = vunpack.c.l.b16 %v204
      %v285 = vunpack.c.l.b16 %v205
      %v286 = vunpack.c.l.b16 %v206
      %v287 = vunpack.c.l.b16 %v207
      %v288 = vunpack.c.l.b16 %v208
      %v289 = vunpack.c.l.b16 %v209
      %v290 = vunpack.c.l.b16 %v210
      %v291 = vunpack.c.l.b16 %v211
      %v292 = vunpack.c.l.b16 %v212
      %v293 = vunpack.c.l.b16 %v213
      %v294 = vunpack.c.l.b16 %v214
      %v295 = vunpack.c.l.b16 %v215
      %v296 = vpack.c.b16 %v265, %v264
      %v297 = vpack.c.b16 %v267, %v266
      %v298 = vpack.c.b16 %v269, %v268
      %v299 = vpack.c.b16 %v271, %v270
      %v300 = vpack.c.b16 %v273, %v272
      %v301 = vpack.c.b16 %v275, %v274
      %v302 = vpack.c.b16 %v277, %v276
      %v303 = vpack.c.b16 %v279, %v278
      %v304 = vpack.c.b16 %v281, %v280
      %v305 = vpack.c.b16 %v283, %v282
      %v306 = vpack.c.b16 %v285, %v284
      %v307 = vpack.c.b16 %v287, %v286
      %v308 = vpack.c.b16 %v289, %v288
      %v309 = vpack.c.b16 %v291, %v290
      %v310 = vpack.c.b16 %v293, %v292
      %v311 = vpack.c.b16 %v295, %v294
      %v344 = vunpack.c.l.b16 %v216
      %v345 = vunpack.c.l.b16 %v217
      %v346 = vunpack.c.l.b16 %v218
      %v347 = vunpack.c.l.b16 %v219
      %v348 = vunpack.c.l.b16 %v220
      %v349 = vunpack.c.l.b16 %v221
      %v350 = vunpack.c.l.b16 %v222
      %v351 = vunpack.c.l.b16 %v223
      %v352 = vunpack.c.l.b16 %v224
      %v353 = vunpack.c.l.b16 %v225
      %v354 = vunpack.c.l.b16 %v226
      %v355 = vunpack.c.l.b16 %v227
      %v356 = vunpack.c.l.b16 %v228
      %v357 = vunpack.c.l.b16 %v229
      %v358 = vunpack.c.l.b16 %v230
      %v359 = vunpack.c.l.b16 %v231
      %v360 = vpack.c.b16 %v345, %v344
      %v361 = vpack.c.b16 %v347, %v346
      %v362 = vpack.c.b16 %v349, %v348
      %v363 = vpack.c.b16 %v351, %v350
      %v364 = vpack.c.b16 %v353, %v352
      %v365 = vpack.c.b16 %v355, %v354
      %v366 = vpack.c.b16 %v357, %v356
      %v367 = vpack.c.b16 %v359, %v358
      %376 = vmatpush.bf16.msra.mxu0 %v367
      %377 = vmatpush.bf16.msra.mxu0 %v366
      %378 = vmatpush.bf16.msra.mxu0 %v365
      %379 = vmatpush.bf16.msra.mxu0 %v364
      %380 = vmatpush.bf16.msra.mxu0 %v363
      %381 = vmatpush.bf16.msra.mxu0 %v362
      %382 = vmatpush.bf16.msra.mxu0 %v361
      %383 = vmatpush.bf16.msra.mxu0 %v360
      %384 = vmatmul.bf16.gmra.mxu0 %v296
      %v385 = vpop.f32.mrf.mxu0
      %v386 = vadd.f32 0.0, %v385
      %v387 = vpop.f32.mrf.mxu0
      %v388 = vadd.f32 0.0, %v387
      %389 = vmatmul.bf16.gmra.mxu0 %v297
      %v390 = vpop.f32.mrf.mxu0
      %v391 = vadd.f32 0.0, %v390
      %v392 = vpop.f32.mrf.mxu0
      %v393 = vadd.f32 0.0, %v392
      %394 = vmatmul.bf16.gmra.mxu0 %v298
      %v395 = vpop.f32.mrf.mxu0
      %v396 = vadd.f32 0.0, %v395
      %v397 = vpop.f32.mrf.mxu0
      %v398 = vadd.f32 0.0, %v397
      %399 = vmatmul.bf16.gmra.mxu0 %v299
      %v400 = vpop.f32.mrf.mxu0
      %v401 = vadd.f32 0.0, %v400
      %v402 = vpop.f32.mrf.mxu0
      %v403 = vadd.f32 0.0, %v402
      %404 = vmatmul.bf16.gmra.mxu0 %v300
      %v405 = vpop.f32.mrf.mxu0
      %v406 = vadd.f32 0.0, %v405
      %v407 = vpop.f32.mrf.mxu0
      %v408 = vadd.f32 0.0, %v407
      %409 = vmatmul.bf16.gmra.mxu0 %v301
      %v410 = vpop.f32.mrf.mxu0
      %v411 = vadd.f32 0.0, %v410
      %v412 = vpop.f32.mrf.mxu0
      %v413 = vadd.f32 0.0, %v412
      %414 = vmatmul.bf16.gmra.mxu0 %v302
      %v415 = vpop.f32.mrf.mxu0
      %v416 = vadd.f32 0.0, %v415
      %v417 = vpop.f32.mrf.mxu0
      %v418 = vadd.f32 0.0, %v417
      %419 = vmatmul.bf16.gmra.mxu0 %v303
      %v420 = vpop.f32.mrf.mxu0
      %v421 = vadd.f32 0.0, %v420
      %v422 = vpop.f32.mrf.mxu0
      %v423 = vadd.f32 0.0, %v422
      %424 = vmatmul.bf16.gmra.mxu0 %v304
      %v425 = vpop.f32.mrf.mxu0
      %v426 = vadd.f32 0.0, %v425
      %v427 = vpop.f32.mrf.mxu0
      %v428 = vadd.f32 0.0, %v427
      %429 = vmatmul.bf16.gmra.mxu0 %v305
      %v430 = vpop.f32.mrf.mxu0
      %v431 = vadd.f32 0.0, %v430
      %v432 = vpop.f32.mrf.mxu0
      %v433 = vadd.f32 0.0, %v432
      %434 = vmatmul.bf16.gmra.mxu0 %v306
      %v435 = vpop.f32.mrf.mxu0
      %v436 = vadd.f32 0.0, %v435
      %v437 = vpop.f32.mrf.mxu0
      %v438 = vadd.f32 0.0, %v437
      %439 = vmatmul.bf16.gmra.mxu0 %v307
      %v440 = vpop.f32.mrf.mxu0
      %v441 = vadd.f32 0.0, %v440
      %v442 = vpop.f32.mrf.mxu0
      %v443 = vadd.f32 0.0, %v442
      %444 = vmatmul.bf16.gmra.mxu0 %v308
      %v445 = vpop.f32.mrf.mxu0
      %v446 = vadd.f32 0.0, %v445
      %v447 = vpop.f32.mrf.mxu0
      %v448 = vadd.f32 0.0, %v447
      %449 = vmatmul.bf16.gmra.mxu0 %v309
      %v450 = vpop.f32.mrf.mxu0
      %v451 = vadd.f32 0.0, %v450
      %v452 = vpop.f32.mrf.mxu0
      %v453 = vadd.f32 0.0, %v452
      %454 = vmatmul.bf16.gmra.mxu0 %v310
      %v455 = vpop.f32.mrf.mxu0
      %v456 = vadd.f32 0.0, %v455
      %v457 = vpop.f32.mrf.mxu0
      %v458 = vadd.f32 0.0, %v457
      %459 = vmatmul.bf16.gmra.mxu0 %v311
      %v460 = vpop.f32.mrf.mxu0
      %v461 = vadd.f32 0.0, %v460
      %v462 = vpop.f32.mrf.mxu0
      %v463 = vadd.f32 0.0, %v462
      %464 = vdwg.mxu0
      %vm465 = vcmp.ge.f32.partialorder %v386, 0.0
      %vm466 = vcmp.ge.f32.partialorder %v388, 0.0
      %vm467 = vcmp.ge.f32.partialorder %v391, 0.0
      %vm468 = vcmp.ge.f32.partialorder %v393, 0.0
      %vm469 = vcmp.ge.f32.partialorder %v396, 0.0
      %vm470 = vcmp.ge.f32.partialorder %v398, 0.0
      %vm471 = vcmp.ge.f32.partialorder %v401, 0.0
      %vm472 = vcmp.ge.f32.partialorder %v403, 0.0
      %vm473 = vcmp.ge.f32.partialorder %v406, 0.0
      %vm474 = vcmp.ge.f32.partialorder %v408, 0.0
      %vm475 = vcmp.ge.f32.partialorder %v411, 0.0
      %vm476 = vcmp.ge.f32.partialorder %v413, 0.0
      %vm477 = vcmp.ge.f32.partialorder %v416, 0.0
      %vm478 = vcmp.ge.f32.partialorder %v418, 0.0
      %vm479 = vcmp.ge.f32.partialorder %v421, 0.0
      %vm480 = vcmp.ge.f32.partialorder %v423, 0.0
      %vm481 = vcmp.ge.f32.partialorder %v426, 0.0
      %vm482 = vcmp.ge.f32.partialorder %v428, 0.0
      %vm483 = vcmp.ge.f32.partialorder %v431, 0.0
      %vm484 = vcmp.ge.f32.partialorder %v433, 0.0
      %vm485 = vcmp.ge.f32.partialorder %v436, 0.0
      %vm486 = vcmp.ge.f32.partialorder %v438, 0.0
      %vm487 = vcmp.ge.f32.partialorder %v441, 0.0
      %vm488 = vcmp.ge.f32.partialorder %v443, 0.0
      %vm489 = vcmp.ge.f32.partialorder %v446, 0.0
      %vm490 = vcmp.ge.f32.partialorder %v448, 0.0
      %vm491 = vcmp.ge.f32.partialorder %v451, 0.0
      %vm492 = vcmp.ge.f32.partialorder %v453, 0.0
      %vm493 = vcmp.ge.f32.partialorder %v456, 0.0
      %vm494 = vcmp.ge.f32.partialorder %v458, 0.0
      %vm495 = vcmp.ge.f32.partialorder %v461, 0.0
      %vm496 = vcmp.ge.f32.partialorder %v463, 0.0
      %v497 = vmul.f32 %v386, 0.2
      %v498 = vmul.f32 %v388, 0.2
      %v499 = vmul.f32 %v391, 0.2
      %v500 = vmul.f32 %v393, 0.2
      %v501 = vmul.f32 %v396, 0.2
      %v502 = vmul.f32 %v398, 0.2
      %v503 = vmul.f32 %v401, 0.2
      %v504 = vmul.f32 %v403, 0.2
      %v505 = vmul.f32 %v406, 0.2
      %v506 = vmul.f32 %v408, 0.2
      %v507 = vmul.f32 %v411, 0.2
      %v508 = vmul.f32 %v413, 0.2
      %v509 = vmul.f32 %v416, 0.2
      %v510 = vmul.f32 %v418, 0.2
      %v511 = vmul.f32 %v421, 0.2
      %v512 = vmul.f32 %v423, 0.2
      %v513 = vmul.f32 %v426, 0.2
      %v514 = vmul.f32 %v428, 0.2
      %v515 = vmul.f32 %v431, 0.2
      %v516 = vmul.f32 %v433, 0.2
      %v517 = vmul.f32 %v436, 0.2
      %v518 = vmul.f32 %v438, 0.2
      %v519 = vmul.f32 %v441, 0.2
      %v520 = vmul.f32 %v443, 0.2
      %v521 = vmul.f32 %v446, 0.2
      %v522 = vmul.f32 %v448, 0.2
      %v523 = vmul.f32 %v451, 0.2
      %v524 = vmul.f32 %v453, 0.2
      %v525 = vmul.f32 %v456, 0.2
      %v526 = vmul.f32 %v458, 0.2
      %v527 = vmul.f32 %v461, 0.2
      %v528 = vmul.f32 %v463, 0.2
      %v529 = vsel %vm465, %v386, %v497
      %v530 = vsel %vm466, %v388, %v498
      %v531 = vsel %vm467, %v391, %v499
      %v532 = vsel %vm468, %v393, %v500
      %v533 = vsel %vm469, %v396, %v501
      %v534 = vsel %vm470, %v398, %v502
      %v535 = vsel %vm471, %v401, %v503
      %v536 = vsel %vm472, %v403, %v504
      %v537 = vsel %vm473, %v406, %v505
      %v538 = vsel %vm474, %v408, %v506
      %v539 = vsel %vm475, %v411, %v507
      %v540 = vsel %vm476, %v413, %v508
      %v541 = vsel %vm477, %v416, %v509
      %v542 = vsel %vm478, %v418, %v510
      %v543 = vsel %vm479, %v421, %v511
      %v544 = vsel %vm480, %v423, %v512
      %v545 = vsel %vm481, %v426, %v513
      %v546 = vsel %vm482, %v428, %v514
      %v547 = vsel %vm483, %v431, %v515
      %v548 = vsel %vm484, %v433, %v516
      %v549 = vsel %vm485, %v436, %v517
      %v550 = vsel %vm486, %v438, %v518
      %v551 = vsel %vm487, %v441, %v519
      %v552 = vsel %vm488, %v443, %v520
      %v553 = vsel %vm489, %v446, %v521
      %v554 = vsel %vm490, %v448, %v522
      %v555 = vsel %vm491, %v451, %v523
      %v556 = vsel %vm492, %v453, %v524
      %v557 = vsel %vm493, %v456, %v525
      %v558 = vsel %vm494, %v458, %v526
      %v559 = vsel %vm495, %v461, %v527
      %v560 = vsel %vm496, %v463, %v528
      %v561 = vpack.c.bf16 %v529, %v529
      %v562 = vpack.c.bf16 %v530, %v530
      %v563 = vpack.c.bf16 %v531, %v531
      %v564 = vpack.c.bf16 %v532, %v532
      %v565 = vpack.c.bf16 %v533, %v533
      %v566 = vpack.c.bf16 %v534, %v534
      %v567 = vpack.c.bf16 %v535, %v535
      %v568 = vpack.c.bf16 %v536, %v536
      %v569 = vpack.c.bf16 %v537, %v537
      %v570 = vpack.c.bf16 %v538, %v538
      %v571 = vpack.c.bf16 %v539, %v539
      %v572 = vpack.c.bf16 %v540, %v540
      %v573 = vpack.c.bf16 %v541, %v541
      %v574 = vpack.c.bf16 %v542, %v542
      %v575 = vpack.c.bf16 %v543, %v543
      %v576 = vpack.c.bf16 %v544, %v544
      %v577 = vpack.c.bf16 %v545, %v545
      %v578 = vpack.c.bf16 %v546, %v546
      %v579 = vpack.c.bf16 %v547, %v547
      %v580 = vpack.c.bf16 %v548, %v548
      %v581 = vpack.c.bf16 %v549, %v549
      %v582 = vpack.c.bf16 %v550, %v550
      %v583 = vpack.c.bf16 %v551, %v551
      %v584 = vpack.c.bf16 %v552, %v552
      %v585 = vpack.c.bf16 %v553, %v553
      %v586 = vpack.c.bf16 %v554, %v554
      %v587 = vpack.c.bf16 %v555, %v555
      %v588 = vpack.c.bf16 %v556, %v556
      %v589 = vpack.c.bf16 %v557, %v557
      %v590 = vpack.c.bf16 %v558, %v558
      %v591 = vpack.c.bf16 %v559, %v559
      %v592 = vpack.c.bf16 %v560, %v560
      %593 = vst [vmem:[%s182] sm:$0xf] %v561
      %594 = vst [vmem:[%s182 + $0x4] sm:$0xf] %v562
      %595 = vst [vmem:[%s182 + $0x8] sm:$0xf] %v563
      %596 = vst [vmem:[%s182 + $0xc] sm:$0xf] %v564
      %597 = vst [vmem:[%s182 + $0x10] sm:$0xf] %v565
      %598 = vst [vmem:[%s182 + $0x14] sm:$0xf] %v566
      %599 = vst [vmem:[%s182 + $0x18] sm:$0xf] %v567
      %600 = vst [vmem:[%s182 + $0x1c] sm:$0xf] %v568
      %601 = vst [vmem:[%s182 + $0x20] sm:$0xf] %v569
      %602 = vst [vmem:[%s182 + $0x24] sm:$0xf] %v570
      %603 = vst [vmem:[%s182 + $0x28] sm:$0xf] %v571
      %604 = vst [vmem:[%s182 + $0x2c] sm:$0xf] %v572
      %605 = vst [vmem:[%s182 + $0x30] sm:$0xf] %v573
      %606 = vst [vmem:[%s182 + $0x34] sm:$0xf] %v574
      %607 = vst [vmem:[%s182 + $0x38] sm:$0xf] %v575
      %608 = vst [vmem:[%s182 + $0x3c] sm:$0xf] %v576
      %609 = vst [vmem:[%s182 + $0x40] sm:$0xf] %v577
      %610 = vst [vmem:[%s182 + $0x44] sm:$0xf] %v578
      %611 = vst [vmem:[%s182 + $0x48] sm:$0xf] %v579
      %612 = vst [vmem:[%s182 + $0x4c] sm:$0xf] %v580
      %613 = vst [vmem:[%s182 + $0x50] sm:$0xf] %v581
      %614 = vst [vmem:[%s182 + $0x54] sm:$0xf] %v582
      %615 = vst [vmem:[%s182 + $0x58] sm:$0xf] %v583
      %616 = vst [vmem:[%s182 + $0x5c] sm:$0xf] %v584
      %617 = vst [vmem:[%s182 + $0x60] sm:$0xf] %v585
      %618 = vst [vmem:[%s182 + $0x64] sm:$0xf] %v586
      %619 = vst [vmem:[%s182 + $0x68] sm:$0xf] %v587
      %620 = vst [vmem:[%s182 + $0x6c] sm:$0xf] %v588
      %621 = vst [vmem:[%s182 + $0x70] sm:$0xf] %v589
      %622 = vst [vmem:[%s182 + $0x74] sm:$0xf] %v590
      %623 = vst [vmem:[%s182 + $0x78] sm:$0xf] %v591
      %624 = vst [vmem:[%s182 + $0x7c] sm:$0xf] %v592
      %s625 = smul.u32 32, %s17
      %p626 = scmp.lt.s32.totalorder %s625, 63
      %s627 = scalar_select %p626, %s625, 63
      %p628 = scmp.lt.s32.totalorder %s18, 0
      %s629 = scalar_select %p628, %s18, 0
      %s630 = sadd.s32 %s629, %s627
      %s631 = smul.addr %s630, 4
      %s632 = scalar_lea.vmem %s2, %s631
      // Predicated region
      $region29: #{discriminator_forward.4} parent=27 // pred_check
        %p633 = pneg %p97
      $region30: #{discriminator_forward.4} parent=27 // pred_check_branch
        %635 = sbr.rel (%p633) target = $region32
      $region31: #{discriminator_forward.4} parent=27 // pred_region
        %s636 = smul.u32 32, %s17
      $region32: #{discriminator_forward.4} parent=27 // pred_fallthru
        _
    $region28: #{discriminator_forward.4} parent=5 // pred_fallthru
      _
    %p637 = scmp.le.s32.totalorder 2, %s8
    // Predicated region
    $region33: #{discriminator_forward.4} parent=5 // pred_check
      %p638 = pneg %p637
    $region34: #{discriminator_forward.4} parent=5 // pred_check_branch
      %640 = sbr.rel (%p638) target = $region36
    $region35: #{discriminator_forward.4} parent=5 // pred_region
      %s641 = ssub.s32 %s8, 2
      // Predicated region
      $region37: #{discriminator_forward.4} parent=35 // pred_check
        %p642 = pneg %p103
      $region38: #{discriminator_forward.4} parent=35 // pred_check_branch
        %644 = sbr.rel (%p642) target = $region40
      $region39: #{discriminator_forward.4} parent=35 // pred_region
        %s645 = smul.u32 32, %s19
        %p646 = scmp.lt.s32.totalorder %s645, 63
        %s647 = scalar_select %p646, %s645, 63
        %p648 = scmp.lt.s32.totalorder %s20, 0
        %s649 = scalar_select %p648, %s20, 0
        %s650 = sadd.s32 %s649, %s647
        %s651 = smul.addr %s650, 4
        %s652 = scalar_lea.vmem %s2, %s651
      $region40: #{discriminator_forward.4} parent=35 // pred_fallthru
        _
    $region36: #{discriminator_forward.4} parent=5 // pred_fallthru
      _
  $region6: #{discriminator_forward.4} parent=0 // loop_footer
    %s12 = sadd.s32 1, %s8
  $region7: #{discriminator_forward.4} parent=0 // loop_footer_branch
    %7 = sbr.rel target = $region3
  $region8: #{discriminator_forward.4} parent=0 // loop_exit
    _

// kernel: discriminator_forward.5
$region0: #{discriminator_forward.5}
  #allocation0 [shape = 'u32[]', space=smem, size = 0x4, offset = 0x4, fixed_abs, tag = 'smem constant byte address 0x4 - core index']
  #allocation1 [shape = 'u32[72,128]{1,0:T(1,128)}', space=vmem, size = 0x9000, scoped, tag = 'internal scratch']
  %s0 = inlined_call_operand.vmem [shape: bf16[128,1024], index: 0, kind: input, shape index: {}]
  %s1 = inlined_call_operand.vmem [shape: bf16[1024,128], index: 1, kind: input, shape index: {}]
  %s2 = inlined_call_operand.vmem [shape: f32[1,128], index: 2, kind: input, shape index: {}]
  %s3 = inlined_call_operand.vmem [shape: f32[1,128], index: 3, kind: input, shape index: {}]
  %s4 = inlined_call_operand.vmem [shape: bf16[128,128], index: 4, kind: output, shape index: {}]
  %s5 = sld [smem:[#allocation0]]
  $region26: #{discriminator_forward.5} parent=0
    _
  %s7 = ssub.s32 1, %s5
  %s8 = scalar_select 0, %s7, %s5
  // Predicated region
  $region2: #{discriminator_forward.5} parent=0 // pred_check
    _
  $region3: #{discriminator_forward.5} parent=0 // pred_check_branch
    %10 = sbr.rel (0) target = $region5
  $region4: #{discriminator_forward.5} parent=0 // pred_region
    _
  $region5: #{discriminator_forward.5} parent=0 // pred_fallthru
    _
  // Predicated region
  $region6: #{discriminator_forward.5} parent=0 // pred_check
    _
  $region7: #{discriminator_forward.5} parent=0 // pred_check_branch
    %12 = sbr.rel (0) target = $region9
  $region8: #{discriminator_forward.5} parent=0 // pred_region
    _
  $region9: #{discriminator_forward.5} parent=0 // pred_fallthru
    _
  // Predicated region
  $region10: #{discriminator_forward.5} parent=0 // pred_check
    _
  $region11: #{discriminator_forward.5} parent=0 // pred_check_branch
    %14 = sbr.rel (0) target = $region13
  $region12: #{discriminator_forward.5} parent=0 // pred_region
    _
  $region13: #{discriminator_forward.5} parent=0 // pred_fallthru
    _
  // Predicated region
  $region14: #{discriminator_forward.5} parent=0 // pred_check
    _
  $region15: #{discriminator_forward.5} parent=0 // pred_check_branch
    %16 = sbr.rel (0) target = $region17
  $region16: #{discriminator_forward.5} parent=0 // pred_region
    _
  $region17: #{discriminator_forward.5} parent=0 // pred_fallthru
    _
  %v17 = vld [vmem:[%s0] sm:$0xff]
  %v18 = vld [vmem:[%s0 + $0x8] sm:$0xff]
  %v19 = vld [vmem:[%s0 + $0x10] sm:$0xff]
  %v20 = vld [vmem:[%s0 + $0x18] sm:$0xff]
  %v21 = vld [vmem:[%s0 + $0x20] sm:$0xff]
  %v22 = vld [vmem:[%s0 + $0x28] sm:$0xff]
  %v23 = vld [vmem:[%s0 + $0x30] sm:$0xff]
  %v24 = vld [vmem:[%s0 + $0x38] sm:$0xff]
  %v25 = vld [vmem:[%s0 + $0x40] sm:$0xff]
  %v26 = vld [vmem:[%s0 + $0x48] sm:$0xff]
  %v27 = vld [vmem:[%s0 + $0x50] sm:$0xff]
  %v28 = vld [vmem:[%s0 + $0x58] sm:$0xff]
  %v29 = vld [vmem:[%s0 + $0x60] sm:$0xff]
  %v30 = vld [vmem:[%s0 + $0x68] sm:$0xff]
  %v31 = vld [vmem:[%s0 + $0x70] sm:$0xff]
  %v32 = vld [vmem:[%s0 + $0x78] sm:$0xff]
  %v33 = vld [vmem:[%s0 + $0x80] sm:$0xff]
  %v34 = vld [vmem:[%s0 + $0x88] sm:$0xff]
  %v35 = vld [vmem:[%s0 + $0x90] sm:$0xff]
  %v36 = vld [vmem:[%s0 + $0x98] sm:$0xff]
  %v37 = vld [vmem:[%s0 + $0xa0] sm:$0xff]
  %v38 = vld [vmem:[%s0 + $0xa8] sm:$0xff]
  %v39 = vld [vmem:[%s0 + $0xb0] sm:$0xff]
  %v40 = vld [vmem:[%s0 + $0xb8] sm:$0xff]
  %v41 = vld [vmem:[%s0 + $0xc0] sm:$0xff]
  %v42 = vld [vmem:[%s0 + $0xc8] sm:$0xff]
  %v43 = vld [vmem:[%s0 + $0xd0] sm:$0xff]
  %v44 = vld [vmem:[%s0 + $0xd8] sm:$0xff]
  %v45 = vld [vmem:[%s0 + $0xe0] sm:$0xff]
  %v46 = vld [vmem:[%s0 + $0xe8] sm:$0xff]
  %v47 = vld [vmem:[%s0 + $0xf0] sm:$0xff]
  %v48 = vld [vmem:[%s0 + $0xf8] sm:$0xff]
  %v49 = vld [vmem:[%s0 + $0x100] sm:$0xff]
  %v50 = vld [vmem:[%s0 + $0x108] sm:$0xff]
  %v51 = vld [vmem:[%s0 + $0x110] sm:$0xff]
  %v52 = vld [vmem:[%s0 + $0x118] sm:$0xff]
  %v53 = vld [vmem:[%s0 + $0x120] sm:$0xff]
  %v54 = vld [vmem:[%s0 + $0x128] sm:$0xff]
  %v55 = vld [vmem:[%s0 + $0x130] sm:$0xff]
  %v56 = vld [vmem:[%s0 + $0x138] sm:$0xff]
  %v57 = vld [vmem:[%s0 + $0x140] sm:$0xff]
  %v58 = vld [vmem:[%s0 + $0x148] sm:$0xff]
  %v59 = vld [vmem:[%s0 + $0x150] sm:$0xff]
  %v60 = vld [vmem:[%s0 + $0x158] sm:$0xff]
  %v61 = vld [vmem:[%s0 + $0x160] sm:$0xff]
  %v62 = vld [vmem:[%s0 + $0x168] sm:$0xff]
  %v63 = vld [vmem:[%s0 + $0x170] sm:$0xff]
  %v64 = vld [vmem:[%s0 + $0x178] sm:$0xff]
  %v65 = vld [vmem:[%s0 + $0x180] sm:$0xff]
  %v66 = vld [vmem:[%s0 + $0x188] sm:$0xff]
  %v67 = vld [vmem:[%s0 + $0x190] sm:$0xff]
  %v68 = vld [vmem:[%s0 + $0x198] sm:$0xff]
  %v69 = vld [vmem:[%s0 + $0x1a0] sm:$0xff]
  %v70 = vld [vmem:[%s0 + $0x1a8] sm:$0xff]
  %v71 = vld [vmem:[%s0 + $0x1b0] sm:$0xff]
  %v72 = vld [vmem:[%s0 + $0x1b8] sm:$0xff]
  %v73 = vld [vmem:[%s0 + $0x1c0] sm:$0xff]
  %v74 = vld [vmem:[%s0 + $0x1c8] sm:$0xff]
  %v75 = vld [vmem:[%s0 + $0x1d0] sm:$0xff]
  %v76 = vld [vmem:[%s0 + $0x1d8] sm:$0xff]
  %v77 = vld [vmem:[%s0 + $0x1e0] sm:$0xff]
  %v78 = vld [vmem:[%s0 + $0x1e8] sm:$0xff]
  %v79 = vld [vmem:[%s0 + $0x1f0] sm:$0xff]
  %v80 = vld [vmem:[%s0 + $0x1f8] sm:$0xff]
  %v81 = vld [vmem:[%s1] sm:$0xf]
  %v82 = vld [vmem:[%s1 + $0x4] sm:$0xf]
  %v83 = vld [vmem:[%s1 + $0x8] sm:$0xf]
  %v84 = vld [vmem:[%s1 + $0xc] sm:$0xf]
  %v85 = vld [vmem:[%s1 + $0x10] sm:$0xf]
  %v86 = vld [vmem:[%s1 + $0x14] sm:$0xf]
  %v87 = vld [vmem:[%s1 + $0x18] sm:$0xf]
  %v88 = vld [vmem:[%s1 + $0x1c] sm:$0xf]
  %v89 = vld [vmem:[%s1 + $0x20] sm:$0xf]
  %v90 = vld [vmem:[%s1 + $0x24] sm:$0xf]
  %v91 = vld [vmem:[%s1 + $0x28] sm:$0xf]
  %v92 = vld [vmem:[%s1 + $0x2c] sm:$0xf]
  %v93 = vld [vmem:[%s1 + $0x30] sm:$0xf]
  %v94 = vld [vmem:[%s1 + $0x34] sm:$0xf]
  %v95 = vld [vmem:[%s1 + $0x38] sm:$0xf]
  %v96 = vld [vmem:[%s1 + $0x3c] sm:$0xf]
  %v97 = vld [vmem:[%s1 + $0x40] sm:$0xf]
  %v98 = vld [vmem:[%s1 + $0x44] sm:$0xf]
  %v99 = vld [vmem:[%s1 + $0x48] sm:$0xf]
  %v100 = vld [vmem:[%s1 + $0x4c] sm:$0xf]
  %v101 = vld [vmem:[%s1 + $0x50] sm:$0xf]
  %v102 = vld [vmem:[%s1 + $0x54] sm:$0xf]
  %v103 = vld [vmem:[%s1 + $0x58] sm:$0xf]
  %v104 = vld [vmem:[%s1 + $0x5c] sm:$0xf]
  %v105 = vld [vmem:[%s1 + $0x60] sm:$0xf]
  %v106 = vld [vmem:[%s1 + $0x64] sm:$0xf]
  %v107 = vld [vmem:[%s1 + $0x68] sm:$0xf]
  %v108 = vld [vmem:[%s1 + $0x6c] sm:$0xf]
  %v109 = vld [vmem:[%s1 + $0x70] sm:$0xf]
  %v110 = vld [vmem:[%s1 + $0x74] sm:$0xf]
  %v111 = vld [vmem:[%s1 + $0x78] sm:$0xf]
  %v112 = vld [vmem:[%s1 + $0x7c] sm:$0xf]
  %v113 = vld [vmem:[%s1 + $0x80] sm:$0xf]
  %v114 = vld [vmem:[%s1 + $0x84] sm:$0xf]
  %v115 = vld [vmem:[%s1 + $0x88] sm:$0xf]
  %v116 = vld [vmem:[%s1 + $0x8c] sm:$0xf]
  %v117 = vld [vmem:[%s1 + $0x90] sm:$0xf]
  %v118 = vld [vmem:[%s1 + $0x94] sm:$0xf]
  %v119 = vld [vmem:[%s1 + $0x98] sm:$0xf]
  %v120 = vld [vmem:[%s1 + $0x9c] sm:$0xf]
  %v121 = vld [vmem:[%s1 + $0xa0] sm:$0xf]
  %v122 = vld [vmem:[%s1 + $0xa4] sm:$0xf]
  %v123 = vld [vmem:[%s1 + $0xa8] sm:$0xf]
  %v124 = vld [vmem:[%s1 + $0xac] sm:$0xf]
  %v125 = vld [vmem:[%s1 + $0xb0] sm:$0xf]
  %v126 = vld [vmem:[%s1 + $0xb4] sm:$0xf]
  %v127 = vld [vmem:[%s1 + $0xb8] sm:$0xf]
  %v128 = vld [vmem:[%s1 + $0xbc] sm:$0xf]
  %v129 = vld [vmem:[%s1 + $0xc0] sm:$0xf]
  %v130 = vld [vmem:[%s1 + $0xc4] sm:$0xf]
  %v131 = vld [vmem:[%s1 + $0xc8] sm:$0xf]
  %v132 = vld [vmem:[%s1 + $0xcc] sm:$0xf]
  %v133 = vld [vmem:[%s1 + $0xd0] sm:$0xf]
  %v134 = vld [vmem:[%s1 + $0xd4] sm:$0xf]
  %v135 = vld [vmem:[%s1 + $0xd8] sm:$0xf]
  %v136 = vld [vmem:[%s1 + $0xdc] sm:$0xf]
  %v137 = vld [vmem:[%s1 + $0xe0] sm:$0xf]
  %v138 = vld [vmem:[%s1 + $0xe4] sm:$0xf]
  %v139 = vld [vmem:[%s1 + $0xe8] sm:$0xf]
  %v140 = vld [vmem:[%s1 + $0xec] sm:$0xf]
  %v141 = vld [vmem:[%s1 + $0xf0] sm:$0xf]
  %v142 = vld [vmem:[%s1 + $0xf4] sm:$0xf]
  %v143 = vld [vmem:[%s1 + $0xf8] sm:$0xf]
  %v144 = vld [vmem:[%s1 + $0xfc] sm:$0xf]
  %v145 = vld [vmem:[%s1 + $0x100] sm:$0xf]
  %v146 = vld [vmem:[%s1 + $0x104] sm:$0xf]
  %v147 = vld [vmem:[%s1 + $0x108] sm:$0xf]
  %v148 = vld [vmem:[%s1 + $0x10c] sm:$0xf]
  %v149 = vld [vmem:[%s1 + $0x110] sm:$0xf]
  %v150 = vld [vmem:[%s1 + $0x114] sm:$0xf]
  %v151 = vld [vmem:[%s1 + $0x118] sm:$0xf]
  %v152 = vld [vmem:[%s1 + $0x11c] sm:$0xf]
  %v153 = vld [vmem:[%s1 + $0x120] sm:$0xf]
  %v154 = vld [vmem:[%s1 + $0x124] sm:$0xf]
  %v155 = vld [vmem:[%s1 + $0x128] sm:$0xf]
  %v156 = vld [vmem:[%s1 + $0x12c] sm:$0xf]
  %v157 = vld [vmem:[%s1 + $0x130] sm:$0xf]
  %v158 = vld [vmem:[%s1 + $0x134] sm:$0xf]
  %v159 = vld [vmem:[%s1 + $0x138] sm:$0xf]
  %v160 = vld [vmem:[%s1 + $0x13c] sm:$0xf]
  %v161 = vld [vmem:[%s1 + $0x140] sm:$0xf]
  %v162 = vld [vmem:[%s1 + $0x144] sm:$0xf]
  %v163 = vld [vmem:[%s1 + $0x148] sm:$0xf]
  %v164 = vld [vmem:[%s1 + $0x14c] sm:$0xf]
  %v165 = vld [vmem:[%s1 + $0x150] sm:$0xf]
  %v166 = vld [vmem:[%s1 + $0x154] sm:$0xf]
  %v167 = vld [vmem:[%s1 + $0x158] sm:$0xf]
  %v168 = vld [vmem:[%s1 + $0x15c] sm:$0xf]
  %v169 = vld [vmem:[%s1 + $0x160] sm:$0xf]
  %v170 = vld [vmem:[%s1 + $0x164] sm:$0xf]
  %v171 = vld [vmem:[%s1 + $0x168] sm:$0xf]
  %v172 = vld [vmem:[%s1 + $0x16c] sm:$0xf]
  %v173 = vld [vmem:[%s1 + $0x170] sm:$0xf]
  %v174 = vld [vmem:[%s1 + $0x174] sm:$0xf]
  %v175 = vld [vmem:[%s1 + $0x178] sm:$0xf]
  %v176 = vld [vmem:[%s1 + $0x17c] sm:$0xf]
  %v177 = vld [vmem:[%s1 + $0x180] sm:$0xf]
  %v178 = vld [vmem:[%s1 + $0x184] sm:$0xf]
  %v179 = vld [vmem:[%s1 + $0x188] sm:$0xf]
  %v180 = vld [vmem:[%s1 + $0x18c] sm:$0xf]
  %v181 = vld [vmem:[%s1 + $0x190] sm:$0xf]
  %v182 = vld [vmem:[%s1 + $0x194] sm:$0xf]
  %v183 = vld [vmem:[%s1 + $0x198] sm:$0xf]
  %v184 = vld [vmem:[%s1 + $0x19c] sm:$0xf]
  %v185 = vld [vmem:[%s1 + $0x1a0] sm:$0xf]
  %v186 = vld [vmem:[%s1 + $0x1a4] sm:$0xf]
  %v187 = vld [vmem:[%s1 + $0x1a8] sm:$0xf]
  %v188 = vld [vmem:[%s1 + $0x1ac] sm:$0xf]
  %v189 = vld [vmem:[%s1 + $0x1b0] sm:$0xf]
  %v190 = vld [vmem:[%s1 + $0x1b4] sm:$0xf]
  %v191 = vld [vmem:[%s1 + $0x1b8] sm:$0xf]
  %v192 = vld [vmem:[%s1 + $0x1bc] sm:$0xf]
  %v193 = vld [vmem:[%s1 + $0x1c0] sm:$0xf]
  %v194 = vld [vmem:[%s1 + $0x1c4] sm:$0xf]
  %v195 = vld [vmem:[%s1 + $0x1c8] sm:$0xf]
  %v196 = vld [vmem:[%s1 + $0x1cc] sm:$0xf]
  %v197 = vld [vmem:[%s1 + $0x1d0] sm:$0xf]
  %v198 = vld [vmem:[%s1 + $0x1d4] sm:$0xf]
  %v199 = vld [vmem:[%s1 + $0x1d8] sm:$0xf]
  %v200 = vld [vmem:[%s1 + $0x1dc] sm:$0xf]
  %v201 = vld [vmem:[%s1 + $0x1e0] sm:$0xf]
  %v202 = vld [vmem:[%s1 + $0x1e4] sm:$0xf]
  %v203 = vld [vmem:[%s1 + $0x1e8] sm:$0xf]
  %v204 = vld [vmem:[%s1 + $0x1ec] sm:$0xf]
  %v205 = vld [vmem:[%s1 + $0x1f0] sm:$0xf]
  %v206 = vld [vmem:[%s1 + $0x1f4] sm:$0xf]
  %v207 = vld [vmem:[%s1 + $0x1f8] sm:$0xf]
  %v208 = vld [vmem:[%s1 + $0x1fc] sm:$0xf]
  %v273 = vunpack.c.l.b16 %v17
  %v274 = vunpack.c.h.b16 %v17
  %v275 = vunpack.c.l.b16 %v18
  %v276 = vunpack.c.h.b16 %v18
  %v277 = vunpack.c.l.b16 %v19
  %v278 = vunpack.c.h.b16 %v19
  %v279 = vunpack.c.l.b16 %v20
  %v280 = vunpack.c.h.b16 %v20
  %v281 = vunpack.c.l.b16 %v21
  %v282 = vunpack.c.h.b16 %v21
  %v283 = vunpack.c.l.b16 %v22
  %v284 = vunpack.c.h.b16 %v22
  %v285 = vunpack.c.l.b16 %v23
  %v286 = vunpack.c.h.b16 %v23
  %v287 = vunpack.c.l.b16 %v24
  %v288 = vunpack.c.h.b16 %v24
  %v289 = vunpack.c.l.b16 %v25
  %v290 = vunpack.c.h.b16 %v25
  %v291 = vunpack.c.l.b16 %v26
  %v292 = vunpack.c.h.b16 %v26
  %v293 = vunpack.c.l.b16 %v27
  %v294 = vunpack.c.h.b16 %v27
  %v295 = vunpack.c.l.b16 %v28
  %v296 = vunpack.c.h.b16 %v28
  %v297 = vunpack.c.l.b16 %v29
  %v298 = vunpack.c.h.b16 %v29
  %v299 = vunpack.c.l.b16 %v30
  %v300 = vunpack.c.h.b16 %v30
  %v301 = vunpack.c.l.b16 %v31
  %v302 = vunpack.c.h.b16 %v31
  %v303 = vunpack.c.l.b16 %v32
  %v304 = vunpack.c.h.b16 %v32
  %v305 = vunpack.c.l.b16 %v33
  %v306 = vunpack.c.h.b16 %v33
  %v307 = vunpack.c.l.b16 %v34
  %v308 = vunpack.c.h.b16 %v34
  %v309 = vunpack.c.l.b16 %v35
  %v310 = vunpack.c.h.b16 %v35
  %v311 = vunpack.c.l.b16 %v36
  %v312 = vunpack.c.h.b16 %v36
  %v313 = vunpack.c.l.b16 %v37
  %v314 = vunpack.c.h.b16 %v37
  %v315 = vunpack.c.l.b16 %v38
  %v316 = vunpack.c.h.b16 %v38
  %v317 = vunpack.c.l.b16 %v39
  %v318 = vunpack.c.h.b16 %v39
  %v319 = vunpack.c.l.b16 %v40
  %v320 = vunpack.c.h.b16 %v40
  %v321 = vunpack.c.l.b16 %v41
  %v322 = vunpack.c.h.b16 %v41
  %v323 = vunpack.c.l.b16 %v42
  %v324 = vunpack.c.h.b16 %v42
  %v325 = vunpack.c.l.b16 %v43
  %v326 = vunpack.c.h.b16 %v43
  %v327 = vunpack.c.l.b16 %v44
  %v328 = vunpack.c.h.b16 %v44
  %v329 = vunpack.c.l.b16 %v45
  %v330 = vunpack.c.h.b16 %v45
  %v331 = vunpack.c.l.b16 %v46
  %v332 = vunpack.c.h.b16 %v46
  %v333 = vunpack.c.l.b16 %v47
  %v334 = vunpack.c.h.b16 %v47
  %v335 = vunpack.c.l.b16 %v48
  %v336 = vunpack.c.h.b16 %v48
  %v337 = vunpack.c.l.b16 %v49
  %v338 = vunpack.c.h.b16 %v49
  %v339 = vunpack.c.l.b16 %v50
  %v340 = vunpack.c.h.b16 %v50
  %v341 = vunpack.c.l.b16 %v51
  %v342 = vunpack.c.h.b16 %v51
  %v343 = vunpack.c.l.b16 %v52
  %v344 = vunpack.c.h.b16 %v52
  %v345 = vunpack.c.l.b16 %v53
  %v346 = vunpack.c.h.b16 %v53
  %v347 = vunpack.c.l.b16 %v54
  %v348 = vunpack.c.h.b16 %v54
  %v349 = vunpack.c.l.b16 %v55
  %v350 = vunpack.c.h.b16 %v55
  %v351 = vunpack.c.l.b16 %v56
  %v352 = vunpack.c.h.b16 %v56
  %v353 = vunpack.c.l.b16 %v57
  %v354 = vunpack.c.h.b16 %v57
  %v355 = vunpack.c.l.b16 %v58
  %v356 = vunpack.c.h.b16 %v58
  %v357 = vunpack.c.l.b16 %v59
  %v358 = vunpack.c.h.b16 %v59
  %v359 = vunpack.c.l.b16 %v60
  %v360 = vunpack.c.h.b16 %v60
  %v361 = vunpack.c.l.b16 %v61
  %v362 = vunpack.c.h.b16 %v61
  %v363 = vunpack.c.l.b16 %v62
  %v364 = vunpack.c.h.b16 %v62
  %v365 = vunpack.c.l.b16 %v63
  %v366 = vunpack.c.h.b16 %v63
  %v367 = vunpack.c.l.b16 %v64
  %v368 = vunpack.c.h.b16 %v64
  %v369 = vunpack.c.l.b16 %v65
  %v370 = vunpack.c.h.b16 %v65
  %v371 = vunpack.c.l.b16 %v66
  %v372 = vunpack.c.h.b16 %v66
  %v373 = vunpack.c.l.b16 %v67
  %v374 = vunpack.c.h.b16 %v67
  %v375 = vunpack.c.l.b16 %v68
  %v376 = vunpack.c.h.b16 %v68
  %v377 = vunpack.c.l.b16 %v69
  %v378 = vunpack.c.h.b16 %v69
  %v379 = vunpack.c.l.b16 %v70
  %v380 = vunpack.c.h.b16 %v70
  %v381 = vunpack.c.l.b16 %v71
  %v382 = vunpack.c.h.b16 %v71
  %v383 = vunpack.c.l.b16 %v72
  %v384 = vunpack.c.h.b16 %v72
  %v385 = vunpack.c.l.b16 %v73
  %v386 = vunpack.c.h.b16 %v73
  %v387 = vunpack.c.l.b16 %v74
  %v388 = vunpack.c.h.b16 %v74
  %v389 = vunpack.c.l.b16 %v75
  %v390 = vunpack.c.h.b16 %v75
  %v391 = vunpack.c.l.b16 %v76
  %v392 = vunpack.c.h.b16 %v76
  %v393 = vunpack.c.l.b16 %v77
  %v394 = vunpack.c.h.b16 %v77
  %v395 = vunpack.c.l.b16 %v78
  %v396 = vunpack.c.h.b16 %v78
  %v397 = vunpack.c.l.b16 %v79
  %v398 = vunpack.c.h.b16 %v79
  %v399 = vunpack.c.l.b16 %v80
  %v400 = vunpack.c.h.b16 %v80
  %v401 = vpack.c.b16 %v281, %v273
  %v402 = vpack.c.b16 %v282, %v274
  %v403 = vpack.c.b16 %v283, %v275
  %v404 = vpack.c.b16 %v284, %v276
  %v405 = vpack.c.b16 %v285, %v277
  %v406 = vpack.c.b16 %v286, %v278
  %v407 = vpack.c.b16 %v287, %v279
  %v408 = vpack.c.b16 %v288, %v280
  %v409 = vpack.c.b16 %v297, %v289
  %v410 = vpack.c.b16 %v298, %v290
  %v411 = vpack.c.b16 %v299, %v291
  %v412 = vpack.c.b16 %v300, %v292
  %v413 = vpack.c.b16 %v301, %v293
  %v414 = vpack.c.b16 %v302, %v294
  %v415 = vpack.c.b16 %v303, %v295
  %v416 = vpack.c.b16 %v304, %v296
  %v417 = vpack.c.b16 %v313, %v305
  %v418 = vpack.c.b16 %v314, %v306
  %v419 = vpack.c.b16 %v315, %v307
  %v420 = vpack.c.b16 %v316, %v308
  %v421 = vpack.c.b16 %v317, %v309
  %v422 = vpack.c.b16 %v318, %v310
  %v423 = vpack.c.b16 %v319, %v311
  %v424 = vpack.c.b16 %v320, %v312
  %v425 = vpack.c.b16 %v329, %v321
  %v426 = vpack.c.b16 %v330, %v322
  %v427 = vpack.c.b16 %v331, %v323
  %v428 = vpack.c.b16 %v332, %v324
  %v429 = vpack.c.b16 %v333, %v325
  %v430 = vpack.c.b16 %v334, %v326
  %v431 = vpack.c.b16 %v335, %v327
  %v432 = vpack.c.b16 %v336, %v328
  %v433 = vpack.c.b16 %v345, %v337
  %v434 = vpack.c.b16 %v346, %v338
  %v435 = vpack.c.b16 %v347, %v339
  %v436 = vpack.c.b16 %v348, %v340
  %v437 = vpack.c.b16 %v349, %v341
  %v438 = vpack.c.b16 %v350, %v342
  %v439 = vpack.c.b16 %v351, %v343
  %v440 = vpack.c.b16 %v352, %v344
  %v441 = vpack.c.b16 %v361, %v353
  %v442 = vpack.c.b16 %v362, %v354
  %v443 = vpack.c.b16 %v363, %v355
  %v444 = vpack.c.b16 %v364, %v356
  %v445 = vpack.c.b16 %v365, %v357
  %v446 = vpack.c.b16 %v366, %v358
  %v447 = vpack.c.b16 %v367, %v359
  %v448 = vpack.c.b16 %v368, %v360
  %v449 = vpack.c.b16 %v377, %v369
  %v450 = vpack.c.b16 %v378, %v370
  %v451 = vpack.c.b16 %v379, %v371
  %v452 = vpack.c.b16 %v380, %v372
  %v453 = vpack.c.b16 %v381, %v373
  %v454 = vpack.c.b16 %v382, %v374
  %v455 = vpack.c.b16 %v383, %v375
  %v456 = vpack.c.b16 %v384, %v376
  %v457 = vpack.c.b16 %v393, %v385
  %v458 = vpack.c.b16 %v394, %v386
  %v459 = vpack.c.b16 %v395, %v387
  %v460 = vpack.c.b16 %v396, %v388
  %v461 = vpack.c.b16 %v397, %v389
  %v462 = vpack.c.b16 %v398, %v390
  %v463 = vpack.c.b16 %v399, %v391
  %v464 = vpack.c.b16 %v400, %v392
  %v657 = vunpack.c.l.b16 %v81
  %v658 = vunpack.c.l.b16 %v82
  %v659 = vunpack.c.l.b16 %v83
  %v660 = vunpack.c.l.b16 %v84
  %v661 = vunpack.c.l.b16 %v85
  %v662 = vunpack.c.l.b16 %v86
  %v663 = vunpack.c.l.b16 %v87
  %v664 = vunpack.c.l.b16 %v88
  %v665 = vunpack.c.l.b16 %v89
  %v666 = vunpack.c.l.b16 %v90
  %v667 = vunpack.c.l.b16 %v91
  %v668 = vunpack.c.l.b16 %v92
  %v669 = vunpack.c.l.b16 %v93
  %v670 = vunpack.c.l.b16 %v94
  %v671 = vunpack.c.l.b16 %v95
  %v672 = vunpack.c.l.b16 %v96
  %v673 = vunpack.c.l.b16 %v97
  %v674 = vunpack.c.l.b16 %v98
  %v675 = vunpack.c.l.b16 %v99
  %v676 = vunpack.c.l.b16 %v100
  %v677 = vunpack.c.l.b16 %v101
  %v678 = vunpack.c.l.b16 %v102
  %v679 = vunpack.c.l.b16 %v103
  %v680 = vunpack.c.l.b16 %v104
  %v681 = vunpack.c.l.b16 %v105
  %v682 = vunpack.c.l.b16 %v106
  %v683 = vunpack.c.l.b16 %v107
  %v684 = vunpack.c.l.b16 %v108
  %v685 = vunpack.c.l.b16 %v109
  %v686 = vunpack.c.l.b16 %v110
  %v687 = vunpack.c.l.b16 %v111
  %v688 = vunpack.c.l.b16 %v112
  %v689 = vunpack.c.l.b16 %v113
  %v690 = vunpack.c.l.b16 %v114
  %v691 = vunpack.c.l.b16 %v115
  %v692 = vunpack.c.l.b16 %v116
  %v693 = vunpack.c.l.b16 %v117
  %v694 = vunpack.c.l.b16 %v118
  %v695 = vunpack.c.l.b16 %v119
  %v696 = vunpack.c.l.b16 %v120
  %v697 = vunpack.c.l.b16 %v121
  %v698 = vunpack.c.l.b16 %v122
  %v699 = vunpack.c.l.b16 %v123
  %v700 = vunpack.c.l.b16 %v124
  %v701 = vunpack.c.l.b16 %v125
  %v702 = vunpack.c.l.b16 %v126
  %v703 = vunpack.c.l.b16 %v127
  %v704 = vunpack.c.l.b16 %v128
  %v705 = vunpack.c.l.b16 %v129
  %v706 = vunpack.c.l.b16 %v130
  %v707 = vunpack.c.l.b16 %v131
  %v708 = vunpack.c.l.b16 %v132
  %v709 = vunpack.c.l.b16 %v133
  %v710 = vunpack.c.l.b16 %v134
  %v711 = vunpack.c.l.b16 %v135
  %v712 = vunpack.c.l.b16 %v136
  %v713 = vunpack.c.l.b16 %v137
  %v714 = vunpack.c.l.b16 %v138
  %v715 = vunpack.c.l.b16 %v139
  %v716 = vunpack.c.l.b16 %v140
  %v717 = vunpack.c.l.b16 %v141
  %v718 = vunpack.c.l.b16 %v142
  %v719 = vunpack.c.l.b16 %v143
  %v720 = vunpack.c.l.b16 %v144
  %v721 = vunpack.c.l.b16 %v145
  %v722 = vunpack.c.l.b16 %v146
  %v723 = vunpack.c.l.b16 %v147
  %v724 = vunpack.c.l.b16 %v148
  %v725 = vunpack.c.l.b16 %v149
  %v726 = vunpack.c.l.b16 %v150
  %v727 = vunpack.c.l.b16 %v151
  %v728 = vunpack.c.l.b16 %v152
  %v729 = vunpack.c.l.b16 %v153
  %v730 = vunpack.c.l.b16 %v154
  %v731 = vunpack.c.l.b16 %v155
  %v732 = vunpack.c.l.b16 %v156
  %v733 = vunpack.c.l.b16 %v157
  %v734 = vunpack.c.l.b16 %v158
  %v735 = vunpack.c.l.b16 %v159
  %v736 = vunpack.c.l.b16 %v160
  %v737 = vunpack.c.l.b16 %v161
  %v738 = vunpack.c.l.b16 %v162
  %v739 = vunpack.c.l.b16 %v163
  %v740 = vunpack.c.l.b16 %v164
  %v741 = vunpack.c.l.b16 %v165
  %v742 = vunpack.c.l.b16 %v166
  %v743 = vunpack.c.l.b16 %v167
  %v744 = vunpack.c.l.b16 %v168
  %v745 = vunpack.c.l.b16 %v169
  %v746 = vunpack.c.l.b16 %v170
  %v747 = vunpack.c.l.b16 %v171
  %v748 = vunpack.c.l.b16 %v172
  %v749 = vunpack.c.l.b16 %v173
  %v750 = vunpack.c.l.b16 %v174
  %v751 = vunpack.c.l.b16 %v175
  %v752 = vunpack.c.l.b16 %v176
  %v753 = vunpack.c.l.b16 %v177
  %v754 = vunpack.c.l.b16 %v178
  %v755 = vunpack.c.l.b16 %v179
  %v756 = vunpack.c.l.b16 %v180
  %v757 = vunpack.c.l.b16 %v181
  %v758 = vunpack.c.l.b16 %v182
  %v759 = vunpack.c.l.b16 %v183
  %v760 = vunpack.c.l.b16 %v184
  %v761 = vunpack.c.l.b16 %v185
  %v762 = vunpack.c.l.b16 %v186
  %v763 = vunpack.c.l.b16 %v187
  %v764 = vunpack.c.l.b16 %v188
  %v765 = vunpack.c.l.b16 %v189
  %v766 = vunpack.c.l.b16 %v190
  %v767 = vunpack.c.l.b16 %v191
  %v768 = vunpack.c.l.b16 %v192
  %v769 = vunpack.c.l.b16 %v193
  %v770 = vunpack.c.l.b16 %v194
  %v771 = vunpack.c.l.b16 %v195
  %v772 = vunpack.c.l.b16 %v196
  %v773 = vunpack.c.l.b16 %v197
  %v774 = vunpack.c.l.b16 %v198
  %v775 = vunpack.c.l.b16 %v199
  %v776 = vunpack.c.l.b16 %v200
  %v777 = vunpack.c.l.b16 %v201
  %v778 = vunpack.c.l.b16 %v202
  %v779 = vunpack.c.l.b16 %v203
  %v780 = vunpack.c.l.b16 %v204
  %v781 = vunpack.c.l.b16 %v205
  %v782 = vunpack.c.l.b16 %v206
  %v783 = vunpack.c.l.b16 %v207
  %v784 = vunpack.c.l.b16 %v208
  %v785 = vpack.c.b16 %v658, %v657
  %v786 = vpack.c.b16 %v660, %v659
  %v787 = vpack.c.b16 %v662, %v661
  %v788 = vpack.c.b16 %v664, %v663
  %v789 = vpack.c.b16 %v666, %v665
  %v790 = vpack.c.b16 %v668, %v667
  %v791 = vpack.c.b16 %v670, %v669
  %v792 = vpack.c.b16 %v672, %v671
  %v793 = vpack.c.b16 %v674, %v673
  %v794 = vpack.c.b16 %v676, %v675
  %v795 = vpack.c.b16 %v678, %v677
  %v796 = vpack.c.b16 %v680, %v679
  %v797 = vpack.c.b16 %v682, %v681
  %v798 = vpack.c.b16 %v684, %v683
  %v799 = vpack.c.b16 %v686, %v685
  %v800 = vpack.c.b16 %v688, %v687
  %v801 = vpack.c.b16 %v690, %v689
  %v802 = vpack.c.b16 %v692, %v691
  %v803 = vpack.c.b16 %v694, %v693
  %v804 = vpack.c.b16 %v696, %v695
  %v805 = vpack.c.b16 %v698, %v697
  %v806 = vpack.c.b16 %v700, %v699
  %v807 = vpack.c.b16 %v702, %v701
  %v808 = vpack.c.b16 %v704, %v703
  %v809 = vpack.c.b16 %v706, %v705
  %v810 = vpack.c.b16 %v708, %v707
  %v811 = vpack.c.b16 %v710, %v709
  %v812 = vpack.c.b16 %v712, %v711
  %v813 = vpack.c.b16 %v714, %v713
  %v814 = vpack.c.b16 %v716, %v715
  %v815 = vpack.c.b16 %v718, %v717
  %v816 = vpack.c.b16 %v720, %v719
  %v817 = vpack.c.b16 %v722, %v721
  %v818 = vpack.c.b16 %v724, %v723
  %v819 = vpack.c.b16 %v726, %v725
  %v820 = vpack.c.b16 %v728, %v727
  %v821 = vpack.c.b16 %v730, %v729
  %v822 = vpack.c.b16 %v732, %v731
  %v823 = vpack.c.b16 %v734, %v733
  %v824 = vpack.c.b16 %v736, %v735
  %v825 = vpack.c.b16 %v738, %v737
  %v826 = vpack.c.b16 %v740, %v739
  %v827 = vpack.c.b16 %v742, %v741
  %v828 = vpack.c.b16 %v744, %v743
  %v829 = vpack.c.b16 %v746, %v745
  %v830 = vpack.c.b16 %v748, %v747
  %v831 = vpack.c.b16 %v750, %v749
  %v832 = vpack.c.b16 %v752, %v751
  %v833 = vpack.c.b16 %v754, %v753
  %v834 = vpack.c.b16 %v756, %v755
  %v835 = vpack.c.b16 %v758, %v757
  %v836 = vpack.c.b16 %v760, %v759
  %v837 = vpack.c.b16 %v762, %v761
  %v838 = vpack.c.b16 %v764, %v763
  %v839 = vpack.c.b16 %v766, %v765
  %v840 = vpack.c.b16 %v768, %v767
  %v841 = vpack.c.b16 %v770, %v769
  %v842 = vpack.c.b16 %v772, %v771
  %v843 = vpack.c.b16 %v774, %v773
  %v844 = vpack.c.b16 %v776, %v775
  %v845 = vpack.c.b16 %v778, %v777
  %v846 = vpack.c.b16 %v780, %v779
  %v847 = vpack.c.b16 %v782, %v781
  %v848 = vpack.c.b16 %v784, %v783
  %913 = vmatpush.bf16.msra.mxu0 %v792
  %914 = vmatpush.bf16.msra.mxu0 %v791
  %915 = vmatpush.bf16.msra.mxu0 %v790
  %916 = vmatpush.bf16.msra.mxu0 %v789
  %917 = vmatpush.bf16.msra.mxu0 %v788
  %918 = vmatpush.bf16.msra.mxu0 %v787
  %919 = vmatpush.bf16.msra.mxu0 %v786
  %920 = vmatpush.bf16.msra.mxu0 %v785
  %921 = vmatmul.bf16.gmra.mxu0 %v401
  %v922 = vpop.f32.mrf.mxu0
  %v923 = vadd.f32 0.0, %v922
  %v924 = vpop.f32.mrf.mxu0
  %v925 = vadd.f32 0.0, %v924
  %926 = vmatmul.bf16.gmra.mxu0 %v409
  %v927 = vpop.f32.mrf.mxu0
  %v928 = vadd.f32 0.0, %v927
  %v929 = vpop.f32.mrf.mxu0
  %v930 = vadd.f32 0.0, %v929
  %931 = vmatmul.bf16.gmra.mxu0 %v417
  %v932 = vpop.f32.mrf.mxu0
  %v933 = vadd.f32 0.0, %v932
  %v934 = vpop.f32.mrf.mxu0
  %v935 = vadd.f32 0.0, %v934
  %936 = vmatmul.bf16.gmra.mxu0 %v425
  %v937 = vpop.f32.mrf.mxu0
  %v938 = vadd.f32 0.0, %v937
  %v939 = vpop.f32.mrf.mxu0
  %v940 = vadd.f32 0.0, %v939
  %941 = vmatmul.bf16.gmra.mxu0 %v433
  %v942 = vpop.f32.mrf.mxu0
  %v943 = vadd.f32 0.0, %v942
  %v944 = vpop.f32.mrf.mxu0
  %v945 = vadd.f32 0.0, %v944
  %946 = vmatmul.bf16.gmra.mxu0 %v441
  %v947 = vpop.f32.mrf.mxu0
  %v948 = vadd.f32 0.0, %v947
  %v949 = vpop.f32.mrf.mxu0
  %v950 = vadd.f32 0.0, %v949
  %951 = vmatmul.bf16.gmra.mxu0 %v449
  %v952 = vpop.f32.mrf.mxu0
  %v953 = vadd.f32 0.0, %v952
  %v954 = vpop.f32.mrf.mxu0
  %v955 = vadd.f32 0.0, %v954
  %956 = vmatmul.bf16.gmra.mxu0 %v457
  %v957 = vpop.f32.mrf.mxu0
  %v958 = vadd.f32 0.0, %v957
  %v959 = vpop.f32.mrf.mxu0
  %v960 = vadd.f32 0.0, %v959
  %961 = vdwg.mxu0
  %962 = vmatpush.bf16.msra.mxu0 %v800
  %963 = vmatpush.bf16.msra.mxu0 %v799
  %964 = vmatpush.bf16.msra.mxu0 %v798
  %965 = vmatpush.bf16.msra.mxu0 %v797
  %966 = vmatpush.bf16.msra.mxu0 %v796
  %967 = vmatpush.bf16.msra.mxu0 %v795
  %968 = vmatpush.bf16.msra.mxu0 %v794
  %969 = vmatpush.bf16.msra.mxu0 %v793
  %970 = vmatmul.bf16.gmra.mxu0 %v402
  %v971 = vpop.f32.mrf.mxu0
  %v972 = vadd.f32 %v923, %v971
  %v973 = vpop.f32.mrf.mxu0
  %v974 = vadd.f32 %v925, %v973
  %975 = vmatmul.bf16.gmra.mxu0 %v410
  %v976 = vpop.f32.mrf.mxu0
  %v977 = vadd.f32 %v928, %v976
  %v978 = vpop.f32.mrf.mxu0
  %v979 = vadd.f32 %v930, %v978
  %980 = vmatmul.bf16.gmra.mxu0 %v418
  %v981 = vpop.f32.mrf.mxu0
  %v982 = vadd.f32 %v933, %v981
  %v983 = vpop.f32.mrf.mxu0
  %v984 = vadd.f32 %v935, %v983
  %985 = vmatmul.bf16.gmra.mxu0 %v426
  %v986 = vpop.f32.mrf.mxu0
  %v987 = vadd.f32 %v938, %v986
  %v988 = vpop.f32.mrf.mxu0
  %v989 = vadd.f32 %v940, %v988
  %990 = vmatmul.bf16.gmra.mxu0 %v434
  %v991 = vpop.f32.mrf.mxu0
  %v992 = vadd.f32 %v943, %v991
  %v993 = vpop.f32.mrf.mxu0
  %v994 = vadd.f32 %v945, %v993
  %995 = vmatmul.bf16.gmra.mxu0 %v442
  %v996 = vpop.f32.mrf.mxu0
  %v997 = vadd.f32 %v948, %v996
  %v998 = vpop.f32.mrf.mxu0
  %v999 = vadd.f32 %v950, %v998
  %1000 = vmatmul.bf16.gmra.mxu0 %v450
  %v1001 = vpop.f32.mrf.mxu0
  %v1002 = vadd.f32 %v953, %v1001
  %v1003 = vpop.f32.mrf.mxu0
  %v1004 = vadd.f32 %v955, %v1003
  %1005 = vmatmul.bf16.gmra.mxu0 %v458
  %v1006 = vpop.f32.mrf.mxu0
  %v1007 = vadd.f32 %v958, %v1006
  %v1008 = vpop.f32.mrf.mxu0
  %v1009 = vadd.f32 %v960, %v1008
  %1010 = vdwg.mxu0
  %1011 = vmatpush.bf16.msra.mxu0 %v808
  %1012 = vmatpush.bf16.msra.mxu0 %v807
  %1013 = vmatpush.bf16.msra.mxu0 %v806
  %1014 = vmatpush.bf16.msra.mxu0 %v805
  %1015 = vmatpush.bf16.msra.mxu0 %v804
  %1016 = vmatpush.bf16.msra.mxu0 %v803
  %1017 = vmatpush.bf16.msra.mxu0 %v802
  %1018 = vmatpush.bf16.msra.mxu0 %v801
  %1019 = vmatmul.bf16.gmra.mxu0 %v403
  %v1020 = vpop.f32.mrf.mxu0
  %v1021 = vadd.f32 %v972, %v1020
  %v1022 = vpop.f32.mrf.mxu0
  %v1023 = vadd.f32 %v974, %v1022
  %1024 = vmatmul.bf16.gmra.mxu0 %v411
  %v1025 = vpop.f32.mrf.mxu0
  %v1026 = vadd.f32 %v977, %v1025
  %v1027 = vpop.f32.mrf.mxu0
  %v1028 = vadd.f32 %v979, %v1027
  %1029 = vmatmul.bf16.gmra.mxu0 %v419
  %v1030 = vpop.f32.mrf.mxu0
  %v1031 = vadd.f32 %v982, %v1030
  %v1032 = vpop.f32.mrf.mxu0
  %v1033 = vadd.f32 %v984, %v1032
  %1034 = vmatmul.bf16.gmra.mxu0 %v427
  %v1035 = vpop.f32.mrf.mxu0
  %v1036 = vadd.f32 %v987, %v1035
  %v1037 = vpop.f32.mrf.mxu0
  %v1038 = vadd.f32 %v989, %v1037
  %1039 = vmatmul.bf16.gmra.mxu0 %v435
  %v1040 = vpop.f32.mrf.mxu0
  %v1041 = vadd.f32 %v992, %v1040
  %v1042 = vpop.f32.mrf.mxu0
  %v1043 = vadd.f32 %v994, %v1042
  %1044 = vmatmul.bf16.gmra.mxu0 %v443
  %v1045 = vpop.f32.mrf.mxu0
  %v1046 = vadd.f32 %v997, %v1045
  %v1047 = vpop.f32.mrf.mxu0
  %v1048 = vadd.f32 %v999, %v1047
  %1049 = vmatmul.bf16.gmra.mxu0 %v451
  %v1050 = vpop.f32.mrf.mxu0
  %v1051 = vadd.f32 %v1002, %v1050
  %v1052 = vpop.f32.mrf.mxu0
  %v1053 = vadd.f32 %v1004, %v1052
  %1054 = vmatmul.bf16.gmra.mxu0 %v459
  %v1055 = vpop.f32.mrf.mxu0
  %v1056 = vadd.f32 %v1007, %v1055
  %v1057 = vpop.f32.mrf.mxu0
  %v1058 = vadd.f32 %v1009, %v1057
  %1059 = vdwg.mxu0
  %1060 = vmatpush.bf16.msra.mxu0 %v816
  %1061 = vmatpush.bf16.msra.mxu0 %v815
  %1062 = vmatpush.bf16.msra.mxu0 %v814
  %1063 = vmatpush.bf16.msra.mxu0 %v813
  %1064 = vmatpush.bf16.msra.mxu0 %v812
  %1065 = vmatpush.bf16.msra.mxu0 %v811
  %1066 = vmatpush.bf16.msra.mxu0 %v810
  %1067 = vmatpush.bf16.msra.mxu0 %v809
  %1068 = vmatmul.bf16.gmra.mxu0 %v404
  %v1069 = vpop.f32.mrf.mxu0
  %v1070 = vadd.f32 %v1021, %v1069
  %v1071 = vpop.f32.mrf.mxu0
  %v1072 = vadd.f32 %v1023, %v1071
  %1073 = vmatmul.bf16.gmra.mxu0 %v412
  %v1074 = vpop.f32.mrf.mxu0
  %v1075 = vadd.f32 %v1026, %v1074
  %v1076 = vpop.f32.mrf.mxu0
  %v1077 = vadd.f32 %v1028, %v1076
  %1078 = vmatmul.bf16.gmra.mxu0 %v420
  %v1079 = vpop.f32.mrf.mxu0
  %v1080 = vadd.f32 %v1031, %v1079
  %v1081 = vpop.f32.mrf.mxu0
  %v1082 = vadd.f32 %v1033, %v1081
  %1083 = vmatmul.bf16.gmra.mxu0 %v428
  %v1084 = vpop.f32.mrf.mxu0
  %v1085 = vadd.f32 %v1036, %v1084
  %v1086 = vpop.f32.mrf.mxu0
  %v1087 = vadd.f32 %v1038, %v1086
  %1088 = vmatmul.bf16.gmra.mxu0 %v436
  %v1089 = vpop.f32.mrf.mxu0
  %v1090 = vadd.f32 %v1041, %v1089
  %v1091 = vpop.f32.mrf.mxu0
  %v1092 = vadd.f32 %v1043, %v1091
  %1093 = vmatmul.bf16.gmra.mxu0 %v444
  %v1094 = vpop.f32.mrf.mxu0
  %v1095 = vadd.f32 %v1046, %v1094
  %v1096 = vpop.f32.mrf.mxu0
  %v1097 = vadd.f32 %v1048, %v1096
  %1098 = vmatmul.bf16.gmra.mxu0 %v452
  %v1099 = vpop.f32.mrf.mxu0
  %v1100 = vadd.f32 %v1051, %v1099
  %v1101 = vpop.f32.mrf.mxu0
  %v1102 = vadd.f32 %v1053, %v1101
  %1103 = vmatmul.bf16.gmra.mxu0 %v460
  %v1104 = vpop.f32.mrf.mxu0
  %v1105 = vadd.f32 %v1056, %v1104
  %v1106 = vpop.f32.mrf.mxu0
  %v1107 = vadd.f32 %v1058, %v1106
  %1108 = vdwg.mxu0
  %1109 = vmatpush.bf16.msra.mxu0 %v824
  %1110 = vmatpush.bf16.msra.mxu0 %v823
  %1111 = vmatpush.bf16.msra.mxu0 %v822
  %1112 = vmatpush.bf16.msra.mxu0 %v821
  %1113 = vmatpush.bf16.msra.mxu0 %v820
  %1114 = vmatpush.bf16.msra.mxu0 %v819
  %1115 = vmatpush.bf16.msra.mxu0 %v818
  %1116 = vmatpush.bf16.msra.mxu0 %v817
  %1117 = vmatmul.bf16.gmra.mxu0 %v405
  %v1118 = vpop.f32.mrf.mxu0
  %v1119 = vadd.f32 %v1070, %v1118
  %v1120 = vpop.f32.mrf.mxu0
  %v1121 = vadd.f32 %v1072, %v1120
  %1122 = vmatmul.bf16.gmra.mxu0 %v413
  %v1123 = vpop.f32.mrf.mxu0
  %v1124 = vadd.f32 %v1075, %v1123
  %v1125 = vpop.f32.mrf.mxu0
  %v1126 = vadd.f32 %v1077, %v1125
  %1127 = vmatmul.bf16.gmra.mxu0 %v421
  %v1128 = vpop.f32.mrf.mxu0
  %v1129 = vadd.f32 %v1080, %v1128
  %v1130 = vpop.f32.mrf.mxu0
  %v1131 = vadd.f32 %v1082, %v1130
  %1132 = vmatmul.bf16.gmra.mxu0 %v429
  %v1133 = vpop.f32.mrf.mxu0
  %v1134 = vadd.f32 %v1085, %v1133
  %v1135 = vpop.f32.mrf.mxu0
  %v1136 = vadd.f32 %v1087, %v1135
  %1137 = vmatmul.bf16.gmra.mxu0 %v437
  %v1138 = vpop.f32.mrf.mxu0
  %v1139 = vadd.f32 %v1090, %v1138
  %v1140 = vpop.f32.mrf.mxu0
  %v1141 = vadd.f32 %v1092, %v1140
  %1142 = vmatmul.bf16.gmra.mxu0 %v445
  %v1143 = vpop.f32.mrf.mxu0
  %v1144 = vadd.f32 %v1095, %v1143
  %v1145 = vpop.f32.mrf.mxu0
  %v1146 = vadd.f32 %v1097, %v1145
  %1147 = vmatmul.bf16.gmra.mxu0 %v453
  %v1148 = vpop.f32.mrf.mxu0
  %v1149 = vadd.f32 %v1100, %v1148
  %v1150 = vpop.f32.mrf.mxu0
  %v1151 = vadd.f32 %v1102, %v1150
  %1152 = vmatmul.bf16.gmra.mxu0 %v461
  %v1153 = vpop.f32.mrf.mxu0
  %v1154 = vadd.f32 %v1105, %v1153
  %v1155 = vpop.f32.mrf.mxu0
  %v1156 = vadd.f32 %v1107, %v1155
  %1157 = vdwg.mxu0
  %1158 = vmatpush.bf16.msra.mxu0 %v832
  %1159 = vmatpush.bf16.msra.mxu0 %v831
  %1160 = vmatpush.bf16.msra.mxu0 %v830
  %1161 = vmatpush.bf16.msra.mxu0 %v829
  %1162 = vmatpush.bf16.msra.mxu0 %v828
  %1163 = vmatpush.bf16.msra.mxu0 %v827
  %1164 = vmatpush.bf16.msra.mxu0 %v826
  %1165 = vmatpush.bf16.msra.mxu0 %v825
  %1166 = vmatmul.bf16.gmra.mxu0 %v406
  %v1167 = vpop.f32.mrf.mxu0
  %v1168 = vadd.f32 %v1119, %v1167
  %v1169 = vpop.f32.mrf.mxu0
  %v1170 = vadd.f32 %v1121, %v1169
  %1171 = vmatmul.bf16.gmra.mxu0 %v414
  %v1172 = vpop.f32.mrf.mxu0
  %v1173 = vadd.f32 %v1124, %v1172
  %v1174 = vpop.f32.mrf.mxu0
  %v1175 = vadd.f32 %v1126, %v1174
  %1176 = vmatmul.bf16.gmra.mxu0 %v422
  %v1177 = vpop.f32.mrf.mxu0
  %v1178 = vadd.f32 %v1129, %v1177
  %v1179 = vpop.f32.mrf.mxu0
  %v1180 = vadd.f32 %v1131, %v1179
  %1181 = vmatmul.bf16.gmra.mxu0 %v430
  %v1182 = vpop.f32.mrf.mxu0
  %v1183 = vadd.f32 %v1134, %v1182
  %v1184 = vpop.f32.mrf.mxu0
  %v1185 = vadd.f32 %v1136, %v1184
  %1186 = vmatmul.bf16.gmra.mxu0 %v438
  %v1187 = vpop.f32.mrf.mxu0
  %v1188 = vadd.f32 %v1139, %v1187
  %v1189 = vpop.f32.mrf.mxu0
  %v1190 = vadd.f32 %v1141, %v1189
  %1191 = vmatmul.bf16.gmra.mxu0 %v446
  %v1192 = vpop.f32.mrf.mxu0
  %v1193 = vadd.f32 %v1144, %v1192
  %v1194 = vpop.f32.mrf.mxu0
  %v1195 = vadd.f32 %v1146, %v1194
  %1196 = vmatmul.bf16.gmra.mxu0 %v454
  %v1197 = vpop.f32.mrf.mxu0
  %v1198 = vadd.f32 %v1149, %v1197
  %v1199 = vpop.f32.mrf.mxu0
  %v1200 = vadd.f32 %v1151, %v1199
  %1201 = vmatmul.bf16.gmra.mxu0 %v462
  %v1202 = vpop.f32.mrf.mxu0
  %v1203 = vadd.f32 %v1154, %v1202
  %v1204 = vpop.f32.mrf.mxu0
  %v1205 = vadd.f32 %v1156, %v1204
  %1206 = vdwg.mxu0
  %1207 = vmatpush.bf16.msra.mxu0 %v840
  %1208 = vmatpush.bf16.msra.mxu0 %v839
  %1209 = vmatpush.bf16.msra.mxu0 %v838
  %1210 = vmatpush.bf16.msra.mxu0 %v837
  %1211 = vmatpush.bf16.msra.mxu0 %v836
  %1212 = vmatpush.bf16.msra.mxu0 %v835
  %1213 = vmatpush.bf16.msra.mxu0 %v834
  %1214 = vmatpush.bf16.msra.mxu0 %v833
  %1215 = vmatmul.bf16.gmra.mxu0 %v407
  %v1216 = vpop.f32.mrf.mxu0
  %v1217 = vadd.f32 %v1168, %v1216
  %v1218 = vpop.f32.mrf.mxu0
  %v1219 = vadd.f32 %v1170, %v1218
  %1220 = vmatmul.bf16.gmra.mxu0 %v415
  %v1221 = vpop.f32.mrf.mxu0
  %v1222 = vadd.f32 %v1173, %v1221
  %v1223 = vpop.f32.mrf.mxu0
  %v1224 = vadd.f32 %v1175, %v1223
  %1225 = vmatmul.bf16.gmra.mxu0 %v423
  %v1226 = vpop.f32.mrf.mxu0
  %v1227 = vadd.f32 %v1178, %v1226
  %v1228 = vpop.f32.mrf.mxu0
  %v1229 = vadd.f32 %v1180, %v1228
  %1230 = vmatmul.bf16.gmra.mxu0 %v431
  %v1231 = vpop.f32.mrf.mxu0
  %v1232 = vadd.f32 %v1183, %v1231
  %v1233 = vpop.f32.mrf.mxu0
  %v1234 = vadd.f32 %v1185, %v1233
  %1235 = vmatmul.bf16.gmra.mxu0 %v439
  %v1236 = vpop.f32.mrf.mxu0
  %v1237 = vadd.f32 %v1188, %v1236
  %v1238 = vpop.f32.mrf.mxu0
  %v1239 = vadd.f32 %v1190, %v1238
  %1240 = vmatmul.bf16.gmra.mxu0 %v447
  %v1241 = vpop.f32.mrf.mxu0
  %v1242 = vadd.f32 %v1193, %v1241
  %v1243 = vpop.f32.mrf.mxu0
  %v1244 = vadd.f32 %v1195, %v1243
  %1245 = vmatmul.bf16.gmra.mxu0 %v455
  %v1246 = vpop.f32.mrf.mxu0
  %v1247 = vadd.f32 %v1198, %v1246
  %v1248 = vpop.f32.mrf.mxu0
  %v1249 = vadd.f32 %v1200, %v1248
  %1250 = vmatmul.bf16.gmra.mxu0 %v463
  %v1251 = vpop.f32.mrf.mxu0
  %v1252 = vadd.f32 %v1203, %v1251
  %v1253 = vpop.f32.mrf.mxu0
  %v1254 = vadd.f32 %v1205, %v1253
  %1255 = vdwg.mxu0
  %1256 = vmatpush.bf16.msra.mxu0 %v848
  %1257 = vmatpush.bf16.msra.mxu0 %v847
  %1258 = vmatpush.bf16.msra.mxu0 %v846
  %1259 = vmatpush.bf16.msra.mxu0 %v845
  %1260 = vmatpush.bf16.msra.mxu0 %v844
  %1261 = vmatpush.bf16.msra.mxu0 %v843
  %1262 = vmatpush.bf16.msra.mxu0 %v842
  %1263 = vmatpush.bf16.msra.mxu0 %v841
  %1264 = vmatmul.bf16.gmra.mxu0 %v408
  %v1265 = vpop.f32.mrf.mxu0
  %v1266 = vadd.f32 %v1217, %v1265
  %v1267 = vpop.f32.mrf.mxu0
  %v1268 = vadd.f32 %v1219, %v1267
  %1269 = vmatmul.bf16.gmra.mxu0 %v416
  %v1270 = vpop.f32.mrf.mxu0
  %v1271 = vadd.f32 %v1222, %v1270
  %v1272 = vpop.f32.mrf.mxu0
  %v1273 = vadd.f32 %v1224, %v1272
  %1274 = vmatmul.bf16.gmra.mxu0 %v424
  %v1275 = vpop.f32.mrf.mxu0
  %v1276 = vadd.f32 %v1227, %v1275
  %v1277 = vpop.f32.mrf.mxu0
  %v1278 = vadd.f32 %v1229, %v1277
  %1279 = vmatmul.bf16.gmra.mxu0 %v432
  %v1280 = vpop.f32.mrf.mxu0
  %v1281 = vadd.f32 %v1232, %v1280
  %v1282 = vpop.f32.mrf.mxu0
  %v1283 = vadd.f32 %v1234, %v1282
  %1284 = vmatmul.bf16.gmra.mxu0 %v440
  %v1285 = vpop.f32.mrf.mxu0
  %v1286 = vadd.f32 %v1237, %v1285
  %v1287 = vpop.f32.mrf.mxu0
  %v1288 = vadd.f32 %v1239, %v1287
  %1289 = vmatmul.bf16.gmra.mxu0 %v448
  %v1290 = vpop.f32.mrf.mxu0
  %v1291 = vadd.f32 %v1242, %v1290
  %v1292 = vpop.f32.mrf.mxu0
  %v1293 = vadd.f32 %v1244, %v1292
  %1294 = vmatmul.bf16.gmra.mxu0 %v456
  %v1295 = vpop.f32.mrf.mxu0
  %v1296 = vadd.f32 %v1247, %v1295
  %v1297 = vpop.f32.mrf.mxu0
  %v1298 = vadd.f32 %v1249, %v1297
  %1299 = vmatmul.bf16.gmra.mxu0 %v464
  %v1300 = vpop.f32.mrf.mxu0
  %v1301 = vadd.f32 %v1252, %v1300
  %v1302 = vpop.f32.mrf.mxu0
  %v1303 = vadd.f32 %v1254, %v1302
  %1304 = vdwg.mxu0
  %v1305 = vadd.f32 %v1266, %v1268
  %v1306 = vadd.f32 %v1305, %v1271
  %v1307 = vadd.f32 %v1306, %v1273
  %v1308 = vadd.f32 %v1307, %v1276
  %v1309 = vadd.f32 %v1308, %v1278
  %v1310 = vadd.f32 %v1309, %v1281
  %v1311 = vadd.f32 %v1310, %v1283
  %v1312 = vadd.f32 %v1311, %v1286
  %v1313 = vadd.f32 %v1312, %v1288
  %v1314 = vadd.f32 %v1313, %v1291
  %v1315 = vadd.f32 %v1314, %v1293
  %v1316 = vadd.f32 %v1315, %v1296
  %v1317 = vadd.f32 %v1316, %v1298
  %v1318 = vadd.f32 %v1317, %v1301
  %v1319 = vadd.f32 %v1318, %v1303
  %v1320 = vrot.slane %v1319, 4
  %v1321 = vadd.f32 %v1319, %v1320
  %v1322 = vrot.slane %v1321, 2
  %v1323 = vadd.f32 %v1321, %v1322
  %v1324 = vrot.slane %v1323, 1
  %v1325 = vadd.f32 %v1323, %v1324
  %v1326 = vmul.f32 %v1325, 0.0078125
  %v1327 = vmul.f32 %v1266, %v1266
  %v1328 = vmul.f32 %v1268, %v1268
  %v1329 = vmul.f32 %v1271, %v1271
  %v1330 = vmul.f32 %v1273, %v1273
  %v1331 = vmul.f32 %v1276, %v1276
  %v1332 = vmul.f32 %v1278, %v1278
  %v1333 = vmul.f32 %v1281, %v1281
  %v1334 = vmul.f32 %v1283, %v1283
  %v1335 = vmul.f32 %v1286, %v1286
  %v1336 = vmul.f32 %v1288, %v1288
  %v1337 = vmul.f32 %v1291, %v1291
  %v1338 = vmul.f32 %v1293, %v1293
  %v1339 = vmul.f32 %v1296, %v1296
  %v1340 = vmul.f32 %v1298, %v1298
  %v1341 = vmul.f32 %v1301, %v1301
  %v1342 = vmul.f32 %v1303, %v1303
  %v1343 = vadd.f32 %v1327, %v1328
  %v1344 = vadd.f32 %v1343, %v1329
  %v1345 = vadd.f32 %v1344, %v1330
  %v1346 = vadd.f32 %v1345, %v1331
  %v1347 = vadd.f32 %v1346, %v1332
  %v1348 = vadd.f32 %v1347, %v1333
  %v1349 = vadd.f32 %v1348, %v1334
  %v1350 = vadd.f32 %v1349, %v1335
  %v1351 = vadd.f32 %v1350, %v1336
  %v1352 = vadd.f32 %v1351, %v1337
  %v1353 = vadd.f32 %v1352, %v1338
  %v1354 = vadd.f32 %v1353, %v1339
  %v1355 = vadd.f32 %v1354, %v1340
  %v1356 = vadd.f32 %v1355, %v1341
  %v1357 = vadd.f32 %v1356, %v1342
  %v1358 = vrot.slane %v1357, 4
  %v1359 = vadd.f32 %v1357, %v1358
  %v1360 = vrot.slane %v1359, 2
  %v1361 = vadd.f32 %v1359, %v1360
  %v1362 = vrot.slane %v1361, 1
  %v1363 = vadd.f32 %v1361, %v1362
  %v1364 = vmul.f32 %v1363, 0.0078125
  %v1365 = vmul.f32 %v1326, %v1326
  %v1366 = vsub.f32 %v1364, %v1365
  %v1367 = vmax.f32 %v1366, 0.0
  %v1368 = vld [vmem:[%s2] sm:$0x1]
  %v1369 = vadd.f32 %v1367, 1e-05
  %v1370 = vrsqrt.pop %v1369
  %v1371 = vmul.f32 %v1370, %v1369
  %v1372 = vmul.f32 %v1371, %v1370
  %v1373 = vmul.f32 0.5, %v1372
  %v1374 = vsub.f32 1.5, %v1373
  %v1375 = vmul.f32 %v1370, %v1374
  %vm1376 = vweird.f32 %v1369
  %vm1377 = vweird.f32 %v1370
  %vm1378 = vmor %vm1376, %vm1377
  %v1379 = vsel %vm1378, %v1370, %v1375
  %v1380 = vmul.f32 %v1368, %v1379
  %v1381 = vld [vmem:[%s3] sm:$0x1]
  %v1382 = vmul.f32 %v1326, %v1380
  %v1383 = vsub.f32 %v1381, %v1382
  %v1385 = vperm.slane %v1380, 0
  %v1387 = vmul.f32 %v1266, %v1385
  %v1388 = vmul.f32 %v1268, %v1385
  %v1389 = vmul.f32 %v1271, %v1385
  %v1390 = vmul.f32 %v1273, %v1385
  %v1391 = vmul.f32 %v1276, %v1385
  %v1392 = vmul.f32 %v1278, %v1385
  %v1393 = vmul.f32 %v1281, %v1385
  %v1394 = vmul.f32 %v1283, %v1385
  %v1395 = vmul.f32 %v1286, %v1385
  %v1396 = vmul.f32 %v1288, %v1385
  %v1397 = vmul.f32 %v1291, %v1385
  %v1398 = vmul.f32 %v1293, %v1385
  %v1399 = vmul.f32 %v1296, %v1385
  %v1400 = vmul.f32 %v1298, %v1385
  %v1401 = vmul.f32 %v1301, %v1385
  %v1402 = vmul.f32 %v1303, %v1385
  %v1404 = vperm.slane %v1383, 0
  %v1406 = vadd.f32 %v1387, %v1404
  %v1407 = vadd.f32 %v1388, %v1404
  %v1408 = vadd.f32 %v1389, %v1404
  %v1409 = vadd.f32 %v1390, %v1404
  %v1410 = vadd.f32 %v1391, %v1404
  %v1411 = vadd.f32 %v1392, %v1404
  %v1412 = vadd.f32 %v1393, %v1404
  %v1413 = vadd.f32 %v1394, %v1404
  %v1414 = vadd.f32 %v1395, %v1404
  %v1415 = vadd.f32 %v1396, %v1404
  %v1416 = vadd.f32 %v1397, %v1404
  %v1417 = vadd.f32 %v1398, %v1404
  %v1418 = vadd.f32 %v1399, %v1404
  %v1419 = vadd.f32 %v1400, %v1404
  %v1420 = vadd.f32 %v1401, %v1404
  %v1421 = vadd.f32 %v1402, %v1404
  %vm1422 = vcmp.ge.f32.partialorder %v1406, 0.0
  %vm1423 = vcmp.ge.f32.partialorder %v1407, 0.0
  %vm1424 = vcmp.ge.f32.partialorder %v1408, 0.0
  %vm1425 = vcmp.ge.f32.partialorder %v1409, 0.0
  %vm1426 = vcmp.ge.f32.partialorder %v1410, 0.0
  %vm1427 = vcmp.ge.f32.partialorder %v1411, 0.0
  %vm1428 = vcmp.ge.f32.partialorder %v1412, 0.0
  %vm1429 = vcmp.ge.f32.partialorder %v1413, 0.0
  %vm1430 = vcmp.ge.f32.partialorder %v1414, 0.0
  %vm1431 = vcmp.ge.f32.partialorder %v1415, 0.0
  %vm1432 = vcmp.ge.f32.partialorder %v1416, 0.0
  %vm1433 = vcmp.ge.f32.partialorder %v1417, 0.0
  %vm1434 = vcmp.ge.f32.partialorder %v1418, 0.0
  %vm1435 = vcmp.ge.f32.partialorder %v1419, 0.0
  %vm1436 = vcmp.ge.f32.partialorder %v1420, 0.0
  %vm1437 = vcmp.ge.f32.partialorder %v1421, 0.0
  %v1438 = vmul.f32 %v1406, 0.2
  %v1439 = vmul.f32 %v1407, 0.2
  %v1440 = vmul.f32 %v1408, 0.2
  %v1441 = vmul.f32 %v1409, 0.2
  %v1442 = vmul.f32 %v1410, 0.2
  %v1443 = vmul.f32 %v1411, 0.2
  %v1444 = vmul.f32 %v1412, 0.2
  %v1445 = vmul.f32 %v1413, 0.2
  %v1446 = vmul.f32 %v1414, 0.2
  %v1447 = vmul.f32 %v1415, 0.2
  %v1448 = vmul.f32 %v1416, 0.2
  %v1449 = vmul.f32 %v1417, 0.2
  %v1450 = vmul.f32 %v1418, 0.2
  %v1451 = vmul.f32 %v1419, 0.2
  %v1452 = vmul.f32 %v1420, 0.2
  %v1453 = vmul.f32 %v1421, 0.2
  %v1454 = vsel %vm1422, %v1406, %v1438
  %v1455 = vsel %vm1423, %v1407, %v1439
  %v1456 = vsel %vm1424, %v1408, %v1440
  %v1457 = vsel %vm1425, %v1409, %v1441
  %v1458 = vsel %vm1426, %v1410, %v1442
  %v1459 = vsel %vm1427, %v1411, %v1443
  %v1460 = vsel %vm1428, %v1412, %v1444
  %v1461 = vsel %vm1429, %v1413, %v1445
  %v1462 = vsel %vm1430, %v1414, %v1446
  %v1463 = vsel %vm1431, %v1415, %v1447
  %v1464 = vsel %vm1432, %v1416, %v1448
  %v1465 = vsel %vm1433, %v1417, %v1449
  %v1466 = vsel %vm1434, %v1418, %v1450
  %v1467 = vsel %vm1435, %v1419, %v1451
  %v1468 = vsel %vm1436, %v1420, %v1452
  %v1469 = vsel %vm1437, %v1421, %v1453
  %v1470 = vpack.c.bf16 %v1454, %v1454
  %v1471 = vpack.c.bf16 %v1455, %v1455
  %v1472 = vpack.c.bf16 %v1456, %v1456
  %v1473 = vpack.c.bf16 %v1457, %v1457
  %v1474 = vpack.c.bf16 %v1458, %v1458
  %v1475 = vpack.c.bf16 %v1459, %v1459
  %v1476 = vpack.c.bf16 %v1460, %v1460
  %v1477 = vpack.c.bf16 %v1461, %v1461
  %v1478 = vpack.c.bf16 %v1462, %v1462
  %v1479 = vpack.c.bf16 %v1463, %v1463
  %v1480 = vpack.c.bf16 %v1464, %v1464
  %v1481 = vpack.c.bf16 %v1465, %v1465
  %v1482 = vpack.c.bf16 %v1466, %v1466
  %v1483 = vpack.c.bf16 %v1467, %v1467
  %v1484 = vpack.c.bf16 %v1468, %v1468
  %v1485 = vpack.c.bf16 %v1469, %v1469
  %1486 = vst [vmem:[%s4] sm:$0xf] %v1470
  %1487 = vst [vmem:[%s4 + $0x4] sm:$0xf] %v1471
  %1488 = vst [vmem:[%s4 + $0x8] sm:$0xf] %v1472
  %1489 = vst [vmem:[%s4 + $0xc] sm:$0xf] %v1473
  %1490 = vst [vmem:[%s4 + $0x10] sm:$0xf] %v1474
  %1491 = vst [vmem:[%s4 + $0x14] sm:$0xf] %v1475
  %1492 = vst [vmem:[%s4 + $0x18] sm:$0xf] %v1476
  %1493 = vst [vmem:[%s4 + $0x1c] sm:$0xf] %v1477
  %1494 = vst [vmem:[%s4 + $0x20] sm:$0xf] %v1478
  %1495 = vst [vmem:[%s4 + $0x24] sm:$0xf] %v1479
  %1496 = vst [vmem:[%s4 + $0x28] sm:$0xf] %v1480
  %1497 = vst [vmem:[%s4 + $0x2c] sm:$0xf] %v1481
  %1498 = vst [vmem:[%s4 + $0x30] sm:$0xf] %v1482
  %1499 = vst [vmem:[%s4 + $0x34] sm:$0xf] %v1483
  %1500 = vst [vmem:[%s4 + $0x38] sm:$0xf] %v1484
  %1501 = vst [vmem:[%s4 + $0x3c] sm:$0xf] %v1485
  // Predicated region
  $region18: #{discriminator_forward.5} parent=0 // pred_check
    _
  $region19: #{discriminator_forward.5} parent=0 // pred_check_branch
    %1503 = sbr.rel (0) target = $region21
  $region20: #{discriminator_forward.5} parent=0 // pred_region
    _
  $region21: #{discriminator_forward.5} parent=0 // pred_fallthru
    _
  // Predicated region
  $region22: #{discriminator_forward.5} parent=0 // pred_check
    _
  $region23: #{discriminator_forward.5} parent=0 // pred_check_branch
    %1505 = sbr.rel (0) target = $region25
  $region24: #{discriminator_forward.5} parent=0 // pred_region
    _
  $region25: #{discriminator_forward.5} parent=0 // pred_fallthru
    _

// kernel: discriminator_forward.6
$region0: #{discriminator_forward.6}
  #allocation0 [shape = 'u32[]', space=smem, size = 0x4, offset = 0x4, fixed_abs, tag = 'smem constant byte address 0x4 - core index']
  #allocation1 [shape = 'u32[72,128]{1,0:T(1,128)}', space=vmem, size = 0x9000, scoped, tag = 'internal scratch']
  %s0 = inlined_call_operand.vmem [shape: bf16[32,2048], index: 0, kind: input, shape index: {}]
  %s1 = inlined_call_operand.vmem [shape: bf16[2048,256], index: 1, kind: input, shape index: {}]
  %s2 = inlined_call_operand.vmem [shape: f32[1,256], index: 2, kind: input, shape index: {}]
  %s3 = inlined_call_operand.vmem [shape: f32[1,256], index: 3, kind: input, shape index: {}]
  %s4 = inlined_call_operand.vmem [shape: bf16[32,256], index: 4, kind: output, shape index: {}]
  %s5 = sld [smem:[#allocation0]]
  $region138: #{discriminator_forward.6} parent=0
    _
  %s7 = ssub.s32 1, %s5
  %s8 = scalar_select 0, %s7, %s5
  $region1: #{discriminator_forward.6} parent=0
    #allocation2 [shape = 'u8[1048576]{0}', space=vmem, size = 0x100000, scoped, tag = 'input window, operand 1']
    #allocation3 [shape = 'u8[16384]{0}', space=vmem, size = 0x4000, scoped, tag = 'output window, operand 0']
    loop: start=0, step=1, limit=4
    $region2: #{discriminator_forward.6} parent=1 // loop_pre_header
      _
    $region3: #{discriminator_forward.6} parent=1 // loop_header
      %s10 = sphi 0, %s14
      %p11 = scmp.ge.s32.totalorder %s10, 4
      %s18 = sphi 0, %s18
      %s20 = sphi 0, %s18
      %s21 = sphi 0, %s20
      %s35 = sphi 0, %s21
      %s41 = sphi 0, %s43
      %s44 = sphi 0, %s41
      %s45 = sphi 0, %s44
      %s61 = sphi 0, %s45
      %s67 = sphi 0, %s69
      %s70 = sphi 0, %s67
      %s71 = sphi 0, %s70
      %s87 = sphi 0, %s71
      %s93 = sphi 0, %s95
      %s96 = sphi 0, %s93
      %s97 = sphi 0, %s96
      %s113 = sphi 0, %s97
      %s119 = sphi 0, %s121
      %s122 = sphi 0, %s119
      %s123 = sphi 0, %s122
      %s139 = sphi 0, %s123
    $region4: #{discriminator_forward.6} parent=1 // loop_header_branch
      %13 = sbr.rel (%p11) target = $region8
    $region5: #{discriminator_forward.6} parent=1 // loop_body
      %s15 = ssub.s32 %s10, 1
      %s16 = ssub.s32 %s10, 2
      %s17 = sadd.s32 %s10, 1
      %s19 = sadd.s32 %s18, 1
      %p22 = scmp.eq.s32.totalorder %s10, 1
      %p23 = scmp.ne.s32.totalorder %s18, %s20
      %p24 = scmp.eq.s32.totalorder %s10, 0
      %p25 = por %p23, %p24
      %p26 = scmp.ne.s32.totalorder %s18, %s20
      %p27 = scmp.eq.s32.totalorder %s15, 1
      %p28 = por %p26, %p27
      %p29 = scmp.ne.s32.totalorder %s20, %s21
      %p30 = scmp.eq.s32.totalorder %s15, 0
      %p31 = por %p29, %p30
      %p32 = scmp.ne.s32.totalorder %s20, %s21
      %p33 = scmp.eq.s32.totalorder %s16, 1
      %p34 = por %p32, %p33
      %p36 = scmp.ne.s32.totalorder %s21, %s35
      %p37 = scmp.eq.s32.totalorder %s16, 0
      %p38 = por %p36, %p37
      %s39 = ssub.s32 %s10, %s17
      %p40 = scmp.eq.s32.totalorder %s39, 0
      %s42 = sadd.s32 %s41, 1
      %s43 = scalar_select %p40, %s41, %s42
      %p46 = pneg %p40
      %p47 = scmp.eq.s32.totalorder %s10, 1
      %p48 = por %p46, %p47
      %p49 = scmp.ne.s32.totalorder %s41, %s44
      %p50 = scmp.eq.s32.totalorder %s10, 0
      %p51 = por %p49, %p50
      %p52 = scmp.ne.s32.totalorder %s41, %s44
      %p53 = scmp.eq.s32.totalorder %s15, 1
      %p54 = por %p52, %p53
      %p55 = scmp.ne.s32.totalorder %s44, %s45
      %p56 = scmp.eq.s32.totalorder %s15, 0
      %p57 = por %p55, %p56
      %p58 = scmp.ne.s32.totalorder %s44, %s45
      %p59 = scmp.eq.s32.totalorder %s16, 1
      %p60 = por %p58, %p59
      %p62 = scmp.ne.s32.totalorder %s45, %s61
      %p63 = scmp.eq.s32.totalorder %s16, 0
      %p64 = por %p62, %p63
      %s65 = ssub.s32 %s10, %s17
      %p66 = scmp.eq.s32.totalorder %s65, 0
      %s68 = sadd.s32 %s67, 1
      %s69 = scalar_select %p66, %s67, %s68
      %p72 = pneg %p66
      %p73 = scmp.eq.s32.totalorder %s10, 1
      %p74 = por %p72, %p73
      %p75 = scmp.ne.s32.totalorder %s67, %s70
      %p76 = scmp.eq.s32.totalorder %s10, 0
      %p77 = por %p75, %p76
      %p78 = scmp.ne.s32.totalorder %s67, %s70
      %p79 = scmp.eq.s32.totalorder %s15, 1
      %p80 = por %p78, %p79
      %p81 = scmp.ne.s32.totalorder %s70, %s71
      %p82 = scmp.eq.s32.totalorder %s15, 0
      %p83 = por %p81, %p82
      %p84 = scmp.ne.s32.totalorder %s70, %s71
      %p85 = scmp.eq.s32.totalorder %s16, 1
      %p86 = por %p84, %p85
      %p88 = scmp.ne.s32.totalorder %s71, %s87
      %p89 = scmp.eq.s32.totalorder %s16, 0
      %p90 = por %p88, %p89
      %s91 = ssub.s32 %s10, %s17
      %p92 = scmp.eq.s32.totalorder %s91, 0
      %s94 = sadd.s32 %s93, 1
      %s95 = scalar_select %p92, %s93, %s94
      %p98 = pneg %p92
      %p99 = scmp.eq.s32.totalorder %s10, 1
      %p100 = por %p98, %p99
      %p101 = scmp.ne.s32.totalorder %s93, %s96
      %p102 = scmp.eq.s32.totalorder %s10, 0
      %p103 = por %p101, %p102
      %p104 = scmp.ne.s32.totalorder %s93, %s96
      %p105 = scmp.eq.s32.totalorder %s15, 1
      %p106 = por %p104, %p105
      %p107 = scmp.ne.s32.totalorder %s96, %s97
      %p108 = scmp.eq.s32.totalorder %s15, 0
      %p109 = por %p107, %p108
      %p110 = scmp.ne.s32.totalorder %s96, %s97
      %p111 = scmp.eq.s32.totalorder %s16, 1
      %p112 = por %p110, %p111
      %p114 = scmp.ne.s32.totalorder %s97, %s113
      %p115 = scmp.eq.s32.totalorder %s16, 0
      %p116 = por %p114, %p115
      %s117 = ssub.s32 %s10, %s17
      %p118 = scmp.eq.s32.totalorder %s117, 0
      %s120 = sadd.s32 %s119, 1
      %s121 = scalar_select %p118, %s119, %s120
      %p124 = pneg %p118
      %p125 = scmp.eq.s32.totalorder %s10, 1
      %p126 = por %p124, %p125
      %p127 = scmp.ne.s32.totalorder %s119, %s122
      %p128 = scmp.eq.s32.totalorder %s10, 0
      %p129 = por %p127, %p128
      %p130 = scmp.ne.s32.totalorder %s119, %s122
      %p131 = scmp.eq.s32.totalorder %s15, 1
      %p132 = por %p130, %p131
      %p133 = scmp.ne.s32.totalorder %s122, %s123
      %p134 = scmp.eq.s32.totalorder %s15, 0
      %p135 = por %p133, %p134
      %p136 = scmp.ne.s32.totalorder %s122, %s123
      %p137 = scmp.eq.s32.totalorder %s16, 1
      %p138 = por %p136, %p137
      %p140 = scmp.ne.s32.totalorder %s123, %s139
      %p141 = scmp.eq.s32.totalorder %s16, 0
      %p142 = por %p140, %p141
      %p143 = scmp.le.s32.totalorder 1, %s10
      %p144 = scmp.lt.s32.totalorder %s10, 3
      %p145 = pnand %p143, %p144
      %p146 = pneg %p145
      // Predicated region
      $region9: #{discriminator_forward.6} parent=5 // pred_check
        _
      $region10: #{discriminator_forward.6} parent=5 // pred_check_branch
        %148 = sbr.rel (%p145) target = $region12
      $region11: #{discriminator_forward.6} parent=5 // pred_region
        %s149 = ssub.s32 %s10, 1
        // Predicated region
        $region13: #{discriminator_forward.6} parent=11 // pred_check
          %p150 = pneg %p31
        $region14: #{discriminator_forward.6} parent=11 // pred_check_branch
          %152 = sbr.rel (%p150) target = $region16
        $region15: #{discriminator_forward.6} parent=11 // pred_region
          _
        $region16: #{discriminator_forward.6} parent=11 // pred_fallthru
          _
      $region12: #{discriminator_forward.6} parent=5 // pred_fallthru
        _
      %p153 = scmp.lt.s32.totalorder %s10, 2
      // Predicated region
      $region17: #{discriminator_forward.6} parent=5 // pred_check
        %p154 = pneg %p153
      $region18: #{discriminator_forward.6} parent=5 // pred_check_branch
        %156 = sbr.rel (%p154) target = $region20
      $region19: #{discriminator_forward.6} parent=5 // pred_region
        // Predicated region
        $region21: #{discriminator_forward.6} parent=19 // pred_check
          %p157 = pneg %p51
        $region22: #{discriminator_forward.6} parent=19 // pred_check_branch
          %159 = sbr.rel (%p157) target = $region24
        $region23: #{discriminator_forward.6} parent=19 // pred_region
          %s160 = sand.u32 %s41, 1
          %s161 = sand.u32 %s41, 1
          %s162 = smul.addr %s161, 1024
          %s163 = scalar_lea.vmem [#allocation2], %s162
          %s164 = smul.addr %s10, 4
          %s165 = scalar_lea.vmem %s1, %s164
          // Predicated region
          $region25: #{discriminator_forward.6} parent=23 // pred_check
            _
          $region26: #{discriminator_forward.6} parent=23 // pred_check_branch
            %167 = sbr.rel (0) target = $region28
          $region27: #{discriminator_forward.6} parent=23 // pred_region
            // Predicated region
            $region29: #{discriminator_forward.6} parent=27 // pred_check
              _
            $region30: #{discriminator_forward.6} parent=27 // pred_check_branch
              %169 = sbr.rel target = $region32
            $region31: #{discriminator_forward.6} parent=27 // pred_region
              // Predicated region
              $region44: #{discriminator_forward.6} parent=31 // pred_check
                _
              $region45: #{discriminator_forward.6} parent=31 // pred_check_branch
                %695 = sbr.rel target = $region47
              $region46: #{discriminator_forward.6} parent=31 // pred_region
                loop: start=0, step=1, limit=0
                $region48: #{discriminator_forward.6} parent=46 // loop_pre_header
                  _
                $region49: #{discriminator_forward.6} parent=46 // loop_header
                  %s697 = sphi 0, %s701
                  %p698 = scmp.ge.s32.totalorder %s697, 0
                  %s702 = sphi 0, %s1219
                  %s703 = sphi %s165, %s1222
                  %s704 = sphi %s163, %s1223
                $region50: #{discriminator_forward.6} parent=46 // loop_header_branch
                  %700 = sbr.rel (%p698) target = $region54
                $region51: #{discriminator_forward.6} parent=46 // loop_body
                  %v705 = vld [vmem:[%s703] sm:$0xff]
                  %706 = vst [vmem:[%s704] sm:$0xff] %v705
                  %v707 = vld [vmem:[%s703 + $0x8] sm:$0xff]
                  %708 = vst [vmem:[%s704 + $0x4] sm:$0xff] %v707
                  %v709 = vld [vmem:[%s703 + $0x10] sm:$0xff]
                  %710 = vst [vmem:[%s704 + $0x8] sm:$0xff] %v709
                  %v711 = vld [vmem:[%s703 + $0x18] sm:$0xff]
                  %712 = vst [vmem:[%s704 + $0xc] sm:$0xff] %v711
                  %v713 = vld [vmem:[%s703 + $0x20] sm:$0xff]
                  %714 = vst [vmem:[%s704 + $0x10] sm:$0xff] %v713
                  %v715 = vld [vmem:[%s703 + $0x28] sm:$0xff]
                  %716 = vst [vmem:[%s704 + $0x14] sm:$0xff] %v715
                  %v717 = vld [vmem:[%s703 + $0x30] sm:$0xff]
                  %718 = vst [vmem:[%s704 + $0x18] sm:$0xff] %v717
                  %v719 = vld [vmem:[%s703 + $0x38] sm:$0xff]
                  %720 = vst [vmem:[%s704 + $0x1c] sm:$0xff] %v719
                  %v721 = vld [vmem:[%s703 + $0x40] sm:$0xff]
                  %722 = vst [vmem:[%s704 + $0x20] sm:$0xff] %v721
                  %v723 = vld [vmem:[%s703 + $0x48] sm:$0xff]
                  %724 = vst [vmem:[%s704 + $0x24] sm:$0xff] %v723
                  %v725 = vld [vmem:[%s703 + $0x50] sm:$0xff]
                  %726 = vst [vmem:[%s704 + $0x28] sm:$0xff] %v725
                  %v727 = vld [vmem:[%s703 + $0x58] sm:$0xff]
                  %728 = vst [vmem:[%s704 + $0x2c] sm:$0xff] %v727
                  %v729 = vld [vmem:[%s703 + $0x60] sm:$0xff]
                  %730 = vst [vmem:[%s704 + $0x30] sm:$0xff] %v729
                  %v731 = vld [vmem:[%s703 + $0x68] sm:$0xff]
                  %732 = vst [vmem:[%s704 + $0x34] sm:$0xff] %v731
                  %v733 = vld [vmem:[%s703 + $0x70] sm:$0xff]
                  %734 = vst [vmem:[%s704 + $0x38] sm:$0xff] %v733
                  %v735 = vld [vmem:[%s703 + $0x78] sm:$0xff]
                  %736 = vst [vmem:[%s704 + $0x3c] sm:$0xff] %v735
                  %v737 = vld [vmem:[%s703 + $0x80] sm:$0xff]
                  %738 = vst [vmem:[%s704 + $0x40] sm:$0xff] %v737
                  %v739 = vld [vmem:[%s703 + $0x88] sm:$0xff]
                  %740 = vst [vmem:[%s704 + $0x44] sm:$0xff] %v739
                  %v741 = vld [vmem:[%s703 + $0x90] sm:$0xff]
                  %742 = vst [vmem:[%s704 + $0x48] sm:$0xff] %v741
                  %v743 = vld [vmem:[%s703 + $0x98] sm:$0xff]
                  %744 = vst [vmem:[%s704 + $0x4c] sm:$0xff] %v743
                  %v745 = vld [vmem:[%s703 + $0xa0] sm:$0xff]
                  %746 = vst [vmem:[%s704 + $0x50] sm:$0xff] %v745
                  %v747 = vld [vmem:[%s703 + $0xa8] sm:$0xff]
                  %748 = vst [vmem:[%s704 + $0x54] sm:$0xff] %v747
                  %v749 = vld [vmem:[%s703 + $0xb0] sm:$0xff]
                  %750 = vst [vmem:[%s704 + $0x58] sm:$0xff] %v749
                  %v751 = vld [vmem:[%s703 + $0xb8] sm:$0xff]
                  %752 = vst [vmem:[%s704 + $0x5c] sm:$0xff] %v751
                  %v753 = vld [vmem:[%s703 + $0xc0] sm:$0xff]
                  %754 = vst [vmem:[%s704 + $0x60] sm:$0xff] %v753
                  %v755 = vld [vmem:[%s703 + $0xc8] sm:$0xff]
                  %756 = vst [vmem:[%s704 + $0x64] sm:$0xff] %v755
                  %v757 = vld [vmem:[%s703 + $0xd0] sm:$0xff]
                  %758 = vst [vmem:[%s704 + $0x68] sm:$0xff] %v757
                  %v759 = vld [vmem:[%s703 + $0xd8] sm:$0xff]
                  %760 = vst [vmem:[%s704 + $0x6c] sm:$0xff] %v759
                  %v761 = vld [vmem:[%s703 + $0xe0] sm:$0xff]
                  %762 = vst [vmem:[%s704 + $0x70] sm:$0xff] %v761
                  %v763 = vld [vmem:[%s703 + $0xe8] sm:$0xff]
                  %764 = vst [vmem:[%s704 + $0x74] sm:$0xff] %v763
                  %v765 = vld [vmem:[%s703 + $0xf0] sm:$0xff]
                  %766 = vst [vmem:[%s704 + $0x78] sm:$0xff] %v765
                  %v767 = vld [vmem:[%s703 + $0xf8] sm:$0xff]
                  %768 = vst [vmem:[%s704 + $0x7c] sm:$0xff] %v767
                  %v769 = vld [vmem:[%s703 + $0x100] sm:$0xff]
                  %770 = vst [vmem:[%s704 + $0x80] sm:$0xff] %v769
                  %v771 = vld [vmem:[%s703 + $0x108] sm:$0xff]
                  %772 = vst [vmem:[%s704 + $0x84] sm:$0xff] %v771
                  %v773 = vld [vmem:[%s703 + $0x110] sm:$0xff]
                  %774 = vst [vmem:[%s704 + $0x88] sm:$0xff] %v773
                  %v775 = vld [vmem:[%s703 + $0x118] sm:$0xff]
                  %776 = vst [vmem:[%s704 + $0x8c] sm:$0xff] %v775
                  %v777 = vld [vmem:[%s703 + $0x120] sm:$0xff]
                  %778 = vst [vmem:[%s704 + $0x90] sm:$0xff] %v777
                  %v779 = vld [vmem:[%s703 + $0x128] sm:$0xff]
                  %780 = vst [vmem:[%s704 + $0x94] sm:$0xff] %v779
                  %v781 = vld [vmem:[%s703 + $0x130] sm:$0xff]
                  %782 = vst [vmem:[%s704 + $0x98] sm:$0xff] %v781
                  %v783 = vld [vmem:[%s703 + $0x138] sm:$0xff]
                  %784 = vst [vmem:[%s704 + $0x9c] sm:$0xff] %v783
                  %v785 = vld [vmem:[%s703 + $0x140] sm:$0xff]
                  %786 = vst [vmem:[%s704 + $0xa0] sm:$0xff] %v785
                  %v787 = vld [vmem:[%s703 + $0x148] sm:$0xff]
                  %788 = vst [vmem:[%s704 + $0xa4] sm:$0xff] %v787
                  %v789 = vld [vmem:[%s703 + $0x150] sm:$0xff]
                  %790 = vst [vmem:[%s704 + $0xa8] sm:$0xff] %v789
                  %v791 = vld [vmem:[%s703 + $0x158] sm:$0xff]
                  %792 = vst [vmem:[%s704 + $0xac] sm:$0xff] %v791
                  %v793 = vld [vmem:[%s703 + $0x160] sm:$0xff]
                  %794 = vst [vmem:[%s704 + $0xb0] sm:$0xff] %v793
                  %v795 = vld [vmem:[%s703 + $0x168] sm:$0xff]
                  %796 = vst [vmem:[%s704 + $0xb4] sm:$0xff] %v795
                  %v797 = vld [vmem:[%s703 + $0x170] sm:$0xff]
                  %798 = vst [vmem:[%s704 + $0xb8] sm:$0xff] %v797
                  %v799 = vld [vmem:[%s703 + $0x178] sm:$0xff]
                  %800 = vst [vmem:[%s704 + $0xbc] sm:$0xff] %v799
                  %v801 = vld [vmem:[%s703 + $0x180] sm:$0xff]
                  %802 = vst [vmem:[%s704 + $0xc0] sm:$0xff] %v801
                  %v803 = vld [vmem:[%s703 + $0x188] sm:$0xff]
                  %804 = vst [vmem:[%s704 + $0xc4] sm:$0xff] %v803
                  %v805 = vld [vmem:[%s703 + $0x190] sm:$0xff]
                  %806 = vst [vmem:[%s704 + $0xc8] sm:$0xff] %v805
                  %v807 = vld [vmem:[%s703 + $0x198] sm:$0xff]
                  %808 = vst [vmem:[%s704 + $0xcc] sm:$0xff] %v807
                  %v809 = vld [vmem:[%s703 + $0x1a0] sm:$0xff]
                  %810 = vst [vmem:[%s704 + $0xd0] sm:$0xff] %v809
                  %v811 = vld [vmem:[%s703 + $0x1a8] sm:$0xff]
                  %812 = vst [vmem:[%s704 + $0xd4] sm:$0xff] %v811
                  %v813 = vld [vmem:[%s703 + $0x1b0] sm:$0xff]
                  %814 = vst [vmem:[%s704 + $0xd8] sm:$0xff] %v813
                  %v815 = vld [vmem:[%s703 + $0x1b8] sm:$0xff]
                  %816 = vst [vmem:[%s704 + $0xdc] sm:$0xff] %v815
                  %v817 = vld [vmem:[%s703 + $0x1c0] sm:$0xff]
                  %818 = vst [vmem:[%s704 + $0xe0] sm:$0xff] %v817
                  %v819 = vld [vmem:[%s703 + $0x1c8] sm:$0xff]
                  %820 = vst [vmem:[%s704 + $0xe4] sm:$0xff] %v819
                  %v821 = vld [vmem:[%s703 + $0x1d0] sm:$0xff]
                  %822 = vst [vmem:[%s704 + $0xe8] sm:$0xff] %v821
                  %v823 = vld [vmem:[%s703 + $0x1d8] sm:$0xff]
                  %824 = vst [vmem:[%s704 + $0xec] sm:$0xff] %v823
                  %v825 = vld [vmem:[%s703 + $0x1e0] sm:$0xff]
                  %826 = vst [vmem:[%s704 + $0xf0] sm:$0xff] %v825
                  %v827 = vld [vmem:[%s703 + $0x1e8] sm:$0xff]
                  %828 = vst [vmem:[%s704 + $0xf4] sm:$0xff] %v827
                  %v829 = vld [vmem:[%s703 + $0x1f0] sm:$0xff]
                  %830 = vst [vmem:[%s704 + $0xf8] sm:$0xff] %v829
                  %v831 = vld [vmem:[%s703 + $0x1f8] sm:$0xff]
                  %832 = vst [vmem:[%s704 + $0xfc] sm:$0xff] %v831
                  %v833 = vld [vmem:[%s703 + $0x200] sm:$0xff]
                  %834 = vst [vmem:[%s704 + $0x100] sm:$0xff] %v833
                  %v835 = vld [vmem:[%s703 + $0x208] sm:$0xff]
                  %836 = vst [vmem:[%s704 + $0x104] sm:$0xff] %v835
                  %v837 = vld [vmem:[%s703 + $0x210] sm:$0xff]
                  %838 = vst [vmem:[%s704 + $0x108] sm:$0xff] %v837
                  %v839 = vld [vmem:[%s703 + $0x218] sm:$0xff]
                  %840 = vst [vmem:[%s704 + $0x10c] sm:$0xff] %v839
                  %v841 = vld [vmem:[%s703 + $0x220] sm:$0xff]
                  %842 = vst [vmem:[%s704 + $0x110] sm:$0xff] %v841
                  %v843 = vld [vmem:[%s703 + $0x228] sm:$0xff]
                  %844 = vst [vmem:[%s704 + $0x114] sm:$0xff] %v843
                  %v845 = vld [vmem:[%s703 + $0x230] sm:$0xff]
                  %846 = vst [vmem:[%s704 + $0x118] sm:$0xff] %v845
                  %v847 = vld [vmem:[%s703 + $0x238] sm:$0xff]
                  %848 = vst [vmem:[%s704 + $0x11c] sm:$0xff] %v847
                  %v849 = vld [vmem:[%s703 + $0x240] sm:$0xff]
                  %850 = vst [vmem:[%s704 + $0x120] sm:$0xff] %v849
                  %v851 = vld [vmem:[%s703 + $0x248] sm:$0xff]
                  %852 = vst [vmem:[%s704 + $0x124] sm:$0xff] %v851
                  %v853 = vld [vmem:[%s703 + $0x250] sm:$0xff]
                  %854 = vst [vmem:[%s704 + $0x128] sm:$0xff] %v853
                  %v855 = vld [vmem:[%s703 + $0x258] sm:$0xff]
                  %856 = vst [vmem:[%s704 + $0x12c] sm:$0xff] %v855
                  %v857 = vld [vmem:[%s703 + $0x260] sm:$0xff]
                  %858 = vst [vmem:[%s704 + $0x130] sm:$0xff] %v857
                  %v859 = vld [vmem:[%s703 + $0x268] sm:$0xff]
                  %860 = vst [vmem:[%s704 + $0x134] sm:$0xff] %v859
                  %v861 = vld [vmem:[%s703 + $0x270] sm:$0xff]
                  %862 = vst [vmem:[%s704 + $0x138] sm:$0xff] %v861
                  %v863 = vld [vmem:[%s703 + $0x278] sm:$0xff]
                  %864 = vst [vmem:[%s704 + $0x13c] sm:$0xff] %v863
                  %v865 = vld [vmem:[%s703 + $0x280] sm:$0xff]
                  %866 = vst [vmem:[%s704 + $0x140] sm:$0xff] %v865
                  %v867 = vld [vmem:[%s703 + $0x288] sm:$0xff]
                  %868 = vst [vmem:[%s704 + $0x144] sm:$0xff] %v867
                  %v869 = vld [vmem:[%s703 + $0x290] sm:$0xff]
                  %870 = vst [vmem:[%s704 + $0x148] sm:$0xff] %v869
                  %v871 = vld [vmem:[%s703 + $0x298] sm:$0xff]
                  %872 = vst [vmem:[%s704 + $0x14c] sm:$0xff] %v871
                  %v873 = vld [vmem:[%s703 + $0x2a0] sm:$0xff]
                  %874 = vst [vmem:[%s704 + $0x150] sm:$0xff] %v873
                  %v875 = vld [vmem:[%s703 + $0x2a8] sm:$0xff]
                  %876 = vst [vmem:[%s704 + $0x154] sm:$0xff] %v875
                  %v877 = vld [vmem:[%s703 + $0x2b0] sm:$0xff]
                  %878 = vst [vmem:[%s704 + $0x158] sm:$0xff] %v877
                  %v879 = vld [vmem:[%s703 + $0x2b8] sm:$0xff]
                  %880 = vst [vmem:[%s704 + $0x15c] sm:$0xff] %v879
                  %v881 = vld [vmem:[%s703 + $0x2c0] sm:$0xff]
                  %882 = vst [vmem:[%s704 + $0x160] sm:$0xff] %v881
                  %v883 = vld [vmem:[%s703 + $0x2c8] sm:$0xff]
                  %884 = vst [vmem:[%s704 + $0x164] sm:$0xff] %v883
                  %v885 = vld [vmem:[%s703 + $0x2d0] sm:$0xff]
                  %886 = vst [vmem:[%s704 + $0x168] sm:$0xff] %v885
                  %v887 = vld [vmem:[%s703 + $0x2d8] sm:$0xff]
                  %888 = vst [vmem:[%s704 + $0x16c] sm:$0xff] %v887
                  %v889 = vld [vmem:[%s703 + $0x2e0] sm:$0xff]
                  %890 = vst [vmem:[%s704 + $0x170] sm:$0xff] %v889
                  %v891 = vld [vmem:[%s703 + $0x2e8] sm:$0xff]
                  %892 = vst [vmem:[%s704 + $0x174] sm:$0xff] %v891
                  %v893 = vld [vmem:[%s703 + $0x2f0] sm:$0xff]
                  %894 = vst [vmem:[%s704 + $0x178] sm:$0xff] %v893
                  %v895 = vld [vmem:[%s703 + $0x2f8] sm:$0xff]
                  %896 = vst [vmem:[%s704 + $0x17c] sm:$0xff] %v895
                  %v897 = vld [vmem:[%s703 + $0x300] sm:$0xff]
                  %898 = vst [vmem:[%s704 + $0x180] sm:$0xff] %v897
                  %v899 = vld [vmem:[%s703 + $0x308] sm:$0xff]
                  %900 = vst [vmem:[%s704 + $0x184] sm:$0xff] %v899
                  %v901 = vld [vmem:[%s703 + $0x310] sm:$0xff]
                  %902 = vst [vmem:[%s704 + $0x188] sm:$0xff] %v901
                  %v903 = vld [vmem:[%s703 + $0x318] sm:$0xff]
                  %904 = vst [vmem:[%s704 + $0x18c] sm:$0xff] %v903
                  %v905 = vld [vmem:[%s703 + $0x320] sm:$0xff]
                  %906 = vst [vmem:[%s704 + $0x190] sm:$0xff] %v905
                  %v907 = vld [vmem:[%s703 + $0x328] sm:$0xff]
                  %908 = vst [vmem:[%s704 + $0x194] sm:$0xff] %v907
                  %v909 = vld [vmem:[%s703 + $0x330] sm:$0xff]
                  %910 = vst [vmem:[%s704 + $0x198] sm:$0xff] %v909
                  %v911 = vld [vmem:[%s703 + $0x338] sm:$0xff]
                  %912 = vst [vmem:[%s704 + $0x19c] sm:$0xff] %v911
                  %v913 = vld [vmem:[%s703 + $0x340] sm:$0xff]
                  %914 = vst [vmem:[%s704 + $0x1a0] sm:$0xff] %v913
                  %v915 = vld [vmem:[%s703 + $0x348] sm:$0xff]
                  %916 = vst [vmem:[%s704 + $0x1a4] sm:$0xff] %v915
                  %v917 = vld [vmem:[%s703 + $0x350] sm:$0xff]
                  %918 = vst [vmem:[%s704 + $0x1a8] sm:$0xff] %v917
                  %v919 = vld [vmem:[%s703 + $0x358] sm:$0xff]
                  %920 = vst [vmem:[%s704 + $0x1ac] sm:$0xff] %v919
                  %v921 = vld [vmem:[%s703 + $0x360] sm:$0xff]
                  %922 = vst [vmem:[%s704 + $0x1b0] sm:$0xff] %v921
                  %v923 = vld [vmem:[%s703 + $0x368] sm:$0xff]
                  %924 = vst [vmem:[%s704 + $0x1b4] sm:$0xff] %v923
                  %v925 = vld [vmem:[%s703 + $0x370] sm:$0xff]
                  %926 = vst [vmem:[%s704 + $0x1b8] sm:$0xff] %v925
                  %v927 = vld [vmem:[%s703 + $0x378] sm:$0xff]
                  %928 = vst [vmem:[%s704 + $0x1bc] sm:$0xff] %v927
                  %v929 = vld [vmem:[%s703 + $0x380] sm:$0xff]
                  %930 = vst [vmem:[%s704 + $0x1c0] sm:$0xff] %v929
                  %v931 = vld [vmem:[%s703 + $0x388] sm:$0xff]
                  %932 = vst [vmem:[%s704 + $0x1c4] sm:$0xff] %v931
                  %v933 = vld [vmem:[%s703 + $0x390] sm:$0xff]
                  %934 = vst [vmem:[%s704 + $0x1c8] sm:$0xff] %v933
                  %v935 = vld [vmem:[%s703 + $0x398] sm:$0xff]
                  %936 = vst [vmem:[%s704 + $0x1cc] sm:$0xff] %v935
                  %v937 = vld [vmem:[%s703 + $0x3a0] sm:$0xff]
                  %938 = vst [vmem:[%s704 + $0x1d0] sm:$0xff] %v937
                  %v939 = vld [vmem:[%s703 + $0x3a8] sm:$0xff]
                  %940 = vst [vmem:[%s704 + $0x1d4] sm:$0xff] %v939
                  %v941 = vld [vmem:[%s703 + $0x3b0] sm:$0xff]
                  %942 = vst [vmem:[%s704 + $0x1d8] sm:$0xff] %v941
                  %v943 = vld [vmem:[%s703 + $0x3b8] sm:$0xff]
                  %944 = vst [vmem:[%s704 + $0x1dc] sm:$0xff] %v943
                  %v945 = vld [vmem:[%s703 + $0x3c0] sm:$0xff]
                  %946 = vst [vmem:[%s704 + $0x1e0] sm:$0xff] %v945
                  %v947 = vld [vmem:[%s703 + $0x3c8] sm:$0xff]
                  %948 = vst [vmem:[%s704 + $0x1e4] sm:$0xff] %v947
                  %v949 = vld [vmem:[%s703 + $0x3d0] sm:$0xff]
                  %950 = vst [vmem:[%s704 + $0x1e8] sm:$0xff] %v949
                  %v951 = vld [vmem:[%s703 + $0x3d8] sm:$0xff]
                  %952 = vst [vmem:[%s704 + $0x1ec] sm:$0xff] %v951
                  %v953 = vld [vmem:[%s703 + $0x3e0] sm:$0xff]
                  %954 = vst [vmem:[%s704 + $0x1f0] sm:$0xff] %v953
                  %v955 = vld [vmem:[%s703 + $0x3e8] sm:$0xff]
                  %956 = vst [vmem:[%s704 + $0x1f4] sm:$0xff] %v955
                  %v957 = vld [vmem:[%s703 + $0x3f0] sm:$0xff]
                  %958 = vst [vmem:[%s704 + $0x1f8] sm:$0xff] %v957
                  %v959 = vld [vmem:[%s703 + $0x3f8] sm:$0xff]
                  %960 = vst [vmem:[%s704 + $0x1fc] sm:$0xff] %v959
                  %v961 = vld [vmem:[%s703 + $0x400] sm:$0xff]
                  %962 = vst [vmem:[%s704 + $0x200] sm:$0xff] %v961
                  %v963 = vld [vmem:[%s703 + $0x408] sm:$0xff]
                  %964 = vst [vmem:[%s704 + $0x204] sm:$0xff] %v963
                  %v965 = vld [vmem:[%s703 + $0x410] sm:$0xff]
                  %966 = vst [vmem:[%s704 + $0x208] sm:$0xff] %v965
                  %v967 = vld [vmem:[%s703 + $0x418] sm:$0xff]
                  %968 = vst [vmem:[%s704 + $0x20c] sm:$0xff] %v967
                  %v969 = vld [vmem:[%s703 + $0x420] sm:$0xff]
                  %970 = vst [vmem:[%s704 + $0x210] sm:$0xff] %v969
                  %v971 = vld [vmem:[%s703 + $0x428] sm:$0xff]
                  %972 = vst [vmem:[%s704 + $0x214] sm:$0xff] %v971
                  %v973 = vld [vmem:[%s703 + $0x430] sm:$0xff]
                  %974 = vst [vmem:[%s704 + $0x218] sm:$0xff] %v973
                  %v975 = vld [vmem:[%s703 + $0x438] sm:$0xff]
                  %976 = vst [vmem:[%s704 + $0x21c] sm:$0xff] %v975
                  %v977 = vld [vmem:[%s703 + $0x440] sm:$0xff]
                  %978 = vst [vmem:[%s704 + $0x220] sm:$0xff] %v977
                  %v979 = vld [vmem:[%s703 + $0x448] sm:$0xff]
                  %980 = vst [vmem:[%s704 + $0x224] sm:$0xff] %v979
                  %v981 = vld [vmem:[%s703 + $0x450] sm:$0xff]
                  %982 = vst [vmem:[%s704 + $0x228] sm:$0xff] %v981
                  %v983 = vld [vmem:[%s703 + $0x458] sm:$0xff]
                  %984 = vst [vmem:[%s704 + $0x22c] sm:$0xff] %v983
                  %v985 = vld [vmem:[%s703 + $0x460] sm:$0xff]
                  %986 = vst [vmem:[%s704 + $0x230] sm:$0xff] %v985
                  %v987 = vld [vmem:[%s703 + $0x468] sm:$0xff]
                  %988 = vst [vmem:[%s704 + $0x234] sm:$0xff] %v987
                  %v989 = vld [vmem:[%s703 + $0x470] sm:$0xff]
                  %990 = vst [vmem:[%s704 + $0x238] sm:$0xff] %v989
                  %v991 = vld [vmem:[%s703 + $0x478] sm:$0xff]
                  %992 = vst [vmem:[%s704 + $0x23c] sm:$0xff] %v991
                  %v993 = vld [vmem:[%s703 + $0x480] sm:$0xff]
                  %994 = vst [vmem:[%s704 + $0x240] sm:$0xff] %v993
                  %v995 = vld [vmem:[%s703 + $0x488] sm:$0xff]
                  %996 = vst [vmem:[%s704 + $0x244] sm:$0xff] %v995
                  %v997 = vld [vmem:[%s703 + $0x490] sm:$0xff]
                  %998 = vst [vmem:[%s704 + $0x248] sm:$0xff] %v997
                  %v999 = vld [vmem:[%s703 + $0x498] sm:$0xff]
                  %1000 = vst [vmem:[%s704 + $0x24c] sm:$0xff] %v999
                  %v1001 = vld [vmem:[%s703 + $0x4a0] sm:$0xff]
                  %1002 = vst [vmem:[%s704 + $0x250] sm:$0xff] %v1001
                  %v1003 = vld [vmem:[%s703 + $0x4a8] sm:$0xff]
                  %1004 = vst [vmem:[%s704 + $0x254] sm:$0xff] %v1003
                  %v1005 = vld [vmem:[%s703 + $0x4b0] sm:$0xff]
                  %1006 = vst [vmem:[%s704 + $0x258] sm:$0xff] %v1005
                  %v1007 = vld [vmem:[%s703 + $0x4b8] sm:$0xff]
                  %1008 = vst [vmem:[%s704 + $0x25c] sm:$0xff] %v1007
                  %v1009 = vld [vmem:[%s703 + $0x4c0] sm:$0xff]
                  %1010 = vst [vmem:[%s704 + $0x260] sm:$0xff] %v1009
                  %v1011 = vld [vmem:[%s703 + $0x4c8] sm:$0xff]
                  %1012 = vst [vmem:[%s704 + $0x264] sm:$0xff] %v1011
                  %v1013 = vld [vmem:[%s703 + $0x4d0] sm:$0xff]
                  %1014 = vst [vmem:[%s704 + $0x268] sm:$0xff] %v1013
                  %v1015 = vld [vmem:[%s703 + $0x4d8] sm:$0xff]
                  %1016 = vst [vmem:[%s704 + $0x26c] sm:$0xff] %v1015
                  %v1017 = vld [vmem:[%s703 + $0x4e0] sm:$0xff]
                  %1018 = vst [vmem:[%s704 + $0x270] sm:$0xff] %v1017
                  %v1019 = vld [vmem:[%s703 + $0x4e8] sm:$0xff]
                  %1020 = vst [vmem:[%s704 + $0x274] sm:$0xff] %v1019
                  %v1021 = vld [vmem:[%s703 + $0x4f0] sm:$0xff]
                  %1022 = vst [vmem:[%s704 + $0x278] sm:$0xff] %v1021
                  %v1023 = vld [vmem:[%s703 + $0x4f8] sm:$0xff]
                  %1024 = vst [vmem:[%s704 + $0x27c] sm:$0xff] %v1023
                  %v1025 = vld [vmem:[%s703 + $0x500] sm:$0xff]
                  %1026 = vst [vmem:[%s704 + $0x280] sm:$0xff] %v1025
                  %v1027 = vld [vmem:[%s703 + $0x508] sm:$0xff]
                  %1028 = vst [vmem:[%s704 + $0x284] sm:$0xff] %v1027
                  %v1029 = vld [vmem:[%s703 + $0x510] sm:$0xff]
                  %1030 = vst [vmem:[%s704 + $0x288] sm:$0xff] %v1029
                  %v1031 = vld [vmem:[%s703 + $0x518] sm:$0xff]
                  %1032 = vst [vmem:[%s704 + $0x28c] sm:$0xff] %v1031
                  %v1033 = vld [vmem:[%s703 + $0x520] sm:$0xff]
                  %1034 = vst [vmem:[%s704 + $0x290] sm:$0xff] %v1033
                  %v1035 = vld [vmem:[%s703 + $0x528] sm:$0xff]
                  %1036 = vst [vmem:[%s704 + $0x294] sm:$0xff] %v1035
                  %v1037 = vld [vmem:[%s703 + $0x530] sm:$0xff]
                  %1038 = vst [vmem:[%s704 + $0x298] sm:$0xff] %v1037
                  %v1039 = vld [vmem:[%s703 + $0x538] sm:$0xff]
                  %1040 = vst [vmem:[%s704 + $0x29c] sm:$0xff] %v1039
                  %v1041 = vld [vmem:[%s703 + $0x540] sm:$0xff]
                  %1042 = vst [vmem:[%s704 + $0x2a0] sm:$0xff] %v1041
                  %v1043 = vld [vmem:[%s703 + $0x548] sm:$0xff]
                  %1044 = vst [vmem:[%s704 + $0x2a4] sm:$0xff] %v1043
                  %v1045 = vld [vmem:[%s703 + $0x550] sm:$0xff]
                  %1046 = vst [vmem:[%s704 + $0x2a8] sm:$0xff] %v1045
                  %v1047 = vld [vmem:[%s703 + $0x558] sm:$0xff]
                  %1048 = vst [vmem:[%s704 + $0x2ac] sm:$0xff] %v1047
                  %v1049 = vld [vmem:[%s703 + $0x560] sm:$0xff]
                  %1050 = vst [vmem:[%s704 + $0x2b0] sm:$0xff] %v1049
                  %v1051 = vld [vmem:[%s703 + $0x568] sm:$0xff]
                  %1052 = vst [vmem:[%s704 + $0x2b4] sm:$0xff] %v1051
                  %v1053 = vld [vmem:[%s703 + $0x570] sm:$0xff]
                  %1054 = vst [vmem:[%s704 + $0x2b8] sm:$0xff] %v1053
                  %v1055 = vld [vmem:[%s703 + $0x578] sm:$0xff]
                  %1056 = vst [vmem:[%s704 + $0x2bc] sm:$0xff] %v1055
                  %v1057 = vld [vmem:[%s703 + $0x580] sm:$0xff]
                  %1058 = vst [vmem:[%s704 + $0x2c0] sm:$0xff] %v1057
                  %v1059 = vld [vmem:[%s703 + $0x588] sm:$0xff]
                  %1060 = vst [vmem:[%s704 + $0x2c4] sm:$0xff] %v1059
                  %v1061 = vld [vmem:[%s703 + $0x590] sm:$0xff]
                  %1062 = vst [vmem:[%s704 + $0x2c8] sm:$0xff] %v1061
                  %v1063 = vld [vmem:[%s703 + $0x598] sm:$0xff]
                  %1064 = vst [vmem:[%s704 + $0x2cc] sm:$0xff] %v1063
                  %v1065 = vld [vmem:[%s703 + $0x5a0] sm:$0xff]
                  %1066 = vst [vmem:[%s704 + $0x2d0] sm:$0xff] %v1065
                  %v1067 = vld [vmem:[%s703 + $0x5a8] sm:$0xff]
                  %1068 = vst [vmem:[%s704 + $0x2d4] sm:$0xff] %v1067
                  %v1069 = vld [vmem:[%s703 + $0x5b0] sm:$0xff]
                  %1070 = vst [vmem:[%s704 + $0x2d8] sm:$0xff] %v1069
                  %v1071 = vld [vmem:[%s703 + $0x5b8] sm:$0xff]
                  %1072 = vst [vmem:[%s704 + $0x2dc] sm:$0xff] %v1071
                  %v1073 = vld [vmem:[%s703 + $0x5c0] sm:$0xff]
                  %1074 = vst [vmem:[%s704 + $0x2e0] sm:$0xff] %v1073
                  %v1075 = vld [vmem:[%s703 + $0x5c8] sm:$0xff]
                  %1076 = vst [vmem:[%s704 + $0x2e4] sm:$0xff] %v1075
                  %v1077 = vld [vmem:[%s703 + $0x5d0] sm:$0xff]
                  %1078 = vst [vmem:[%s704 + $0x2e8] sm:$0xff] %v1077
                  %v1079 = vld [vmem:[%s703 + $0x5d8] sm:$0xff]
                  %1080 = vst [vmem:[%s704 + $0x2ec] sm:$0xff] %v1079
                  %v1081 = vld [vmem:[%s703 + $0x5e0] sm:$0xff]
                  %1082 = vst [vmem:[%s704 + $0x2f0] sm:$0xff] %v1081
                  %v1083 = vld [vmem:[%s703 + $0x5e8] sm:$0xff]
                  %1084 = vst [vmem:[%s704 + $0x2f4] sm:$0xff] %v1083
                  %v1085 = vld [vmem:[%s703 + $0x5f0] sm:$0xff]
                  %1086 = vst [vmem:[%s704 + $0x2f8] sm:$0xff] %v1085
                  %v1087 = vld [vmem:[%s703 + $0x5f8] sm:$0xff]
                  %1088 = vst [vmem:[%s704 + $0x2fc] sm:$0xff] %v1087
                  %v1089 = vld [vmem:[%s703 + $0x600] sm:$0xff]
                  %1090 = vst [vmem:[%s704 + $0x300] sm:$0xff] %v1089
                  %v1091 = vld [vmem:[%s703 + $0x608] sm:$0xff]
                  %1092 = vst [vmem:[%s704 + $0x304] sm:$0xff] %v1091
                  %v1093 = vld [vmem:[%s703 + $0x610] sm:$0xff]
                  %1094 = vst [vmem:[%s704 + $0x308] sm:$0xff] %v1093
                  %v1095 = vld [vmem:[%s703 + $0x618] sm:$0xff]
                  %1096 = vst [vmem:[%s704 + $0x30c] sm:$0xff] %v1095
                  %v1097 = vld [vmem:[%s703 + $0x620] sm:$0xff]
                  %1098 = vst [vmem:[%s704 + $0x310] sm:$0xff] %v1097
                  %v1099 = vld [vmem:[%s703 + $0x628] sm:$0xff]
                  %1100 = vst [vmem:[%s704 + $0x314] sm:$0xff] %v1099
                  %v1101 = vld [vmem:[%s703 + $0x630] sm:$0xff]
                  %1102 = vst [vmem:[%s704 + $0x318] sm:$0xff] %v1101
                  %v1103 = vld [vmem:[%s703 + $0x638] sm:$0xff]
                  %1104 = vst [vmem:[%s704 + $0x31c] sm:$0xff] %v1103
                  %v1105 = vld [vmem:[%s703 + $0x640] sm:$0xff]
                  %1106 = vst [vmem:[%s704 + $0x320] sm:$0xff] %v1105
                  %v1107 = vld [vmem:[%s703 + $0x648] sm:$0xff]
                  %1108 = vst [vmem:[%s704 + $0x324] sm:$0xff] %v1107
                  %v1109 = vld [vmem:[%s703 + $0x650] sm:$0xff]
                  %1110 = vst [vmem:[%s704 + $0x328] sm:$0xff] %v1109
                  %v1111 = vld [vmem:[%s703 + $0x658] sm:$0xff]
                  %1112 = vst [vmem:[%s704 + $0x32c] sm:$0xff] %v1111
                  %v1113 = vld [vmem:[%s703 + $0x660] sm:$0xff]
                  %1114 = vst [vmem:[%s704 + $0x330] sm:$0xff] %v1113
                  %v1115 = vld [vmem:[%s703 + $0x668] sm:$0xff]
                  %1116 = vst [vmem:[%s704 + $0x334] sm:$0xff] %v1115
                  %v1117 = vld [vmem:[%s703 + $0x670] sm:$0xff]
                  %1118 = vst [vmem:[%s704 + $0x338] sm:$0xff] %v1117
                  %v1119 = vld [vmem:[%s703 + $0x678] sm:$0xff]
                  %1120 = vst [vmem:[%s704 + $0x33c] sm:$0xff] %v1119
                  %v1121 = vld [vmem:[%s703 + $0x680] sm:$0xff]
                  %1122 = vst [vmem:[%s704 + $0x340] sm:$0xff] %v1121
                  %v1123 = vld [vmem:[%s703 + $0x688] sm:$0xff]
                  %1124 = vst [vmem:[%s704 + $0x344] sm:$0xff] %v1123
                  %v1125 = vld [vmem:[%s703 + $0x690] sm:$0xff]
                  %1126 = vst [vmem:[%s704 + $0x348] sm:$0xff] %v1125
                  %v1127 = vld [vmem:[%s703 + $0x698] sm:$0xff]
                  %1128 = vst [vmem:[%s704 + $0x34c] sm:$0xff] %v1127
                  %v1129 = vld [vmem:[%s703 + $0x6a0] sm:$0xff]
                  %1130 = vst [vmem:[%s704 + $0x350] sm:$0xff] %v1129
                  %v1131 = vld [vmem:[%s703 + $0x6a8] sm:$0xff]
                  %1132 = vst [vmem:[%s704 + $0x354] sm:$0xff] %v1131
                  %v1133 = vld [vmem:[%s703 + $0x6b0] sm:$0xff]
                  %1134 = vst [vmem:[%s704 + $0x358] sm:$0xff] %v1133
                  %v1135 = vld [vmem:[%s703 + $0x6b8] sm:$0xff]
                  %1136 = vst [vmem:[%s704 + $0x35c] sm:$0xff] %v1135
                  %v1137 = vld [vmem:[%s703 + $0x6c0] sm:$0xff]
                  %1138 = vst [vmem:[%s704 + $0x360] sm:$0xff] %v1137
                  %v1139 = vld [vmem:[%s703 + $0x6c8] sm:$0xff]
                  %1140 = vst [vmem:[%s704 + $0x364] sm:$0xff] %v1139
                  %v1141 = vld [vmem:[%s703 + $0x6d0] sm:$0xff]
                  %1142 = vst [vmem:[%s704 + $0x368] sm:$0xff] %v1141
                  %v1143 = vld [vmem:[%s703 + $0x6d8] sm:$0xff]
                  %1144 = vst [vmem:[%s704 + $0x36c] sm:$0xff] %v1143
                  %v1145 = vld [vmem:[%s703 + $0x6e0] sm:$0xff]
                  %1146 = vst [vmem:[%s704 + $0x370] sm:$0xff] %v1145
                  %v1147 = vld [vmem:[%s703 + $0x6e8] sm:$0xff]
                  %1148 = vst [vmem:[%s704 + $0x374] sm:$0xff] %v1147
                  %v1149 = vld [vmem:[%s703 + $0x6f0] sm:$0xff]
                  %1150 = vst [vmem:[%s704 + $0x378] sm:$0xff] %v1149
                  %v1151 = vld [vmem:[%s703 + $0x6f8] sm:$0xff]
                  %1152 = vst [vmem:[%s704 + $0x37c] sm:$0xff] %v1151
                  %v1153 = vld [vmem:[%s703 + $0x700] sm:$0xff]
                  %1154 = vst [vmem:[%s704 + $0x380] sm:$0xff] %v1153
                  %v1155 = vld [vmem:[%s703 + $0x708] sm:$0xff]
                  %1156 = vst [vmem:[%s704 + $0x384] sm:$0xff] %v1155
                  %v1157 = vld [vmem:[%s703 + $0x710] sm:$0xff]
                  %1158 = vst [vmem:[%s704 + $0x388] sm:$0xff] %v1157
                  %v1159 = vld [vmem:[%s703 + $0x718] sm:$0xff]
                  %1160 = vst [vmem:[%s704 + $0x38c] sm:$0xff] %v1159
                  %v1161 = vld [vmem:[%s703 + $0x720] sm:$0xff]
                  %1162 = vst [vmem:[%s704 + $0x390] sm:$0xff] %v1161
                  %v1163 = vld [vmem:[%s703 + $0x728] sm:$0xff]
                  %1164 = vst [vmem:[%s704 + $0x394] sm:$0xff] %v1163
                  %v1165 = vld [vmem:[%s703 + $0x730] sm:$0xff]
                  %1166 = vst [vmem:[%s704 + $0x398] sm:$0xff] %v1165
                  %v1167 = vld [vmem:[%s703 + $0x738] sm:$0xff]
                  %1168 = vst [vmem:[%s704 + $0x39c] sm:$0xff] %v1167
                  %v1169 = vld [vmem:[%s703 + $0x740] sm:$0xff]
                  %1170 = vst [vmem:[%s704 + $0x3a0] sm:$0xff] %v1169
                  %v1171 = vld [vmem:[%s703 + $0x748] sm:$0xff]
                  %1172 = vst [vmem:[%s704 + $0x3a4] sm:$0xff] %v1171
                  %v1173 = vld [vmem:[%s703 + $0x750] sm:$0xff]
                  %1174 = vst [vmem:[%s704 + $0x3a8] sm:$0xff] %v1173
                  %v1175 = vld [vmem:[%s703 + $0x758] sm:$0xff]
                  %1176 = vst [vmem:[%s704 + $0x3ac] sm:$0xff] %v1175
                  %v1177 = vld [vmem:[%s703 + $0x760] sm:$0xff]
                  %1178 = vst [vmem:[%s704 + $0x3b0] sm:$0xff] %v1177
                  %v1179 = vld [vmem:[%s703 + $0x768] sm:$0xff]
                  %1180 = vst [vmem:[%s704 + $0x3b4] sm:$0xff] %v1179
                  %v1181 = vld [vmem:[%s703 + $0x770] sm:$0xff]
                  %1182 = vst [vmem:[%s704 + $0x3b8] sm:$0xff] %v1181
                  %v1183 = vld [vmem:[%s703 + $0x778] sm:$0xff]
                  %1184 = vst [vmem:[%s704 + $0x3bc] sm:$0xff] %v1183
                  %v1185 = vld [vmem:[%s703 + $0x780] sm:$0xff]
                  %1186 = vst [vmem:[%s704 + $0x3c0] sm:$0xff] %v1185
                  %v1187 = vld [vmem:[%s703 + $0x788] sm:$0xff]
                  %1188 = vst [vmem:[%s704 + $0x3c4] sm:$0xff] %v1187
                  %v1189 = vld [vmem:[%s703 + $0x790] sm:$0xff]
                  %1190 = vst [vmem:[%s704 + $0x3c8] sm:$0xff] %v1189
                  %v1191 = vld [vmem:[%s703 + $0x798] sm:$0xff]
                  %1192 = vst [vmem:[%s704 + $0x3cc] sm:$0xff] %v1191
                  %v1193 = vld [vmem:[%s703 + $0x7a0] sm:$0xff]
                  %1194 = vst [vmem:[%s704 + $0x3d0] sm:$0xff] %v1193
                  %v1195 = vld [vmem:[%s703 + $0x7a8] sm:$0xff]
                  %1196 = vst [vmem:[%s704 + $0x3d4] sm:$0xff] %v1195
                  %v1197 = vld [vmem:[%s703 + $0x7b0] sm:$0xff]
                  %1198 = vst [vmem:[%s704 + $0x3d8] sm:$0xff] %v1197
                  %v1199 = vld [vmem:[%s703 + $0x7b8] sm:$0xff]
                  %1200 = vst [vmem:[%s704 + $0x3dc] sm:$0xff] %v1199
                  %v1201 = vld [vmem:[%s703 + $0x7c0] sm:$0xff]
                  %1202 = vst [vmem:[%s704 + $0x3e0] sm:$0xff] %v1201
                  %v1203 = vld [vmem:[%s703 + $0x7c8] sm:$0xff]
                  %1204 = vst [vmem:[%s704 + $0x3e4] sm:$0xff] %v1203
                  %v1205 = vld [vmem:[%s703 + $0x7d0] sm:$0xff]
                  %1206 = vst [vmem:[%s704 + $0x3e8] sm:$0xff] %v1205
                  %v1207 = vld [vmem:[%s703 + $0x7d8] sm:$0xff]
                  %1208 = vst [vmem:[%s704 + $0x3ec] sm:$0xff] %v1207
                  %v1209 = vld [vmem:[%s703 + $0x7e0] sm:$0xff]
                  %1210 = vst [vmem:[%s704 + $0x3f0] sm:$0xff] %v1209
                  %v1211 = vld [vmem:[%s703 + $0x7e8] sm:$0xff]
                  %1212 = vst [vmem:[%s704 + $0x3f4] sm:$0xff] %v1211
                  %v1213 = vld [vmem:[%s703 + $0x7f0] sm:$0xff]
                  %1214 = vst [vmem:[%s704 + $0x3f8] sm:$0xff] %v1213
                  %v1215 = vld [vmem:[%s703 + $0x7f8] sm:$0xff]
                  %1216 = vst [vmem:[%s704 + $0x3fc] sm:$0xff] %v1215
                  %s1217 = sadd.s32 1, %s702
                  %p1218 = scmp.ge.s32.totalorder %s1217, 0
                  %s1219 = scalar_select %p1218, 0, %s1217
                  %s1220 = smul.u32 %s1219, 8
                  %s1221 = smul.u32 %s1219, 8
                  %s1222 = scalar_lea.vmem %s165, %s1220
                  %s1223 = scalar_lea.vmem %s163, %s1221 [#allocation2]
                $region52: #{discriminator_forward.6} parent=46 // loop_footer
                  %s701 = sadd.s32 1, %s697
                $region53: #{discriminator_forward.6} parent=46 // loop_footer_branch
                  %696 = sbr.rel target = $region49
                $region54: #{discriminator_forward.6} parent=46 // loop_exit
                  _
              $region47: #{discriminator_forward.6} parent=31 // pred_fallthru
                _
              // Predicated region
              $region55: #{discriminator_forward.6} parent=31 // pred_check
                _
              $region56: #{discriminator_forward.6} parent=31 // pred_check_branch
                %1225 = sbr.rel (0) target = $region58
              $region57: #{discriminator_forward.6} parent=31 // pred_region
                loop: start=0, step=1, limit=0
                $region59: #{discriminator_forward.6} parent=57 // loop_pre_header
                  _
                $region60: #{discriminator_forward.6} parent=57 // loop_header
                  %s1227 = sphi 0, %s1231
                  %p1228 = scmp.ge.s32.totalorder %s1227, 0
                  %s1232 = sphi 0, %s1749
                  %s1233 = sphi %s165, %s1752
                  %s1234 = sphi %s163, %s1753
                $region61: #{discriminator_forward.6} parent=57 // loop_header_branch
                  %1230 = sbr.rel (%p1228) target = $region65
                $region62: #{discriminator_forward.6} parent=57 // loop_body
                  %v1235 = vld [vmem:[%s1233] sm:$0xff]
                  %1236 = vst [vmem:[%s1234] sm:$0xff] %v1235
                  %v1237 = vld [vmem:[%s1233 + $0x8] sm:$0xff]
                  %1238 = vst [vmem:[%s1234 + $0x4] sm:$0xff] %v1237
                  %v1239 = vld [vmem:[%s1233 + $0x10] sm:$0xff]
                  %1240 = vst [vmem:[%s1234 + $0x8] sm:$0xff] %v1239
                  %v1241 = vld [vmem:[%s1233 + $0x18] sm:$0xff]
                  %1242 = vst [vmem:[%s1234 + $0xc] sm:$0xff] %v1241
                  %v1243 = vld [vmem:[%s1233 + $0x20] sm:$0xff]
                  %1244 = vst [vmem:[%s1234 + $0x10] sm:$0xff] %v1243
                  %v1245 = vld [vmem:[%s1233 + $0x28] sm:$0xff]
                  %1246 = vst [vmem:[%s1234 + $0x14] sm:$0xff] %v1245
                  %v1247 = vld [vmem:[%s1233 + $0x30] sm:$0xff]
                  %1248 = vst [vmem:[%s1234 + $0x18] sm:$0xff] %v1247
                  %v1249 = vld [vmem:[%s1233 + $0x38] sm:$0xff]
                  %1250 = vst [vmem:[%s1234 + $0x1c] sm:$0xff] %v1249
                  %v1251 = vld [vmem:[%s1233 + $0x40] sm:$0xff]
                  %1252 = vst [vmem:[%s1234 + $0x20] sm:$0xff] %v1251
                  %v1253 = vld [vmem:[%s1233 + $0x48] sm:$0xff]
                  %1254 = vst [vmem:[%s1234 + $0x24] sm:$0xff] %v1253
                  %v1255 = vld [vmem:[%s1233 + $0x50] sm:$0xff]
                  %1256 = vst [vmem:[%s1234 + $0x28] sm:$0xff] %v1255
                  %v1257 = vld [vmem:[%s1233 + $0x58] sm:$0xff]
                  %1258 = vst [vmem:[%s1234 + $0x2c] sm:$0xff] %v1257
                  %v1259 = vld [vmem:[%s1233 + $0x60] sm:$0xff]
                  %1260 = vst [vmem:[%s1234 + $0x30] sm:$0xff] %v1259
                  %v1261 = vld [vmem:[%s1233 + $0x68] sm:$0xff]
                  %1262 = vst [vmem:[%s1234 + $0x34] sm:$0xff] %v1261
                  %v1263 = vld [vmem:[%s1233 + $0x70] sm:$0xff]
                  %1264 = vst [vmem:[%s1234 + $0x38] sm:$0xff] %v1263
                  %v1265 = vld [vmem:[%s1233 + $0x78] sm:$0xff]
                  %1266 = vst [vmem:[%s1234 + $0x3c] sm:$0xff] %v1265
                  %v1267 = vld [vmem:[%s1233 + $0x80] sm:$0xff]
                  %1268 = vst [vmem:[%s1234 + $0x40] sm:$0xff] %v1267
                  %v1269 = vld [vmem:[%s1233 + $0x88] sm:$0xff]
                  %1270 = vst [vmem:[%s1234 + $0x44] sm:$0xff] %v1269
                  %v1271 = vld [vmem:[%s1233 + $0x90] sm:$0xff]
                  %1272 = vst [vmem:[%s1234 + $0x48] sm:$0xff] %v1271
                  %v1273 = vld [vmem:[%s1233 + $0x98] sm:$0xff]
                  %1274 = vst [vmem:[%s1234 + $0x4c] sm:$0xff] %v1273
                  %v1275 = vld [vmem:[%s1233 + $0xa0] sm:$0xff]
                  %1276 = vst [vmem:[%s1234 + $0x50] sm:$0xff] %v1275
                  %v1277 = vld [vmem:[%s1233 + $0xa8] sm:$0xff]
                  %1278 = vst [vmem:[%s1234 + $0x54] sm:$0xff] %v1277
                  %v1279 = vld [vmem:[%s1233 + $0xb0] sm:$0xff]
                  %1280 = vst [vmem:[%s1234 + $0x58] sm:$0xff] %v1279
                  %v1281 = vld [vmem:[%s1233 + $0xb8] sm:$0xff]
                  %1282 = vst [vmem:[%s1234 + $0x5c] sm:$0xff] %v1281
                  %v1283 = vld [vmem:[%s1233 + $0xc0] sm:$0xff]
                  %1284 = vst [vmem:[%s1234 + $0x60] sm:$0xff] %v1283
                  %v1285 = vld [vmem:[%s1233 + $0xc8] sm:$0xff]
                  %1286 = vst [vmem:[%s1234 + $0x64] sm:$0xff] %v1285
                  %v1287 = vld [vmem:[%s1233 + $0xd0] sm:$0xff]
                  %1288 = vst [vmem:[%s1234 + $0x68] sm:$0xff] %v1287
                  %v1289 = vld [vmem:[%s1233 + $0xd8] sm:$0xff]
                  %1290 = vst [vmem:[%s1234 + $0x6c] sm:$0xff] %v1289
                  %v1291 = vld [vmem:[%s1233 + $0xe0] sm:$0xff]
                  %1292 = vst [vmem:[%s1234 + $0x70] sm:$0xff] %v1291
                  %v1293 = vld [vmem:[%s1233 + $0xe8] sm:$0xff]
                  %1294 = vst [vmem:[%s1234 + $0x74] sm:$0xff] %v1293
                  %v1295 = vld [vmem:[%s1233 + $0xf0] sm:$0xff]
                  %1296 = vst [vmem:[%s1234 + $0x78] sm:$0xff] %v1295
                  %v1297 = vld [vmem:[%s1233 + $0xf8] sm:$0xff]
                  %1298 = vst [vmem:[%s1234 + $0x7c] sm:$0xff] %v1297
                  %v1299 = vld [vmem:[%s1233 + $0x100] sm:$0xff]
                  %1300 = vst [vmem:[%s1234 + $0x80] sm:$0xff] %v1299
                  %v1301 = vld [vmem:[%s1233 + $0x108] sm:$0xff]
                  %1302 = vst [vmem:[%s1234 + $0x84] sm:$0xff] %v1301
                  %v1303 = vld [vmem:[%s1233 + $0x110] sm:$0xff]
                  %1304 = vst [vmem:[%s1234 + $0x88] sm:$0xff] %v1303
                  %v1305 = vld [vmem:[%s1233 + $0x118] sm:$0xff]
                  %1306 = vst [vmem:[%s1234 + $0x8c] sm:$0xff] %v1305
                  %v1307 = vld [vmem:[%s1233 + $0x120] sm:$0xff]
                  %1308 = vst [vmem:[%s1234 + $0x90] sm:$0xff] %v1307
                  %v1309 = vld [vmem:[%s1233 + $0x128] sm:$0xff]
                  %1310 = vst [vmem:[%s1234 + $0x94] sm:$0xff] %v1309
                  %v1311 = vld [vmem:[%s1233 + $0x130] sm:$0xff]
                  %1312 = vst [vmem:[%s1234 + $0x98] sm:$0xff] %v1311
                  %v1313 = vld [vmem:[%s1233 + $0x138] sm:$0xff]
                  %1314 = vst [vmem:[%s1234 + $0x9c] sm:$0xff] %v1313
                  %v1315 = vld [vmem:[%s1233 + $0x140] sm:$0xff]
                  %1316 = vst [vmem:[%s1234 + $0xa0] sm:$0xff] %v1315
                  %v1317 = vld [vmem:[%s1233 + $0x148] sm:$0xff]
                  %1318 = vst [vmem:[%s1234 + $0xa4] sm:$0xff] %v1317
                  %v1319 = vld [vmem:[%s1233 + $0x150] sm:$0xff]
                  %1320 = vst [vmem:[%s1234 + $0xa8] sm:$0xff] %v1319
                  %v1321 = vld [vmem:[%s1233 + $0x158] sm:$0xff]
                  %1322 = vst [vmem:[%s1234 + $0xac] sm:$0xff] %v1321
                  %v1323 = vld [vmem:[%s1233 + $0x160] sm:$0xff]
                  %1324 = vst [vmem:[%s1234 + $0xb0] sm:$0xff] %v1323
                  %v1325 = vld [vmem:[%s1233 + $0x168] sm:$0xff]
                  %1326 = vst [vmem:[%s1234 + $0xb4] sm:$0xff] %v1325
                  %v1327 = vld [vmem:[%s1233 + $0x170] sm:$0xff]
                  %1328 = vst [vmem:[%s1234 + $0xb8] sm:$0xff] %v1327
                  %v1329 = vld [vmem:[%s1233 + $0x178] sm:$0xff]
                  %1330 = vst [vmem:[%s1234 + $0xbc] sm:$0xff] %v1329
                  %v1331 = vld [vmem:[%s1233 + $0x180] sm:$0xff]
                  %1332 = vst [vmem:[%s1234 + $0xc0] sm:$0xff] %v1331
                  %v1333 = vld [vmem:[%s1233 + $0x188] sm:$0xff]
                  %1334 = vst [vmem:[%s1234 + $0xc4] sm:$0xff] %v1333
                  %v1335 = vld [vmem:[%s1233 + $0x190] sm:$0xff]
                  %1336 = vst [vmem:[%s1234 + $0xc8] sm:$0xff] %v1335
                  %v1337 = vld [vmem:[%s1233 + $0x198] sm:$0xff]
                  %1338 = vst [vmem:[%s1234 + $0xcc] sm:$0xff] %v1337
                  %v1339 = vld [vmem:[%s1233 + $0x1a0] sm:$0xff]
                  %1340 = vst [vmem:[%s1234 + $0xd0] sm:$0xff] %v1339
                  %v1341 = vld [vmem:[%s1233 + $0x1a8] sm:$0xff]
                  %1342 = vst [vmem:[%s1234 + $0xd4] sm:$0xff] %v1341
                  %v1343 = vld [vmem:[%s1233 + $0x1b0] sm:$0xff]
                  %1344 = vst [vmem:[%s1234 + $0xd8] sm:$0xff] %v1343
                  %v1345 = vld [vmem:[%s1233 + $0x1b8] sm:$0xff]
                  %1346 = vst [vmem:[%s1234 + $0xdc] sm:$0xff] %v1345
                  %v1347 = vld [vmem:[%s1233 + $0x1c0] sm:$0xff]
                  %1348 = vst [vmem:[%s1234 + $0xe0] sm:$0xff] %v1347
                  %v1349 = vld [vmem:[%s1233 + $0x1c8] sm:$0xff]
                  %1350 = vst [vmem:[%s1234 + $0xe4] sm:$0xff] %v1349
                  %v1351 = vld [vmem:[%s1233 + $0x1d0] sm:$0xff]
                  %1352 = vst [vmem:[%s1234 + $0xe8] sm:$0xff] %v1351
                  %v1353 = vld [vmem:[%s1233 + $0x1d8] sm:$0xff]
                  %1354 = vst [vmem:[%s1234 + $0xec] sm:$0xff] %v1353
                  %v1355 = vld [vmem:[%s1233 + $0x1e0] sm:$0xff]
                  %1356 = vst [vmem:[%s1234 + $0xf0] sm:$0xff] %v1355
                  %v1357 = vld [vmem:[%s1233 + $0x1e8] sm:$0xff]
                  %1358 = vst [vmem:[%s1234 + $0xf4] sm:$0xff] %v1357
                  %v1359 = vld [vmem:[%s1233 + $0x1f0] sm:$0xff]
                  %1360 = vst [vmem:[%s1234 + $0xf8] sm:$0xff] %v1359
                  %v1361 = vld [vmem:[%s1233 + $0x1f8] sm:$0xff]
                  %1362 = vst [vmem:[%s1234 + $0xfc] sm:$0xff] %v1361
                  %v1363 = vld [vmem:[%s1233 + $0x200] sm:$0xff]
                  %1364 = vst [vmem:[%s1234 + $0x100] sm:$0xff] %v1363
                  %v1365 = vld [vmem:[%s1233 + $0x208] sm:$0xff]
                  %1366 = vst [vmem:[%s1234 + $0x104] sm:$0xff] %v1365
                  %v1367 = vld [vmem:[%s1233 + $0x210] sm:$0xff]
                  %1368 = vst [vmem:[%s1234 + $0x108] sm:$0xff] %v1367
                  %v1369 = vld [vmem:[%s1233 + $0x218] sm:$0xff]
                  %1370 = vst [vmem:[%s1234 + $0x10c] sm:$0xff] %v1369
                  %v1371 = vld [vmem:[%s1233 + $0x220] sm:$0xff]
                  %1372 = vst [vmem:[%s1234 + $0x110] sm:$0xff] %v1371
                  %v1373 = vld [vmem:[%s1233 + $0x228] sm:$0xff]
                  %1374 = vst [vmem:[%s1234 + $0x114] sm:$0xff] %v1373
                  %v1375 = vld [vmem:[%s1233 + $0x230] sm:$0xff]
                  %1376 = vst [vmem:[%s1234 + $0x118] sm:$0xff] %v1375
                  %v1377 = vld [vmem:[%s1233 + $0x238] sm:$0xff]
                  %1378 = vst [vmem:[%s1234 + $0x11c] sm:$0xff] %v1377
                  %v1379 = vld [vmem:[%s1233 + $0x240] sm:$0xff]
                  %1380 = vst [vmem:[%s1234 + $0x120] sm:$0xff] %v1379
                  %v1381 = vld [vmem:[%s1233 + $0x248] sm:$0xff]
                  %1382 = vst [vmem:[%s1234 + $0x124] sm:$0xff] %v1381
                  %v1383 = vld [vmem:[%s1233 + $0x250] sm:$0xff]
                  %1384 = vst [vmem:[%s1234 + $0x128] sm:$0xff] %v1383
                  %v1385 = vld [vmem:[%s1233 + $0x258] sm:$0xff]
                  %1386 = vst [vmem:[%s1234 + $0x12c] sm:$0xff] %v1385
                  %v1387 = vld [vmem:[%s1233 + $0x260] sm:$0xff]
                  %1388 = vst [vmem:[%s1234 + $0x130] sm:$0xff] %v1387
                  %v1389 = vld [vmem:[%s1233 + $0x268] sm:$0xff]
                  %1390 = vst [vmem:[%s1234 + $0x134] sm:$0xff] %v1389
                  %v1391 = vld [vmem:[%s1233 + $0x270] sm:$0xff]
                  %1392 = vst [vmem:[%s1234 + $0x138] sm:$0xff] %v1391
                  %v1393 = vld [vmem:[%s1233 + $0x278] sm:$0xff]
                  %1394 = vst [vmem:[%s1234 + $0x13c] sm:$0xff] %v1393
                  %v1395 = vld [vmem:[%s1233 + $0x280] sm:$0xff]
                  %1396 = vst [vmem:[%s1234 + $0x140] sm:$0xff] %v1395
                  %v1397 = vld [vmem:[%s1233 + $0x288] sm:$0xff]
                  %1398 = vst [vmem:[%s1234 + $0x144] sm:$0xff] %v1397
                  %v1399 = vld [vmem:[%s1233 + $0x290] sm:$0xff]
                  %1400 = vst [vmem:[%s1234 + $0x148] sm:$0xff] %v1399
                  %v1401 = vld [vmem:[%s1233 + $0x298] sm:$0xff]
                  %1402 = vst [vmem:[%s1234 + $0x14c] sm:$0xff] %v1401
                  %v1403 = vld [vmem:[%s1233 + $0x2a0] sm:$0xff]
                  %1404 = vst [vmem:[%s1234 + $0x150] sm:$0xff] %v1403
                  %v1405 = vld [vmem:[%s1233 + $0x2a8] sm:$0xff]
                  %1406 = vst [vmem:[%s1234 + $0x154] sm:$0xff] %v1405
                  %v1407 = vld [vmem:[%s1233 + $0x2b0] sm:$0xff]
                  %1408 = vst [vmem:[%s1234 + $0x158] sm:$0xff] %v1407
                  %v1409 = vld [vmem:[%s1233 + $0x2b8] sm:$0xff]
                  %1410 = vst [vmem:[%s1234 + $0x15c] sm:$0xff] %v1409
                  %v1411 = vld [vmem:[%s1233 + $0x2c0] sm:$0xff]
                  %1412 = vst [vmem:[%s1234 + $0x160] sm:$0xff] %v1411
                  %v1413 = vld [vmem:[%s1233 + $0x2c8] sm:$0xff]
                  %1414 = vst [vmem:[%s1234 + $0x164] sm:$0xff] %v1413
                  %v1415 = vld [vmem:[%s1233 + $0x2d0] sm:$0xff]
                  %1416 = vst [vmem:[%s1234 + $0x168] sm:$0xff] %v1415
                  %v1417 = vld [vmem:[%s1233 + $0x2d8] sm:$0xff]
                  %1418 = vst [vmem:[%s1234 + $0x16c] sm:$0xff] %v1417
                  %v1419 = vld [vmem:[%s1233 + $0x2e0] sm:$0xff]
                  %1420 = vst [vmem:[%s1234 + $0x170] sm:$0xff] %v1419
                  %v1421 = vld [vmem:[%s1233 + $0x2e8] sm:$0xff]
                  %1422 = vst [vmem:[%s1234 + $0x174] sm:$0xff] %v1421
                  %v1423 = vld [vmem:[%s1233 + $0x2f0] sm:$0xff]
                  %1424 = vst [vmem:[%s1234 + $0x178] sm:$0xff] %v1423
                  %v1425 = vld [vmem:[%s1233 + $0x2f8] sm:$0xff]
                  %1426 = vst [vmem:[%s1234 + $0x17c] sm:$0xff] %v1425
                  %v1427 = vld [vmem:[%s1233 + $0x300] sm:$0xff]
                  %1428 = vst [vmem:[%s1234 + $0x180] sm:$0xff] %v1427
                  %v1429 = vld [vmem:[%s1233 + $0x308] sm:$0xff]
                  %1430 = vst [vmem:[%s1234 + $0x184] sm:$0xff] %v1429
                  %v1431 = vld [vmem:[%s1233 + $0x310] sm:$0xff]
                  %1432 = vst [vmem:[%s1234 + $0x188] sm:$0xff] %v1431
                  %v1433 = vld [vmem:[%s1233 + $0x318] sm:$0xff]
                  %1434 = vst [vmem:[%s1234 + $0x18c] sm:$0xff] %v1433
                  %v1435 = vld [vmem:[%s1233 + $0x320] sm:$0xff]
                  %1436 = vst [vmem:[%s1234 + $0x190] sm:$0xff] %v1435
                  %v1437 = vld [vmem:[%s1233 + $0x328] sm:$0xff]
                  %1438 = vst [vmem:[%s1234 + $0x194] sm:$0xff] %v1437
                  %v1439 = vld [vmem:[%s1233 + $0x330] sm:$0xff]
                  %1440 = vst [vmem:[%s1234 + $0x198] sm:$0xff] %v1439
                  %v1441 = vld [vmem:[%s1233 + $0x338] sm:$0xff]
                  %1442 = vst [vmem:[%s1234 + $0x19c] sm:$0xff] %v1441
                  %v1443 = vld [vmem:[%s1233 + $0x340] sm:$0xff]
                  %1444 = vst [vmem:[%s1234 + $0x1a0] sm:$0xff] %v1443
                  %v1445 = vld [vmem:[%s1233 + $0x348] sm:$0xff]
                  %1446 = vst [vmem:[%s1234 + $0x1a4] sm:$0xff] %v1445
                  %v1447 = vld [vmem:[%s1233 + $0x350] sm:$0xff]
                  %1448 = vst [vmem:[%s1234 + $0x1a8] sm:$0xff] %v1447
                  %v1449 = vld [vmem:[%s1233 + $0x358] sm:$0xff]
                  %1450 = vst [vmem:[%s1234 + $0x1ac] sm:$0xff] %v1449
                  %v1451 = vld [vmem:[%s1233 + $0x360] sm:$0xff]
                  %1452 = vst [vmem:[%s1234 + $0x1b0] sm:$0xff] %v1451
                  %v1453 = vld [vmem:[%s1233 + $0x368] sm:$0xff]
                  %1454 = vst [vmem:[%s1234 + $0x1b4] sm:$0xff] %v1453
                  %v1455 = vld [vmem:[%s1233 + $0x370] sm:$0xff]
                  %1456 = vst [vmem:[%s1234 + $0x1b8] sm:$0xff] %v1455
                  %v1457 = vld [vmem:[%s1233 + $0x378] sm:$0xff]
                  %1458 = vst [vmem:[%s1234 + $0x1bc] sm:$0xff] %v1457
                  %v1459 = vld [vmem:[%s1233 + $0x380] sm:$0xff]
                  %1460 = vst [vmem:[%s1234 + $0x1c0] sm:$0xff] %v1459
                  %v1461 = vld [vmem:[%s1233 + $0x388] sm:$0xff]
                  %1462 = vst [vmem:[%s1234 + $0x1c4] sm:$0xff] %v1461
                  %v1463 = vld [vmem:[%s1233 + $0x390] sm:$0xff]
                  %1464 = vst [vmem:[%s1234 + $0x1c8] sm:$0xff] %v1463
                  %v1465 = vld [vmem:[%s1233 + $0x398] sm:$0xff]
                  %1466 = vst [vmem:[%s1234 + $0x1cc] sm:$0xff] %v1465
                  %v1467 = vld [vmem:[%s1233 + $0x3a0] sm:$0xff]
                  %1468 = vst [vmem:[%s1234 + $0x1d0] sm:$0xff] %v1467
                  %v1469 = vld [vmem:[%s1233 + $0x3a8] sm:$0xff]
                  %1470 = vst [vmem:[%s1234 + $0x1d4] sm:$0xff] %v1469
                  %v1471 = vld [vmem:[%s1233 + $0x3b0] sm:$0xff]
                  %1472 = vst [vmem:[%s1234 + $0x1d8] sm:$0xff] %v1471
                  %v1473 = vld [vmem:[%s1233 + $0x3b8] sm:$0xff]
                  %1474 = vst [vmem:[%s1234 + $0x1dc] sm:$0xff] %v1473
                  %v1475 = vld [vmem:[%s1233 + $0x3c0] sm:$0xff]
                  %1476 = vst [vmem:[%s1234 + $0x1e0] sm:$0xff] %v1475
                  %v1477 = vld [vmem:[%s1233 + $0x3c8] sm:$0xff]
                  %1478 = vst [vmem:[%s1234 + $0x1e4] sm:$0xff] %v1477
                  %v1479 = vld [vmem:[%s1233 + $0x3d0] sm:$0xff]
                  %1480 = vst [vmem:[%s1234 + $0x1e8] sm:$0xff] %v1479
                  %v1481 = vld [vmem:[%s1233 + $0x3d8] sm:$0xff]
                  %1482 = vst [vmem:[%s1234 + $0x1ec] sm:$0xff] %v1481
                  %v1483 = vld [vmem:[%s1233 + $0x3e0] sm:$0xff]
                  %1484 = vst [vmem:[%s1234 + $0x1f0] sm:$0xff] %v1483
                  %v1485 = vld [vmem:[%s1233 + $0x3e8] sm:$0xff]
                  %1486 = vst [vmem:[%s1234 + $0x1f4] sm:$0xff] %v1485
                  %v1487 = vld [vmem:[%s1233 + $0x3f0] sm:$0xff]
                  %1488 = vst [vmem:[%s1234 + $0x1f8] sm:$0xff] %v1487
                  %v1489 = vld [vmem:[%s1233 + $0x3f8] sm:$0xff]
                  %1490 = vst [vmem:[%s1234 + $0x1fc] sm:$0xff] %v1489
                  %v1491 = vld [vmem:[%s1233 + $0x400] sm:$0xff]
                  %1492 = vst [vmem:[%s1234 + $0x200] sm:$0xff] %v1491
                  %v1493 = vld [vmem:[%s1233 + $0x408] sm:$0xff]
                  %1494 = vst [vmem:[%s1234 + $0x204] sm:$0xff] %v1493
                  %v1495 = vld [vmem:[%s1233 + $0x410] sm:$0xff]
                  %1496 = vst [vmem:[%s1234 + $0x208] sm:$0xff] %v1495
                  %v1497 = vld [vmem:[%s1233 + $0x418] sm:$0xff]
                  %1498 = vst [vmem:[%s1234 + $0x20c] sm:$0xff] %v1497
                  %v1499 = vld [vmem:[%s1233 + $0x420] sm:$0xff]
                  %1500 = vst [vmem:[%s1234 + $0x210] sm:$0xff] %v1499
                  %v1501 = vld [vmem:[%s1233 + $0x428] sm:$0xff]
                  %1502 = vst [vmem:[%s1234 + $0x214] sm:$0xff] %v1501
                  %v1503 = vld [vmem:[%s1233 + $0x430] sm:$0xff]
                  %1504 = vst [vmem:[%s1234 + $0x218] sm:$0xff] %v1503
                  %v1505 = vld [vmem:[%s1233 + $0x438] sm:$0xff]
                  %1506 = vst [vmem:[%s1234 + $0x21c] sm:$0xff] %v1505
                  %v1507 = vld [vmem:[%s1233 + $0x440] sm:$0xff]
                  %1508 = vst [vmem:[%s1234 + $0x220] sm:$0xff] %v1507
                  %v1509 = vld [vmem:[%s1233 + $0x448] sm:$0xff]
                  %1510 = vst [vmem:[%s1234 + $0x224] sm:$0xff] %v1509
                  %v1511 = vld [vmem:[%s1233 + $0x450] sm:$0xff]
                  %1512 = vst [vmem:[%s1234 + $0x228] sm:$0xff] %v1511
                  %v1513 = vld [vmem:[%s1233 + $0x458] sm:$0xff]
                  %1514 = vst [vmem:[%s1234 + $0x22c] sm:$0xff] %v1513
                  %v1515 = vld [vmem:[%s1233 + $0x460] sm:$0xff]
                  %1516 = vst [vmem:[%s1234 + $0x230] sm:$0xff] %v1515
                  %v1517 = vld [vmem:[%s1233 + $0x468] sm:$0xff]
                  %1518 = vst [vmem:[%s1234 + $0x234] sm:$0xff] %v1517
                  %v1519 = vld [vmem:[%s1233 + $0x470] sm:$0xff]
                  %1520 = vst [vmem:[%s1234 + $0x238] sm:$0xff] %v1519
                  %v1521 = vld [vmem:[%s1233 + $0x478] sm:$0xff]
                  %1522 = vst [vmem:[%s1234 + $0x23c] sm:$0xff] %v1521
                  %v1523 = vld [vmem:[%s1233 + $0x480] sm:$0xff]
                  %1524 = vst [vmem:[%s1234 + $0x240] sm:$0xff] %v1523
                  %v1525 = vld [vmem:[%s1233 + $0x488] sm:$0xff]
                  %1526 = vst [vmem:[%s1234 + $0x244] sm:$0xff] %v1525
                  %v1527 = vld [vmem:[%s1233 + $0x490] sm:$0xff]
                  %1528 = vst [vmem:[%s1234 + $0x248] sm:$0xff] %v1527
                  %v1529 = vld [vmem:[%s1233 + $0x498] sm:$0xff]
                  %1530 = vst [vmem:[%s1234 + $0x24c] sm:$0xff] %v1529
                  %v1531 = vld [vmem:[%s1233 + $0x4a0] sm:$0xff]
                  %1532 = vst [vmem:[%s1234 + $0x250] sm:$0xff] %v1531
                  %v1533 = vld [vmem:[%s1233 + $0x4a8] sm:$0xff]
                  %1534 = vst [vmem:[%s1234 + $0x254] sm:$0xff] %v1533
                  %v1535 = vld [vmem:[%s1233 + $0x4b0] sm:$0xff]
                  %1536 = vst [vmem:[%s1234 + $0x258] sm:$0xff] %v1535
                  %v1537 = vld [vmem:[%s1233 + $0x4b8] sm:$0xff]
                  %1538 = vst [vmem:[%s1234 + $0x25c] sm:$0xff] %v1537
                  %v1539 = vld [vmem:[%s1233 + $0x4c0] sm:$0xff]
                  %1540 = vst [vmem:[%s1234 + $0x260] sm:$0xff] %v1539
                  %v1541 = vld [vmem:[%s1233 + $0x4c8] sm:$0xff]
                  %1542 = vst [vmem:[%s1234 + $0x264] sm:$0xff] %v1541
                  %v1543 = vld [vmem:[%s1233 + $0x4d0] sm:$0xff]
                  %1544 = vst [vmem:[%s1234 + $0x268] sm:$0xff] %v1543
                  %v1545 = vld [vmem:[%s1233 + $0x4d8] sm:$0xff]
                  %1546 = vst [vmem:[%s1234 + $0x26c] sm:$0xff] %v1545
                  %v1547 = vld [vmem:[%s1233 + $0x4e0] sm:$0xff]
                  %1548 = vst [vmem:[%s1234 + $0x270] sm:$0xff] %v1547
                  %v1549 = vld [vmem:[%s1233 + $0x4e8] sm:$0xff]
                  %1550 = vst [vmem:[%s1234 + $0x274] sm:$0xff] %v1549
                  %v1551 = vld [vmem:[%s1233 + $0x4f0] sm:$0xff]
                  %1552 = vst [vmem:[%s1234 + $0x278] sm:$0xff] %v1551
                  %v1553 = vld [vmem:[%s1233 + $0x4f8] sm:$0xff]
                  %1554 = vst [vmem:[%s1234 + $0x27c] sm:$0xff] %v1553
                  %v1555 = vld [vmem:[%s1233 + $0x500] sm:$0xff]
                  %1556 = vst [vmem:[%s1234 + $0x280] sm:$0xff] %v1555
                  %v1557 = vld [vmem:[%s1233 + $0x508] sm:$0xff]
                  %1558 = vst [vmem:[%s1234 + $0x284] sm:$0xff] %v1557
                  %v1559 = vld [vmem:[%s1233 + $0x510] sm:$0xff]
                  %1560 = vst [vmem:[%s1234 + $0x288] sm:$0xff] %v1559
                  %v1561 = vld [vmem:[%s1233 + $0x518] sm:$0xff]
                  %1562 = vst [vmem:[%s1234 + $0x28c] sm:$0xff] %v1561
                  %v1563 = vld [vmem:[%s1233 + $0x520] sm:$0xff]
                  %1564 = vst [vmem:[%s1234 + $0x290] sm:$0xff] %v1563
                  %v1565 = vld [vmem:[%s1233 + $0x528] sm:$0xff]
                  %1566 = vst [vmem:[%s1234 + $0x294] sm:$0xff] %v1565
                  %v1567 = vld [vmem:[%s1233 + $0x530] sm:$0xff]
                  %1568 = vst [vmem:[%s1234 + $0x298] sm:$0xff] %v1567
                  %v1569 = vld [vmem:[%s1233 + $0x538] sm:$0xff]
                  %1570 = vst [vmem:[%s1234 + $0x29c] sm:$0xff] %v1569
                  %v1571 = vld [vmem:[%s1233 + $0x540] sm:$0xff]
                  %1572 = vst [vmem:[%s1234 + $0x2a0] sm:$0xff] %v1571
                  %v1573 = vld [vmem:[%s1233 + $0x548] sm:$0xff]
                  %1574 = vst [vmem:[%s1234 + $0x2a4] sm:$0xff] %v1573
                  %v1575 = vld [vmem:[%s1233 + $0x550] sm:$0xff]
                  %1576 = vst [vmem:[%s1234 + $0x2a8] sm:$0xff] %v1575
                  %v1577 = vld [vmem:[%s1233 + $0x558] sm:$0xff]
                  %1578 = vst [vmem:[%s1234 + $0x2ac] sm:$0xff] %v1577
                  %v1579 = vld [vmem:[%s1233 + $0x560] sm:$0xff]
                  %1580 = vst [vmem:[%s1234 + $0x2b0] sm:$0xff] %v1579
                  %v1581 = vld [vmem:[%s1233 + $0x568] sm:$0xff]
                  %1582 = vst [vmem:[%s1234 + $0x2b4] sm:$0xff] %v1581
                  %v1583 = vld [vmem:[%s1233 + $0x570] sm:$0xff]
                  %1584 = vst [vmem:[%s1234 + $0x2b8] sm:$0xff] %v1583
                  %v1585 = vld [vmem:[%s1233 + $0x578] sm:$0xff]
                  %1586 = vst [vmem:[%s1234 + $0x2bc] sm:$0xff] %v1585
                  %v1587 = vld [vmem:[%s1233 + $0x580] sm:$0xff]
                  %1588 = vst [vmem:[%s1234 + $0x2c0] sm:$0xff] %v1587
                  %v1589 = vld [vmem:[%s1233 + $0x588] sm:$0xff]
                  %1590 = vst [vmem:[%s1234 + $0x2c4] sm:$0xff] %v1589
                  %v1591 = vld [vmem:[%s1233 + $0x590] sm:$0xff]
                  %1592 = vst [vmem:[%s1234 + $0x2c8] sm:$0xff] %v1591
                  %v1593 = vld [vmem:[%s1233 + $0x598] sm:$0xff]
                  %1594 = vst [vmem:[%s1234 + $0x2cc] sm:$0xff] %v1593
                  %v1595 = vld [vmem:[%s1233 + $0x5a0] sm:$0xff]
                  %1596 = vst [vmem:[%s1234 + $0x2d0] sm:$0xff] %v1595
                  %v1597 = vld [vmem:[%s1233 + $0x5a8] sm:$0xff]
                  %1598 = vst [vmem:[%s1234 + $0x2d4] sm:$0xff] %v1597
                  %v1599 = vld [vmem:[%s1233 + $0x5b0] sm:$0xff]
                  %1600 = vst [vmem:[%s1234 + $0x2d8] sm:$0xff] %v1599
                  %v1601 = vld [vmem:[%s1233 + $0x5b8] sm:$0xff]
                  %1602 = vst [vmem:[%s1234 + $0x2dc] sm:$0xff] %v1601
                  %v1603 = vld [vmem:[%s1233 + $0x5c0] sm:$0xff]
                  %1604 = vst [vmem:[%s1234 + $0x2e0] sm:$0xff] %v1603
                  %v1605 = vld [vmem:[%s1233 + $0x5c8] sm:$0xff]
                  %1606 = vst [vmem:[%s1234 + $0x2e4] sm:$0xff] %v1605
                  %v1607 = vld [vmem:[%s1233 + $0x5d0] sm:$0xff]
                  %1608 = vst [vmem:[%s1234 + $0x2e8] sm:$0xff] %v1607
                  %v1609 = vld [vmem:[%s1233 + $0x5d8] sm:$0xff]
                  %1610 = vst [vmem:[%s1234 + $0x2ec] sm:$0xff] %v1609
                  %v1611 = vld [vmem:[%s1233 + $0x5e0] sm:$0xff]
                  %1612 = vst [vmem:[%s1234 + $0x2f0] sm:$0xff] %v1611
                  %v1613 = vld [vmem:[%s1233 + $0x5e8] sm:$0xff]
                  %1614 = vst [vmem:[%s1234 + $0x2f4] sm:$0xff] %v1613
                  %v1615 = vld [vmem:[%s1233 + $0x5f0] sm:$0xff]
                  %1616 = vst [vmem:[%s1234 + $0x2f8] sm:$0xff] %v1615
                  %v1617 = vld [vmem:[%s1233 + $0x5f8] sm:$0xff]
                  %1618 = vst [vmem:[%s1234 + $0x2fc] sm:$0xff] %v1617
                  %v1619 = vld [vmem:[%s1233 + $0x600] sm:$0xff]
                  %1620 = vst [vmem:[%s1234 + $0x300] sm:$0xff] %v1619
                  %v1621 = vld [vmem:[%s1233 + $0x608] sm:$0xff]
                  %1622 = vst [vmem:[%s1234 + $0x304] sm:$0xff] %v1621
                  %v1623 = vld [vmem:[%s1233 + $0x610] sm:$0xff]
                  %1624 = vst [vmem:[%s1234 + $0x308] sm:$0xff] %v1623
                  %v1625 = vld [vmem:[%s1233 + $0x618] sm:$0xff]
                  %1626 = vst [vmem:[%s1234 + $0x30c] sm:$0xff] %v1625
                  %v1627 = vld [vmem:[%s1233 + $0x620] sm:$0xff]
                  %1628 = vst [vmem:[%s1234 + $0x310] sm:$0xff] %v1627
                  %v1629 = vld [vmem:[%s1233 + $0x628] sm:$0xff]
                  %1630 = vst [vmem:[%s1234 + $0x314] sm:$0xff] %v1629
                  %v1631 = vld [vmem:[%s1233 + $0x630] sm:$0xff]
                  %1632 = vst [vmem:[%s1234 + $0x318] sm:$0xff] %v1631
                  %v1633 = vld [vmem:[%s1233 + $0x638] sm:$0xff]
                  %1634 = vst [vmem:[%s1234 + $0x31c] sm:$0xff] %v1633
                  %v1635 = vld [vmem:[%s1233 + $0x640] sm:$0xff]
                  %1636 = vst [vmem:[%s1234 + $0x320] sm:$0xff] %v1635
                  %v1637 = vld [vmem:[%s1233 + $0x648] sm:$0xff]
                  %1638 = vst [vmem:[%s1234 + $0x324] sm:$0xff] %v1637
                  %v1639 = vld [vmem:[%s1233 + $0x650] sm:$0xff]
                  %1640 = vst [vmem:[%s1234 + $0x328] sm:$0xff] %v1639
                  %v1641 = vld [vmem:[%s1233 + $0x658] sm:$0xff]
                  %1642 = vst [vmem:[%s1234 + $0x32c] sm:$0xff] %v1641
                  %v1643 = vld [vmem:[%s1233 + $0x660] sm:$0xff]
                  %1644 = vst [vmem:[%s1234 + $0x330] sm:$0xff] %v1643
                  %v1645 = vld [vmem:[%s1233 + $0x668] sm:$0xff]
                  %1646 = vst [vmem:[%s1234 + $0x334] sm:$0xff] %v1645
                  %v1647 = vld [vmem:[%s1233 + $0x670] sm:$0xff]
                  %1648 = vst [vmem:[%s1234 + $0x338] sm:$0xff] %v1647
                  %v1649 = vld [vmem:[%s1233 + $0x678] sm:$0xff]
                  %1650 = vst [vmem:[%s1234 + $0x33c] sm:$0xff] %v1649
                  %v1651 = vld [vmem:[%s1233 + $0x680] sm:$0xff]
                  %1652 = vst [vmem:[%s1234 + $0x340] sm:$0xff] %v1651
                  %v1653 = vld [vmem:[%s1233 + $0x688] sm:$0xff]
                  %1654 = vst [vmem:[%s1234 + $0x344] sm:$0xff] %v1653
                  %v1655 = vld [vmem:[%s1233 + $0x690] sm:$0xff]
                  %1656 = vst [vmem:[%s1234 + $0x348] sm:$0xff] %v1655
                  %v1657 = vld [vmem:[%s1233 + $0x698] sm:$0xff]
                  %1658 = vst [vmem:[%s1234 + $0x34c] sm:$0xff] %v1657
                  %v1659 = vld [vmem:[%s1233 + $0x6a0] sm:$0xff]
                  %1660 = vst [vmem:[%s1234 + $0x350] sm:$0xff] %v1659
                  %v1661 = vld [vmem:[%s1233 + $0x6a8] sm:$0xff]
                  %1662 = vst [vmem:[%s1234 + $0x354] sm:$0xff] %v1661
                  %v1663 = vld [vmem:[%s1233 + $0x6b0] sm:$0xff]
                  %1664 = vst [vmem:[%s1234 + $0x358] sm:$0xff] %v1663
                  %v1665 = vld [vmem:[%s1233 + $0x6b8] sm:$0xff]
                  %1666 = vst [vmem:[%s1234 + $0x35c] sm:$0xff] %v1665
                  %v1667 = vld [vmem:[%s1233 + $0x6c0] sm:$0xff]
                  %1668 = vst [vmem:[%s1234 + $0x360] sm:$0xff] %v1667
                  %v1669 = vld [vmem:[%s1233 + $0x6c8] sm:$0xff]
                  %1670 = vst [vmem:[%s1234 + $0x364] sm:$0xff] %v1669
                  %v1671 = vld [vmem:[%s1233 + $0x6d0] sm:$0xff]
                  %1672 = vst [vmem:[%s1234 + $0x368] sm:$0xff] %v1671
                  %v1673 = vld [vmem:[%s1233 + $0x6d8] sm:$0xff]
                  %1674 = vst [vmem:[%s1234 + $0x36c] sm:$0xff] %v1673
                  %v1675 = vld [vmem:[%s1233 + $0x6e0] sm:$0xff]
                  %1676 = vst [vmem:[%s1234 + $0x370] sm:$0xff] %v1675
                  %v1677 = vld [vmem:[%s1233 + $0x6e8] sm:$0xff]
                  %1678 = vst [vmem:[%s1234 + $0x374] sm:$0xff] %v1677
                  %v1679 = vld [vmem:[%s1233 + $0x6f0] sm:$0xff]
                  %1680 = vst [vmem:[%s1234 + $0x378] sm:$0xff] %v1679
                  %v1681 = vld [vmem:[%s1233 + $0x6f8] sm:$0xff]
                  %1682 = vst [vmem:[%s1234 + $0x37c] sm:$0xff] %v1681
                  %v1683 = vld [vmem:[%s1233 + $0x700] sm:$0xff]
                  %1684 = vst [vmem:[%s1234 + $0x380] sm:$0xff] %v1683
                  %v1685 = vld [vmem:[%s1233 + $0x708] sm:$0xff]
                  %1686 = vst [vmem:[%s1234 + $0x384] sm:$0xff] %v1685
                  %v1687 = vld [vmem:[%s1233 + $0x710] sm:$0xff]
                  %1688 = vst [vmem:[%s1234 + $0x388] sm:$0xff] %v1687
                  %v1689 = vld [vmem:[%s1233 + $0x718] sm:$0xff]
                  %1690 = vst [vmem:[%s1234 + $0x38c] sm:$0xff] %v1689
                  %v1691 = vld [vmem:[%s1233 + $0x720] sm:$0xff]
                  %1692 = vst [vmem:[%s1234 + $0x390] sm:$0xff] %v1691
                  %v1693 = vld [vmem:[%s1233 + $0x728] sm:$0xff]
                  %1694 = vst [vmem:[%s1234 + $0x394] sm:$0xff] %v1693
                  %v1695 = vld [vmem:[%s1233 + $0x730] sm:$0xff]
                  %1696 = vst [vmem:[%s1234 + $0x398] sm:$0xff] %v1695
                  %v1697 = vld [vmem:[%s1233 + $0x738] sm:$0xff]
                  %1698 = vst [vmem:[%s1234 + $0x39c] sm:$0xff] %v1697
                  %v1699 = vld [vmem:[%s1233 + $0x740] sm:$0xff]
                  %1700 = vst [vmem:[%s1234 + $0x3a0] sm:$0xff] %v1699
                  %v1701 = vld [vmem:[%s1233 + $0x748] sm:$0xff]
                  %1702 = vst [vmem:[%s1234 + $0x3a4] sm:$0xff] %v1701
                  %v1703 = vld [vmem:[%s1233 + $0x750] sm:$0xff]
                  %1704 = vst [vmem:[%s1234 + $0x3a8] sm:$0xff] %v1703
                  %v1705 = vld [vmem:[%s1233 + $0x758] sm:$0xff]
                  %1706 = vst [vmem:[%s1234 + $0x3ac] sm:$0xff] %v1705
                  %v1707 = vld [vmem:[%s1233 + $0x760] sm:$0xff]
                  %1708 = vst [vmem:[%s1234 + $0x3b0] sm:$0xff] %v1707
                  %v1709 = vld [vmem:[%s1233 + $0x768] sm:$0xff]
                  %1710 = vst [vmem:[%s1234 + $0x3b4] sm:$0xff] %v1709
                  %v1711 = vld [vmem:[%s1233 + $0x770] sm:$0xff]
                  %1712 = vst [vmem:[%s1234 + $0x3b8] sm:$0xff] %v1711
                  %v1713 = vld [vmem:[%s1233 + $0x778] sm:$0xff]
                  %1714 = vst [vmem:[%s1234 + $0x3bc] sm:$0xff] %v1713
                  %v1715 = vld [vmem:[%s1233 + $0x780] sm:$0xff]
                  %1716 = vst [vmem:[%s1234 + $0x3c0] sm:$0xff] %v1715
                  %v1717 = vld [vmem:[%s1233 + $0x788] sm:$0xff]
                  %1718 = vst [vmem:[%s1234 + $0x3c4] sm:$0xff] %v1717
                  %v1719 = vld [vmem:[%s1233 + $0x790] sm:$0xff]
                  %1720 = vst [vmem:[%s1234 + $0x3c8] sm:$0xff] %v1719
                  %v1721 = vld [vmem:[%s1233 + $0x798] sm:$0xff]
                  %1722 = vst [vmem:[%s1234 + $0x3cc] sm:$0xff] %v1721
                  %v1723 = vld [vmem:[%s1233 + $0x7a0] sm:$0xff]
                  %1724 = vst [vmem:[%s1234 + $0x3d0] sm:$0xff] %v1723
                  %v1725 = vld [vmem:[%s1233 + $0x7a8] sm:$0xff]
                  %1726 = vst [vmem:[%s1234 + $0x3d4] sm:$0xff] %v1725
                  %v1727 = vld [vmem:[%s1233 + $0x7b0] sm:$0xff]
                  %1728 = vst [vmem:[%s1234 + $0x3d8] sm:$0xff] %v1727
                  %v1729 = vld [vmem:[%s1233 + $0x7b8] sm:$0xff]
                  %1730 = vst [vmem:[%s1234 + $0x3dc] sm:$0xff] %v1729
                  %v1731 = vld [vmem:[%s1233 + $0x7c0] sm:$0xff]
                  %1732 = vst [vmem:[%s1234 + $0x3e0] sm:$0xff] %v1731
                  %v1733 = vld [vmem:[%s1233 + $0x7c8] sm:$0xff]
                  %1734 = vst [vmem:[%s1234 + $0x3e4] sm:$0xff] %v1733
                  %v1735 = vld [vmem:[%s1233 + $0x7d0] sm:$0xff]
                  %1736 = vst [vmem:[%s1234 + $0x3e8] sm:$0xff] %v1735
                  %v1737 = vld [vmem:[%s1233 + $0x7d8] sm:$0xff]
                  %1738 = vst [vmem:[%s1234 + $0x3ec] sm:$0xff] %v1737
                  %v1739 = vld [vmem:[%s1233 + $0x7e0] sm:$0xff]
                  %1740 = vst [vmem:[%s1234 + $0x3f0] sm:$0xff] %v1739
                  %v1741 = vld [vmem:[%s1233 + $0x7e8] sm:$0xff]
                  %1742 = vst [vmem:[%s1234 + $0x3f4] sm:$0xff] %v1741
                  %v1743 = vld [vmem:[%s1233 + $0x7f0] sm:$0xff]
                  %1744 = vst [vmem:[%s1234 + $0x3f8] sm:$0xff] %v1743
                  %v1745 = vld [vmem:[%s1233 + $0x7f8] sm:$0xff]
                  %1746 = vst [vmem:[%s1234 + $0x3fc] sm:$0xff] %v1745
                  %s1747 = sadd.s32 1, %s1232
                  %p1748 = scmp.ge.s32.totalorder %s1747, 0
                  %s1749 = scalar_select %p1748, 0, %s1747
                  %s1750 = smul.u32 %s1749, 8
                  %s1751 = smul.u32 %s1749, 8
                  %s1752 = scalar_lea.vmem %s165, %s1750
                  %s1753 = scalar_lea.vmem %s163, %s1751 [#allocation2]
                $region63: #{discriminator_forward.6} parent=57 // loop_footer
                  %s1231 = sadd.s32 1, %s1227
                $region64: #{discriminator_forward.6} parent=57 // loop_footer_branch
                  %1226 = sbr.rel target = $region60
                $region65: #{discriminator_forward.6} parent=57 // loop_exit
                  _
                %s1755 = ssub.s32 16, 1
                loop: start=0, step=1, limit=1
                $region66: #{discriminator_forward.6} parent=57 // loop_pre_header
                  _
                $region67: #{discriminator_forward.6} parent=57 // loop_header
                  %s1757 = sphi 0, %s1761
                  %p1758 = scmp.ge.s32.totalorder %s1757, 1
                  %s1762 = sphi %s165, %s165
                  %s1763 = sphi %s163, %s163
                $region68: #{discriminator_forward.6} parent=57 // loop_header_branch
                  %1760 = sbr.rel (%p1758) target = $region72
                $region69: #{discriminator_forward.6} parent=57 // loop_body
                  %v1764 = vld [vmem:[%s1762] sm:%s1755]
                  %1765 = vst [vmem:[%s1763] sm:%s1755] %v1764
                  %v1766 = vld [vmem:[%s1762 + $0x8] sm:%s1755]
                  %1767 = vst [vmem:[%s1763 + $0x4] sm:%s1755] %v1766
                  %v1768 = vld [vmem:[%s1762 + $0x10] sm:%s1755]
                  %1769 = vst [vmem:[%s1763 + $0x8] sm:%s1755] %v1768
                  %v1770 = vld [vmem:[%s1762 + $0x18] sm:%s1755]
                  %1771 = vst [vmem:[%s1763 + $0xc] sm:%s1755] %v1770
                  %v1772 = vld [vmem:[%s1762 + $0x20] sm:%s1755]
                  %1773 = vst [vmem:[%s1763 + $0x10] sm:%s1755] %v1772
                  %v1774 = vld [vmem:[%s1762 + $0x28] sm:%s1755]
                  %1775 = vst [vmem:[%s1763 + $0x14] sm:%s1755] %v1774
                  %v1776 = vld [vmem:[%s1762 + $0x30] sm:%s1755]
                  %1777 = vst [vmem:[%s1763 + $0x18] sm:%s1755] %v1776
                  %v1778 = vld [vmem:[%s1762 + $0x38] sm:%s1755]
                  %1779 = vst [vmem:[%s1763 + $0x1c] sm:%s1755] %v1778
                  %v1780 = vld [vmem:[%s1762 + $0x40] sm:%s1755]
                  %1781 = vst [vmem:[%s1763 + $0x20] sm:%s1755] %v1780
                  %v1782 = vld [vmem:[%s1762 + $0x48] sm:%s1755]
                  %1783 = vst [vmem:[%s1763 + $0x24] sm:%s1755] %v1782
                  %v1784 = vld [vmem:[%s1762 + $0x50] sm:%s1755]
                  %1785 = vst [vmem:[%s1763 + $0x28] sm:%s1755] %v1784
                  %v1786 = vld [vmem:[%s1762 + $0x58] sm:%s1755]
                  %1787 = vst [vmem:[%s1763 + $0x2c] sm:%s1755] %v1786
                  %v1788 = vld [vmem:[%s1762 + $0x60] sm:%s1755]
                  %1789 = vst [vmem:[%s1763 + $0x30] sm:%s1755] %v1788
                  %v1790 = vld [vmem:[%s1762 + $0x68] sm:%s1755]
                  %1791 = vst [vmem:[%s1763 + $0x34] sm:%s1755] %v1790
                  %v1792 = vld [vmem:[%s1762 + $0x70] sm:%s1755]
                  %1793 = vst [vmem:[%s1763 + $0x38] sm:%s1755] %v1792
                  %v1794 = vld [vmem:[%s1762 + $0x78] sm:%s1755]
                  %1795 = vst [vmem:[%s1763 + $0x3c] sm:%s1755] %v1794
                  %v1796 = vld [vmem:[%s1762 + $0x80] sm:%s1755]
                  %1797 = vst [vmem:[%s1763 + $0x40] sm:%s1755] %v1796
                  %v1798 = vld [vmem:[%s1762 + $0x88] sm:%s1755]
                  %1799 = vst [vmem:[%s1763 + $0x44] sm:%s1755] %v1798
                  %v1800 = vld [vmem:[%s1762 + $0x90] sm:%s1755]
                  %1801 = vst [vmem:[%s1763 + $0x48] sm:%s1755] %v1800
                  %v1802 = vld [vmem:[%s1762 + $0x98] sm:%s1755]
                  %1803 = vst [vmem:[%s1763 + $0x4c] sm:%s1755] %v1802
                  %v1804 = vld [vmem:[%s1762 + $0xa0] sm:%s1755]
                  %1805 = vst [vmem:[%s1763 + $0x50] sm:%s1755] %v1804
                  %v1806 = vld [vmem:[%s1762 + $0xa8] sm:%s1755]
                  %1807 = vst [vmem:[%s1763 + $0x54] sm:%s1755] %v1806
                  %v1808 = vld [vmem:[%s1762 + $0xb0] sm:%s1755]
                  %1809 = vst [vmem:[%s1763 + $0x58] sm:%s1755] %v1808
                  %v1810 = vld [vmem:[%s1762 + $0xb8] sm:%s1755]
                  %1811 = vst [vmem:[%s1763 + $0x5c] sm:%s1755] %v1810
                  %v1812 = vld [vmem:[%s1762 + $0xc0] sm:%s1755]
                  %1813 = vst [vmem:[%s1763 + $0x60] sm:%s1755] %v1812
                  %v1814 = vld [vmem:[%s1762 + $0xc8] sm:%s1755]
                  %1815 = vst [vmem:[%s1763 + $0x64] sm:%s1755] %v1814
                  %v1816 = vld [vmem:[%s1762 + $0xd0] sm:%s1755]
                  %1817 = vst [vmem:[%s1763 + $0x68] sm:%s1755] %v1816
                  %v1818 = vld [vmem:[%s1762 + $0xd8] sm:%s1755]
                  %1819 = vst [vmem:[%s1763 + $0x6c] sm:%s1755] %v1818
                  %v1820 = vld [vmem:[%s1762 + $0xe0] sm:%s1755]
                  %1821 = vst [vmem:[%s1763 + $0x70] sm:%s1755] %v1820
                  %v1822 = vld [vmem:[%s1762 + $0xe8] sm:%s1755]
                  %1823 = vst [vmem:[%s1763 + $0x74] sm:%s1755] %v1822
                  %v1824 = vld [vmem:[%s1762 + $0xf0] sm:%s1755]
                  %1825 = vst [vmem:[%s1763 + $0x78] sm:%s1755] %v1824
                  %v1826 = vld [vmem:[%s1762 + $0xf8] sm:%s1755]
                  %1827 = vst [vmem:[%s1763 + $0x7c] sm:%s1755] %v1826
                  %v1828 = vld [vmem:[%s1762 + $0x100] sm:%s1755]
                  %1829 = vst [vmem:[%s1763 + $0x80] sm:%s1755] %v1828
                  %v1830 = vld [vmem:[%s1762 + $0x108] sm:%s1755]
                  %1831 = vst [vmem:[%s1763 + $0x84] sm:%s1755] %v1830
                  %v1832 = vld [vmem:[%s1762 + $0x110] sm:%s1755]
                  %1833 = vst [vmem:[%s1763 + $0x88] sm:%s1755] %v1832
                  %v1834 = vld [vmem:[%s1762 + $0x118] sm:%s1755]
                  %1835 = vst [vmem:[%s1763 + $0x8c] sm:%s1755] %v1834
                  %v1836 = vld [vmem:[%s1762 + $0x120] sm:%s1755]
                  %1837 = vst [vmem:[%s1763 + $0x90] sm:%s1755] %v1836
                  %v1838 = vld [vmem:[%s1762 + $0x128] sm:%s1755]
                  %1839 = vst [vmem:[%s1763 + $0x94] sm:%s1755] %v1838
                  %v1840 = vld [vmem:[%s1762 + $0x130] sm:%s1755]
                  %1841 = vst [vmem:[%s1763 + $0x98] sm:%s1755] %v1840
                  %v1842 = vld [vmem:[%s1762 + $0x138] sm:%s1755]
                  %1843 = vst [vmem:[%s1763 + $0x9c] sm:%s1755] %v1842
                  %v1844 = vld [vmem:[%s1762 + $0x140] sm:%s1755]
                  %1845 = vst [vmem:[%s1763 + $0xa0] sm:%s1755] %v1844
                  %v1846 = vld [vmem:[%s1762 + $0x148] sm:%s1755]
                  %1847 = vst [vmem:[%s1763 + $0xa4] sm:%s1755] %v1846
                  %v1848 = vld [vmem:[%s1762 + $0x150] sm:%s1755]
                  %1849 = vst [vmem:[%s1763 + $0xa8] sm:%s1755] %v1848
                  %v1850 = vld [vmem:[%s1762 + $0x158] sm:%s1755]
                  %1851 = vst [vmem:[%s1763 + $0xac] sm:%s1755] %v1850
                  %v1852 = vld [vmem:[%s1762 + $0x160] sm:%s1755]
                  %1853 = vst [vmem:[%s1763 + $0xb0] sm:%s1755] %v1852
                  %v1854 = vld [vmem:[%s1762 + $0x168] sm:%s1755]
                  %1855 = vst [vmem:[%s1763 + $0xb4] sm:%s1755] %v1854
                  %v1856 = vld [vmem:[%s1762 + $0x170] sm:%s1755]
                  %1857 = vst [vmem:[%s1763 + $0xb8] sm:%s1755] %v1856
                  %v1858 = vld [vmem:[%s1762 + $0x178] sm:%s1755]
                  %1859 = vst [vmem:[%s1763 + $0xbc] sm:%s1755] %v1858
                  %v1860 = vld [vmem:[%s1762 + $0x180] sm:%s1755]
                  %1861 = vst [vmem:[%s1763 + $0xc0] sm:%s1755] %v1860
                  %v1862 = vld [vmem:[%s1762 + $0x188] sm:%s1755]
                  %1863 = vst [vmem:[%s1763 + $0xc4] sm:%s1755] %v1862
                  %v1864 = vld [vmem:[%s1762 + $0x190] sm:%s1755]
                  %1865 = vst [vmem:[%s1763 + $0xc8] sm:%s1755] %v1864
                  %v1866 = vld [vmem:[%s1762 + $0x198] sm:%s1755]
                  %1867 = vst [vmem:[%s1763 + $0xcc] sm:%s1755] %v1866
                  %v1868 = vld [vmem:[%s1762 + $0x1a0] sm:%s1755]
                  %1869 = vst [vmem:[%s1763 + $0xd0] sm:%s1755] %v1868
                  %v1870 = vld [vmem:[%s1762 + $0x1a8] sm:%s1755]
                  %1871 = vst [vmem:[%s1763 + $0xd4] sm:%s1755] %v1870
                  %v1872 = vld [vmem:[%s1762 + $0x1b0] sm:%s1755]
                  %1873 = vst [vmem:[%s1763 + $0xd8] sm:%s1755] %v1872
                  %v1874 = vld [vmem:[%s1762 + $0x1b8] sm:%s1755]
                  %1875 = vst [vmem:[%s1763 + $0xdc] sm:%s1755] %v1874
                  %v1876 = vld [vmem:[%s1762 + $0x1c0] sm:%s1755]
                  %1877 = vst [vmem:[%s1763 + $0xe0] sm:%s1755] %v1876
                  %v1878 = vld [vmem:[%s1762 + $0x1c8] sm:%s1755]
                  %1879 = vst [vmem:[%s1763 + $0xe4] sm:%s1755] %v1878
                  %v1880 = vld [vmem:[%s1762 + $0x1d0] sm:%s1755]
                  %1881 = vst [vmem:[%s1763 + $0xe8] sm:%s1755] %v1880
                  %v1882 = vld [vmem:[%s1762 + $0x1d8] sm:%s1755]
                  %1883 = vst [vmem:[%s1763 + $0xec] sm:%s1755] %v1882
                  %v1884 = vld [vmem:[%s1762 + $0x1e0] sm:%s1755]
                  %1885 = vst [vmem:[%s1763 + $0xf0] sm:%s1755] %v1884
                  %v1886 = vld [vmem:[%s1762 + $0x1e8] sm:%s1755]
                  %1887 = vst [vmem:[%s1763 + $0xf4] sm:%s1755] %v1886
                  %v1888 = vld [vmem:[%s1762 + $0x1f0] sm:%s1755]
                  %1889 = vst [vmem:[%s1763 + $0xf8] sm:%s1755] %v1888
                  %v1890 = vld [vmem:[%s1762 + $0x1f8] sm:%s1755]
                  %1891 = vst [vmem:[%s1763 + $0xfc] sm:%s1755] %v1890
                  %v1892 = vld [vmem:[%s1762 + $0x200] sm:%s1755]
                  %1893 = vst [vmem:[%s1763 + $0x100] sm:%s1755] %v1892
                  %v1894 = vld [vmem:[%s1762 + $0x208] sm:%s1755]
                  %1895 = vst [vmem:[%s1763 + $0x104] sm:%s1755] %v1894
                  %v1896 = vld [vmem:[%s1762 + $0x210] sm:%s1755]
                  %1897 = vst [vmem:[%s1763 + $0x108] sm:%s1755] %v1896
                  %v1898 = vld [vmem:[%s1762 + $0x218] sm:%s1755]
                  %1899 = vst [vmem:[%s1763 + $0x10c] sm:%s1755] %v1898
                  %v1900 = vld [vmem:[%s1762 + $0x220] sm:%s1755]
                  %1901 = vst [vmem:[%s1763 + $0x110] sm:%s1755] %v1900
                  %v1902 = vld [vmem:[%s1762 + $0x228] sm:%s1755]
                  %1903 = vst [vmem:[%s1763 + $0x114] sm:%s1755] %v1902
                  %v1904 = vld [vmem:[%s1762 + $0x230] sm:%s1755]
                  %1905 = vst [vmem:[%s1763 + $0x118] sm:%s1755] %v1904
                  %v1906 = vld [vmem:[%s1762 + $0x238] sm:%s1755]
                  %1907 = vst [vmem:[%s1763 + $0x11c] sm:%s1755] %v1906
                  %v1908 = vld [vmem:[%s1762 + $0x240] sm:%s1755]
                  %1909 = vst [vmem:[%s1763 + $0x120] sm:%s1755] %v1908
                  %v1910 = vld [vmem:[%s1762 + $0x248] sm:%s1755]
                  %1911 = vst [vmem:[%s1763 + $0x124] sm:%s1755] %v1910
                  %v1912 = vld [vmem:[%s1762 + $0x250] sm:%s1755]
                  %1913 = vst [vmem:[%s1763 + $0x128] sm:%s1755] %v1912
                  %v1914 = vld [vmem:[%s1762 + $0x258] sm:%s1755]
                  %1915 = vst [vmem:[%s1763 + $0x12c] sm:%s1755] %v1914
                  %v1916 = vld [vmem:[%s1762 + $0x260] sm:%s1755]
                  %1917 = vst [vmem:[%s1763 + $0x130] sm:%s1755] %v1916
                  %v1918 = vld [vmem:[%s1762 + $0x268] sm:%s1755]
                  %1919 = vst [vmem:[%s1763 + $0x134] sm:%s1755] %v1918
                  %v1920 = vld [vmem:[%s1762 + $0x270] sm:%s1755]
                  %1921 = vst [vmem:[%s1763 + $0x138] sm:%s1755] %v1920
                  %v1922 = vld [vmem:[%s1762 + $0x278] sm:%s1755]
                  %1923 = vst [vmem:[%s1763 + $0x13c] sm:%s1755] %v1922
                  %v1924 = vld [vmem:[%s1762 + $0x280] sm:%s1755]
                  %1925 = vst [vmem:[%s1763 + $0x140] sm:%s1755] %v1924
                  %v1926 = vld [vmem:[%s1762 + $0x288] sm:%s1755]
                  %1927 = vst [vmem:[%s1763 + $0x144] sm:%s1755] %v1926
                  %v1928 = vld [vmem:[%s1762 + $0x290] sm:%s1755]
                  %1929 = vst [vmem:[%s1763 + $0x148] sm:%s1755] %v1928
                  %v1930 = vld [vmem:[%s1762 + $0x298] sm:%s1755]
                  %1931 = vst [vmem:[%s1763 + $0x14c] sm:%s1755] %v1930
                  %v1932 = vld [vmem:[%s1762 + $0x2a0] sm:%s1755]
                  %1933 = vst [vmem:[%s1763 + $0x150] sm:%s1755] %v1932
                  %v1934 = vld [vmem:[%s1762 + $0x2a8] sm:%s1755]
                  %1935 = vst [vmem:[%s1763 + $0x154] sm:%s1755] %v1934
                  %v1936 = vld [vmem:[%s1762 + $0x2b0] sm:%s1755]
                  %1937 = vst [vmem:[%s1763 + $0x158] sm:%s1755] %v1936
                  %v1938 = vld [vmem:[%s1762 + $0x2b8] sm:%s1755]
                  %1939 = vst [vmem:[%s1763 + $0x15c] sm:%s1755] %v1938
                  %v1940 = vld [vmem:[%s1762 + $0x2c0] sm:%s1755]
                  %1941 = vst [vmem:[%s1763 + $0x160] sm:%s1755] %v1940
                  %v1942 = vld [vmem:[%s1762 + $0x2c8] sm:%s1755]
                  %1943 = vst [vmem:[%s1763 + $0x164] sm:%s1755] %v1942
                  %v1944 = vld [vmem:[%s1762 + $0x2d0] sm:%s1755]
                  %1945 = vst [vmem:[%s1763 + $0x168] sm:%s1755] %v1944
                  %v1946 = vld [vmem:[%s1762 + $0x2d8] sm:%s1755]
                  %1947 = vst [vmem:[%s1763 + $0x16c] sm:%s1755] %v1946
                  %v1948 = vld [vmem:[%s1762 + $0x2e0] sm:%s1755]
                  %1949 = vst [vmem:[%s1763 + $0x170] sm:%s1755] %v1948
                  %v1950 = vld [vmem:[%s1762 + $0x2e8] sm:%s1755]
                  %1951 = vst [vmem:[%s1763 + $0x174] sm:%s1755] %v1950
                  %v1952 = vld [vmem:[%s1762 + $0x2f0] sm:%s1755]
                  %1953 = vst [vmem:[%s1763 + $0x178] sm:%s1755] %v1952
                  %v1954 = vld [vmem:[%s1762 + $0x2f8] sm:%s1755]
                  %1955 = vst [vmem:[%s1763 + $0x17c] sm:%s1755] %v1954
                  %v1956 = vld [vmem:[%s1762 + $0x300] sm:%s1755]
                  %1957 = vst [vmem:[%s1763 + $0x180] sm:%s1755] %v1956
                  %v1958 = vld [vmem:[%s1762 + $0x308] sm:%s1755]
                  %1959 = vst [vmem:[%s1763 + $0x184] sm:%s1755] %v1958
                  %v1960 = vld [vmem:[%s1762 + $0x310] sm:%s1755]
                  %1961 = vst [vmem:[%s1763 + $0x188] sm:%s1755] %v1960
                  %v1962 = vld [vmem:[%s1762 + $0x318] sm:%s1755]
                  %1963 = vst [vmem:[%s1763 + $0x18c] sm:%s1755] %v1962
                  %v1964 = vld [vmem:[%s1762 + $0x320] sm:%s1755]
                  %1965 = vst [vmem:[%s1763 + $0x190] sm:%s1755] %v1964
                  %v1966 = vld [vmem:[%s1762 + $0x328] sm:%s1755]
                  %1967 = vst [vmem:[%s1763 + $0x194] sm:%s1755] %v1966
                  %v1968 = vld [vmem:[%s1762 + $0x330] sm:%s1755]
                  %1969 = vst [vmem:[%s1763 + $0x198] sm:%s1755] %v1968
                  %v1970 = vld [vmem:[%s1762 + $0x338] sm:%s1755]
                  %1971 = vst [vmem:[%s1763 + $0x19c] sm:%s1755] %v1970
                  %v1972 = vld [vmem:[%s1762 + $0x340] sm:%s1755]
                  %1973 = vst [vmem:[%s1763 + $0x1a0] sm:%s1755] %v1972
                  %v1974 = vld [vmem:[%s1762 + $0x348] sm:%s1755]
                  %1975 = vst [vmem:[%s1763 + $0x1a4] sm:%s1755] %v1974
                  %v1976 = vld [vmem:[%s1762 + $0x350] sm:%s1755]
                  %1977 = vst [vmem:[%s1763 + $0x1a8] sm:%s1755] %v1976
                  %v1978 = vld [vmem:[%s1762 + $0x358] sm:%s1755]
                  %1979 = vst [vmem:[%s1763 + $0x1ac] sm:%s1755] %v1978
                  %v1980 = vld [vmem:[%s1762 + $0x360] sm:%s1755]
                  %1981 = vst [vmem:[%s1763 + $0x1b0] sm:%s1755] %v1980
                  %v1982 = vld [vmem:[%s1762 + $0x368] sm:%s1755]
                  %1983 = vst [vmem:[%s1763 + $0x1b4] sm:%s1755] %v1982
                  %v1984 = vld [vmem:[%s1762 + $0x370] sm:%s1755]
                  %1985 = vst [vmem:[%s1763 + $0x1b8] sm:%s1755] %v1984
                  %v1986 = vld [vmem:[%s1762 + $0x378] sm:%s1755]
                  %1987 = vst [vmem:[%s1763 + $0x1bc] sm:%s1755] %v1986
                  %v1988 = vld [vmem:[%s1762 + $0x380] sm:%s1755]
                  %1989 = vst [vmem:[%s1763 + $0x1c0] sm:%s1755] %v1988
                  %v1990 = vld [vmem:[%s1762 + $0x388] sm:%s1755]
                  %1991 = vst [vmem:[%s1763 + $0x1c4] sm:%s1755] %v1990
                  %v1992 = vld [vmem:[%s1762 + $0x390] sm:%s1755]
                  %1993 = vst [vmem:[%s1763 + $0x1c8] sm:%s1755] %v1992
                  %v1994 = vld [vmem:[%s1762 + $0x398] sm:%s1755]
                  %1995 = vst [vmem:[%s1763 + $0x1cc] sm:%s1755] %v1994
                  %v1996 = vld [vmem:[%s1762 + $0x3a0] sm:%s1755]
                  %1997 = vst [vmem:[%s1763 + $0x1d0] sm:%s1755] %v1996
                  %v1998 = vld [vmem:[%s1762 + $0x3a8] sm:%s1755]
                  %1999 = vst [vmem:[%s1763 + $0x1d4] sm:%s1755] %v1998
                  %v2000 = vld [vmem:[%s1762 + $0x3b0] sm:%s1755]
                  %2001 = vst [vmem:[%s1763 + $0x1d8] sm:%s1755] %v2000
                  %v2002 = vld [vmem:[%s1762 + $0x3b8] sm:%s1755]
                  %2003 = vst [vmem:[%s1763 + $0x1dc] sm:%s1755] %v2002
                  %v2004 = vld [vmem:[%s1762 + $0x3c0] sm:%s1755]
                  %2005 = vst [vmem:[%s1763 + $0x1e0] sm:%s1755] %v2004
                  %v2006 = vld [vmem:[%s1762 + $0x3c8] sm:%s1755]
                  %2007 = vst [vmem:[%s1763 + $0x1e4] sm:%s1755] %v2006
                  %v2008 = vld [vmem:[%s1762 + $0x3d0] sm:%s1755]
                  %2009 = vst [vmem:[%s1763 + $0x1e8] sm:%s1755] %v2008
                  %v2010 = vld [vmem:[%s1762 + $0x3d8] sm:%s1755]
                  %2011 = vst [vmem:[%s1763 + $0x1ec] sm:%s1755] %v2010
                  %v2012 = vld [vmem:[%s1762 + $0x3e0] sm:%s1755]
                  %2013 = vst [vmem:[%s1763 + $0x1f0] sm:%s1755] %v2012
                  %v2014 = vld [vmem:[%s1762 + $0x3e8] sm:%s1755]
                  %2015 = vst [vmem:[%s1763 + $0x1f4] sm:%s1755] %v2014
                  %v2016 = vld [vmem:[%s1762 + $0x3f0] sm:%s1755]
                  %2017 = vst [vmem:[%s1763 + $0x1f8] sm:%s1755] %v2016
                  %v2018 = vld [vmem:[%s1762 + $0x3f8] sm:%s1755]
                  %2019 = vst [vmem:[%s1763 + $0x1fc] sm:%s1755] %v2018
                  %v2020 = vld [vmem:[%s1762 + $0x400] sm:%s1755]
                  %2021 = vst [vmem:[%s1763 + $0x200] sm:%s1755] %v2020
                  %v2022 = vld [vmem:[%s1762 + $0x408] sm:%s1755]
                  %2023 = vst [vmem:[%s1763 + $0x204] sm:%s1755] %v2022
                  %v2024 = vld [vmem:[%s1762 + $0x410] sm:%s1755]
                  %2025 = vst [vmem:[%s1763 + $0x208] sm:%s1755] %v2024
                  %v2026 = vld [vmem:[%s1762 + $0x418] sm:%s1755]
                  %2027 = vst [vmem:[%s1763 + $0x20c] sm:%s1755] %v2026
                  %v2028 = vld [vmem:[%s1762 + $0x420] sm:%s1755]
                  %2029 = vst [vmem:[%s1763 + $0x210] sm:%s1755] %v2028
                  %v2030 = vld [vmem:[%s1762 + $0x428] sm:%s1755]
                  %2031 = vst [vmem:[%s1763 + $0x214] sm:%s1755] %v2030
                  %v2032 = vld [vmem:[%s1762 + $0x430] sm:%s1755]
                  %2033 = vst [vmem:[%s1763 + $0x218] sm:%s1755] %v2032
                  %v2034 = vld [vmem:[%s1762 + $0x438] sm:%s1755]
                  %2035 = vst [vmem:[%s1763 + $0x21c] sm:%s1755] %v2034
                  %v2036 = vld [vmem:[%s1762 + $0x440] sm:%s1755]
                  %2037 = vst [vmem:[%s1763 + $0x220] sm:%s1755] %v2036
                  %v2038 = vld [vmem:[%s1762 + $0x448] sm:%s1755]
                  %2039 = vst [vmem:[%s1763 + $0x224] sm:%s1755] %v2038
                  %v2040 = vld [vmem:[%s1762 + $0x450] sm:%s1755]
                  %2041 = vst [vmem:[%s1763 + $0x228] sm:%s1755] %v2040
                  %v2042 = vld [vmem:[%s1762 + $0x458] sm:%s1755]
                  %2043 = vst [vmem:[%s1763 + $0x22c] sm:%s1755] %v2042
                  %v2044 = vld [vmem:[%s1762 + $0x460] sm:%s1755]
                  %2045 = vst [vmem:[%s1763 + $0x230] sm:%s1755] %v2044
                  %v2046 = vld [vmem:[%s1762 + $0x468] sm:%s1755]
                  %2047 = vst [vmem:[%s1763 + $0x234] sm:%s1755] %v2046
                  %v2048 = vld [vmem:[%s1762 + $0x470] sm:%s1755]
                  %2049 = vst [vmem:[%s1763 + $0x238] sm:%s1755] %v2048
                  %v2050 = vld [vmem:[%s1762 + $0x478] sm:%s1755]
                  %2051 = vst [vmem:[%s1763 + $0x23c] sm:%s1755] %v2050
                  %v2052 = vld [vmem:[%s1762 + $0x480] sm:%s1755]
                  %2053 = vst [vmem:[%s1763 + $0x240] sm:%s1755] %v2052
                  %v2054 = vld [vmem:[%s1762 + $0x488] sm:%s1755]
                  %2055 = vst [vmem:[%s1763 + $0x244] sm:%s1755] %v2054
                  %v2056 = vld [vmem:[%s1762 + $0x490] sm:%s1755]
                  %2057 = vst [vmem:[%s1763 + $0x248] sm:%s1755] %v2056
                  %v2058 = vld [vmem:[%s1762 + $0x498] sm:%s1755]
                  %2059 = vst [vmem:[%s1763 + $0x24c] sm:%s1755] %v2058
                  %v2060 = vld [vmem:[%s1762 + $0x4a0] sm:%s1755]
                  %2061 = vst [vmem:[%s1763 + $0x250] sm:%s1755] %v2060
                  %v2062 = vld [vmem:[%s1762 + $0x4a8] sm:%s1755]
                  %2063 = vst [vmem:[%s1763 + $0x254] sm:%s1755] %v2062
                  %v2064 = vld [vmem:[%s1762 + $0x4b0] sm:%s1755]
                  %2065 = vst [vmem:[%s1763 + $0x258] sm:%s1755] %v2064
                  %v2066 = vld [vmem:[%s1762 + $0x4b8] sm:%s1755]
                  %2067 = vst [vmem:[%s1763 + $0x25c] sm:%s1755] %v2066
                  %v2068 = vld [vmem:[%s1762 + $0x4c0] sm:%s1755]
                  %2069 = vst [vmem:[%s1763 + $0x260] sm:%s1755] %v2068
                  %v2070 = vld [vmem:[%s1762 + $0x4c8] sm:%s1755]
                  %2071 = vst [vmem:[%s1763 + $0x264] sm:%s1755] %v2070
                  %v2072 = vld [vmem:[%s1762 + $0x4d0] sm:%s1755]
                  %2073 = vst [vmem:[%s1763 + $0x268] sm:%s1755] %v2072
                  %v2074 = vld [vmem:[%s1762 + $0x4d8] sm:%s1755]
                  %2075 = vst [vmem:[%s1763 + $0x26c] sm:%s1755] %v2074
                  %v2076 = vld [vmem:[%s1762 + $0x4e0] sm:%s1755]
                  %2077 = vst [vmem:[%s1763 + $0x270] sm:%s1755] %v2076
                  %v2078 = vld [vmem:[%s1762 + $0x4e8] sm:%s1755]
                  %2079 = vst [vmem:[%s1763 + $0x274] sm:%s1755] %v2078
                  %v2080 = vld [vmem:[%s1762 + $0x4f0] sm:%s1755]
                  %2081 = vst [vmem:[%s1763 + $0x278] sm:%s1755] %v2080
                  %v2082 = vld [vmem:[%s1762 + $0x4f8] sm:%s1755]
                  %2083 = vst [vmem:[%s1763 + $0x27c] sm:%s1755] %v2082
                  %v2084 = vld [vmem:[%s1762 + $0x500] sm:%s1755]
                  %2085 = vst [vmem:[%s1763 + $0x280] sm:%s1755] %v2084
                  %v2086 = vld [vmem:[%s1762 + $0x508] sm:%s1755]
                  %2087 = vst [vmem:[%s1763 + $0x284] sm:%s1755] %v2086
                  %v2088 = vld [vmem:[%s1762 + $0x510] sm:%s1755]
                  %2089 = vst [vmem:[%s1763 + $0x288] sm:%s1755] %v2088
                  %v2090 = vld [vmem:[%s1762 + $0x518] sm:%s1755]
                  %2091 = vst [vmem:[%s1763 + $0x28c] sm:%s1755] %v2090
                  %v2092 = vld [vmem:[%s1762 + $0x520] sm:%s1755]
                  %2093 = vst [vmem:[%s1763 + $0x290] sm:%s1755] %v2092
                  %v2094 = vld [vmem:[%s1762 + $0x528] sm:%s1755]
                  %2095 = vst [vmem:[%s1763 + $0x294] sm:%s1755] %v2094
                  %v2096 = vld [vmem:[%s1762 + $0x530] sm:%s1755]
                  %2097 = vst [vmem:[%s1763 + $0x298] sm:%s1755] %v2096
                  %v2098 = vld [vmem:[%s1762 + $0x538] sm:%s1755]
                  %2099 = vst [vmem:[%s1763 + $0x29c] sm:%s1755] %v2098
                  %v2100 = vld [vmem:[%s1762 + $0x540] sm:%s1755]
                  %2101 = vst [vmem:[%s1763 + $0x2a0] sm:%s1755] %v2100
                  %v2102 = vld [vmem:[%s1762 + $0x548] sm:%s1755]
                  %2103 = vst [vmem:[%s1763 + $0x2a4] sm:%s1755] %v2102
                  %v2104 = vld [vmem:[%s1762 + $0x550] sm:%s1755]
                  %2105 = vst [vmem:[%s1763 + $0x2a8] sm:%s1755] %v2104
                  %v2106 = vld [vmem:[%s1762 + $0x558] sm:%s1755]
                  %2107 = vst [vmem:[%s1763 + $0x2ac] sm:%s1755] %v2106
                  %v2108 = vld [vmem:[%s1762 + $0x560] sm:%s1755]
                  %2109 = vst [vmem:[%s1763 + $0x2b0] sm:%s1755] %v2108
                  %v2110 = vld [vmem:[%s1762 + $0x568] sm:%s1755]
                  %2111 = vst [vmem:[%s1763 + $0x2b4] sm:%s1755] %v2110
                  %v2112 = vld [vmem:[%s1762 + $0x570] sm:%s1755]
                  %2113 = vst [vmem:[%s1763 + $0x2b8] sm:%s1755] %v2112
                  %v2114 = vld [vmem:[%s1762 + $0x578] sm:%s1755]
                  %2115 = vst [vmem:[%s1763 + $0x2bc] sm:%s1755] %v2114
                  %v2116 = vld [vmem:[%s1762 + $0x580] sm:%s1755]
                  %2117 = vst [vmem:[%s1763 + $0x2c0] sm:%s1755] %v2116
                  %v2118 = vld [vmem:[%s1762 + $0x588] sm:%s1755]
                  %2119 = vst [vmem:[%s1763 + $0x2c4] sm:%s1755] %v2118
                  %v2120 = vld [vmem:[%s1762 + $0x590] sm:%s1755]
                  %2121 = vst [vmem:[%s1763 + $0x2c8] sm:%s1755] %v2120
                  %v2122 = vld [vmem:[%s1762 + $0x598] sm:%s1755]
                  %2123 = vst [vmem:[%s1763 + $0x2cc] sm:%s1755] %v2122
                  %v2124 = vld [vmem:[%s1762 + $0x5a0] sm:%s1755]
                  %2125 = vst [vmem:[%s1763 + $0x2d0] sm:%s1755] %v2124
                  %v2126 = vld [vmem:[%s1762 + $0x5a8] sm:%s1755]
                  %2127 = vst [vmem:[%s1763 + $0x2d4] sm:%s1755] %v2126
                  %v2128 = vld [vmem:[%s1762 + $0x5b0] sm:%s1755]
                  %2129 = vst [vmem:[%s1763 + $0x2d8] sm:%s1755] %v2128
                  %v2130 = vld [vmem:[%s1762 + $0x5b8] sm:%s1755]
                  %2131 = vst [vmem:[%s1763 + $0x2dc] sm:%s1755] %v2130
                  %v2132 = vld [vmem:[%s1762 + $0x5c0] sm:%s1755]
                  %2133 = vst [vmem:[%s1763 + $0x2e0] sm:%s1755] %v2132
                  %v2134 = vld [vmem:[%s1762 + $0x5c8] sm:%s1755]
                  %2135 = vst [vmem:[%s1763 + $0x2e4] sm:%s1755] %v2134
                  %v2136 = vld [vmem:[%s1762 + $0x5d0] sm:%s1755]
                  %2137 = vst [vmem:[%s1763 + $0x2e8] sm:%s1755] %v2136
                  %v2138 = vld [vmem:[%s1762 + $0x5d8] sm:%s1755]
                  %2139 = vst [vmem:[%s1763 + $0x2ec] sm:%s1755] %v2138
                  %v2140 = vld [vmem:[%s1762 + $0x5e0] sm:%s1755]
                  %2141 = vst [vmem:[%s1763 + $0x2f0] sm:%s1755] %v2140
                  %v2142 = vld [vmem:[%s1762 + $0x5e8] sm:%s1755]
                  %2143 = vst [vmem:[%s1763 + $0x2f4] sm:%s1755] %v2142
                  %v2144 = vld [vmem:[%s1762 + $0x5f0] sm:%s1755]
                  %2145 = vst [vmem:[%s1763 + $0x2f8] sm:%s1755] %v2144
                  %v2146 = vld [vmem:[%s1762 + $0x5f8] sm:%s1755]
                  %2147 = vst [vmem:[%s1763 + $0x2fc] sm:%s1755] %v2146
                  %v2148 = vld [vmem:[%s1762 + $0x600] sm:%s1755]
                  %2149 = vst [vmem:[%s1763 + $0x300] sm:%s1755] %v2148
                  %v2150 = vld [vmem:[%s1762 + $0x608] sm:%s1755]
                  %2151 = vst [vmem:[%s1763 + $0x304] sm:%s1755] %v2150
                  %v2152 = vld [vmem:[%s1762 + $0x610] sm:%s1755]
                  %2153 = vst [vmem:[%s1763 + $0x308] sm:%s1755] %v2152
                  %v2154 = vld [vmem:[%s1762 + $0x618] sm:%s1755]
                  %2155 = vst [vmem:[%s1763 + $0x30c] sm:%s1755] %v2154
                  %v2156 = vld [vmem:[%s1762 + $0x620] sm:%s1755]
                  %2157 = vst [vmem:[%s1763 + $0x310] sm:%s1755] %v2156
                  %v2158 = vld [vmem:[%s1762 + $0x628] sm:%s1755]
                  %2159 = vst [vmem:[%s1763 + $0x314] sm:%s1755] %v2158
                  %v2160 = vld [vmem:[%s1762 + $0x630] sm:%s1755]
                  %2161 = vst [vmem:[%s1763 + $0x318] sm:%s1755] %v2160
                  %v2162 = vld [vmem:[%s1762 + $0x638] sm:%s1755]
                  %2163 = vst [vmem:[%s1763 + $0x31c] sm:%s1755] %v2162
                  %v2164 = vld [vmem:[%s1762 + $0x640] sm:%s1755]
                  %2165 = vst [vmem:[%s1763 + $0x320] sm:%s1755] %v2164
                  %v2166 = vld [vmem:[%s1762 + $0x648] sm:%s1755]
                  %2167 = vst [vmem:[%s1763 + $0x324] sm:%s1755] %v2166
                  %v2168 = vld [vmem:[%s1762 + $0x650] sm:%s1755]
                  %2169 = vst [vmem:[%s1763 + $0x328] sm:%s1755] %v2168
                  %v2170 = vld [vmem:[%s1762 + $0x658] sm:%s1755]
                  %2171 = vst [vmem:[%s1763 + $0x32c] sm:%s1755] %v2170
                  %v2172 = vld [vmem:[%s1762 + $0x660] sm:%s1755]
                  %2173 = vst [vmem:[%s1763 + $0x330] sm:%s1755] %v2172
                  %v2174 = vld [vmem:[%s1762 + $0x668] sm:%s1755]
                  %2175 = vst [vmem:[%s1763 + $0x334] sm:%s1755] %v2174
                  %v2176 = vld [vmem:[%s1762 + $0x670] sm:%s1755]
                  %2177 = vst [vmem:[%s1763 + $0x338] sm:%s1755] %v2176
                  %v2178 = vld [vmem:[%s1762 + $0x678] sm:%s1755]
                  %2179 = vst [vmem:[%s1763 + $0x33c] sm:%s1755] %v2178
                  %v2180 = vld [vmem:[%s1762 + $0x680] sm:%s1755]
                  %2181 = vst [vmem:[%s1763 + $0x340] sm:%s1755] %v2180
                  %v2182 = vld [vmem:[%s1762 + $0x688] sm:%s1755]
                  %2183 = vst [vmem:[%s1763 + $0x344] sm:%s1755] %v2182
                  %v2184 = vld [vmem:[%s1762 + $0x690] sm:%s1755]
                  %2185 = vst [vmem:[%s1763 + $0x348] sm:%s1755] %v2184
                  %v2186 = vld [vmem:[%s1762 + $0x698] sm:%s1755]
                  %2187 = vst [vmem:[%s1763 + $0x34c] sm:%s1755] %v2186
                  %v2188 = vld [vmem:[%s1762 + $0x6a0] sm:%s1755]
                  %2189 = vst [vmem:[%s1763 + $0x350] sm:%s1755] %v2188
                  %v2190 = vld [vmem:[%s1762 + $0x6a8] sm:%s1755]
                  %2191 = vst [vmem:[%s1763 + $0x354] sm:%s1755] %v2190
                  %v2192 = vld [vmem:[%s1762 + $0x6b0] sm:%s1755]
                  %2193 = vst [vmem:[%s1763 + $0x358] sm:%s1755] %v2192
                  %v2194 = vld [vmem:[%s1762 + $0x6b8] sm:%s1755]
                  %2195 = vst [vmem:[%s1763 + $0x35c] sm:%s1755] %v2194
                  %v2196 = vld [vmem:[%s1762 + $0x6c0] sm:%s1755]
                  %2197 = vst [vmem:[%s1763 + $0x360] sm:%s1755] %v2196
                  %v2198 = vld [vmem:[%s1762 + $0x6c8] sm:%s1755]
                  %2199 = vst [vmem:[%s1763 + $0x364] sm:%s1755] %v2198
                  %v2200 = vld [vmem:[%s1762 + $0x6d0] sm:%s1755]
                  %2201 = vst [vmem:[%s1763 + $0x368] sm:%s1755] %v2200
                  %v2202 = vld [vmem:[%s1762 + $0x6d8] sm:%s1755]
                  %2203 = vst [vmem:[%s1763 + $0x36c] sm:%s1755] %v2202
                  %v2204 = vld [vmem:[%s1762 + $0x6e0] sm:%s1755]
                  %2205 = vst [vmem:[%s1763 + $0x370] sm:%s1755] %v2204
                  %v2206 = vld [vmem:[%s1762 + $0x6e8] sm:%s1755]
                  %2207 = vst [vmem:[%s1763 + $0x374] sm:%s1755] %v2206
                  %v2208 = vld [vmem:[%s1762 + $0x6f0] sm:%s1755]
                  %2209 = vst [vmem:[%s1763 + $0x378] sm:%s1755] %v2208
                  %v2210 = vld [vmem:[%s1762 + $0x6f8] sm:%s1755]
                  %2211 = vst [vmem:[%s1763 + $0x37c] sm:%s1755] %v2210
                  %v2212 = vld [vmem:[%s1762 + $0x700] sm:%s1755]
                  %2213 = vst [vmem:[%s1763 + $0x380] sm:%s1755] %v2212
                  %v2214 = vld [vmem:[%s1762 + $0x708] sm:%s1755]
                  %2215 = vst [vmem:[%s1763 + $0x384] sm:%s1755] %v2214
                  %v2216 = vld [vmem:[%s1762 + $0x710] sm:%s1755]
                  %2217 = vst [vmem:[%s1763 + $0x388] sm:%s1755] %v2216
                  %v2218 = vld [vmem:[%s1762 + $0x718] sm:%s1755]
                  %2219 = vst [vmem:[%s1763 + $0x38c] sm:%s1755] %v2218
                  %v2220 = vld [vmem:[%s1762 + $0x720] sm:%s1755]
                  %2221 = vst [vmem:[%s1763 + $0x390] sm:%s1755] %v2220
                  %v2222 = vld [vmem:[%s1762 + $0x728] sm:%s1755]
                  %2223 = vst [vmem:[%s1763 + $0x394] sm:%s1755] %v2222
                  %v2224 = vld [vmem:[%s1762 + $0x730] sm:%s1755]
                  %2225 = vst [vmem:[%s1763 + $0x398] sm:%s1755] %v2224
                  %v2226 = vld [vmem:[%s1762 + $0x738] sm:%s1755]
                  %2227 = vst [vmem:[%s1763 + $0x39c] sm:%s1755] %v2226
                  %v2228 = vld [vmem:[%s1762 + $0x740] sm:%s1755]
                  %2229 = vst [vmem:[%s1763 + $0x3a0] sm:%s1755] %v2228
                  %v2230 = vld [vmem:[%s1762 + $0x748] sm:%s1755]
                  %2231 = vst [vmem:[%s1763 + $0x3a4] sm:%s1755] %v2230
                  %v2232 = vld [vmem:[%s1762 + $0x750] sm:%s1755]
                  %2233 = vst [vmem:[%s1763 + $0x3a8] sm:%s1755] %v2232
                  %v2234 = vld [vmem:[%s1762 + $0x758] sm:%s1755]
                  %2235 = vst [vmem:[%s1763 + $0x3ac] sm:%s1755] %v2234
                  %v2236 = vld [vmem:[%s1762 + $0x760] sm:%s1755]
                  %2237 = vst [vmem:[%s1763 + $0x3b0] sm:%s1755] %v2236
                  %v2238 = vld [vmem:[%s1762 + $0x768] sm:%s1755]
                  %2239 = vst [vmem:[%s1763 + $0x3b4] sm:%s1755] %v2238
                  %v2240 = vld [vmem:[%s1762 + $0x770] sm:%s1755]
                  %2241 = vst [vmem:[%s1763 + $0x3b8] sm:%s1755] %v2240
                  %v2242 = vld [vmem:[%s1762 + $0x778] sm:%s1755]
                  %2243 = vst [vmem:[%s1763 + $0x3bc] sm:%s1755] %v2242
                  %v2244 = vld [vmem:[%s1762 + $0x780] sm:%s1755]
                  %2245 = vst [vmem:[%s1763 + $0x3c0] sm:%s1755] %v2244
                  %v2246 = vld [vmem:[%s1762 + $0x788] sm:%s1755]
                  %2247 = vst [vmem:[%s1763 + $0x3c4] sm:%s1755] %v2246
                  %v2248 = vld [vmem:[%s1762 + $0x790] sm:%s1755]
                  %2249 = vst [vmem:[%s1763 + $0x3c8] sm:%s1755] %v2248
                  %v2250 = vld [vmem:[%s1762 + $0x798] sm:%s1755]
                  %2251 = vst [vmem:[%s1763 + $0x3cc] sm:%s1755] %v2250
                  %v2252 = vld [vmem:[%s1762 + $0x7a0] sm:%s1755]
                  %2253 = vst [vmem:[%s1763 + $0x3d0] sm:%s1755] %v2252
                  %v2254 = vld [vmem:[%s1762 + $0x7a8] sm:%s1755]
                  %2255 = vst [vmem:[%s1763 + $0x3d4] sm:%s1755] %v2254
                  %v2256 = vld [vmem:[%s1762 + $0x7b0] sm:%s1755]
                  %2257 = vst [vmem:[%s1763 + $0x3d8] sm:%s1755] %v2256
                  %v2258 = vld [vmem:[%s1762 + $0x7b8] sm:%s1755]
                  %2259 = vst [vmem:[%s1763 + $0x3dc] sm:%s1755] %v2258
                  %v2260 = vld [vmem:[%s1762 + $0x7c0] sm:%s1755]
                  %2261 = vst [vmem:[%s1763 + $0x3e0] sm:%s1755] %v2260
                  %v2262 = vld [vmem:[%s1762 + $0x7c8] sm:%s1755]
                  %2263 = vst [vmem:[%s1763 + $0x3e4] sm:%s1755] %v2262
                  %v2264 = vld [vmem:[%s1762 + $0x7d0] sm:%s1755]
                  %2265 = vst [vmem:[%s1763 + $0x3e8] sm:%s1755] %v2264
                  %v2266 = vld [vmem:[%s1762 + $0x7d8] sm:%s1755]
                  %2267 = vst [vmem:[%s1763 + $0x3ec] sm:%s1755] %v2266
                  %v2268 = vld [vmem:[%s1762 + $0x7e0] sm:%s1755]
                  %2269 = vst [vmem:[%s1763 + $0x3f0] sm:%s1755] %v2268
                  %v2270 = vld [vmem:[%s1762 + $0x7e8] sm:%s1755]
                  %2271 = vst [vmem:[%s1763 + $0x3f4] sm:%s1755] %v2270
                  %v2272 = vld [vmem:[%s1762 + $0x7f0] sm:%s1755]
                  %2273 = vst [vmem:[%s1763 + $0x3f8] sm:%s1755] %v2272
                  %v2274 = vld [vmem:[%s1762 + $0x7f8] sm:%s1755]
                  %2275 = vst [vmem:[%s1763 + $0x3fc] sm:%s1755] %v2274
                $region70: #{discriminator_forward.6} parent=57 // loop_footer
                  %s1761 = sadd.s32 1, %s1757
                $region71: #{discriminator_forward.6} parent=57 // loop_footer_branch
                  %1756 = sbr.rel target = $region67
                $region72: #{discriminator_forward.6} parent=57 // loop_exit
                  _
              $region58: #{discriminator_forward.6} parent=31 // pred_fallthru
                _
            $region32: #{discriminator_forward.6} parent=27 // pred_fallthru
              _
            // Predicated region
            $region33: #{discriminator_forward.6} parent=27 // pred_check
              _
            $region34: #{discriminator_forward.6} parent=27 // pred_check_branch
              %171 = sbr.rel (0) target = $region36
            $region35: #{discriminator_forward.6} parent=27 // pred_region
              %s173 = ssub.s32 16, 1
              loop: start=0, step=1, limit=1
              $region37: #{discriminator_forward.6} parent=35 // loop_pre_header
                _
              $region38: #{discriminator_forward.6} parent=35 // loop_header
                %s175 = sphi 0, %s179
                %p176 = scmp.ge.s32.totalorder %s175, 1
                %s180 = sphi %s165, %s165
                %s181 = sphi %s163, %s163
              $region39: #{discriminator_forward.6} parent=35 // loop_header_branch
                %178 = sbr.rel (%p176) target = $region43
              $region40: #{discriminator_forward.6} parent=35 // loop_body
                %v182 = vld [vmem:[%s180] sm:%s173]
                %183 = vst [vmem:[%s181] sm:%s173] %v182
                %v184 = vld [vmem:[%s180 + $0x8] sm:%s173]
                %185 = vst [vmem:[%s181 + $0x4] sm:%s173] %v184
                %v186 = vld [vmem:[%s180 + $0x10] sm:%s173]
                %187 = vst [vmem:[%s181 + $0x8] sm:%s173] %v186
                %v188 = vld [vmem:[%s180 + $0x18] sm:%s173]
                %189 = vst [vmem:[%s181 + $0xc] sm:%s173] %v188
                %v190 = vld [vmem:[%s180 + $0x20] sm:%s173]
                %191 = vst [vmem:[%s181 + $0x10] sm:%s173] %v190
                %v192 = vld [vmem:[%s180 + $0x28] sm:%s173]
                %193 = vst [vmem:[%s181 + $0x14] sm:%s173] %v192
                %v194 = vld [vmem:[%s180 + $0x30] sm:%s173]
                %195 = vst [vmem:[%s181 + $0x18] sm:%s173] %v194
                %v196 = vld [vmem:[%s180 + $0x38] sm:%s173]
                %197 = vst [vmem:[%s181 + $0x1c] sm:%s173] %v196
                %v198 = vld [vmem:[%s180 + $0x40] sm:%s173]
                %199 = vst [vmem:[%s181 + $0x20] sm:%s173] %v198
                %v200 = vld [vmem:[%s180 + $0x48] sm:%s173]
                %201 = vst [vmem:[%s181 + $0x24] sm:%s173] %v200
                %v202 = vld [vmem:[%s180 + $0x50] sm:%s173]
                %203 = vst [vmem:[%s181 + $0x28] sm:%s173] %v202
                %v204 = vld [vmem:[%s180 + $0x58] sm:%s173]
                %205 = vst [vmem:[%s181 + $0x2c] sm:%s173] %v204
                %v206 = vld [vmem:[%s180 + $0x60] sm:%s173]
                %207 = vst [vmem:[%s181 + $0x30] sm:%s173] %v206
                %v208 = vld [vmem:[%s180 + $0x68] sm:%s173]
                %209 = vst [vmem:[%s181 + $0x34] sm:%s173] %v208
                %v210 = vld [vmem:[%s180 + $0x70] sm:%s173]
                %211 = vst [vmem:[%s181 + $0x38] sm:%s173] %v210
                %v212 = vld [vmem:[%s180 + $0x78] sm:%s173]
                %213 = vst [vmem:[%s181 + $0x3c] sm:%s173] %v212
                %v214 = vld [vmem:[%s180 + $0x80] sm:%s173]
                %215 = vst [vmem:[%s181 + $0x40] sm:%s173] %v214
                %v216 = vld [vmem:[%s180 + $0x88] sm:%s173]
                %217 = vst [vmem:[%s181 + $0x44] sm:%s173] %v216
                %v218 = vld [vmem:[%s180 + $0x90] sm:%s173]
                %219 = vst [vmem:[%s181 + $0x48] sm:%s173] %v218
                %v220 = vld [vmem:[%s180 + $0x98] sm:%s173]
                %221 = vst [vmem:[%s181 + $0x4c] sm:%s173] %v220
                %v222 = vld [vmem:[%s180 + $0xa0] sm:%s173]
                %223 = vst [vmem:[%s181 + $0x50] sm:%s173] %v222
                %v224 = vld [vmem:[%s180 + $0xa8] sm:%s173]
                %225 = vst [vmem:[%s181 + $0x54] sm:%s173] %v224
                %v226 = vld [vmem:[%s180 + $0xb0] sm:%s173]
                %227 = vst [vmem:[%s181 + $0x58] sm:%s173] %v226
                %v228 = vld [vmem:[%s180 + $0xb8] sm:%s173]
                %229 = vst [vmem:[%s181 + $0x5c] sm:%s173] %v228
                %v230 = vld [vmem:[%s180 + $0xc0] sm:%s173]
                %231 = vst [vmem:[%s181 + $0x60] sm:%s173] %v230
                %v232 = vld [vmem:[%s180 + $0xc8] sm:%s173]
                %233 = vst [vmem:[%s181 + $0x64] sm:%s173] %v232
                %v234 = vld [vmem:[%s180 + $0xd0] sm:%s173]
                %235 = vst [vmem:[%s181 + $0x68] sm:%s173] %v234
                %v236 = vld [vmem:[%s180 + $0xd8] sm:%s173]
                %237 = vst [vmem:[%s181 + $0x6c] sm:%s173] %v236
                %v238 = vld [vmem:[%s180 + $0xe0] sm:%s173]
                %239 = vst [vmem:[%s181 + $0x70] sm:%s173] %v238
                %v240 = vld [vmem:[%s180 + $0xe8] sm:%s173]
                %241 = vst [vmem:[%s181 + $0x74] sm:%s173] %v240
                %v242 = vld [vmem:[%s180 + $0xf0] sm:%s173]
                %243 = vst [vmem:[%s181 + $0x78] sm:%s173] %v242
                %v244 = vld [vmem:[%s180 + $0xf8] sm:%s173]
                %245 = vst [vmem:[%s181 + $0x7c] sm:%s173] %v244
                %v246 = vld [vmem:[%s180 + $0x100] sm:%s173]
                %247 = vst [vmem:[%s181 + $0x80] sm:%s173] %v246
                %v248 = vld [vmem:[%s180 + $0x108] sm:%s173]
                %249 = vst [vmem:[%s181 + $0x84] sm:%s173] %v248
                %v250 = vld [vmem:[%s180 + $0x110] sm:%s173]
                %251 = vst [vmem:[%s181 + $0x88] sm:%s173] %v250
                %v252 = vld [vmem:[%s180 + $0x118] sm:%s173]
                %253 = vst [vmem:[%s181 + $0x8c] sm:%s173] %v252
                %v254 = vld [vmem:[%s180 + $0x120] sm:%s173]
                %255 = vst [vmem:[%s181 + $0x90] sm:%s173] %v254
                %v256 = vld [vmem:[%s180 + $0x128] sm:%s173]
                %257 = vst [vmem:[%s181 + $0x94] sm:%s173] %v256
                %v258 = vld [vmem:[%s180 + $0x130] sm:%s173]
                %259 = vst [vmem:[%s181 + $0x98] sm:%s173] %v258
                %v260 = vld [vmem:[%s180 + $0x138] sm:%s173]
                %261 = vst [vmem:[%s181 + $0x9c] sm:%s173] %v260
                %v262 = vld [vmem:[%s180 + $0x140] sm:%s173]
                %263 = vst [vmem:[%s181 + $0xa0] sm:%s173] %v262
                %v264 = vld [vmem:[%s180 + $0x148] sm:%s173]
                %265 = vst [vmem:[%s181 + $0xa4] sm:%s173] %v264
                %v266 = vld [vmem:[%s180 + $0x150] sm:%s173]
                %267 = vst [vmem:[%s181 + $0xa8] sm:%s173] %v266
                %v268 = vld [vmem:[%s180 + $0x158] sm:%s173]
                %269 = vst [vmem:[%s181 + $0xac] sm:%s173] %v268
                %v270 = vld [vmem:[%s180 + $0x160] sm:%s173]
                %271 = vst [vmem:[%s181 + $0xb0] sm:%s173] %v270
                %v272 = vld [vmem:[%s180 + $0x168] sm:%s173]
                %273 = vst [vmem:[%s181 + $0xb4] sm:%s173] %v272
                %v274 = vld [vmem:[%s180 + $0x170] sm:%s173]
                %275 = vst [vmem:[%s181 + $0xb8] sm:%s173] %v274
                %v276 = vld [vmem:[%s180 + $0x178] sm:%s173]
                %277 = vst [vmem:[%s181 + $0xbc] sm:%s173] %v276
                %v278 = vld [vmem:[%s180 + $0x180] sm:%s173]
                %279 = vst [vmem:[%s181 + $0xc0] sm:%s173] %v278
                %v280 = vld [vmem:[%s180 + $0x188] sm:%s173]
                %281 = vst [vmem:[%s181 + $0xc4] sm:%s173] %v280
                %v282 = vld [vmem:[%s180 + $0x190] sm:%s173]
                %283 = vst [vmem:[%s181 + $0xc8] sm:%s173] %v282
                %v284 = vld [vmem:[%s180 + $0x198] sm:%s173]
                %285 = vst [vmem:[%s181 + $0xcc] sm:%s173] %v284
                %v286 = vld [vmem:[%s180 + $0x1a0] sm:%s173]
                %287 = vst [vmem:[%s181 + $0xd0] sm:%s173] %v286
                %v288 = vld [vmem:[%s180 + $0x1a8] sm:%s173]
                %289 = vst [vmem:[%s181 + $0xd4] sm:%s173] %v288
                %v290 = vld [vmem:[%s180 + $0x1b0] sm:%s173]
                %291 = vst [vmem:[%s181 + $0xd8] sm:%s173] %v290
                %v292 = vld [vmem:[%s180 + $0x1b8] sm:%s173]
                %293 = vst [vmem:[%s181 + $0xdc] sm:%s173] %v292
                %v294 = vld [vmem:[%s180 + $0x1c0] sm:%s173]
                %295 = vst [vmem:[%s181 + $0xe0] sm:%s173] %v294
                %v296 = vld [vmem:[%s180 + $0x1c8] sm:%s173]
                %297 = vst [vmem:[%s181 + $0xe4] sm:%s173] %v296
                %v298 = vld [vmem:[%s180 + $0x1d0] sm:%s173]
                %299 = vst [vmem:[%s181 + $0xe8] sm:%s173] %v298
                %v300 = vld [vmem:[%s180 + $0x1d8] sm:%s173]
                %301 = vst [vmem:[%s181 + $0xec] sm:%s173] %v300
                %v302 = vld [vmem:[%s180 + $0x1e0] sm:%s173]
                %303 = vst [vmem:[%s181 + $0xf0] sm:%s173] %v302
                %v304 = vld [vmem:[%s180 + $0x1e8] sm:%s173]
                %305 = vst [vmem:[%s181 + $0xf4] sm:%s173] %v304
                %v306 = vld [vmem:[%s180 + $0x1f0] sm:%s173]
                %307 = vst [vmem:[%s181 + $0xf8] sm:%s173] %v306
                %v308 = vld [vmem:[%s180 + $0x1f8] sm:%s173]
                %309 = vst [vmem:[%s181 + $0xfc] sm:%s173] %v308
                %v310 = vld [vmem:[%s180 + $0x200] sm:%s173]
                %311 = vst [vmem:[%s181 + $0x100] sm:%s173] %v310
                %v312 = vld [vmem:[%s180 + $0x208] sm:%s173]
                %313 = vst [vmem:[%s181 + $0x104] sm:%s173] %v312
                %v314 = vld [vmem:[%s180 + $0x210] sm:%s173]
                %315 = vst [vmem:[%s181 + $0x108] sm:%s173] %v314
                %v316 = vld [vmem:[%s180 + $0x218] sm:%s173]
                %317 = vst [vmem:[%s181 + $0x10c] sm:%s173] %v316
                %v318 = vld [vmem:[%s180 + $0x220] sm:%s173]
                %319 = vst [vmem:[%s181 + $0x110] sm:%s173] %v318
                %v320 = vld [vmem:[%s180 + $0x228] sm:%s173]
                %321 = vst [vmem:[%s181 + $0x114] sm:%s173] %v320
                %v322 = vld [vmem:[%s180 + $0x230] sm:%s173]
                %323 = vst [vmem:[%s181 + $0x118] sm:%s173] %v322
                %v324 = vld [vmem:[%s180 + $0x238] sm:%s173]
                %325 = vst [vmem:[%s181 + $0x11c] sm:%s173] %v324
                %v326 = vld [vmem:[%s180 + $0x240] sm:%s173]
                %327 = vst [vmem:[%s181 + $0x120] sm:%s173] %v326
                %v328 = vld [vmem:[%s180 + $0x248] sm:%s173]
                %329 = vst [vmem:[%s181 + $0x124] sm:%s173] %v328
                %v330 = vld [vmem:[%s180 + $0x250] sm:%s173]
                %331 = vst [vmem:[%s181 + $0x128] sm:%s173] %v330
                %v332 = vld [vmem:[%s180 + $0x258] sm:%s173]
                %333 = vst [vmem:[%s181 + $0x12c] sm:%s173] %v332
                %v334 = vld [vmem:[%s180 + $0x260] sm:%s173]
                %335 = vst [vmem:[%s181 + $0x130] sm:%s173] %v334
                %v336 = vld [vmem:[%s180 + $0x268] sm:%s173]
                %337 = vst [vmem:[%s181 + $0x134] sm:%s173] %v336
                %v338 = vld [vmem:[%s180 + $0x270] sm:%s173]
                %339 = vst [vmem:[%s181 + $0x138] sm:%s173] %v338
                %v340 = vld [vmem:[%s180 + $0x278] sm:%s173]
                %341 = vst [vmem:[%s181 + $0x13c] sm:%s173] %v340
                %v342 = vld [vmem:[%s180 + $0x280] sm:%s173]
                %343 = vst [vmem:[%s181 + $0x140] sm:%s173] %v342
                %v344 = vld [vmem:[%s180 + $0x288] sm:%s173]
                %345 = vst [vmem:[%s181 + $0x144] sm:%s173] %v344
                %v346 = vld [vmem:[%s180 + $0x290] sm:%s173]
                %347 = vst [vmem:[%s181 + $0x148] sm:%s173] %v346
                %v348 = vld [vmem:[%s180 + $0x298] sm:%s173]
                %349 = vst [vmem:[%s181 + $0x14c] sm:%s173] %v348
                %v350 = vld [vmem:[%s180 + $0x2a0] sm:%s173]
                %351 = vst [vmem:[%s181 + $0x150] sm:%s173] %v350
                %v352 = vld [vmem:[%s180 + $0x2a8] sm:%s173]
                %353 = vst [vmem:[%s181 + $0x154] sm:%s173] %v352
                %v354 = vld [vmem:[%s180 + $0x2b0] sm:%s173]
                %355 = vst [vmem:[%s181 + $0x158] sm:%s173] %v354
                %v356 = vld [vmem:[%s180 + $0x2b8] sm:%s173]
                %357 = vst [vmem:[%s181 + $0x15c] sm:%s173] %v356
                %v358 = vld [vmem:[%s180 + $0x2c0] sm:%s173]
                %359 = vst [vmem:[%s181 + $0x160] sm:%s173] %v358
                %v360 = vld [vmem:[%s180 + $0x2c8] sm:%s173]
                %361 = vst [vmem:[%s181 + $0x164] sm:%s173] %v360
                %v362 = vld [vmem:[%s180 + $0x2d0] sm:%s173]
                %363 = vst [vmem:[%s181 + $0x168] sm:%s173] %v362
                %v364 = vld [vmem:[%s180 + $0x2d8] sm:%s173]
                %365 = vst [vmem:[%s181 + $0x16c] sm:%s173] %v364
                %v366 = vld [vmem:[%s180 + $0x2e0] sm:%s173]
                %367 = vst [vmem:[%s181 + $0x170] sm:%s173] %v366
                %v368 = vld [vmem:[%s180 + $0x2e8] sm:%s173]
                %369 = vst [vmem:[%s181 + $0x174] sm:%s173] %v368
                %v370 = vld [vmem:[%s180 + $0x2f0] sm:%s173]
                %371 = vst [vmem:[%s181 + $0x178] sm:%s173] %v370
                %v372 = vld [vmem:[%s180 + $0x2f8] sm:%s173]
                %373 = vst [vmem:[%s181 + $0x17c] sm:%s173] %v372
                %v374 = vld [vmem:[%s180 + $0x300] sm:%s173]
                %375 = vst [vmem:[%s181 + $0x180] sm:%s173] %v374
                %v376 = vld [vmem:[%s180 + $0x308] sm:%s173]
                %377 = vst [vmem:[%s181 + $0x184] sm:%s173] %v376
                %v378 = vld [vmem:[%s180 + $0x310] sm:%s173]
                %379 = vst [vmem:[%s181 + $0x188] sm:%s173] %v378
                %v380 = vld [vmem:[%s180 + $0x318] sm:%s173]
                %381 = vst [vmem:[%s181 + $0x18c] sm:%s173] %v380
                %v382 = vld [vmem:[%s180 + $0x320] sm:%s173]
                %383 = vst [vmem:[%s181 + $0x190] sm:%s173] %v382
                %v384 = vld [vmem:[%s180 + $0x328] sm:%s173]
                %385 = vst [vmem:[%s181 + $0x194] sm:%s173] %v384
                %v386 = vld [vmem:[%s180 + $0x330] sm:%s173]
                %387 = vst [vmem:[%s181 + $0x198] sm:%s173] %v386
                %v388 = vld [vmem:[%s180 + $0x338] sm:%s173]
                %389 = vst [vmem:[%s181 + $0x19c] sm:%s173] %v388
                %v390 = vld [vmem:[%s180 + $0x340] sm:%s173]
                %391 = vst [vmem:[%s181 + $0x1a0] sm:%s173] %v390
                %v392 = vld [vmem:[%s180 + $0x348] sm:%s173]
                %393 = vst [vmem:[%s181 + $0x1a4] sm:%s173] %v392
                %v394 = vld [vmem:[%s180 + $0x350] sm:%s173]
                %395 = vst [vmem:[%s181 + $0x1a8] sm:%s173] %v394
                %v396 = vld [vmem:[%s180 + $0x358] sm:%s173]
                %397 = vst [vmem:[%s181 + $0x1ac] sm:%s173] %v396
                %v398 = vld [vmem:[%s180 + $0x360] sm:%s173]
                %399 = vst [vmem:[%s181 + $0x1b0] sm:%s173] %v398
                %v400 = vld [vmem:[%s180 + $0x368] sm:%s173]
                %401 = vst [vmem:[%s181 + $0x1b4] sm:%s173] %v400
                %v402 = vld [vmem:[%s180 + $0x370] sm:%s173]
                %403 = vst [vmem:[%s181 + $0x1b8] sm:%s173] %v402
                %v404 = vld [vmem:[%s180 + $0x378] sm:%s173]
                %405 = vst [vmem:[%s181 + $0x1bc] sm:%s173] %v404
                %v406 = vld [vmem:[%s180 + $0x380] sm:%s173]
                %407 = vst [vmem:[%s181 + $0x1c0] sm:%s173] %v406
                %v408 = vld [vmem:[%s180 + $0x388] sm:%s173]
                %409 = vst [vmem:[%s181 + $0x1c4] sm:%s173] %v408
                %v410 = vld [vmem:[%s180 + $0x390] sm:%s173]
                %411 = vst [vmem:[%s181 + $0x1c8] sm:%s173] %v410
                %v412 = vld [vmem:[%s180 + $0x398] sm:%s173]
                %413 = vst [vmem:[%s181 + $0x1cc] sm:%s173] %v412
                %v414 = vld [vmem:[%s180 + $0x3a0] sm:%s173]
                %415 = vst [vmem:[%s181 + $0x1d0] sm:%s173] %v414
                %v416 = vld [vmem:[%s180 + $0x3a8] sm:%s173]
                %417 = vst [vmem:[%s181 + $0x1d4] sm:%s173] %v416
                %v418 = vld [vmem:[%s180 + $0x3b0] sm:%s173]
                %419 = vst [vmem:[%s181 + $0x1d8] sm:%s173] %v418
                %v420 = vld [vmem:[%s180 + $0x3b8] sm:%s173]
                %421 = vst [vmem:[%s181 + $0x1dc] sm:%s173] %v420
                %v422 = vld [vmem:[%s180 + $0x3c0] sm:%s173]
                %423 = vst [vmem:[%s181 + $0x1e0] sm:%s173] %v422
                %v424 = vld [vmem:[%s180 + $0x3c8] sm:%s173]
                %425 = vst [vmem:[%s181 + $0x1e4] sm:%s173] %v424
                %v426 = vld [vmem:[%s180 + $0x3d0] sm:%s173]
                %427 = vst [vmem:[%s181 + $0x1e8] sm:%s173] %v426
                %v428 = vld [vmem:[%s180 + $0x3d8] sm:%s173]
                %429 = vst [vmem:[%s181 + $0x1ec] sm:%s173] %v428
                %v430 = vld [vmem:[%s180 + $0x3e0] sm:%s173]
                %431 = vst [vmem:[%s181 + $0x1f0] sm:%s173] %v430
                %v432 = vld [vmem:[%s180 + $0x3e8] sm:%s173]
                %433 = vst [vmem:[%s181 + $0x1f4] sm:%s173] %v432
                %v434 = vld [vmem:[%s180 + $0x3f0] sm:%s173]
                %435 = vst [vmem:[%s181 + $0x1f8] sm:%s173] %v434
                %v436 = vld [vmem:[%s180 + $0x3f8] sm:%s173]
                %437 = vst [vmem:[%s181 + $0x1fc] sm:%s173] %v436
                %v438 = vld [vmem:[%s180 + $0x400] sm:%s173]
                %439 = vst [vmem:[%s181 + $0x200] sm:%s173] %v438
                %v440 = vld [vmem:[%s180 + $0x408] sm:%s173]
                %441 = vst [vmem:[%s181 + $0x204] sm:%s173] %v440
                %v442 = vld [vmem:[%s180 + $0x410] sm:%s173]
                %443 = vst [vmem:[%s181 + $0x208] sm:%s173] %v442
                %v444 = vld [vmem:[%s180 + $0x418] sm:%s173]
                %445 = vst [vmem:[%s181 + $0x20c] sm:%s173] %v444
                %v446 = vld [vmem:[%s180 + $0x420] sm:%s173]
                %447 = vst [vmem:[%s181 + $0x210] sm:%s173] %v446
                %v448 = vld [vmem:[%s180 + $0x428] sm:%s173]
                %449 = vst [vmem:[%s181 + $0x214] sm:%s173] %v448
                %v450 = vld [vmem:[%s180 + $0x430] sm:%s173]
                %451 = vst [vmem:[%s181 + $0x218] sm:%s173] %v450
                %v452 = vld [vmem:[%s180 + $0x438] sm:%s173]
                %453 = vst [vmem:[%s181 + $0x21c] sm:%s173] %v452
                %v454 = vld [vmem:[%s180 + $0x440] sm:%s173]
                %455 = vst [vmem:[%s181 + $0x220] sm:%s173] %v454
                %v456 = vld [vmem:[%s180 + $0x448] sm:%s173]
                %457 = vst [vmem:[%s181 + $0x224] sm:%s173] %v456
                %v458 = vld [vmem:[%s180 + $0x450] sm:%s173]
                %459 = vst [vmem:[%s181 + $0x228] sm:%s173] %v458
                %v460 = vld [vmem:[%s180 + $0x458] sm:%s173]
                %461 = vst [vmem:[%s181 + $0x22c] sm:%s173] %v460
                %v462 = vld [vmem:[%s180 + $0x460] sm:%s173]
                %463 = vst [vmem:[%s181 + $0x230] sm:%s173] %v462
                %v464 = vld [vmem:[%s180 + $0x468] sm:%s173]
                %465 = vst [vmem:[%s181 + $0x234] sm:%s173] %v464
                %v466 = vld [vmem:[%s180 + $0x470] sm:%s173]
                %467 = vst [vmem:[%s181 + $0x238] sm:%s173] %v466
                %v468 = vld [vmem:[%s180 + $0x478] sm:%s173]
                %469 = vst [vmem:[%s181 + $0x23c] sm:%s173] %v468
                %v470 = vld [vmem:[%s180 + $0x480] sm:%s173]
                %471 = vst [vmem:[%s181 + $0x240] sm:%s173] %v470
                %v472 = vld [vmem:[%s180 + $0x488] sm:%s173]
                %473 = vst [vmem:[%s181 + $0x244] sm:%s173] %v472
                %v474 = vld [vmem:[%s180 + $0x490] sm:%s173]
                %475 = vst [vmem:[%s181 + $0x248] sm:%s173] %v474
                %v476 = vld [vmem:[%s180 + $0x498] sm:%s173]
                %477 = vst [vmem:[%s181 + $0x24c] sm:%s173] %v476
                %v478 = vld [vmem:[%s180 + $0x4a0] sm:%s173]
                %479 = vst [vmem:[%s181 + $0x250] sm:%s173] %v478
                %v480 = vld [vmem:[%s180 + $0x4a8] sm:%s173]
                %481 = vst [vmem:[%s181 + $0x254] sm:%s173] %v480
                %v482 = vld [vmem:[%s180 + $0x4b0] sm:%s173]
                %483 = vst [vmem:[%s181 + $0x258] sm:%s173] %v482
                %v484 = vld [vmem:[%s180 + $0x4b8] sm:%s173]
                %485 = vst [vmem:[%s181 + $0x25c] sm:%s173] %v484
                %v486 = vld [vmem:[%s180 + $0x4c0] sm:%s173]
                %487 = vst [vmem:[%s181 + $0x260] sm:%s173] %v486
                %v488 = vld [vmem:[%s180 + $0x4c8] sm:%s173]
                %489 = vst [vmem:[%s181 + $0x264] sm:%s173] %v488
                %v490 = vld [vmem:[%s180 + $0x4d0] sm:%s173]
                %491 = vst [vmem:[%s181 + $0x268] sm:%s173] %v490
                %v492 = vld [vmem:[%s180 + $0x4d8] sm:%s173]
                %493 = vst [vmem:[%s181 + $0x26c] sm:%s173] %v492
                %v494 = vld [vmem:[%s180 + $0x4e0] sm:%s173]
                %495 = vst [vmem:[%s181 + $0x270] sm:%s173] %v494
                %v496 = vld [vmem:[%s180 + $0x4e8] sm:%s173]
                %497 = vst [vmem:[%s181 + $0x274] sm:%s173] %v496
                %v498 = vld [vmem:[%s180 + $0x4f0] sm:%s173]
                %499 = vst [vmem:[%s181 + $0x278] sm:%s173] %v498
                %v500 = vld [vmem:[%s180 + $0x4f8] sm:%s173]
                %501 = vst [vmem:[%s181 + $0x27c] sm:%s173] %v500
                %v502 = vld [vmem:[%s180 + $0x500] sm:%s173]
                %503 = vst [vmem:[%s181 + $0x280] sm:%s173] %v502
                %v504 = vld [vmem:[%s180 + $0x508] sm:%s173]
                %505 = vst [vmem:[%s181 + $0x284] sm:%s173] %v504
                %v506 = vld [vmem:[%s180 + $0x510] sm:%s173]
                %507 = vst [vmem:[%s181 + $0x288] sm:%s173] %v506
                %v508 = vld [vmem:[%s180 + $0x518] sm:%s173]
                %509 = vst [vmem:[%s181 + $0x28c] sm:%s173] %v508
                %v510 = vld [vmem:[%s180 + $0x520] sm:%s173]
                %511 = vst [vmem:[%s181 + $0x290] sm:%s173] %v510
                %v512 = vld [vmem:[%s180 + $0x528] sm:%s173]
                %513 = vst [vmem:[%s181 + $0x294] sm:%s173] %v512
                %v514 = vld [vmem:[%s180 + $0x530] sm:%s173]
                %515 = vst [vmem:[%s181 + $0x298] sm:%s173] %v514
                %v516 = vld [vmem:[%s180 + $0x538] sm:%s173]
                %517 = vst [vmem:[%s181 + $0x29c] sm:%s173] %v516
                %v518 = vld [vmem:[%s180 + $0x540] sm:%s173]
                %519 = vst [vmem:[%s181 + $0x2a0] sm:%s173] %v518
                %v520 = vld [vmem:[%s180 + $0x548] sm:%s173]
                %521 = vst [vmem:[%s181 + $0x2a4] sm:%s173] %v520
                %v522 = vld [vmem:[%s180 + $0x550] sm:%s173]
                %523 = vst [vmem:[%s181 + $0x2a8] sm:%s173] %v522
                %v524 = vld [vmem:[%s180 + $0x558] sm:%s173]
                %525 = vst [vmem:[%s181 + $0x2ac] sm:%s173] %v524
                %v526 = vld [vmem:[%s180 + $0x560] sm:%s173]
                %527 = vst [vmem:[%s181 + $0x2b0] sm:%s173] %v526
                %v528 = vld [vmem:[%s180 + $0x568] sm:%s173]
                %529 = vst [vmem:[%s181 + $0x2b4] sm:%s173] %v528
                %v530 = vld [vmem:[%s180 + $0x570] sm:%s173]
                %531 = vst [vmem:[%s181 + $0x2b8] sm:%s173] %v530
                %v532 = vld [vmem:[%s180 + $0x578] sm:%s173]
                %533 = vst [vmem:[%s181 + $0x2bc] sm:%s173] %v532
                %v534 = vld [vmem:[%s180 + $0x580] sm:%s173]
                %535 = vst [vmem:[%s181 + $0x2c0] sm:%s173] %v534
                %v536 = vld [vmem:[%s180 + $0x588] sm:%s173]
                %537 = vst [vmem:[%s181 + $0x2c4] sm:%s173] %v536
                %v538 = vld [vmem:[%s180 + $0x590] sm:%s173]
                %539 = vst [vmem:[%s181 + $0x2c8] sm:%s173] %v538
                %v540 = vld [vmem:[%s180 + $0x598] sm:%s173]
                %541 = vst [vmem:[%s181 + $0x2cc] sm:%s173] %v540
                %v542 = vld [vmem:[%s180 + $0x5a0] sm:%s173]
                %543 = vst [vmem:[%s181 + $0x2d0] sm:%s173] %v542
                %v544 = vld [vmem:[%s180 + $0x5a8] sm:%s173]
                %545 = vst [vmem:[%s181 + $0x2d4] sm:%s173] %v544
                %v546 = vld [vmem:[%s180 + $0x5b0] sm:%s173]
                %547 = vst [vmem:[%s181 + $0x2d8] sm:%s173] %v546
                %v548 = vld [vmem:[%s180 + $0x5b8] sm:%s173]
                %549 = vst [vmem:[%s181 + $0x2dc] sm:%s173] %v548
                %v550 = vld [vmem:[%s180 + $0x5c0] sm:%s173]
                %551 = vst [vmem:[%s181 + $0x2e0] sm:%s173] %v550
                %v552 = vld [vmem:[%s180 + $0x5c8] sm:%s173]
                %553 = vst [vmem:[%s181 + $0x2e4] sm:%s173] %v552
                %v554 = vld [vmem:[%s180 + $0x5d0] sm:%s173]
                %555 = vst [vmem:[%s181 + $0x2e8] sm:%s173] %v554
                %v556 = vld [vmem:[%s180 + $0x5d8] sm:%s173]
                %557 = vst [vmem:[%s181 + $0x2ec] sm:%s173] %v556
                %v558 = vld [vmem:[%s180 + $0x5e0] sm:%s173]
                %559 = vst [vmem:[%s181 + $0x2f0] sm:%s173] %v558
                %v560 = vld [vmem:[%s180 + $0x5e8] sm:%s173]
                %561 = vst [vmem:[%s181 + $0x2f4] sm:%s173] %v560
                %v562 = vld [vmem:[%s180 + $0x5f0] sm:%s173]
                %563 = vst [vmem:[%s181 + $0x2f8] sm:%s173] %v562
                %v564 = vld [vmem:[%s180 + $0x5f8] sm:%s173]
                %565 = vst [vmem:[%s181 + $0x2fc] sm:%s173] %v564
                %v566 = vld [vmem:[%s180 + $0x600] sm:%s173]
                %567 = vst [vmem:[%s181 + $0x300] sm:%s173] %v566
                %v568 = vld [vmem:[%s180 + $0x608] sm:%s173]
                %569 = vst [vmem:[%s181 + $0x304] sm:%s173] %v568
                %v570 = vld [vmem:[%s180 + $0x610] sm:%s173]
                %571 = vst [vmem:[%s181 + $0x308] sm:%s173] %v570
                %v572 = vld [vmem:[%s180 + $0x618] sm:%s173]
                %573 = vst [vmem:[%s181 + $0x30c] sm:%s173] %v572
                %v574 = vld [vmem:[%s180 + $0x620] sm:%s173]
                %575 = vst [vmem:[%s181 + $0x310] sm:%s173] %v574
                %v576 = vld [vmem:[%s180 + $0x628] sm:%s173]
                %577 = vst [vmem:[%s181 + $0x314] sm:%s173] %v576
                %v578 = vld [vmem:[%s180 + $0x630] sm:%s173]
                %579 = vst [vmem:[%s181 + $0x318] sm:%s173] %v578
                %v580 = vld [vmem:[%s180 + $0x638] sm:%s173]
                %581 = vst [vmem:[%s181 + $0x31c] sm:%s173] %v580
                %v582 = vld [vmem:[%s180 + $0x640] sm:%s173]
                %583 = vst [vmem:[%s181 + $0x320] sm:%s173] %v582
                %v584 = vld [vmem:[%s180 + $0x648] sm:%s173]
                %585 = vst [vmem:[%s181 + $0x324] sm:%s173] %v584
                %v586 = vld [vmem:[%s180 + $0x650] sm:%s173]
                %587 = vst [vmem:[%s181 + $0x328] sm:%s173] %v586
                %v588 = vld [vmem:[%s180 + $0x658] sm:%s173]
                %589 = vst [vmem:[%s181 + $0x32c] sm:%s173] %v588
                %v590 = vld [vmem:[%s180 + $0x660] sm:%s173]
                %591 = vst [vmem:[%s181 + $0x330] sm:%s173] %v590
                %v592 = vld [vmem:[%s180 + $0x668] sm:%s173]
                %593 = vst [vmem:[%s181 + $0x334] sm:%s173] %v592
                %v594 = vld [vmem:[%s180 + $0x670] sm:%s173]
                %595 = vst [vmem:[%s181 + $0x338] sm:%s173] %v594
                %v596 = vld [vmem:[%s180 + $0x678] sm:%s173]
                %597 = vst [vmem:[%s181 + $0x33c] sm:%s173] %v596
                %v598 = vld [vmem:[%s180 + $0x680] sm:%s173]
                %599 = vst [vmem:[%s181 + $0x340] sm:%s173] %v598
                %v600 = vld [vmem:[%s180 + $0x688] sm:%s173]
                %601 = vst [vmem:[%s181 + $0x344] sm:%s173] %v600
                %v602 = vld [vmem:[%s180 + $0x690] sm:%s173]
                %603 = vst [vmem:[%s181 + $0x348] sm:%s173] %v602
                %v604 = vld [vmem:[%s180 + $0x698] sm:%s173]
                %605 = vst [vmem:[%s181 + $0x34c] sm:%s173] %v604
                %v606 = vld [vmem:[%s180 + $0x6a0] sm:%s173]
                %607 = vst [vmem:[%s181 + $0x350] sm:%s173] %v606
                %v608 = vld [vmem:[%s180 + $0x6a8] sm:%s173]
                %609 = vst [vmem:[%s181 + $0x354] sm:%s173] %v608
                %v610 = vld [vmem:[%s180 + $0x6b0] sm:%s173]
                %611 = vst [vmem:[%s181 + $0x358] sm:%s173] %v610
                %v612 = vld [vmem:[%s180 + $0x6b8] sm:%s173]
                %613 = vst [vmem:[%s181 + $0x35c] sm:%s173] %v612
                %v614 = vld [vmem:[%s180 + $0x6c0] sm:%s173]
                %615 = vst [vmem:[%s181 + $0x360] sm:%s173] %v614
                %v616 = vld [vmem:[%s180 + $0x6c8] sm:%s173]
                %617 = vst [vmem:[%s181 + $0x364] sm:%s173] %v616
                %v618 = vld [vmem:[%s180 + $0x6d0] sm:%s173]
                %619 = vst [vmem:[%s181 + $0x368] sm:%s173] %v618
                %v620 = vld [vmem:[%s180 + $0x6d8] sm:%s173]
                %621 = vst [vmem:[%s181 + $0x36c] sm:%s173] %v620
                %v622 = vld [vmem:[%s180 + $0x6e0] sm:%s173]
                %623 = vst [vmem:[%s181 + $0x370] sm:%s173] %v622
                %v624 = vld [vmem:[%s180 + $0x6e8] sm:%s173]
                %625 = vst [vmem:[%s181 + $0x374] sm:%s173] %v624
                %v626 = vld [vmem:[%s180 + $0x6f0] sm:%s173]
                %627 = vst [vmem:[%s181 + $0x378] sm:%s173] %v626
                %v628 = vld [vmem:[%s180 + $0x6f8] sm:%s173]
                %629 = vst [vmem:[%s181 + $0x37c] sm:%s173] %v628
                %v630 = vld [vmem:[%s180 + $0x700] sm:%s173]
                %631 = vst [vmem:[%s181 + $0x380] sm:%s173] %v630
                %v632 = vld [vmem:[%s180 + $0x708] sm:%s173]
                %633 = vst [vmem:[%s181 + $0x384] sm:%s173] %v632
                %v634 = vld [vmem:[%s180 + $0x710] sm:%s173]
                %635 = vst [vmem:[%s181 + $0x388] sm:%s173] %v634
                %v636 = vld [vmem:[%s180 + $0x718] sm:%s173]
                %637 = vst [vmem:[%s181 + $0x38c] sm:%s173] %v636
                %v638 = vld [vmem:[%s180 + $0x720] sm:%s173]
                %639 = vst [vmem:[%s181 + $0x390] sm:%s173] %v638
                %v640 = vld [vmem:[%s180 + $0x728] sm:%s173]
                %641 = vst [vmem:[%s181 + $0x394] sm:%s173] %v640
                %v642 = vld [vmem:[%s180 + $0x730] sm:%s173]
                %643 = vst [vmem:[%s181 + $0x398] sm:%s173] %v642
                %v644 = vld [vmem:[%s180 + $0x738] sm:%s173]
                %645 = vst [vmem:[%s181 + $0x39c] sm:%s173] %v644
                %v646 = vld [vmem:[%s180 + $0x740] sm:%s173]
                %647 = vst [vmem:[%s181 + $0x3a0] sm:%s173] %v646
                %v648 = vld [vmem:[%s180 + $0x748] sm:%s173]
                %649 = vst [vmem:[%s181 + $0x3a4] sm:%s173] %v648
                %v650 = vld [vmem:[%s180 + $0x750] sm:%s173]
                %651 = vst [vmem:[%s181 + $0x3a8] sm:%s173] %v650
                %v652 = vld [vmem:[%s180 + $0x758] sm:%s173]
                %653 = vst [vmem:[%s181 + $0x3ac] sm:%s173] %v652
                %v654 = vld [vmem:[%s180 + $0x760] sm:%s173]
                %655 = vst [vmem:[%s181 + $0x3b0] sm:%s173] %v654
                %v656 = vld [vmem:[%s180 + $0x768] sm:%s173]
                %657 = vst [vmem:[%s181 + $0x3b4] sm:%s173] %v656
                %v658 = vld [vmem:[%s180 + $0x770] sm:%s173]
                %659 = vst [vmem:[%s181 + $0x3b8] sm:%s173] %v658
                %v660 = vld [vmem:[%s180 + $0x778] sm:%s173]
                %661 = vst [vmem:[%s181 + $0x3bc] sm:%s173] %v660
                %v662 = vld [vmem:[%s180 + $0x780] sm:%s173]
                %663 = vst [vmem:[%s181 + $0x3c0] sm:%s173] %v662
                %v664 = vld [vmem:[%s180 + $0x788] sm:%s173]
                %665 = vst [vmem:[%s181 + $0x3c4] sm:%s173] %v664
                %v666 = vld [vmem:[%s180 + $0x790] sm:%s173]
                %667 = vst [vmem:[%s181 + $0x3c8] sm:%s173] %v666
                %v668 = vld [vmem:[%s180 + $0x798] sm:%s173]
                %669 = vst [vmem:[%s181 + $0x3cc] sm:%s173] %v668
                %v670 = vld [vmem:[%s180 + $0x7a0] sm:%s173]
                %671 = vst [vmem:[%s181 + $0x3d0] sm:%s173] %v670
                %v672 = vld [vmem:[%s180 + $0x7a8] sm:%s173]
                %673 = vst [vmem:[%s181 + $0x3d4] sm:%s173] %v672
                %v674 = vld [vmem:[%s180 + $0x7b0] sm:%s173]
                %675 = vst [vmem:[%s181 + $0x3d8] sm:%s173] %v674
                %v676 = vld [vmem:[%s180 + $0x7b8] sm:%s173]
                %677 = vst [vmem:[%s181 + $0x3dc] sm:%s173] %v676
                %v678 = vld [vmem:[%s180 + $0x7c0] sm:%s173]
                %679 = vst [vmem:[%s181 + $0x3e0] sm:%s173] %v678
                %v680 = vld [vmem:[%s180 + $0x7c8] sm:%s173]
                %681 = vst [vmem:[%s181 + $0x3e4] sm:%s173] %v680
                %v682 = vld [vmem:[%s180 + $0x7d0] sm:%s173]
                %683 = vst [vmem:[%s181 + $0x3e8] sm:%s173] %v682
                %v684 = vld [vmem:[%s180 + $0x7d8] sm:%s173]
                %685 = vst [vmem:[%s181 + $0x3ec] sm:%s173] %v684
                %v686 = vld [vmem:[%s180 + $0x7e0] sm:%s173]
                %687 = vst [vmem:[%s181 + $0x3f0] sm:%s173] %v686
                %v688 = vld [vmem:[%s180 + $0x7e8] sm:%s173]
                %689 = vst [vmem:[%s181 + $0x3f4] sm:%s173] %v688
                %v690 = vld [vmem:[%s180 + $0x7f0] sm:%s173]
                %691 = vst [vmem:[%s181 + $0x3f8] sm:%s173] %v690
                %v692 = vld [vmem:[%s180 + $0x7f8] sm:%s173]
                %693 = vst [vmem:[%s181 + $0x3fc] sm:%s173] %v692
              $region41: #{discriminator_forward.6} parent=35 // loop_footer
                %s179 = sadd.s32 1, %s175
              $region42: #{discriminator_forward.6} parent=35 // loop_footer_branch
                %174 = sbr.rel target = $region38
              $region43: #{discriminator_forward.6} parent=35 // loop_exit
                _
            $region36: #{discriminator_forward.6} parent=27 // pred_fallthru
              _
          $region28: #{discriminator_forward.6} parent=23 // pred_fallthru
            _
          %2276 = vnop
        $region24: #{discriminator_forward.6} parent=19 // pred_fallthru
          _
        // Predicated region
        $region73: #{discriminator_forward.6} parent=19 // pred_check
          %p2277 = pneg %p77
        $region74: #{discriminator_forward.6} parent=19 // pred_check_branch
          %2279 = sbr.rel (%p2277) target = $region76
        $region75: #{discriminator_forward.6} parent=19 // pred_region
          %p2280 = scmp.lt.s32.totalorder %s10, 1
          %s2281 = scalar_select %p2280, %s10, 1
          %s2282 = scalar_lea.vmem %s2, %s2281
        $region76: #{discriminator_forward.6} parent=19 // pred_fallthru
          _
        // Predicated region
        $region77: #{discriminator_forward.6} parent=19 // pred_check
          %p2283 = pneg %p103
        $region78: #{discriminator_forward.6} parent=19 // pred_check_branch
          %2285 = sbr.rel (%p2283) target = $region80
        $region79: #{discriminator_forward.6} parent=19 // pred_region
          %p2286 = scmp.lt.s32.totalorder %s10, 1
          %s2287 = scalar_select %p2286, %s10, 1
          %s2288 = scalar_lea.vmem %s3, %s2287
        $region80: #{discriminator_forward.6} parent=19 // pred_fallthru
          _
      $region20: #{discriminator_forward.6} parent=5 // pred_fallthru
        _
      %p2289 = scmp.le.s32.totalorder 1, %s10
      %p2290 = scmp.lt.s32.totalorder %s10, 3
      %p2291 = pnand %p2289, %p2290
      %p2292 = pneg %p2291
      // Predicated region
      $region81: #{discriminator_forward.6} parent=5 // pred_check
        _
      $region82: #{discriminator_forward.6} parent=5 // pred_check_branch
        %2294 = sbr.rel (%p2291) target = $region84
      $region83: #{discriminator_forward.6} parent=5 // pred_region
        %s2295 = ssub.s32 %s10, 1
        %s2296 = sand.u32 %s44, 1
        %s2297 = sand.u32 %s44, 1
        %s2298 = smul.addr %s2297, 1024
        %s2299 = scalar_lea.vmem [#allocation2], %s2298
        // Predicated region
        $region85: #{discriminator_forward.6} parent=83 // pred_check
          %p2300 = pneg %p57
        $region86: #{discriminator_forward.6} parent=83 // pred_check_branch
          %2302 = sbr.rel (%p2300) target = $region88
        $region87: #{discriminator_forward.6} parent=83 // pred_region
          _
        $region88: #{discriminator_forward.6} parent=83 // pred_fallthru
          _
        %p2303 = pneg %p31
        %p2304 = pneg %p28
        %s2305 = sand.u32 %s44, 1
        %s2306 = sand.u32 %s44, 1
        %s2307 = smul.addr %s2306, 1024
        %s2308 = scalar_lea.vmem [#allocation2], %s2307
        %p2309 = pneg %p57
        %p2310 = pneg %p54
        %p2311 = scmp.lt.s32.totalorder %s15, 1
        %s2312 = scalar_select %p2311, %s15, 1
        %s2313 = scalar_lea.vmem %s2, %s2312
        %p2314 = pneg %p83
        %p2315 = pneg %p80
        %p2316 = scmp.lt.s32.totalorder %s15, 1
        %s2317 = scalar_select %p2316, %s15, 1
        %s2318 = scalar_lea.vmem %s3, %s2317
        %p2319 = pneg %p109
        %p2320 = pneg %p106
        %p2321 = pneg %p135
        %p2322 = pneg %p132
        %s2323 = sand.u32 %s122, 1
        %s2324 = sand.u32 %s122, 1
        %s2325 = smul.addr %s2324, 16
        %s2326 = scalar_lea.vmem [#allocation3], %s2325
        %p2327 = scmp.lt.s32.totalorder %s15, 1
        %s2328 = scalar_select %p2327, %s15, 1
        %s2329 = scalar_lea.vmem %s2, %s2328
        %p2330 = scmp.lt.s32.totalorder %s15, 1
        %s2331 = scalar_select %p2330, %s15, 1
        %s2332 = scalar_lea.vmem %s3, %s2331
        %v2333 = vld [vmem:[%s0] sm:$0xff]
        %v2334 = vld [vmem:[%s0 + $0x8] sm:$0xff]
        %v2335 = vld [vmem:[%s0 + $0x10] sm:$0xff]
        %v2336 = vld [vmem:[%s0 + $0x18] sm:$0xff]
        %v2337 = vld [vmem:[%s0 + $0x20] sm:$0xff]
        %v2338 = vld [vmem:[%s0 + $0x28] sm:$0xff]
        %v2339 = vld [vmem:[%s0 + $0x30] sm:$0xff]
        %v2340 = vld [vmem:[%s0 + $0x38] sm:$0xff]
        %v2341 = vld [vmem:[%s0 + $0x40] sm:$0xff]
        %v2342 = vld [vmem:[%s0 + $0x48] sm:$0xff]
        %v2343 = vld [vmem:[%s0 + $0x50] sm:$0xff]
        %v2344 = vld [vmem:[%s0 + $0x58] sm:$0xff]
        %v2345 = vld [vmem:[%s0 + $0x60] sm:$0xff]
        %v2346 = vld [vmem:[%s0 + $0x68] sm:$0xff]
        %v2347 = vld [vmem:[%s0 + $0x70] sm:$0xff]
        %v2348 = vld [vmem:[%s0 + $0x78] sm:$0xff]
        %v2349 = vld [vmem:[%s0 + $0x80] sm:$0xff]
        %v2350 = vld [vmem:[%s0 + $0x88] sm:$0xff]
        %v2351 = vld [vmem:[%s0 + $0x90] sm:$0xff]
        %v2352 = vld [vmem:[%s0 + $0x98] sm:$0xff]
        %v2353 = vld [vmem:[%s0 + $0xa0] sm:$0xff]
        %v2354 = vld [vmem:[%s0 + $0xa8] sm:$0xff]
        %v2355 = vld [vmem:[%s0 + $0xb0] sm:$0xff]
        %v2356 = vld [vmem:[%s0 + $0xb8] sm:$0xff]
        %v2357 = vld [vmem:[%s0 + $0xc0] sm:$0xff]
        %v2358 = vld [vmem:[%s0 + $0xc8] sm:$0xff]
        %v2359 = vld [vmem:[%s0 + $0xd0] sm:$0xff]
        %v2360 = vld [vmem:[%s0 + $0xd8] sm:$0xff]
        %v2361 = vld [vmem:[%s0 + $0xe0] sm:$0xff]
        %v2362 = vld [vmem:[%s0 + $0xe8] sm:$0xff]
        %v2363 = vld [vmem:[%s0 + $0xf0] sm:$0xff]
        %v2364 = vld [vmem:[%s0 + $0xf8] sm:$0xff]
        %v2365 = vld [vmem:[%s2299] sm:$0xf]
        %v2366 = vld [vmem:[%s2299 + $0x4] sm:$0xf]
        %v2367 = vld [vmem:[%s2299 + $0x8] sm:$0xf]
        %v2368 = vld [vmem:[%s2299 + $0xc] sm:$0xf]
        %v2369 = vld [vmem:[%s2299 + $0x10] sm:$0xf]
        %v2370 = vld [vmem:[%s2299 + $0x14] sm:$0xf]
        %v2371 = vld [vmem:[%s2299 + $0x18] sm:$0xf]
        %v2372 = vld [vmem:[%s2299 + $0x1c] sm:$0xf]
        %v2373 = vld [vmem:[%s2299 + $0x20] sm:$0xf]
        %v2374 = vld [vmem:[%s2299 + $0x24] sm:$0xf]
        %v2375 = vld [vmem:[%s2299 + $0x28] sm:$0xf]
        %v2376 = vld [vmem:[%s2299 + $0x2c] sm:$0xf]
        %v2377 = vld [vmem:[%s2299 + $0x30] sm:$0xf]
        %v2378 = vld [vmem:[%s2299 + $0x34] sm:$0xf]
        %v2379 = vld [vmem:[%s2299 + $0x38] sm:$0xf]
        %v2380 = vld [vmem:[%s2299 + $0x3c] sm:$0xf]
        %v2381 = vld [vmem:[%s2299 + $0x40] sm:$0xf]
        %v2382 = vld [vmem:[%s2299 + $0x44] sm:$0xf]
        %v2383 = vld [vmem:[%s2299 + $0x48] sm:$0xf]
        %v2384 = vld [vmem:[%s2299 + $0x4c] sm:$0xf]
        %v2385 = vld [vmem:[%s2299 + $0x50] sm:$0xf]
        %v2386 = vld [vmem:[%s2299 + $0x54] sm:$0xf]
        %v2387 = vld [vmem:[%s2299 + $0x58] sm:$0xf]
        %v2388 = vld [vmem:[%s2299 + $0x5c] sm:$0xf]
        %v2389 = vld [vmem:[%s2299 + $0x60] sm:$0xf]
        %v2390 = vld [vmem:[%s2299 + $0x64] sm:$0xf]
        %v2391 = vld [vmem:[%s2299 + $0x68] sm:$0xf]
        %v2392 = vld [vmem:[%s2299 + $0x6c] sm:$0xf]
        %v2393 = vld [vmem:[%s2299 + $0x70] sm:$0xf]
        %v2394 = vld [vmem:[%s2299 + $0x74] sm:$0xf]
        %v2395 = vld [vmem:[%s2299 + $0x78] sm:$0xf]
        %v2396 = vld [vmem:[%s2299 + $0x7c] sm:$0xf]
        %v2397 = vld [vmem:[%s2299 + $0x80] sm:$0xf]
        %v2398 = vld [vmem:[%s2299 + $0x84] sm:$0xf]
        %v2399 = vld [vmem:[%s2299 + $0x88] sm:$0xf]
        %v2400 = vld [vmem:[%s2299 + $0x8c] sm:$0xf]
        %v2401 = vld [vmem:[%s2299 + $0x90] sm:$0xf]
        %v2402 = vld [vmem:[%s2299 + $0x94] sm:$0xf]
        %v2403 = vld [vmem:[%s2299 + $0x98] sm:$0xf]
        %v2404 = vld [vmem:[%s2299 + $0x9c] sm:$0xf]
        %v2405 = vld [vmem:[%s2299 + $0xa0] sm:$0xf]
        %v2406 = vld [vmem:[%s2299 + $0xa4] sm:$0xf]
        %v2407 = vld [vmem:[%s2299 + $0xa8] sm:$0xf]
        %v2408 = vld [vmem:[%s2299 + $0xac] sm:$0xf]
        %v2409 = vld [vmem:[%s2299 + $0xb0] sm:$0xf]
        %v2410 = vld [vmem:[%s2299 + $0xb4] sm:$0xf]
        %v2411 = vld [vmem:[%s2299 + $0xb8] sm:$0xf]
        %v2412 = vld [vmem:[%s2299 + $0xbc] sm:$0xf]
        %v2413 = vld [vmem:[%s2299 + $0xc0] sm:$0xf]
        %v2414 = vld [vmem:[%s2299 + $0xc4] sm:$0xf]
        %v2415 = vld [vmem:[%s2299 + $0xc8] sm:$0xf]
        %v2416 = vld [vmem:[%s2299 + $0xcc] sm:$0xf]
        %v2417 = vld [vmem:[%s2299 + $0xd0] sm:$0xf]
        %v2418 = vld [vmem:[%s2299 + $0xd4] sm:$0xf]
        %v2419 = vld [vmem:[%s2299 + $0xd8] sm:$0xf]
        %v2420 = vld [vmem:[%s2299 + $0xdc] sm:$0xf]
        %v2421 = vld [vmem:[%s2299 + $0xe0] sm:$0xf]
        %v2422 = vld [vmem:[%s2299 + $0xe4] sm:$0xf]
        %v2423 = vld [vmem:[%s2299 + $0xe8] sm:$0xf]
        %v2424 = vld [vmem:[%s2299 + $0xec] sm:$0xf]
        %v2425 = vld [vmem:[%s2299 + $0xf0] sm:$0xf]
        %v2426 = vld [vmem:[%s2299 + $0xf4] sm:$0xf]
        %v2427 = vld [vmem:[%s2299 + $0xf8] sm:$0xf]
        %v2428 = vld [vmem:[%s2299 + $0xfc] sm:$0xf]
        %v2429 = vld [vmem:[%s2299 + $0x100] sm:$0xf]
        %v2430 = vld [vmem:[%s2299 + $0x104] sm:$0xf]
        %v2431 = vld [vmem:[%s2299 + $0x108] sm:$0xf]
        %v2432 = vld [vmem:[%s2299 + $0x10c] sm:$0xf]
        %v2433 = vld [vmem:[%s2299 + $0x110] sm:$0xf]
        %v2434 = vld [vmem:[%s2299 + $0x114] sm:$0xf]
        %v2435 = vld [vmem:[%s2299 + $0x118] sm:$0xf]
        %v2436 = vld [vmem:[%s2299 + $0x11c] sm:$0xf]
        %v2437 = vld [vmem:[%s2299 + $0x120] sm:$0xf]
        %v2438 = vld [vmem:[%s2299 + $0x124] sm:$0xf]
        %v2439 = vld [vmem:[%s2299 + $0x128] sm:$0xf]
        %v2440 = vld [vmem:[%s2299 + $0x12c] sm:$0xf]
        %v2441 = vld [vmem:[%s2299 + $0x130] sm:$0xf]
        %v2442 = vld [vmem:[%s2299 + $0x134] sm:$0xf]
        %v2443 = vld [vmem:[%s2299 + $0x138] sm:$0xf]
        %v2444 = vld [vmem:[%s2299 + $0x13c] sm:$0xf]
        %v2445 = vld [vmem:[%s2299 + $0x140] sm:$0xf]
        %v2446 = vld [vmem:[%s2299 + $0x144] sm:$0xf]
        %v2447 = vld [vmem:[%s2299 + $0x148] sm:$0xf]
        %v2448 = vld [vmem:[%s2299 + $0x14c] sm:$0xf]
        %v2449 = vld [vmem:[%s2299 + $0x150] sm:$0xf]
        %v2450 = vld [vmem:[%s2299 + $0x154] sm:$0xf]
        %v2451 = vld [vmem:[%s2299 + $0x158] sm:$0xf]
        %v2452 = vld [vmem:[%s2299 + $0x15c] sm:$0xf]
        %v2453 = vld [vmem:[%s2299 + $0x160] sm:$0xf]
        %v2454 = vld [vmem:[%s2299 + $0x164] sm:$0xf]
        %v2455 = vld [vmem:[%s2299 + $0x168] sm:$0xf]
        %v2456 = vld [vmem:[%s2299 + $0x16c] sm:$0xf]
        %v2457 = vld [vmem:[%s2299 + $0x170] sm:$0xf]
        %v2458 = vld [vmem:[%s2299 + $0x174] sm:$0xf]
        %v2459 = vld [vmem:[%s2299 + $0x178] sm:$0xf]
        %v2460 = vld [vmem:[%s2299 + $0x17c] sm:$0xf]
        %v2461 = vld [vmem:[%s2299 + $0x180] sm:$0xf]
        %v2462 = vld [vmem:[%s2299 + $0x184] sm:$0xf]
        %v2463 = vld [vmem:[%s2299 + $0x188] sm:$0xf]
        %v2464 = vld [vmem:[%s2299 + $0x18c] sm:$0xf]
        %v2465 = vld [vmem:[%s2299 + $0x190] sm:$0xf]
        %v2466 = vld [vmem:[%s2299 + $0x194] sm:$0xf]
        %v2467 = vld [vmem:[%s2299 + $0x198] sm:$0xf]
        %v2468 = vld [vmem:[%s2299 + $0x19c] sm:$0xf]
        %v2469 = vld [vmem:[%s2299 + $0x1a0] sm:$0xf]
        %v2470 = vld [vmem:[%s2299 + $0x1a4] sm:$0xf]
        %v2471 = vld [vmem:[%s2299 + $0x1a8] sm:$0xf]
        %v2472 = vld [vmem:[%s2299 + $0x1ac] sm:$0xf]
        %v2473 = vld [vmem:[%s2299 + $0x1b0] sm:$0xf]
        %v2474 = vld [vmem:[%s2299 + $0x1b4] sm:$0xf]
        %v2475 = vld [vmem:[%s2299 + $0x1b8] sm:$0xf]
        %v2476 = vld [vmem:[%s2299 + $0x1bc] sm:$0xf]
        %v2477 = vld [vmem:[%s2299 + $0x1c0] sm:$0xf]
        %v2478 = vld [vmem:[%s2299 + $0x1c4] sm:$0xf]
        %v2479 = vld [vmem:[%s2299 + $0x1c8] sm:$0xf]
        %v2480 = vld [vmem:[%s2299 + $0x1cc] sm:$0xf]
        %v2481 = vld [vmem:[%s2299 + $0x1d0] sm:$0xf]
        %v2482 = vld [vmem:[%s2299 + $0x1d4] sm:$0xf]
        %v2483 = vld [vmem:[%s2299 + $0x1d8] sm:$0xf]
        %v2484 = vld [vmem:[%s2299 + $0x1dc] sm:$0xf]
        %v2485 = vld [vmem:[%s2299 + $0x1e0] sm:$0xf]
        %v2486 = vld [vmem:[%s2299 + $0x1e4] sm:$0xf]
        %v2487 = vld [vmem:[%s2299 + $0x1e8] sm:$0xf]
        %v2488 = vld [vmem:[%s2299 + $0x1ec] sm:$0xf]
        %v2489 = vld [vmem:[%s2299 + $0x1f0] sm:$0xf]
        %v2490 = vld [vmem:[%s2299 + $0x1f4] sm:$0xf]
        %v2491 = vld [vmem:[%s2299 + $0x1f8] sm:$0xf]
        %v2492 = vld [vmem:[%s2299 + $0x1fc] sm:$0xf]
        %v2493 = vld [vmem:[%s2299 + $0x200] sm:$0xf]
        %v2494 = vld [vmem:[%s2299 + $0x204] sm:$0xf]
        %v2495 = vld [vmem:[%s2299 + $0x208] sm:$0xf]
        %v2496 = vld [vmem:[%s2299 + $0x20c] sm:$0xf]
        %v2497 = vld [vmem:[%s2299 + $0x210] sm:$0xf]
        %v2498 = vld [vmem:[%s2299 + $0x214] sm:$0xf]
        %v2499 = vld [vmem:[%s2299 + $0x218] sm:$0xf]
        %v2500 = vld [vmem:[%s2299 + $0x21c] sm:$0xf]
        %v2501 = vld [vmem:[%s2299 + $0x220] sm:$0xf]
        %v2502 = vld [vmem:[%s2299 + $0x224] sm:$0xf]
        %v2503 = vld [vmem:[%s2299 + $0x228] sm:$0xf]
        %v2504 = vld [vmem:[%s2299 + $0x22c] sm:$0xf]
        %v2505 = vld [vmem:[%s2299 + $0x230] sm:$0xf]
        %v2506 = vld [vmem:[%s2299 + $0x234] sm:$0xf]
        %v2507 = vld [vmem:[%s2299 + $0x238] sm:$0xf]
        %v2508 = vld [vmem:[%s2299 + $0x23c] sm:$0xf]
        %v2509 = vld [vmem:[%s2299 + $0x240] sm:$0xf]
        %v2510 = vld [vmem:[%s2299 + $0x244] sm:$0xf]
        %v2511 = vld [vmem:[%s2299 + $0x248] sm:$0xf]
        %v2512 = vld [vmem:[%s2299 + $0x24c] sm:$0xf]
        %v2513 = vld [vmem:[%s2299 + $0x250] sm:$0xf]
        %v2514 = vld [vmem:[%s2299 + $0x254] sm:$0xf]
        %v2515 = vld [vmem:[%s2299 + $0x258] sm:$0xf]
        %v2516 = vld [vmem:[%s2299 + $0x25c] sm:$0xf]
        %v2517 = vld [vmem:[%s2299 + $0x260] sm:$0xf]
        %v2518 = vld [vmem:[%s2299 + $0x264] sm:$0xf]
        %v2519 = vld [vmem:[%s2299 + $0x268] sm:$0xf]
        %v2520 = vld [vmem:[%s2299 + $0x26c] sm:$0xf]
        %v2521 = vld [vmem:[%s2299 + $0x270] sm:$0xf]
        %v2522 = vld [vmem:[%s2299 + $0x274] sm:$0xf]
        %v2523 = vld [vmem:[%s2299 + $0x278] sm:$0xf]
        %v2524 = vld [vmem:[%s2299 + $0x27c] sm:$0xf]
        %v2525 = vld [vmem:[%s2299 + $0x280] sm:$0xf]
        %v2526 = vld [vmem:[%s2299 + $0x284] sm:$0xf]
        %v2527 = vld [vmem:[%s2299 + $0x288] sm:$0xf]
        %v2528 = vld [vmem:[%s2299 + $0x28c] sm:$0xf]
        %v2529 = vld [vmem:[%s2299 + $0x290] sm:$0xf]
        %v2530 = vld [vmem:[%s2299 + $0x294] sm:$0xf]
        %v2531 = vld [vmem:[%s2299 + $0x298] sm:$0xf]
        %v2532 = vld [vmem:[%s2299 + $0x29c] sm:$0xf]
        %v2533 = vld [vmem:[%s2299 + $0x2a0] sm:$0xf]
        %v2534 = vld [vmem:[%s2299 + $0x2a4] sm:$0xf]
        %v2535 = vld [vmem:[%s2299 + $0x2a8] sm:$0xf]
        %v2536 = vld [vmem:[%s2299 + $0x2ac] sm:$0xf]
        %v2537 = vld [vmem:[%s2299 + $0x2b0] sm:$0xf]
        %v2538 = vld [vmem:[%s2299 + $0x2b4] sm:$0xf]
        %v2539 = vld [vmem:[%s2299 + $0x2b8] sm:$0xf]
        %v2540 = vld [vmem:[%s2299 + $0x2bc] sm:$0xf]
        %v2541 = vld [vmem:[%s2299 + $0x2c0] sm:$0xf]
        %v2542 = vld [vmem:[%s2299 + $0x2c4] sm:$0xf]
        %v2543 = vld [vmem:[%s2299 + $0x2c8] sm:$0xf]
        %v2544 = vld [vmem:[%s2299 + $0x2cc] sm:$0xf]
        %v2545 = vld [vmem:[%s2299 + $0x2d0] sm:$0xf]
        %v2546 = vld [vmem:[%s2299 + $0x2d4] sm:$0xf]
        %v2547 = vld [vmem:[%s2299 + $0x2d8] sm:$0xf]
        %v2548 = vld [vmem:[%s2299 + $0x2dc] sm:$0xf]
        %v2549 = vld [vmem:[%s2299 + $0x2e0] sm:$0xf]
        %v2550 = vld [vmem:[%s2299 + $0x2e4] sm:$0xf]
        %v2551 = vld [vmem:[%s2299 + $0x2e8] sm:$0xf]
        %v2552 = vld [vmem:[%s2299 + $0x2ec] sm:$0xf]
        %v2553 = vld [vmem:[%s2299 + $0x2f0] sm:$0xf]
        %v2554 = vld [vmem:[%s2299 + $0x2f4] sm:$0xf]
        %v2555 = vld [vmem:[%s2299 + $0x2f8] sm:$0xf]
        %v2556 = vld [vmem:[%s2299 + $0x2fc] sm:$0xf]
        %v2557 = vld [vmem:[%s2299 + $0x300] sm:$0xf]
        %v2558 = vld [vmem:[%s2299 + $0x304] sm:$0xf]
        %v2559 = vld [vmem:[%s2299 + $0x308] sm:$0xf]
        %v2560 = vld [vmem:[%s2299 + $0x30c] sm:$0xf]
        %v2561 = vld [vmem:[%s2299 + $0x310] sm:$0xf]
        %v2562 = vld [vmem:[%s2299 + $0x314] sm:$0xf]
        %v2563 = vld [vmem:[%s2299 + $0x318] sm:$0xf]
        %v2564 = vld [vmem:[%s2299 + $0x31c] sm:$0xf]
        %v2565 = vld [vmem:[%s2299 + $0x320] sm:$0xf]
        %v2566 = vld [vmem:[%s2299 + $0x324] sm:$0xf]
        %v2567 = vld [vmem:[%s2299 + $0x328] sm:$0xf]
        %v2568 = vld [vmem:[%s2299 + $0x32c] sm:$0xf]
        %v2569 = vld [vmem:[%s2299 + $0x330] sm:$0xf]
        %v2570 = vld [vmem:[%s2299 + $0x334] sm:$0xf]
        %v2571 = vld [vmem:[%s2299 + $0x338] sm:$0xf]
        %v2572 = vld [vmem:[%s2299 + $0x33c] sm:$0xf]
        %v2573 = vld [vmem:[%s2299 + $0x340] sm:$0xf]
        %v2574 = vld [vmem:[%s2299 + $0x344] sm:$0xf]
        %v2575 = vld [vmem:[%s2299 + $0x348] sm:$0xf]
        %v2576 = vld [vmem:[%s2299 + $0x34c] sm:$0xf]
        %v2577 = vld [vmem:[%s2299 + $0x350] sm:$0xf]
        %v2578 = vld [vmem:[%s2299 + $0x354] sm:$0xf]
        %v2579 = vld [vmem:[%s2299 + $0x358] sm:$0xf]
        %v2580 = vld [vmem:[%s2299 + $0x35c] sm:$0xf]
        %v2581 = vld [vmem:[%s2299 + $0x360] sm:$0xf]
        %v2582 = vld [vmem:[%s2299 + $0x364] sm:$0xf]
        %v2583 = vld [vmem:[%s2299 + $0x368] sm:$0xf]
        %v2584 = vld [vmem:[%s2299 + $0x36c] sm:$0xf]
        %v2585 = vld [vmem:[%s2299 + $0x370] sm:$0xf]
        %v2586 = vld [vmem:[%s2299 + $0x374] sm:$0xf]
        %v2587 = vld [vmem:[%s2299 + $0x378] sm:$0xf]
        %v2588 = vld [vmem:[%s2299 + $0x37c] sm:$0xf]
        %v2589 = vld [vmem:[%s2299 + $0x380] sm:$0xf]
        %v2590 = vld [vmem:[%s2299 + $0x384] sm:$0xf]
        %v2591 = vld [vmem:[%s2299 + $0x388] sm:$0xf]
        %v2592 = vld [vmem:[%s2299 + $0x38c] sm:$0xf]
        %v2593 = vld [vmem:[%s2299 + $0x390] sm:$0xf]
        %v2594 = vld [vmem:[%s2299 + $0x394] sm:$0xf]
        %v2595 = vld [vmem:[%s2299 + $0x398] sm:$0xf]
        %v2596 = vld [vmem:[%s2299 + $0x39c] sm:$0xf]
        %v2597 = vld [vmem:[%s2299 + $0x3a0] sm:$0xf]
        %v2598 = vld [vmem:[%s2299 + $0x3a4] sm:$0xf]
        %v2599 = vld [vmem:[%s2299 + $0x3a8] sm:$0xf]
        %v2600 = vld [vmem:[%s2299 + $0x3ac] sm:$0xf]
        %v2601 = vld [vmem:[%s2299 + $0x3b0] sm:$0xf]
        %v2602 = vld [vmem:[%s2299 + $0x3b4] sm:$0xf]
        %v2603 = vld [vmem:[%s2299 + $0x3b8] sm:$0xf]
        %v2604 = vld [vmem:[%s2299 + $0x3bc] sm:$0xf]
        %v2605 = vld [vmem:[%s2299 + $0x3c0] sm:$0xf]
        %v2606 = vld [vmem:[%s2299 + $0x3c4] sm:$0xf]
        %v2607 = vld [vmem:[%s2299 + $0x3c8] sm:$0xf]
        %v2608 = vld [vmem:[%s2299 + $0x3cc] sm:$0xf]
        %v2609 = vld [vmem:[%s2299 + $0x3d0] sm:$0xf]
        %v2610 = vld [vmem:[%s2299 + $0x3d4] sm:$0xf]
        %v2611 = vld [vmem:[%s2299 + $0x3d8] sm:$0xf]
        %v2612 = vld [vmem:[%s2299 + $0x3dc] sm:$0xf]
        %v2613 = vld [vmem:[%s2299 + $0x3e0] sm:$0xf]
        %v2614 = vld [vmem:[%s2299 + $0x3e4] sm:$0xf]
        %v2615 = vld [vmem:[%s2299 + $0x3e8] sm:$0xf]
        %v2616 = vld [vmem:[%s2299 + $0x3ec] sm:$0xf]
        %v2617 = vld [vmem:[%s2299 + $0x3f0] sm:$0xf]
        %v2618 = vld [vmem:[%s2299 + $0x3f4] sm:$0xf]
        %v2619 = vld [vmem:[%s2299 + $0x3f8] sm:$0xf]
        %v2620 = vld [vmem:[%s2299 + $0x3fc] sm:$0xf]
        %v2653 = vunpack.c.l.b16 %v2333
        %v2654 = vunpack.c.h.b16 %v2333
        %v2655 = vunpack.c.l.b16 %v2334
        %v2656 = vunpack.c.h.b16 %v2334
        %v2657 = vunpack.c.l.b16 %v2335
        %v2658 = vunpack.c.h.b16 %v2335
        %v2659 = vunpack.c.l.b16 %v2336
        %v2660 = vunpack.c.h.b16 %v2336
        %v2661 = vunpack.c.l.b16 %v2337
        %v2662 = vunpack.c.h.b16 %v2337
        %v2663 = vunpack.c.l.b16 %v2338
        %v2664 = vunpack.c.h.b16 %v2338
        %v2665 = vunpack.c.l.b16 %v2339
        %v2666 = vunpack.c.h.b16 %v2339
        %v2667 = vunpack.c.l.b16 %v2340
        %v2668 = vunpack.c.h.b16 %v2340
        %v2669 = vunpack.c.l.b16 %v2341
        %v2670 = vunpack.c.h.b16 %v2341
        %v2671 = vunpack.c.l.b16 %v2342
        %v2672 = vunpack.c.h.b16 %v2342
        %v2673 = vunpack.c.l.b16 %v2343
        %v2674 = vunpack.c.h.b16 %v2343
        %v2675 = vunpack.c.l.b16 %v2344
        %v2676 = vunpack.c.h.b16 %v2344
        %v2677 = vunpack.c.l.b16 %v2345
        %v2678 = vunpack.c.h.b16 %v2345
        %v2679 = vunpack.c.l.b16 %v2346
        %v2680 = vunpack.c.h.b16 %v2346
        %v2681 = vunpack.c.l.b16 %v2347
        %v2682 = vunpack.c.h.b16 %v2347
        %v2683 = vunpack.c.l.b16 %v2348
        %v2684 = vunpack.c.h.b16 %v2348
        %v2685 = vunpack.c.l.b16 %v2349
        %v2686 = vunpack.c.h.b16 %v2349
        %v2687 = vunpack.c.l.b16 %v2350
        %v2688 = vunpack.c.h.b16 %v2350
        %v2689 = vunpack.c.l.b16 %v2351
        %v2690 = vunpack.c.h.b16 %v2351
        %v2691 = vunpack.c.l.b16 %v2352
        %v2692 = vunpack.c.h.b16 %v2352
        %v2693 = vunpack.c.l.b16 %v2353
        %v2694 = vunpack.c.h.b16 %v2353
        %v2695 = vunpack.c.l.b16 %v2354
        %v2696 = vunpack.c.h.b16 %v2354
        %v2697 = vunpack.c.l.b16 %v2355
        %v2698 = vunpack.c.h.b16 %v2355
        %v2699 = vunpack.c.l.b16 %v2356
        %v2700 = vunpack.c.h.b16 %v2356
        %v2701 = vunpack.c.l.b16 %v2357
        %v2702 = vunpack.c.h.b16 %v2357
        %v2703 = vunpack.c.l.b16 %v2358
        %v2704 = vunpack.c.h.b16 %v2358
        %v2705 = vunpack.c.l.b16 %v2359
        %v2706 = vunpack.c.h.b16 %v2359
        %v2707 = vunpack.c.l.b16 %v2360
        %v2708 = vunpack.c.h.b16 %v2360
        %v2709 = vunpack.c.l.b16 %v2361
        %v2710 = vunpack.c.h.b16 %v2361
        %v2711 = vunpack.c.l.b16 %v2362
        %v2712 = vunpack.c.h.b16 %v2362
        %v2713 = vunpack.c.l.b16 %v2363
        %v2714 = vunpack.c.h.b16 %v2363
        %v2715 = vunpack.c.l.b16 %v2364
        %v2716 = vunpack.c.h.b16 %v2364
        %v2717 = vpack.c.b16 %v2669, %v2653
        %v2718 = vpack.c.b16 %v2670, %v2654
        %v2719 = vpack.c.b16 %v2671, %v2655
        %v2720 = vpack.c.b16 %v2672, %v2656
        %v2721 = vpack.c.b16 %v2673, %v2657
        %v2722 = vpack.c.b16 %v2674, %v2658
        %v2723 = vpack.c.b16 %v2675, %v2659
        %v2724 = vpack.c.b16 %v2676, %v2660
        %v2725 = vpack.c.b16 %v2677, %v2661
        %v2726 = vpack.c.b16 %v2678, %v2662
        %v2727 = vpack.c.b16 %v2679, %v2663
        %v2728 = vpack.c.b16 %v2680, %v2664
        %v2729 = vpack.c.b16 %v2681, %v2665
        %v2730 = vpack.c.b16 %v2682, %v2666
        %v2731 = vpack.c.b16 %v2683, %v2667
        %v2732 = vpack.c.b16 %v2684, %v2668
        %v2733 = vpack.c.b16 %v2701, %v2685
        %v2734 = vpack.c.b16 %v2702, %v2686
        %v2735 = vpack.c.b16 %v2703, %v2687
        %v2736 = vpack.c.b16 %v2704, %v2688
        %v2737 = vpack.c.b16 %v2705, %v2689
        %v2738 = vpack.c.b16 %v2706, %v2690
        %v2739 = vpack.c.b16 %v2707, %v2691
        %v2740 = vpack.c.b16 %v2708, %v2692
        %v2741 = vpack.c.b16 %v2709, %v2693
        %v2742 = vpack.c.b16 %v2710, %v2694
        %v2743 = vpack.c.b16 %v2711, %v2695
        %v2744 = vpack.c.b16 %v2712, %v2696
        %v2745 = vpack.c.b16 %v2713, %v2697
        %v2746 = vpack.c.b16 %v2714, %v2698
        %v2747 = vpack.c.b16 %v2715, %v2699
        %v2748 = vpack.c.b16 %v2716, %v2700
        %v3037 = vunpack.c.l.b16 %v2365
        %v3038 = vunpack.c.l.b16 %v2366
        %v3039 = vunpack.c.l.b16 %v2367
        %v3040 = vunpack.c.l.b16 %v2368
        %v3041 = vunpack.c.l.b16 %v2369
        %v3042 = vunpack.c.l.b16 %v2370
        %v3043 = vunpack.c.l.b16 %v2371
        %v3044 = vunpack.c.l.b16 %v2372
        %v3045 = vunpack.c.l.b16 %v2373
        %v3046 = vunpack.c.l.b16 %v2374
        %v3047 = vunpack.c.l.b16 %v2375
        %v3048 = vunpack.c.l.b16 %v2376
        %v3049 = vunpack.c.l.b16 %v2377
        %v3050 = vunpack.c.l.b16 %v2378
        %v3051 = vunpack.c.l.b16 %v2379
        %v3052 = vunpack.c.l.b16 %v2380
        %v3053 = vunpack.c.l.b16 %v2381
        %v3054 = vunpack.c.l.b16 %v2382
        %v3055 = vunpack.c.l.b16 %v2383
        %v3056 = vunpack.c.l.b16 %v2384
        %v3057 = vunpack.c.l.b16 %v2385
        %v3058 = vunpack.c.l.b16 %v2386
        %v3059 = vunpack.c.l.b16 %v2387
        %v3060 = vunpack.c.l.b16 %v2388
        %v3061 = vunpack.c.l.b16 %v2389
        %v3062 = vunpack.c.l.b16 %v2390
        %v3063 = vunpack.c.l.b16 %v2391
        %v3064 = vunpack.c.l.b16 %v2392
        %v3065 = vunpack.c.l.b16 %v2393
        %v3066 = vunpack.c.l.b16 %v2394
        %v3067 = vunpack.c.l.b16 %v2395
        %v3068 = vunpack.c.l.b16 %v2396
        %v3069 = vunpack.c.l.b16 %v2397
        %v3070 = vunpack.c.l.b16 %v2398
        %v3071 = vunpack.c.l.b16 %v2399
        %v3072 = vunpack.c.l.b16 %v2400
        %v3073 = vunpack.c.l.b16 %v2401
        %v3074 = vunpack.c.l.b16 %v2402
        %v3075 = vunpack.c.l.b16 %v2403
        %v3076 = vunpack.c.l.b16 %v2404
        %v3077 = vunpack.c.l.b16 %v2405
        %v3078 = vunpack.c.l.b16 %v2406
        %v3079 = vunpack.c.l.b16 %v2407
        %v3080 = vunpack.c.l.b16 %v2408
        %v3081 = vunpack.c.l.b16 %v2409
        %v3082 = vunpack.c.l.b16 %v2410
        %v3083 = vunpack.c.l.b16 %v2411
        %v3084 = vunpack.c.l.b16 %v2412
        %v3085 = vunpack.c.l.b16 %v2413
        %v3086 = vunpack.c.l.b16 %v2414
        %v3087 = vunpack.c.l.b16 %v2415
        %v3088 = vunpack.c.l.b16 %v2416
        %v3089 = vunpack.c.l.b16 %v2417
        %v3090 = vunpack.c.l.b16 %v2418
        %v3091 = vunpack.c.l.b16 %v2419
        %v3092 = vunpack.c.l.b16 %v2420
        %v3093 = vunpack.c.l.b16 %v2421
        %v3094 = vunpack.c.l.b16 %v2422
        %v3095 = vunpack.c.l.b16 %v2423
        %v3096 = vunpack.c.l.b16 %v2424
        %v3097 = vunpack.c.l.b16 %v2425
        %v3098 = vunpack.c.l.b16 %v2426
        %v3099 = vunpack.c.l.b16 %v2427
        %v3100 = vunpack.c.l.b16 %v2428
        %v3101 = vunpack.c.l.b16 %v2429
        %v3102 = vunpack.c.l.b16 %v2430
        %v3103 = vunpack.c.l.b16 %v2431
        %v3104 = vunpack.c.l.b16 %v2432
        %v3105 = vunpack.c.l.b16 %v2433
        %v3106 = vunpack.c.l.b16 %v2434
        %v3107 = vunpack.c.l.b16 %v2435
        %v3108 = vunpack.c.l.b16 %v2436
        %v3109 = vunpack.c.l.b16 %v2437
        %v3110 = vunpack.c.l.b16 %v2438
        %v3111 = vunpack.c.l.b16 %v2439
        %v3112 = vunpack.c.l.b16 %v2440
        %v3113 = vunpack.c.l.b16 %v2441
        %v3114 = vunpack.c.l.b16 %v2442
        %v3115 = vunpack.c.l.b16 %v2443
        %v3116 = vunpack.c.l.b16 %v2444
        %v3117 = vunpack.c.l.b16 %v2445
        %v3118 = vunpack.c.l.b16 %v2446
        %v3119 = vunpack.c.l.b16 %v2447
        %v3120 = vunpack.c.l.b16 %v2448
        %v3121 = vunpack.c.l.b16 %v2449
        %v3122 = vunpack.c.l.b16 %v2450
        %v3123 = vunpack.c.l.b16 %v2451
        %v3124 = vunpack.c.l.b16 %v2452
        %v3125 = vunpack.c.l.b16 %v2453
        %v3126 = vunpack.c.l.b16 %v2454
        %v3127 = vunpack.c.l.b16 %v2455
        %v3128 = vunpack.c.l.b16 %v2456
        %v3129 = vunpack.c.l.b16 %v2457
        %v3130 = vunpack.c.l.b16 %v2458
        %v3131 = vunpack.c.l.b16 %v2459
        %v3132 = vunpack.c.l.b16 %v2460
        %v3133 = vunpack.c.l.b16 %v2461
        %v3134 = vunpack.c.l.b16 %v2462
        %v3135 = vunpack.c.l.b16 %v2463
        %v3136 = vunpack.c.l.b16 %v2464
        %v3137 = vunpack.c.l.b16 %v2465
        %v3138 = vunpack.c.l.b16 %v2466
        %v3139 = vunpack.c.l.b16 %v2467
        %v3140 = vunpack.c.l.b16 %v2468
        %v3141 = vunpack.c.l.b16 %v2469
        %v3142 = vunpack.c.l.b16 %v2470
        %v3143 = vunpack.c.l.b16 %v2471
        %v3144 = vunpack.c.l.b16 %v2472
        %v3145 = vunpack.c.l.b16 %v2473
        %v3146 = vunpack.c.l.b16 %v2474
        %v3147 = vunpack.c.l.b16 %v2475
        %v3148 = vunpack.c.l.b16 %v2476
        %v3149 = vunpack.c.l.b16 %v2477
        %v3150 = vunpack.c.l.b16 %v2478
        %v3151 = vunpack.c.l.b16 %v2479
        %v3152 = vunpack.c.l.b16 %v2480
        %v3153 = vunpack.c.l.b16 %v2481
        %v3154 = vunpack.c.l.b16 %v2482
        %v3155 = vunpack.c.l.b16 %v2483
        %v3156 = vunpack.c.l.b16 %v2484
        %v3157 = vunpack.c.l.b16 %v2485
        %v3158 = vunpack.c.l.b16 %v2486
        %v3159 = vunpack.c.l.b16 %v2487
        %v3160 = vunpack.c.l.b16 %v2488
        %v3161 = vunpack.c.l.b16 %v2489
        %v3162 = vunpack.c.l.b16 %v2490
        %v3163 = vunpack.c.l.b16 %v2491
        %v3164 = vunpack.c.l.b16 %v2492
        %v3165 = vunpack.c.l.b16 %v2493
        %v3166 = vunpack.c.l.b16 %v2494
        %v3167 = vunpack.c.l.b16 %v2495
        %v3168 = vunpack.c.l.b16 %v2496
        %v3169 = vunpack.c.l.b16 %v2497
        %v3170 = vunpack.c.l.b16 %v2498
        %v3171 = vunpack.c.l.b16 %v2499
        %v3172 = vunpack.c.l.b16 %v2500
        %v3173 = vunpack.c.l.b16 %v2501
        %v3174 = vunpack.c.l.b16 %v2502
        %v3175 = vunpack.c.l.b16 %v2503
        %v3176 = vunpack.c.l.b16 %v2504
        %v3177 = vunpack.c.l.b16 %v2505
        %v3178 = vunpack.c.l.b16 %v2506
        %v3179 = vunpack.c.l.b16 %v2507
        %v3180 = vunpack.c.l.b16 %v2508
        %v3181 = vunpack.c.l.b16 %v2509
        %v3182 = vunpack.c.l.b16 %v2510
        %v3183 = vunpack.c.l.b16 %v2511
        %v3184 = vunpack.c.l.b16 %v2512
        %v3185 = vunpack.c.l.b16 %v2513
        %v3186 = vunpack.c.l.b16 %v2514
        %v3187 = vunpack.c.l.b16 %v2515
        %v3188 = vunpack.c.l.b16 %v2516
        %v3189 = vunpack.c.l.b16 %v2517
        %v3190 = vunpack.c.l.b16 %v2518
        %v3191 = vunpack.c.l.b16 %v2519
        %v3192 = vunpack.c.l.b16 %v2520
        %v3193 = vunpack.c.l.b16 %v2521
        %v3194 = vunpack.c.l.b16 %v2522
        %v3195 = vunpack.c.l.b16 %v2523
        %v3196 = vunpack.c.l.b16 %v2524
        %v3197 = vunpack.c.l.b16 %v2525
        %v3198 = vunpack.c.l.b16 %v2526
        %v3199 = vunpack.c.l.b16 %v2527
        %v3200 = vunpack.c.l.b16 %v2528
        %v3201 = vunpack.c.l.b16 %v2529
        %v3202 = vunpack.c.l.b16 %v2530
        %v3203 = vunpack.c.l.b16 %v2531
        %v3204 = vunpack.c.l.b16 %v2532
        %v3205 = vunpack.c.l.b16 %v2533
        %v3206 = vunpack.c.l.b16 %v2534
        %v3207 = vunpack.c.l.b16 %v2535
        %v3208 = vunpack.c.l.b16 %v2536
        %v3209 = vunpack.c.l.b16 %v2537
        %v3210 = vunpack.c.l.b16 %v2538
        %v3211 = vunpack.c.l.b16 %v2539
        %v3212 = vunpack.c.l.b16 %v2540
        %v3213 = vunpack.c.l.b16 %v2541
        %v3214 = vunpack.c.l.b16 %v2542
        %v3215 = vunpack.c.l.b16 %v2543
        %v3216 = vunpack.c.l.b16 %v2544
        %v3217 = vunpack.c.l.b16 %v2545
        %v3218 = vunpack.c.l.b16 %v2546
        %v3219 = vunpack.c.l.b16 %v2547
        %v3220 = vunpack.c.l.b16 %v2548
        %v3221 = vunpack.c.l.b16 %v2549
        %v3222 = vunpack.c.l.b16 %v2550
        %v3223 = vunpack.c.l.b16 %v2551
        %v3224 = vunpack.c.l.b16 %v2552
        %v3225 = vunpack.c.l.b16 %v2553
        %v3226 = vunpack.c.l.b16 %v2554
        %v3227 = vunpack.c.l.b16 %v2555
        %v3228 = vunpack.c.l.b16 %v2556
        %v3229 = vunpack.c.l.b16 %v2557
        %v3230 = vunpack.c.l.b16 %v2558
        %v3231 = vunpack.c.l.b16 %v2559
        %v3232 = vunpack.c.l.b16 %v2560
        %v3233 = vunpack.c.l.b16 %v2561
        %v3234 = vunpack.c.l.b16 %v2562
        %v3235 = vunpack.c.l.b16 %v2563
        %v3236 = vunpack.c.l.b16 %v2564
        %v3237 = vunpack.c.l.b16 %v2565
        %v3238 = vunpack.c.l.b16 %v2566
        %v3239 = vunpack.c.l.b16 %v2567
        %v3240 = vunpack.c.l.b16 %v2568
        %v3241 = vunpack.c.l.b16 %v2569
        %v3242 = vunpack.c.l.b16 %v2570
        %v3243 = vunpack.c.l.b16 %v2571
        %v3244 = vunpack.c.l.b16 %v2572
        %v3245 = vunpack.c.l.b16 %v2573
        %v3246 = vunpack.c.l.b16 %v2574
        %v3247 = vunpack.c.l.b16 %v2575
        %v3248 = vunpack.c.l.b16 %v2576
        %v3249 = vunpack.c.l.b16 %v2577
        %v3250 = vunpack.c.l.b16 %v2578
        %v3251 = vunpack.c.l.b16 %v2579
        %v3252 = vunpack.c.l.b16 %v2580
        %v3253 = vunpack.c.l.b16 %v2581
        %v3254 = vunpack.c.l.b16 %v2582
        %v3255 = vunpack.c.l.b16 %v2583
        %v3256 = vunpack.c.l.b16 %v2584
        %v3257 = vunpack.c.l.b16 %v2585
        %v3258 = vunpack.c.l.b16 %v2586
        %v3259 = vunpack.c.l.b16 %v2587
        %v3260 = vunpack.c.l.b16 %v2588
        %v3261 = vunpack.c.l.b16 %v2589
        %v3262 = vunpack.c.l.b16 %v2590
        %v3263 = vunpack.c.l.b16 %v2591
        %v3264 = vunpack.c.l.b16 %v2592
        %v3265 = vunpack.c.l.b16 %v2593
        %v3266 = vunpack.c.l.b16 %v2594
        %v3267 = vunpack.c.l.b16 %v2595
        %v3268 = vunpack.c.l.b16 %v2596
        %v3269 = vunpack.c.l.b16 %v2597
        %v3270 = vunpack.c.l.b16 %v2598
        %v3271 = vunpack.c.l.b16 %v2599
        %v3272 = vunpack.c.l.b16 %v2600
        %v3273 = vunpack.c.l.b16 %v2601
        %v3274 = vunpack.c.l.b16 %v2602
        %v3275 = vunpack.c.l.b16 %v2603
        %v3276 = vunpack.c.l.b16 %v2604
        %v3277 = vunpack.c.l.b16 %v2605
        %v3278 = vunpack.c.l.b16 %v2606
        %v3279 = vunpack.c.l.b16 %v2607
        %v3280 = vunpack.c.l.b16 %v2608
        %v3281 = vunpack.c.l.b16 %v2609
        %v3282 = vunpack.c.l.b16 %v2610
        %v3283 = vunpack.c.l.b16 %v2611
        %v3284 = vunpack.c.l.b16 %v2612
        %v3285 = vunpack.c.l.b16 %v2613
        %v3286 = vunpack.c.l.b16 %v2614
        %v3287 = vunpack.c.l.b16 %v2615
        %v3288 = vunpack.c.l.b16 %v2616
        %v3289 = vunpack.c.l.b16 %v2617
        %v3290 = vunpack.c.l.b16 %v2618
        %v3291 = vunpack.c.l.b16 %v2619
        %v3292 = vunpack.c.l.b16 %v2620
        %v3293 = vpack.c.b16 %v3038, %v3037
        %v3294 = vpack.c.b16 %v3040, %v3039
        %v3295 = vpack.c.b16 %v3042, %v3041
        %v3296 = vpack.c.b16 %v3044, %v3043
        %v3297 = vpack.c.b16 %v3046, %v3045
        %v3298 = vpack.c.b16 %v3048, %v3047
        %v3299 = vpack.c.b16 %v3050, %v3049
        %v3300 = vpack.c.b16 %v3052, %v3051
        %v3301 = vpack.c.b16 %v3054, %v3053
        %v3302 = vpack.c.b16 %v3056, %v3055
        %v3303 = vpack.c.b16 %v3058, %v3057
        %v3304 = vpack.c.b16 %v3060, %v3059
        %v3305 = vpack.c.b16 %v3062, %v3061
        %v3306 = vpack.c.b16 %v3064, %v3063
        %v3307 = vpack.c.b16 %v3066, %v3065
        %v3308 = vpack.c.b16 %v3068, %v3067
        %v3309 = vpack.c.b16 %v3070, %v3069
        %v3310 = vpack.c.b16 %v3072, %v3071
        %v3311 = vpack.c.b16 %v3074, %v3073
        %v3312 = vpack.c.b16 %v3076, %v3075
        %v3313 = vpack.c.b16 %v3078, %v3077
        %v3314 = vpack.c.b16 %v3080, %v3079
        %v3315 = vpack.c.b16 %v3082, %v3081
        %v3316 = vpack.c.b16 %v3084, %v3083
        %v3317 = vpack.c.b16 %v3086, %v3085
        %v3318 = vpack.c.b16 %v3088, %v3087
        %v3319 = vpack.c.b16 %v3090, %v3089
        %v3320 = vpack.c.b16 %v3092, %v3091
        %v3321 = vpack.c.b16 %v3094, %v3093
        %v3322 = vpack.c.b16 %v3096, %v3095
        %v3323 = vpack.c.b16 %v3098, %v3097
        %v3324 = vpack.c.b16 %v3100, %v3099
        %v3325 = vpack.c.b16 %v3102, %v3101
        %v3326 = vpack.c.b16 %v3104, %v3103
        %v3327 = vpack.c.b16 %v3106, %v3105
        %v3328 = vpack.c.b16 %v3108, %v3107
        %v3329 = vpack.c.b16 %v3110, %v3109
        %v3330 = vpack.c.b16 %v3112, %v3111
        %v3331 = vpack.c.b16 %v3114, %v3113
        %v3332 = vpack.c.b16 %v3116, %v3115
        %v3333 = vpack.c.b16 %v3118, %v3117
        %v3334 = vpack.c.b16 %v3120, %v3119
        %v3335 = vpack.c.b16 %v3122, %v3121
        %v3336 = vpack.c.b16 %v3124, %v3123
        %v3337 = vpack.c.b16 %v3126, %v3125
        %v3338 = vpack.c.b16 %v3128, %v3127
        %v3339 = vpack.c.b16 %v3130, %v3129
        %v3340 = vpack.c.b16 %v3132, %v3131
        %v3341 = vpack.c.b16 %v3134, %v3133
        %v3342 = vpack.c.b16 %v3136, %v3135
        %v3343 = vpack.c.b16 %v3138, %v3137
        %v3344 = vpack.c.b16 %v3140, %v3139
        %v3345 = vpack.c.b16 %v3142, %v3141
        %v3346 = vpack.c.b16 %v3144, %v3143
        %v3347 = vpack.c.b16 %v3146, %v3145
        %v3348 = vpack.c.b16 %v3148, %v3147
        %v3349 = vpack.c.b16 %v3150, %v3149
        %v3350 = vpack.c.b16 %v3152, %v3151
        %v3351 = vpack.c.b16 %v3154, %v3153
        %v3352 = vpack.c.b16 %v3156, %v3155
        %v3353 = vpack.c.b16 %v3158, %v3157
        %v3354 = vpack.c.b16 %v3160, %v3159
        %v3355 = vpack.c.b16 %v3162, %v3161
        %v3356 = vpack.c.b16 %v3164, %v3163
        %v3357 = vpack.c.b16 %v3166, %v3165
        %v3358 = vpack.c.b16 %v3168, %v3167
        %v3359 = vpack.c.b16 %v3170, %v3169
        %v3360 = vpack.c.b16 %v3172, %v3171
        %v3361 = vpack.c.b16 %v3174, %v3173
        %v3362 = vpack.c.b16 %v3176, %v3175
        %v3363 = vpack.c.b16 %v3178, %v3177
        %v3364 = vpack.c.b16 %v3180, %v3179
        %v3365 = vpack.c.b16 %v3182, %v3181
        %v3366 = vpack.c.b16 %v3184, %v3183
        %v3367 = vpack.c.b16 %v3186, %v3185
        %v3368 = vpack.c.b16 %v3188, %v3187
        %v3369 = vpack.c.b16 %v3190, %v3189
        %v3370 = vpack.c.b16 %v3192, %v3191
        %v3371 = vpack.c.b16 %v3194, %v3193
        %v3372 = vpack.c.b16 %v3196, %v3195
        %v3373 = vpack.c.b16 %v3198, %v3197
        %v3374 = vpack.c.b16 %v3200, %v3199
        %v3375 = vpack.c.b16 %v3202, %v3201
        %v3376 = vpack.c.b16 %v3204, %v3203
        %v3377 = vpack.c.b16 %v3206, %v3205
        %v3378 = vpack.c.b16 %v3208, %v3207
        %v3379 = vpack.c.b16 %v3210, %v3209
        %v3380 = vpack.c.b16 %v3212, %v3211
        %v3381 = vpack.c.b16 %v3214, %v3213
        %v3382 = vpack.c.b16 %v3216, %v3215
        %v3383 = vpack.c.b16 %v3218, %v3217
        %v3384 = vpack.c.b16 %v3220, %v3219
        %v3385 = vpack.c.b16 %v3222, %v3221
        %v3386 = vpack.c.b16 %v3224, %v3223
        %v3387 = vpack.c.b16 %v3226, %v3225
        %v3388 = vpack.c.b16 %v3228, %v3227
        %v3389 = vpack.c.b16 %v3230, %v3229
        %v3390 = vpack.c.b16 %v3232, %v3231
        %v3391 = vpack.c.b16 %v3234, %v3233
        %v3392 = vpack.c.b16 %v3236, %v3235
        %v3393 = vpack.c.b16 %v3238, %v3237
        %v3394 = vpack.c.b16 %v3240, %v3239
        %v3395 = vpack.c.b16 %v3242, %v3241
        %v3396 = vpack.c.b16 %v3244, %v3243
        %v3397 = vpack.c.b16 %v3246, %v3245
        %v3398 = vpack.c.b16 %v3248, %v3247
        %v3399 = vpack.c.b16 %v3250, %v3249
        %v3400 = vpack.c.b16 %v3252, %v3251
        %v3401 = vpack.c.b16 %v3254, %v3253
        %v3402 = vpack.c.b16 %v3256, %v3255
        %v3403 = vpack.c.b16 %v3258, %v3257
        %v3404 = vpack.c.b16 %v3260, %v3259
        %v3405 = vpack.c.b16 %v3262, %v3261
        %v3406 = vpack.c.b16 %v3264, %v3263
        %v3407 = vpack.c.b16 %v3266, %v3265
        %v3408 = vpack.c.b16 %v3268, %v3267
        %v3409 = vpack.c.b16 %v3270, %v3269
        %v3410 = vpack.c.b16 %v3272, %v3271
        %v3411 = vpack.c.b16 %v3274, %v3273
        %v3412 = vpack.c.b16 %v3276, %v3275
        %v3413 = vpack.c.b16 %v3278, %v3277
        %v3414 = vpack.c.b16 %v3280, %v3279
        %v3415 = vpack.c.b16 %v3282, %v3281
        %v3416 = vpack.c.b16 %v3284, %v3283
        %v3417 = vpack.c.b16 %v3286, %v3285
        %v3418 = vpack.c.b16 %v3288, %v3287
        %v3419 = vpack.c.b16 %v3290, %v3289
        %v3420 = vpack.c.b16 %v3292, %v3291
        %3549 = vmatpush.bf16.msra.mxu0 %v3300
        %3550 = vmatpush.bf16.msra.mxu0 %v3299
        %3551 = vmatpush.bf16.msra.mxu0 %v3298
        %3552 = vmatpush.bf16.msra.mxu0 %v3297
        %3553 = vmatpush.bf16.msra.mxu0 %v3296
        %3554 = vmatpush.bf16.msra.mxu0 %v3295
        %3555 = vmatpush.bf16.msra.mxu0 %v3294
        %3556 = vmatpush.bf16.msra.mxu0 %v3293
        %3557 = vmatmul.bf16.gmra.mxu0 %v2717
        %v3558 = vpop.f32.mrf.mxu0
        %v3559 = vadd.f32 0.0, %v3558
        %v3560 = vpop.f32.mrf.mxu0
        %v3561 = vadd.f32 0.0, %v3560
        %3562 = vmatmul.bf16.gmra.mxu0 %v2733
        %v3563 = vpop.f32.mrf.mxu0
        %v3564 = vadd.f32 0.0, %v3563
        %v3565 = vpop.f32.mrf.mxu0
        %v3566 = vadd.f32 0.0, %v3565
        %3567 = vdwg.mxu0
        %3568 = vmatpush.bf16.msra.mxu0 %v3308
        %3569 = vmatpush.bf16.msra.mxu0 %v3307
        %3570 = vmatpush.bf16.msra.mxu0 %v3306
        %3571 = vmatpush.bf16.msra.mxu0 %v3305
        %3572 = vmatpush.bf16.msra.mxu0 %v3304
        %3573 = vmatpush.bf16.msra.mxu0 %v3303
        %3574 = vmatpush.bf16.msra.mxu0 %v3302
        %3575 = vmatpush.bf16.msra.mxu0 %v3301
        %3576 = vmatmul.bf16.gmra.mxu0 %v2718
        %v3577 = vpop.f32.mrf.mxu0
        %v3578 = vadd.f32 %v3559, %v3577
        %v3579 = vpop.f32.mrf.mxu0
        %v3580 = vadd.f32 %v3561, %v3579
        %3581 = vmatmul.bf16.gmra.mxu0 %v2734
        %v3582 = vpop.f32.mrf.mxu0
        %v3583 = vadd.f32 %v3564, %v3582
        %v3584 = vpop.f32.mrf.mxu0
        %v3585 = vadd.f32 %v3566, %v3584
        %3586 = vdwg.mxu0
        %3587 = vmatpush.bf16.msra.mxu0 %v3316
        %3588 = vmatpush.bf16.msra.mxu0 %v3315
        %3589 = vmatpush.bf16.msra.mxu0 %v3314
        %3590 = vmatpush.bf16.msra.mxu0 %v3313
        %3591 = vmatpush.bf16.msra.mxu0 %v3312
        %3592 = vmatpush.bf16.msra.mxu0 %v3311
        %3593 = vmatpush.bf16.msra.mxu0 %v3310
        %3594 = vmatpush.bf16.msra.mxu0 %v3309
        %3595 = vmatmul.bf16.gmra.mxu0 %v2719
        %v3596 = vpop.f32.mrf.mxu0
        %v3597 = vadd.f32 %v3578, %v3596
        %v3598 = vpop.f32.mrf.mxu0
        %v3599 = vadd.f32 %v3580, %v3598
        %3600 = vmatmul.bf16.gmra.mxu0 %v2735
        %v3601 = vpop.f32.mrf.mxu0
        %v3602 = vadd.f32 %v3583, %v3601
        %v3603 = vpop.f32.mrf.mxu0
        %v3604 = vadd.f32 %v3585, %v3603
        %3605 = vdwg.mxu0
        %3606 = vmatpush.bf16.msra.mxu0 %v3324
        %3607 = vmatpush.bf16.msra.mxu0 %v3323
        %3608 = vmatpush.bf16.msra.mxu0 %v3322
        %3609 = vmatpush.bf16.msra.mxu0 %v3321
        %3610 = vmatpush.bf16.msra.mxu0 %v3320
        %3611 = vmatpush.bf16.msra.mxu0 %v3319
        %3612 = vmatpush.bf16.msra.mxu0 %v3318
        %3613 = vmatpush.bf16.msra.mxu0 %v3317
        %3614 = vmatmul.bf16.gmra.mxu0 %v2720
        %v3615 = vpop.f32.mrf.mxu0
        %v3616 = vadd.f32 %v3597, %v3615
        %v3617 = vpop.f32.mrf.mxu0
        %v3618 = vadd.f32 %v3599, %v3617
        %3619 = vmatmul.bf16.gmra.mxu0 %v2736
        %v3620 = vpop.f32.mrf.mxu0
        %v3621 = vadd.f32 %v3602, %v3620
        %v3622 = vpop.f32.mrf.mxu0
        %v3623 = vadd.f32 %v3604, %v3622
        %3624 = vdwg.mxu0
        %3625 = vmatpush.bf16.msra.mxu0 %v3332
        %3626 = vmatpush.bf16.msra.mxu0 %v3331
        %3627 = vmatpush.bf16.msra.mxu0 %v3330
        %3628 = vmatpush.bf16.msra.mxu0 %v3329
        %3629 = vmatpush.bf16.msra.mxu0 %v3328
        %3630 = vmatpush.bf16.msra.mxu0 %v3327
        %3631 = vmatpush.bf16.msra.mxu0 %v3326
        %3632 = vmatpush.bf16.msra.mxu0 %v3325
        %3633 = vmatmul.bf16.gmra.mxu0 %v2721
        %v3634 = vpop.f32.mrf.mxu0
        %v3635 = vadd.f32 %v3616, %v3634
        %v3636 = vpop.f32.mrf.mxu0
        %v3637 = vadd.f32 %v3618, %v3636
        %3638 = vmatmul.bf16.gmra.mxu0 %v2737
        %v3639 = vpop.f32.mrf.mxu0
        %v3640 = vadd.f32 %v3621, %v3639
        %v3641 = vpop.f32.mrf.mxu0
        %v3642 = vadd.f32 %v3623, %v3641
        %3643 = vdwg.mxu0
        %3644 = vmatpush.bf16.msra.mxu0 %v3340
        %3645 = vmatpush.bf16.msra.mxu0 %v3339
        %3646 = vmatpush.bf16.msra.mxu0 %v3338
        %3647 = vmatpush.bf16.msra.mxu0 %v3337
        %3648 = vmatpush.bf16.msra.mxu0 %v3336
        %3649 = vmatpush.bf16.msra.mxu0 %v3335
        %3650 = vmatpush.bf16.msra.mxu0 %v3334
        %3651 = vmatpush.bf16.msra.mxu0 %v3333
        %3652 = vmatmul.bf16.gmra.mxu0 %v2722
        %v3653 = vpop.f32.mrf.mxu0
        %v3654 = vadd.f32 %v3635, %v3653
        %v3655 = vpop.f32.mrf.mxu0
        %v3656 = vadd.f32 %v3637, %v3655
        %3657 = vmatmul.bf16.gmra.mxu0 %v2738
        %v3658 = vpop.f32.mrf.mxu0
        %v3659 = vadd.f32 %v3640, %v3658
        %v3660 = vpop.f32.mrf.mxu0
        %v3661 = vadd.f32 %v3642, %v3660
        %3662 = vdwg.mxu0
        %3663 = vmatpush.bf16.msra.mxu0 %v3348
        %3664 = vmatpush.bf16.msra.mxu0 %v3347
        %3665 = vmatpush.bf16.msra.mxu0 %v3346
        %3666 = vmatpush.bf16.msra.mxu0 %v3345
        %3667 = vmatpush.bf16.msra.mxu0 %v3344
        %3668 = vmatpush.bf16.msra.mxu0 %v3343
        %3669 = vmatpush.bf16.msra.mxu0 %v3342
        %3670 = vmatpush.bf16.msra.mxu0 %v3341
        %3671 = vmatmul.bf16.gmra.mxu0 %v2723
        %v3672 = vpop.f32.mrf.mxu0
        %v3673 = vadd.f32 %v3654, %v3672
        %v3674 = vpop.f32.mrf.mxu0
        %v3675 = vadd.f32 %v3656, %v3674
        %3676 = vmatmul.bf16.gmra.mxu0 %v2739
        %v3677 = vpop.f32.mrf.mxu0
        %v3678 = vadd.f32 %v3659, %v3677
        %v3679 = vpop.f32.mrf.mxu0
        %v3680 = vadd.f32 %v3661, %v3679
        %3681 = vdwg.mxu0
        %3682 = vmatpush.bf16.msra.mxu0 %v3356
        %3683 = vmatpush.bf16.msra.mxu0 %v3355
        %3684 = vmatpush.bf16.msra.mxu0 %v3354
        %3685 = vmatpush.bf16.msra.mxu0 %v3353
        %3686 = vmatpush.bf16.msra.mxu0 %v3352
        %3687 = vmatpush.bf16.msra.mxu0 %v3351
        %3688 = vmatpush.bf16.msra.mxu0 %v3350
        %3689 = vmatpush.bf16.msra.mxu0 %v3349
        %3690 = vmatmul.bf16.gmra.mxu0 %v2724
        %v3691 = vpop.f32.mrf.mxu0
        %v3692 = vadd.f32 %v3673, %v3691
        %v3693 = vpop.f32.mrf.mxu0
        %v3694 = vadd.f32 %v3675, %v3693
        %3695 = vmatmul.bf16.gmra.mxu0 %v2740
        %v3696 = vpop.f32.mrf.mxu0
        %v3697 = vadd.f32 %v3678, %v3696
        %v3698 = vpop.f32.mrf.mxu0
        %v3699 = vadd.f32 %v3680, %v3698
        %3700 = vdwg.mxu0
        %3701 = vmatpush.bf16.msra.mxu0 %v3364
        %3702 = vmatpush.bf16.msra.mxu0 %v3363
        %3703 = vmatpush.bf16.msra.mxu0 %v3362
        %3704 = vmatpush.bf16.msra.mxu0 %v3361
        %3705 = vmatpush.bf16.msra.mxu0 %v3360
        %3706 = vmatpush.bf16.msra.mxu0 %v3359
        %3707 = vmatpush.bf16.msra.mxu0 %v3358
        %3708 = vmatpush.bf16.msra.mxu0 %v3357
        %3709 = vmatmul.bf16.gmra.mxu0 %v2725
        %v3710 = vpop.f32.mrf.mxu0
        %v3711 = vadd.f32 %v3692, %v3710
        %v3712 = vpop.f32.mrf.mxu0
        %v3713 = vadd.f32 %v3694, %v3712
        %3714 = vmatmul.bf16.gmra.mxu0 %v2741
        %v3715 = vpop.f32.mrf.mxu0
        %v3716 = vadd.f32 %v3697, %v3715
        %v3717 = vpop.f32.mrf.mxu0
        %v3718 = vadd.f32 %v3699, %v3717
        %3719 = vdwg.mxu0
        %3720 = vmatpush.bf16.msra.mxu0 %v3372
        %3721 = vmatpush.bf16.msra.mxu0 %v3371
        %3722 = vmatpush.bf16.msra.mxu0 %v3370
        %3723 = vmatpush.bf16.msra.mxu0 %v3369
        %3724 = vmatpush.bf16.msra.mxu0 %v3368
        %3725 = vmatpush.bf16.msra.mxu0 %v3367
        %3726 = vmatpush.bf16.msra.mxu0 %v3366
        %3727 = vmatpush.bf16.msra.mxu0 %v3365
        %3728 = vmatmul.bf16.gmra.mxu0 %v2726
        %v3729 = vpop.f32.mrf.mxu0
        %v3730 = vadd.f32 %v3711, %v3729
        %v3731 = vpop.f32.mrf.mxu0
        %v3732 = vadd.f32 %v3713, %v3731
        %3733 = vmatmul.bf16.gmra.mxu0 %v2742
        %v3734 = vpop.f32.mrf.mxu0
        %v3735 = vadd.f32 %v3716, %v3734
        %v3736 = vpop.f32.mrf.mxu0
        %v3737 = vadd.f32 %v3718, %v3736
        %3738 = vdwg.mxu0
        %3739 = vmatpush.bf16.msra.mxu0 %v3380
        %3740 = vmatpush.bf16.msra.mxu0 %v3379
        %3741 = vmatpush.bf16.msra.mxu0 %v3378
        %3742 = vmatpush.bf16.msra.mxu0 %v3377
        %3743 = vmatpush.bf16.msra.mxu0 %v3376
        %3744 = vmatpush.bf16.msra.mxu0 %v3375
        %3745 = vmatpush.bf16.msra.mxu0 %v3374
        %3746 = vmatpush.bf16.msra.mxu0 %v3373
        %3747 = vmatmul.bf16.gmra.mxu0 %v2727
        %v3748 = vpop.f32.mrf.mxu0
        %v3749 = vadd.f32 %v3730, %v3748
        %v3750 = vpop.f32.mrf.mxu0
        %v3751 = vadd.f32 %v3732, %v3750
        %3752 = vmatmul.bf16.gmra.mxu0 %v2743
        %v3753 = vpop.f32.mrf.mxu0
        %v3754 = vadd.f32 %v3735, %v3753
        %v3755 = vpop.f32.mrf.mxu0
        %v3756 = vadd.f32 %v3737, %v3755
        %3757 = vdwg.mxu0
        %3758 = vmatpush.bf16.msra.mxu0 %v3388
        %3759 = vmatpush.bf16.msra.mxu0 %v3387
        %3760 = vmatpush.bf16.msra.mxu0 %v3386
        %3761 = vmatpush.bf16.msra.mxu0 %v3385
        %3762 = vmatpush.bf16.msra.mxu0 %v3384
        %3763 = vmatpush.bf16.msra.mxu0 %v3383
        %3764 = vmatpush.bf16.msra.mxu0 %v3382
        %3765 = vmatpush.bf16.msra.mxu0 %v3381
        %3766 = vmatmul.bf16.gmra.mxu0 %v2728
        %v3767 = vpop.f32.mrf.mxu0
        %v3768 = vadd.f32 %v3749, %v3767
        %v3769 = vpop.f32.mrf.mxu0
        %v3770 = vadd.f32 %v3751, %v3769
        %3771 = vmatmul.bf16.gmra.mxu0 %v2744
        %v3772 = vpop.f32.mrf.mxu0
        %v3773 = vadd.f32 %v3754, %v3772
        %v3774 = vpop.f32.mrf.mxu0
        %v3775 = vadd.f32 %v3756, %v3774
        %3776 = vdwg.mxu0
        %3777 = vmatpush.bf16.msra.mxu0 %v3396
        %3778 = vmatpush.bf16.msra.mxu0 %v3395
        %3779 = vmatpush.bf16.msra.mxu0 %v3394
        %3780 = vmatpush.bf16.msra.mxu0 %v3393
        %3781 = vmatpush.bf16.msra.mxu0 %v3392
        %3782 = vmatpush.bf16.msra.mxu0 %v3391
        %3783 = vmatpush.bf16.msra.mxu0 %v3390
        %3784 = vmatpush.bf16.msra.mxu0 %v3389
        %3785 = vmatmul.bf16.gmra.mxu0 %v2729
        %v3786 = vpop.f32.mrf.mxu0
        %v3787 = vadd.f32 %v3768, %v3786
        %v3788 = vpop.f32.mrf.mxu0
        %v3789 = vadd.f32 %v3770, %v3788
        %3790 = vmatmul.bf16.gmra.mxu0 %v2745
        %v3791 = vpop.f32.mrf.mxu0
        %v3792 = vadd.f32 %v3773, %v3791
        %v3793 = vpop.f32.mrf.mxu0
        %v3794 = vadd.f32 %v3775, %v3793
        %3795 = vdwg.mxu0
        %3796 = vmatpush.bf16.msra.mxu0 %v3404
        %3797 = vmatpush.bf16.msra.mxu0 %v3403
        %3798 = vmatpush.bf16.msra.mxu0 %v3402
        %3799 = vmatpush.bf16.msra.mxu0 %v3401
        %3800 = vmatpush.bf16.msra.mxu0 %v3400
        %3801 = vmatpush.bf16.msra.mxu0 %v3399
        %3802 = vmatpush.bf16.msra.mxu0 %v3398
        %3803 = vmatpush.bf16.msra.mxu0 %v3397
        %3804 = vmatmul.bf16.gmra.mxu0 %v2730
        %v3805 = vpop.f32.mrf.mxu0
        %v3806 = vadd.f32 %v3787, %v3805
        %v3807 = vpop.f32.mrf.mxu0
        %v3808 = vadd.f32 %v3789, %v3807
        %3809 = vmatmul.bf16.gmra.mxu0 %v2746
        %v3810 = vpop.f32.mrf.mxu0
        %v3811 = vadd.f32 %v3792, %v3810
        %v3812 = vpop.f32.mrf.mxu0
        %v3813 = vadd.f32 %v3794, %v3812
        %3814 = vdwg.mxu0
        %3815 = vmatpush.bf16.msra.mxu0 %v3412
        %3816 = vmatpush.bf16.msra.mxu0 %v3411
        %3817 = vmatpush.bf16.msra.mxu0 %v3410
        %3818 = vmatpush.bf16.msra.mxu0 %v3409
        %3819 = vmatpush.bf16.msra.mxu0 %v3408
        %3820 = vmatpush.bf16.msra.mxu0 %v3407
        %3821 = vmatpush.bf16.msra.mxu0 %v3406
        %3822 = vmatpush.bf16.msra.mxu0 %v3405
        %3823 = vmatmul.bf16.gmra.mxu0 %v2731
        %v3824 = vpop.f32.mrf.mxu0
        %v3825 = vadd.f32 %v3806, %v3824
        %v3826 = vpop.f32.mrf.mxu0
        %v3827 = vadd.f32 %v3808, %v3826
        %3828 = vmatmul.bf16.gmra.mxu0 %v2747
        %v3829 = vpop.f32.mrf.mxu0
        %v3830 = vadd.f32 %v3811, %v3829
        %v3831 = vpop.f32.mrf.mxu0
        %v3832 = vadd.f32 %v3813, %v3831
        %3833 = vdwg.mxu0
        %3834 = vmatpush.bf16.msra.mxu0 %v3420
        %3835 = vmatpush.bf16.msra.mxu0 %v3419
        %3836 = vmatpush.bf16.msra.mxu0 %v3418
        %3837 = vmatpush.bf16.msra.mxu0 %v3417
        %3838 = vmatpush.bf16.msra.mxu0 %v3416
        %3839 = vmatpush.bf16.msra.mxu0 %v3415
        %3840 = vmatpush.bf16.msra.mxu0 %v3414
        %3841 = vmatpush.bf16.msra.mxu0 %v3413
        %3842 = vmatmul.bf16.gmra.mxu0 %v2732
        %v3843 = vpop.f32.mrf.mxu0
        %v3844 = vadd.f32 %v3825, %v3843
        %v3845 = vpop.f32.mrf.mxu0
        %v3846 = vadd.f32 %v3827, %v3845
        %3847 = vmatmul.bf16.gmra.mxu0 %v2748
        %v3848 = vpop.f32.mrf.mxu0
        %v3849 = vadd.f32 %v3830, %v3848
        %v3850 = vpop.f32.mrf.mxu0
        %v3851 = vadd.f32 %v3832, %v3850
        %3852 = vdwg.mxu0
        %v3853 = vadd.f32 %v3844, %v3846
        %v3854 = vadd.f32 %v3853, %v3849
        %v3855 = vadd.f32 %v3854, %v3851
        %v3856 = vrot.slane %v3855, 4
        %v3857 = vadd.f32 %v3855, %v3856
        %v3858 = vrot.slane %v3857, 2
        %v3859 = vadd.f32 %v3857, %v3858
        %v3860 = vrot.slane %v3859, 1
        %v3861 = vadd.f32 %v3859, %v3860
        %v3862 = vmul.f32 %v3861, 0.03125
        %v3863 = vmul.f32 %v3844, %v3844
        %v3864 = vmul.f32 %v3846, %v3846
        %v3865 = vmul.f32 %v3849, %v3849
        %v3866 = vmul.f32 %v3851, %v3851
        %v3867 = vadd.f32 %v3863, %v3864
        %v3868 = vadd.f32 %v3867, %v3865
        %v3869 = vadd.f32 %v3868, %v3866
        %v3870 = vrot.slane %v3869, 4
        %v3871 = vadd.f32 %v3869, %v3870
        %v3872 = vrot.slane %v3871, 2
        %v3873 = vadd.f32 %v3871, %v3872
        %v3874 = vrot.slane %v3873, 1
        %v3875 = vadd.f32 %v3873, %v3874
        %v3876 = vmul.f32 %v3875, 0.03125
        %v3877 = vmul.f32 %v3862, %v3862
        %v3878 = vsub.f32 %v3876, %v3877
        %v3879 = vmax.f32 %v3878, 0.0
        %v3880 = vld [vmem:[%s2329] sm:$0x1]
        %v3881 = vadd.f32 %v3879, 1e-05
        %v3882 = vrsqrt.pop %v3881
        %v3883 = vmul.f32 %v3882, %v3881
        %v3884 = vmul.f32 %v3883, %v3882
        %v3885 = vmul.f32 0.5, %v3884
        %v3886 = vsub.f32 1.5, %v3885
        %v3887 = vmul.f32 %v3882, %v3886
        %vm3888 = vweird.f32 %v3881
        %vm3889 = vweird.f32 %v3882
        %vm3890 = vmor %vm3888, %vm3889
        %v3891 = vsel %vm3890, %v3882, %v3887
        %v3892 = vmul.f32 %v3880, %v3891
        %v3893 = vld [vmem:[%s2332] sm:$0x1]
        %v3894 = vmul.f32 %v3862, %v3892
        %v3895 = vsub.f32 %v3893, %v3894
        %v3897 = vperm.slane %v3892, 0
        %v3899 = vmul.f32 %v3844, %v3897
        %v3900 = vmul.f32 %v3846, %v3897
        %v3901 = vmul.f32 %v3849, %v3897
        %v3902 = vmul.f32 %v3851, %v3897
        %v3904 = vperm.slane %v3895, 0
        %v3906 = vadd.f32 %v3899, %v3904
        %v3907 = vadd.f32 %v3900, %v3904
        %v3908 = vadd.f32 %v3901, %v3904
        %v3909 = vadd.f32 %v3902, %v3904
        %vm3910 = vcmp.ge.f32.partialorder %v3906, 0.0
        %vm3911 = vcmp.ge.f32.partialorder %v3907, 0.0
        %vm3912 = vcmp.ge.f32.partialorder %v3908, 0.0
        %vm3913 = vcmp.ge.f32.partialorder %v3909, 0.0
        %v3914 = vmul.f32 %v3906, 0.2
        %v3915 = vmul.f32 %v3907, 0.2
        %v3916 = vmul.f32 %v3908, 0.2
        %v3917 = vmul.f32 %v3909, 0.2
        %v3918 = vsel %vm3910, %v3906, %v3914
        %v3919 = vsel %vm3911, %v3907, %v3915
        %v3920 = vsel %vm3912, %v3908, %v3916
        %v3921 = vsel %vm3913, %v3909, %v3917
        %v3922 = vpack.c.bf16 %v3918, %v3918
        %v3923 = vpack.c.bf16 %v3919, %v3919
        %v3924 = vpack.c.bf16 %v3920, %v3920
        %v3925 = vpack.c.bf16 %v3921, %v3921
        %3926 = vst [vmem:[%s2326] sm:$0xf] %v3922
        %3927 = vst [vmem:[%s2326 + $0x4] sm:$0xf] %v3923
        %3928 = vst [vmem:[%s2326 + $0x8] sm:$0xf] %v3924
        %3929 = vst [vmem:[%s2326 + $0xc] sm:$0xf] %v3925
        %s3930 = sand.u32 %s122, 1
        %s3931 = sand.u32 %s122, 1
        %s3932 = smul.addr %s3931, 16
        %s3933 = scalar_lea.vmem [#allocation3], %s3932
        // Predicated region
        $region89: #{discriminator_forward.6} parent=83 // pred_check
          %p3934 = pneg %p132
        $region90: #{discriminator_forward.6} parent=83 // pred_check_branch
          %3936 = sbr.rel (%p3934) target = $region92
        $region91: #{discriminator_forward.6} parent=83 // pred_region
          %s3937 = smul.addr %s15, 4
          %s3938 = scalar_lea.vmem %s4, %s3937
          // Predicated region
          $region93: #{discriminator_forward.6} parent=91 // pred_check
            _
          $region94: #{discriminator_forward.6} parent=91 // pred_check_branch
            %3940 = sbr.rel (0) target = $region96
          $region95: #{discriminator_forward.6} parent=91 // pred_region
            // Predicated region
            $region97: #{discriminator_forward.6} parent=95 // pred_check
              _
            $region98: #{discriminator_forward.6} parent=95 // pred_check_branch
              %3942 = sbr.rel target = $region100
            $region99: #{discriminator_forward.6} parent=95 // pred_region
              // Predicated region
              $region112: #{discriminator_forward.6} parent=99 // pred_check
                _
              $region113: #{discriminator_forward.6} parent=99 // pred_check_branch
                %3964 = sbr.rel (0) target = $region115
              $region114: #{discriminator_forward.6} parent=99 // pred_region
                loop: start=0, step=1, limit=1
                $region116: #{discriminator_forward.6} parent=114 // loop_pre_header
                  _
                $region117: #{discriminator_forward.6} parent=114 // loop_header
                  %s3966 = sphi 0, %s3970
                  %p3967 = scmp.ge.s32.totalorder %s3966, 1
                  %s3971 = sphi %s3933, %s3933
                  %s3972 = sphi %s3938, %s3938
                $region118: #{discriminator_forward.6} parent=114 // loop_header_branch
                  %3969 = sbr.rel (%p3967) target = $region122
                $region119: #{discriminator_forward.6} parent=114 // loop_body
                  _
                $region120: #{discriminator_forward.6} parent=114 // loop_footer
                  %s3970 = sadd.s32 1, %s3966
                $region121: #{discriminator_forward.6} parent=114 // loop_footer_branch
                  %3965 = sbr.rel target = $region117
                $region122: #{discriminator_forward.6} parent=114 // loop_exit
                  _
                %s3974 = ssub.s32 16, 1
                loop: start=0, step=1, limit=1
                $region123: #{discriminator_forward.6} parent=114 // loop_pre_header
                  _
                $region124: #{discriminator_forward.6} parent=114 // loop_header
                  %s3976 = sphi 0, %s3980
                  %p3977 = scmp.ge.s32.totalorder %s3976, 1
                  %s3981 = sphi %s3933, %s3933
                  %s3982 = sphi %s3938, %s3938
                $region125: #{discriminator_forward.6} parent=114 // loop_header_branch
                  %3979 = sbr.rel (%p3977) target = $region129
                $region126: #{discriminator_forward.6} parent=114 // loop_body
                  %v3983 = vld [vmem:[%s3981] sm:%s3974]
                  %3984 = vst [vmem:[%s3982] sm:%s3974] %v3983
                  %v3985 = vld [vmem:[%s3981 + $0x4] sm:%s3974]
                  %3986 = vst [vmem:[%s3982 + $0x8] sm:%s3974] %v3985
                  %v3987 = vld [vmem:[%s3981 + $0x8] sm:%s3974]
                  %3988 = vst [vmem:[%s3982 + $0x10] sm:%s3974] %v3987
                  %v3989 = vld [vmem:[%s3981 + $0xc] sm:%s3974]
                  %3990 = vst [vmem:[%s3982 + $0x18] sm:%s3974] %v3989
                $region127: #{discriminator_forward.6} parent=114 // loop_footer
                  %s3980 = sadd.s32 1, %s3976
                $region128: #{discriminator_forward.6} parent=114 // loop_footer_branch
                  %3975 = sbr.rel target = $region124
                $region129: #{discriminator_forward.6} parent=114 // loop_exit
                  _
              $region115: #{discriminator_forward.6} parent=99 // pred_fallthru
                _
            $region100: #{discriminator_forward.6} parent=95 // pred_fallthru
              _
            // Predicated region
            $region101: #{discriminator_forward.6} parent=95 // pred_check
              _
            $region102: #{discriminator_forward.6} parent=95 // pred_check_branch
              %3944 = sbr.rel (0) target = $region104
            $region103: #{discriminator_forward.6} parent=95 // pred_region
              %s3946 = ssub.s32 16, 1
              loop: start=0, step=1, limit=1
              $region105: #{discriminator_forward.6} parent=103 // loop_pre_header
                _
              $region106: #{discriminator_forward.6} parent=103 // loop_header
                %s3948 = sphi 0, %s3952
                %p3949 = scmp.ge.s32.totalorder %s3948, 1
                %s3953 = sphi %s3933, %s3933
                %s3954 = sphi %s3938, %s3938
              $region107: #{discriminator_forward.6} parent=103 // loop_header_branch
                %3951 = sbr.rel (%p3949) target = $region111
              $region108: #{discriminator_forward.6} parent=103 // loop_body
                %v3955 = vld [vmem:[%s3953] sm:%s3946]
                %3956 = vst [vmem:[%s3954] sm:%s3946] %v3955
                %v3957 = vld [vmem:[%s3953 + $0x4] sm:%s3946]
                %3958 = vst [vmem:[%s3954 + $0x8] sm:%s3946] %v3957
                %v3959 = vld [vmem:[%s3953 + $0x8] sm:%s3946]
                %3960 = vst [vmem:[%s3954 + $0x10] sm:%s3946] %v3959
                %v3961 = vld [vmem:[%s3953 + $0xc] sm:%s3946]
                %3962 = vst [vmem:[%s3954 + $0x18] sm:%s3946] %v3961
              $region109: #{discriminator_forward.6} parent=103 // loop_footer
                %s3952 = sadd.s32 1, %s3948
              $region110: #{discriminator_forward.6} parent=103 // loop_footer_branch
                %3947 = sbr.rel target = $region106
              $region111: #{discriminator_forward.6} parent=103 // loop_exit
                _
            $region104: #{discriminator_forward.6} parent=95 // pred_fallthru
              _
          $region96: #{discriminator_forward.6} parent=91 // pred_fallthru
            _
          %3991 = vnop
        $region92: #{discriminator_forward.6} parent=83 // pred_fallthru
          _
      $region84: #{discriminator_forward.6} parent=5 // pred_fallthru
        _
      %p3992 = scmp.le.s32.totalorder 2, %s10
      // Predicated region
      $region130: #{discriminator_forward.6} parent=5 // pred_check
        %p3993 = pneg %p3992
      $region131: #{discriminator_forward.6} parent=5 // pred_check_branch
        %3995 = sbr.rel (%p3993) target = $region133
      $region132: #{discriminator_forward.6} parent=5 // pred_region
        %s3996 = ssub.s32 %s10, 2
        // Predicated region
        $region134: #{discriminator_forward.6} parent=132 // pred_check
          %p3997 = pneg %p138
        $region135: #{discriminator_forward.6} parent=132 // pred_check_branch
          %3999 = sbr.rel (%p3997) target = $region137
        $region136: #{discriminator_forward.6} parent=132 // pred_region
          %s4000 = sand.u32 %s123, 1
          %s4001 = sand.u32 %s123, 1
          %s4002 = smul.addr %s4001, 16
          %s4003 = scalar_lea.vmem [#allocation3], %s4002
        $region137: #{discriminator_forward.6} parent=132 // pred_fallthru
          _
      $region133: #{discriminator_forward.6} parent=5 // pred_fallthru
        _
    $region6: #{discriminator_forward.6} parent=1 // loop_footer
      %s14 = sadd.s32 1, %s10
    $region7: #{discriminator_forward.6} parent=1 // loop_footer_branch
      %9 = sbr.rel target = $region3
    $region8: #{discriminator_forward.6} parent=1 // loop_exit
      _

// kernel: discriminator_forward.7
$region0: #{discriminator_forward.7}
  #allocation0 [shape = 'u32[]', space=smem, size = 0x4, offset = 0x4, fixed_abs, tag = 'smem constant byte address 0x4 - core index']
  #allocation1 [shape = 'u32[72,128]{1,0:T(1,128)}', space=vmem, size = 0x9000, scoped, tag = 'internal scratch']
  %s0 = inlined_call_operand.vmem [shape: bf16[8,4096], index: 0, kind: input, shape index: {}]
  %s1 = inlined_call_operand.vmem [shape: bf16[4096,128], index: 1, kind: input, shape index: {}]
  %s2 = inlined_call_operand.vmem [shape: f32[8,128], index: 2, kind: output, shape index: {}]
  %s3 = sld [smem:[#allocation0]]
  $region18: #{discriminator_forward.7} parent=0
    _
  %s5 = ssub.s32 1, %s3
  %s6 = scalar_select 0, %s5, %s3
  // Predicated region
  $region2: #{discriminator_forward.7} parent=0 // pred_check
    _
  $region3: #{discriminator_forward.7} parent=0 // pred_check_branch
    %8 = sbr.rel (0) target = $region5
  $region4: #{discriminator_forward.7} parent=0 // pred_region
    _
  $region5: #{discriminator_forward.7} parent=0 // pred_fallthru
    _
  // Predicated region
  $region6: #{discriminator_forward.7} parent=0 // pred_check
    _
  $region7: #{discriminator_forward.7} parent=0 // pred_check_branch
    %10 = sbr.rel (0) target = $region9
  $region8: #{discriminator_forward.7} parent=0 // pred_region
    _
  $region9: #{discriminator_forward.7} parent=0 // pred_fallthru
    _
  %v11 = vld [vmem:[%s0] sm:$0xff]
  %v12 = vld [vmem:[%s0 + $0x8] sm:$0xff]
  %v13 = vld [vmem:[%s0 + $0x10] sm:$0xff]
  %v14 = vld [vmem:[%s0 + $0x18] sm:$0xff]
  %v15 = vld [vmem:[%s0 + $0x20] sm:$0xff]
  %v16 = vld [vmem:[%s0 + $0x28] sm:$0xff]
  %v17 = vld [vmem:[%s0 + $0x30] sm:$0xff]
  %v18 = vld [vmem:[%s0 + $0x38] sm:$0xff]
  %v19 = vld [vmem:[%s0 + $0x40] sm:$0xff]
  %v20 = vld [vmem:[%s0 + $0x48] sm:$0xff]
  %v21 = vld [vmem:[%s0 + $0x50] sm:$0xff]
  %v22 = vld [vmem:[%s0 + $0x58] sm:$0xff]
  %v23 = vld [vmem:[%s0 + $0x60] sm:$0xff]
  %v24 = vld [vmem:[%s0 + $0x68] sm:$0xff]
  %v25 = vld [vmem:[%s0 + $0x70] sm:$0xff]
  %v26 = vld [vmem:[%s0 + $0x78] sm:$0xff]
  %v27 = vld [vmem:[%s1] sm:$0xf]
  %v28 = vld [vmem:[%s1 + $0x4] sm:$0xf]
  %v29 = vld [vmem:[%s1 + $0x8] sm:$0xf]
  %v30 = vld [vmem:[%s1 + $0xc] sm:$0xf]
  %v31 = vld [vmem:[%s1 + $0x10] sm:$0xf]
  %v32 = vld [vmem:[%s1 + $0x14] sm:$0xf]
  %v33 = vld [vmem:[%s1 + $0x18] sm:$0xf]
  %v34 = vld [vmem:[%s1 + $0x1c] sm:$0xf]
  %v35 = vld [vmem:[%s1 + $0x20] sm:$0xf]
  %v36 = vld [vmem:[%s1 + $0x24] sm:$0xf]
  %v37 = vld [vmem:[%s1 + $0x28] sm:$0xf]
  %v38 = vld [vmem:[%s1 + $0x2c] sm:$0xf]
  %v39 = vld [vmem:[%s1 + $0x30] sm:$0xf]
  %v40 = vld [vmem:[%s1 + $0x34] sm:$0xf]
  %v41 = vld [vmem:[%s1 + $0x38] sm:$0xf]
  %v42 = vld [vmem:[%s1 + $0x3c] sm:$0xf]
  %v43 = vld [vmem:[%s1 + $0x40] sm:$0xf]
  %v44 = vld [vmem:[%s1 + $0x44] sm:$0xf]
  %v45 = vld [vmem:[%s1 + $0x48] sm:$0xf]
  %v46 = vld [vmem:[%s1 + $0x4c] sm:$0xf]
  %v47 = vld [vmem:[%s1 + $0x50] sm:$0xf]
  %v48 = vld [vmem:[%s1 + $0x54] sm:$0xf]
  %v49 = vld [vmem:[%s1 + $0x58] sm:$0xf]
  %v50 = vld [vmem:[%s1 + $0x5c] sm:$0xf]
  %v51 = vld [vmem:[%s1 + $0x60] sm:$0xf]
  %v52 = vld [vmem:[%s1 + $0x64] sm:$0xf]
  %v53 = vld [vmem:[%s1 + $0x68] sm:$0xf]
  %v54 = vld [vmem:[%s1 + $0x6c] sm:$0xf]
  %v55 = vld [vmem:[%s1 + $0x70] sm:$0xf]
  %v56 = vld [vmem:[%s1 + $0x74] sm:$0xf]
  %v57 = vld [vmem:[%s1 + $0x78] sm:$0xf]
  %v58 = vld [vmem:[%s1 + $0x7c] sm:$0xf]
  %v59 = vld [vmem:[%s1 + $0x80] sm:$0xf]
  %v60 = vld [vmem:[%s1 + $0x84] sm:$0xf]
  %v61 = vld [vmem:[%s1 + $0x88] sm:$0xf]
  %v62 = vld [vmem:[%s1 + $0x8c] sm:$0xf]
  %v63 = vld [vmem:[%s1 + $0x90] sm:$0xf]
  %v64 = vld [vmem:[%s1 + $0x94] sm:$0xf]
  %v65 = vld [vmem:[%s1 + $0x98] sm:$0xf]
  %v66 = vld [vmem:[%s1 + $0x9c] sm:$0xf]
  %v67 = vld [vmem:[%s1 + $0xa0] sm:$0xf]
  %v68 = vld [vmem:[%s1 + $0xa4] sm:$0xf]
  %v69 = vld [vmem:[%s1 + $0xa8] sm:$0xf]
  %v70 = vld [vmem:[%s1 + $0xac] sm:$0xf]
  %v71 = vld [vmem:[%s1 + $0xb0] sm:$0xf]
  %v72 = vld [vmem:[%s1 + $0xb4] sm:$0xf]
  %v73 = vld [vmem:[%s1 + $0xb8] sm:$0xf]
  %v74 = vld [vmem:[%s1 + $0xbc] sm:$0xf]
  %v75 = vld [vmem:[%s1 + $0xc0] sm:$0xf]
  %v76 = vld [vmem:[%s1 + $0xc4] sm:$0xf]
  %v77 = vld [vmem:[%s1 + $0xc8] sm:$0xf]
  %v78 = vld [vmem:[%s1 + $0xcc] sm:$0xf]
  %v79 = vld [vmem:[%s1 + $0xd0] sm:$0xf]
  %v80 = vld [vmem:[%s1 + $0xd4] sm:$0xf]
  %v81 = vld [vmem:[%s1 + $0xd8] sm:$0xf]
  %v82 = vld [vmem:[%s1 + $0xdc] sm:$0xf]
  %v83 = vld [vmem:[%s1 + $0xe0] sm:$0xf]
  %v84 = vld [vmem:[%s1 + $0xe4] sm:$0xf]
  %v85 = vld [vmem:[%s1 + $0xe8] sm:$0xf]
  %v86 = vld [vmem:[%s1 + $0xec] sm:$0xf]
  %v87 = vld [vmem:[%s1 + $0xf0] sm:$0xf]
  %v88 = vld [vmem:[%s1 + $0xf4] sm:$0xf]
  %v89 = vld [vmem:[%s1 + $0xf8] sm:$0xf]
  %v90 = vld [vmem:[%s1 + $0xfc] sm:$0xf]
  %v91 = vld [vmem:[%s1 + $0x100] sm:$0xf]
  %v92 = vld [vmem:[%s1 + $0x104] sm:$0xf]
  %v93 = vld [vmem:[%s1 + $0x108] sm:$0xf]
  %v94 = vld [vmem:[%s1 + $0x10c] sm:$0xf]
  %v95 = vld [vmem:[%s1 + $0x110] sm:$0xf]
  %v96 = vld [vmem:[%s1 + $0x114] sm:$0xf]
  %v97 = vld [vmem:[%s1 + $0x118] sm:$0xf]
  %v98 = vld [vmem:[%s1 + $0x11c] sm:$0xf]
  %v99 = vld [vmem:[%s1 + $0x120] sm:$0xf]
  %v100 = vld [vmem:[%s1 + $0x124] sm:$0xf]
  %v101 = vld [vmem:[%s1 + $0x128] sm:$0xf]
  %v102 = vld [vmem:[%s1 + $0x12c] sm:$0xf]
  %v103 = vld [vmem:[%s1 + $0x130] sm:$0xf]
  %v104 = vld [vmem:[%s1 + $0x134] sm:$0xf]
  %v105 = vld [vmem:[%s1 + $0x138] sm:$0xf]
  %v106 = vld [vmem:[%s1 + $0x13c] sm:$0xf]
  %v107 = vld [vmem:[%s1 + $0x140] sm:$0xf]
  %v108 = vld [vmem:[%s1 + $0x144] sm:$0xf]
  %v109 = vld [vmem:[%s1 + $0x148] sm:$0xf]
  %v110 = vld [vmem:[%s1 + $0x14c] sm:$0xf]
  %v111 = vld [vmem:[%s1 + $0x150] sm:$0xf]
  %v112 = vld [vmem:[%s1 + $0x154] sm:$0xf]
  %v113 = vld [vmem:[%s1 + $0x158] sm:$0xf]
  %v114 = vld [vmem:[%s1 + $0x15c] sm:$0xf]
  %v115 = vld [vmem:[%s1 + $0x160] sm:$0xf]
  %v116 = vld [vmem:[%s1 + $0x164] sm:$0xf]
  %v117 = vld [vmem:[%s1 + $0x168] sm:$0xf]
  %v118 = vld [vmem:[%s1 + $0x16c] sm:$0xf]
  %v119 = vld [vmem:[%s1 + $0x170] sm:$0xf]
  %v120 = vld [vmem:[%s1 + $0x174] sm:$0xf]
  %v121 = vld [vmem:[%s1 + $0x178] sm:$0xf]
  %v122 = vld [vmem:[%s1 + $0x17c] sm:$0xf]
  %v123 = vld [vmem:[%s1 + $0x180] sm:$0xf]
  %v124 = vld [vmem:[%s1 + $0x184] sm:$0xf]
  %v125 = vld [vmem:[%s1 + $0x188] sm:$0xf]
  %v126 = vld [vmem:[%s1 + $0x18c] sm:$0xf]
  %v127 = vld [vmem:[%s1 + $0x190] sm:$0xf]
  %v128 = vld [vmem:[%s1 + $0x194] sm:$0xf]
  %v129 = vld [vmem:[%s1 + $0x198] sm:$0xf]
  %v130 = vld [vmem:[%s1 + $0x19c] sm:$0xf]
  %v131 = vld [vmem:[%s1 + $0x1a0] sm:$0xf]
  %v132 = vld [vmem:[%s1 + $0x1a4] sm:$0xf]
  %v133 = vld [vmem:[%s1 + $0x1a8] sm:$0xf]
  %v134 = vld [vmem:[%s1 + $0x1ac] sm:$0xf]
  %v135 = vld [vmem:[%s1 + $0x1b0] sm:$0xf]
  %v136 = vld [vmem:[%s1 + $0x1b4] sm:$0xf]
  %v137 = vld [vmem:[%s1 + $0x1b8] sm:$0xf]
  %v138 = vld [vmem:[%s1 + $0x1bc] sm:$0xf]
  %v139 = vld [vmem:[%s1 + $0x1c0] sm:$0xf]
  %v140 = vld [vmem:[%s1 + $0x1c4] sm:$0xf]
  %v141 = vld [vmem:[%s1 + $0x1c8] sm:$0xf]
  %v142 = vld [vmem:[%s1 + $0x1cc] sm:$0xf]
  %v143 = vld [vmem:[%s1 + $0x1d0] sm:$0xf]
  %v144 = vld [vmem:[%s1 + $0x1d4] sm:$0xf]
  %v145 = vld [vmem:[%s1 + $0x1d8] sm:$0xf]
  %v146 = vld [vmem:[%s1 + $0x1dc] sm:$0xf]
  %v147 = vld [vmem:[%s1 + $0x1e0] sm:$0xf]
  %v148 = vld [vmem:[%s1 + $0x1e4] sm:$0xf]
  %v149 = vld [vmem:[%s1 + $0x1e8] sm:$0xf]
  %v150 = vld [vmem:[%s1 + $0x1ec] sm:$0xf]
  %v151 = vld [vmem:[%s1 + $0x1f0] sm:$0xf]
  %v152 = vld [vmem:[%s1 + $0x1f4] sm:$0xf]
  %v153 = vld [vmem:[%s1 + $0x1f8] sm:$0xf]
  %v154 = vld [vmem:[%s1 + $0x1fc] sm:$0xf]
  %v155 = vld [vmem:[%s1 + $0x200] sm:$0xf]
  %v156 = vld [vmem:[%s1 + $0x204] sm:$0xf]
  %v157 = vld [vmem:[%s1 + $0x208] sm:$0xf]
  %v158 = vld [vmem:[%s1 + $0x20c] sm:$0xf]
  %v159 = vld [vmem:[%s1 + $0x210] sm:$0xf]
  %v160 = vld [vmem:[%s1 + $0x214] sm:$0xf]
  %v161 = vld [vmem:[%s1 + $0x218] sm:$0xf]
  %v162 = vld [vmem:[%s1 + $0x21c] sm:$0xf]
  %v163 = vld [vmem:[%s1 + $0x220] sm:$0xf]
  %v164 = vld [vmem:[%s1 + $0x224] sm:$0xf]
  %v165 = vld [vmem:[%s1 + $0x228] sm:$0xf]
  %v166 = vld [vmem:[%s1 + $0x22c] sm:$0xf]
  %v167 = vld [vmem:[%s1 + $0x230] sm:$0xf]
  %v168 = vld [vmem:[%s1 + $0x234] sm:$0xf]
  %v169 = vld [vmem:[%s1 + $0x238] sm:$0xf]
  %v170 = vld [vmem:[%s1 + $0x23c] sm:$0xf]
  %v171 = vld [vmem:[%s1 + $0x240] sm:$0xf]
  %v172 = vld [vmem:[%s1 + $0x244] sm:$0xf]
  %v173 = vld [vmem:[%s1 + $0x248] sm:$0xf]
  %v174 = vld [vmem:[%s1 + $0x24c] sm:$0xf]
  %v175 = vld [vmem:[%s1 + $0x250] sm:$0xf]
  %v176 = vld [vmem:[%s1 + $0x254] sm:$0xf]
  %v177 = vld [vmem:[%s1 + $0x258] sm:$0xf]
  %v178 = vld [vmem:[%s1 + $0x25c] sm:$0xf]
  %v179 = vld [vmem:[%s1 + $0x260] sm:$0xf]
  %v180 = vld [vmem:[%s1 + $0x264] sm:$0xf]
  %v181 = vld [vmem:[%s1 + $0x268] sm:$0xf]
  %v182 = vld [vmem:[%s1 + $0x26c] sm:$0xf]
  %v183 = vld [vmem:[%s1 + $0x270] sm:$0xf]
  %v184 = vld [vmem:[%s1 + $0x274] sm:$0xf]
  %v185 = vld [vmem:[%s1 + $0x278] sm:$0xf]
  %v186 = vld [vmem:[%s1 + $0x27c] sm:$0xf]
  %v187 = vld [vmem:[%s1 + $0x280] sm:$0xf]
  %v188 = vld [vmem:[%s1 + $0x284] sm:$0xf]
  %v189 = vld [vmem:[%s1 + $0x288] sm:$0xf]
  %v190 = vld [vmem:[%s1 + $0x28c] sm:$0xf]
  %v191 = vld [vmem:[%s1 + $0x290] sm:$0xf]
  %v192 = vld [vmem:[%s1 + $0x294] sm:$0xf]
  %v193 = vld [vmem:[%s1 + $0x298] sm:$0xf]
  %v194 = vld [vmem:[%s1 + $0x29c] sm:$0xf]
  %v195 = vld [vmem:[%s1 + $0x2a0] sm:$0xf]
  %v196 = vld [vmem:[%s1 + $0x2a4] sm:$0xf]
  %v197 = vld [vmem:[%s1 + $0x2a8] sm:$0xf]
  %v198 = vld [vmem:[%s1 + $0x2ac] sm:$0xf]
  %v199 = vld [vmem:[%s1 + $0x2b0] sm:$0xf]
  %v200 = vld [vmem:[%s1 + $0x2b4] sm:$0xf]
  %v201 = vld [vmem:[%s1 + $0x2b8] sm:$0xf]
  %v202 = vld [vmem:[%s1 + $0x2bc] sm:$0xf]
  %v203 = vld [vmem:[%s1 + $0x2c0] sm:$0xf]
  %v204 = vld [vmem:[%s1 + $0x2c4] sm:$0xf]
  %v205 = vld [vmem:[%s1 + $0x2c8] sm:$0xf]
  %v206 = vld [vmem:[%s1 + $0x2cc] sm:$0xf]
  %v207 = vld [vmem:[%s1 + $0x2d0] sm:$0xf]
  %v208 = vld [vmem:[%s1 + $0x2d4] sm:$0xf]
  %v209 = vld [vmem:[%s1 + $0x2d8] sm:$0xf]
  %v210 = vld [vmem:[%s1 + $0x2dc] sm:$0xf]
  %v211 = vld [vmem:[%s1 + $0x2e0] sm:$0xf]
  %v212 = vld [vmem:[%s1 + $0x2e4] sm:$0xf]
  %v213 = vld [vmem:[%s1 + $0x2e8] sm:$0xf]
  %v214 = vld [vmem:[%s1 + $0x2ec] sm:$0xf]
  %v215 = vld [vmem:[%s1 + $0x2f0] sm:$0xf]
  %v216 = vld [vmem:[%s1 + $0x2f4] sm:$0xf]
  %v217 = vld [vmem:[%s1 + $0x2f8] sm:$0xf]
  %v218 = vld [vmem:[%s1 + $0x2fc] sm:$0xf]
  %v219 = vld [vmem:[%s1 + $0x300] sm:$0xf]
  %v220 = vld [vmem:[%s1 + $0x304] sm:$0xf]
  %v221 = vld [vmem:[%s1 + $0x308] sm:$0xf]
  %v222 = vld [vmem:[%s1 + $0x30c] sm:$0xf]
  %v223 = vld [vmem:[%s1 + $0x310] sm:$0xf]
  %v224 = vld [vmem:[%s1 + $0x314] sm:$0xf]
  %v225 = vld [vmem:[%s1 + $0x318] sm:$0xf]
  %v226 = vld [vmem:[%s1 + $0x31c] sm:$0xf]
  %v227 = vld [vmem:[%s1 + $0x320] sm:$0xf]
  %v228 = vld [vmem:[%s1 + $0x324] sm:$0xf]
  %v229 = vld [vmem:[%s1 + $0x328] sm:$0xf]
  %v230 = vld [vmem:[%s1 + $0x32c] sm:$0xf]
  %v231 = vld [vmem:[%s1 + $0x330] sm:$0xf]
  %v232 = vld [vmem:[%s1 + $0x334] sm:$0xf]
  %v233 = vld [vmem:[%s1 + $0x338] sm:$0xf]
  %v234 = vld [vmem:[%s1 + $0x33c] sm:$0xf]
  %v235 = vld [vmem:[%s1 + $0x340] sm:$0xf]
  %v236 = vld [vmem:[%s1 + $0x344] sm:$0xf]
  %v237 = vld [vmem:[%s1 + $0x348] sm:$0xf]
  %v238 = vld [vmem:[%s1 + $0x34c] sm:$0xf]
  %v239 = vld [vmem:[%s1 + $0x350] sm:$0xf]
  %v240 = vld [vmem:[%s1 + $0x354] sm:$0xf]
  %v241 = vld [vmem:[%s1 + $0x358] sm:$0xf]
  %v242 = vld [vmem:[%s1 + $0x35c] sm:$0xf]
  %v243 = vld [vmem:[%s1 + $0x360] sm:$0xf]
  %v244 = vld [vmem:[%s1 + $0x364] sm:$0xf]
  %v245 = vld [vmem:[%s1 + $0x368] sm:$0xf]
  %v246 = vld [vmem:[%s1 + $0x36c] sm:$0xf]
  %v247 = vld [vmem:[%s1 + $0x370] sm:$0xf]
  %v248 = vld [vmem:[%s1 + $0x374] sm:$0xf]
  %v249 = vld [vmem:[%s1 + $0x378] sm:$0xf]
  %v250 = vld [vmem:[%s1 + $0x37c] sm:$0xf]
  %v251 = vld [vmem:[%s1 + $0x380] sm:$0xf]
  %v252 = vld [vmem:[%s1 + $0x384] sm:$0xf]
  %v253 = vld [vmem:[%s1 + $0x388] sm:$0xf]
  %v254 = vld [vmem:[%s1 + $0x38c] sm:$0xf]
  %v255 = vld [vmem:[%s1 + $0x390] sm:$0xf]
  %v256 = vld [vmem:[%s1 + $0x394] sm:$0xf]
  %v257 = vld [vmem:[%s1 + $0x398] sm:$0xf]
  %v258 = vld [vmem:[%s1 + $0x39c] sm:$0xf]
  %v259 = vld [vmem:[%s1 + $0x3a0] sm:$0xf]
  %v260 = vld [vmem:[%s1 + $0x3a4] sm:$0xf]
  %v261 = vld [vmem:[%s1 + $0x3a8] sm:$0xf]
  %v262 = vld [vmem:[%s1 + $0x3ac] sm:$0xf]
  %v263 = vld [vmem:[%s1 + $0x3b0] sm:$0xf]
  %v264 = vld [vmem:[%s1 + $0x3b4] sm:$0xf]
  %v265 = vld [vmem:[%s1 + $0x3b8] sm:$0xf]
  %v266 = vld [vmem:[%s1 + $0x3bc] sm:$0xf]
  %v267 = vld [vmem:[%s1 + $0x3c0] sm:$0xf]
  %v268 = vld [vmem:[%s1 + $0x3c4] sm:$0xf]
  %v269 = vld [vmem:[%s1 + $0x3c8] sm:$0xf]
  %v270 = vld [vmem:[%s1 + $0x3cc] sm:$0xf]
  %v271 = vld [vmem:[%s1 + $0x3d0] sm:$0xf]
  %v272 = vld [vmem:[%s1 + $0x3d4] sm:$0xf]
  %v273 = vld [vmem:[%s1 + $0x3d8] sm:$0xf]
  %v274 = vld [vmem:[%s1 + $0x3dc] sm:$0xf]
  %v275 = vld [vmem:[%s1 + $0x3e0] sm:$0xf]
  %v276 = vld [vmem:[%s1 + $0x3e4] sm:$0xf]
  %v277 = vld [vmem:[%s1 + $0x3e8] sm:$0xf]
  %v278 = vld [vmem:[%s1 + $0x3ec] sm:$0xf]
  %v279 = vld [vmem:[%s1 + $0x3f0] sm:$0xf]
  %v280 = vld [vmem:[%s1 + $0x3f4] sm:$0xf]
  %v281 = vld [vmem:[%s1 + $0x3f8] sm:$0xf]
  %v282 = vld [vmem:[%s1 + $0x3fc] sm:$0xf]
  %v283 = vld [vmem:[%s1 + $0x400] sm:$0xf]
  %v284 = vld [vmem:[%s1 + $0x404] sm:$0xf]
  %v285 = vld [vmem:[%s1 + $0x408] sm:$0xf]
  %v286 = vld [vmem:[%s1 + $0x40c] sm:$0xf]
  %v287 = vld [vmem:[%s1 + $0x410] sm:$0xf]
  %v288 = vld [vmem:[%s1 + $0x414] sm:$0xf]
  %v289 = vld [vmem:[%s1 + $0x418] sm:$0xf]
  %v290 = vld [vmem:[%s1 + $0x41c] sm:$0xf]
  %v291 = vld [vmem:[%s1 + $0x420] sm:$0xf]
  %v292 = vld [vmem:[%s1 + $0x424] sm:$0xf]
  %v293 = vld [vmem:[%s1 + $0x428] sm:$0xf]
  %v294 = vld [vmem:[%s1 + $0x42c] sm:$0xf]
  %v295 = vld [vmem:[%s1 + $0x430] sm:$0xf]
  %v296 = vld [vmem:[%s1 + $0x434] sm:$0xf]
  %v297 = vld [vmem:[%s1 + $0x438] sm:$0xf]
  %v298 = vld [vmem:[%s1 + $0x43c] sm:$0xf]
  %v299 = vld [vmem:[%s1 + $0x440] sm:$0xf]
  %v300 = vld [vmem:[%s1 + $0x444] sm:$0xf]
  %v301 = vld [vmem:[%s1 + $0x448] sm:$0xf]
  %v302 = vld [vmem:[%s1 + $0x44c] sm:$0xf]
  %v303 = vld [vmem:[%s1 + $0x450] sm:$0xf]
  %v304 = vld [vmem:[%s1 + $0x454] sm:$0xf]
  %v305 = vld [vmem:[%s1 + $0x458] sm:$0xf]
  %v306 = vld [vmem:[%s1 + $0x45c] sm:$0xf]
  %v307 = vld [vmem:[%s1 + $0x460] sm:$0xf]
  %v308 = vld [vmem:[%s1 + $0x464] sm:$0xf]
  %v309 = vld [vmem:[%s1 + $0x468] sm:$0xf]
  %v310 = vld [vmem:[%s1 + $0x46c] sm:$0xf]
  %v311 = vld [vmem:[%s1 + $0x470] sm:$0xf]
  %v312 = vld [vmem:[%s1 + $0x474] sm:$0xf]
  %v313 = vld [vmem:[%s1 + $0x478] sm:$0xf]
  %v314 = vld [vmem:[%s1 + $0x47c] sm:$0xf]
  %v315 = vld [vmem:[%s1 + $0x480] sm:$0xf]
  %v316 = vld [vmem:[%s1 + $0x484] sm:$0xf]
  %v317 = vld [vmem:[%s1 + $0x488] sm:$0xf]
  %v318 = vld [vmem:[%s1 + $0x48c] sm:$0xf]
  %v319 = vld [vmem:[%s1 + $0x490] sm:$0xf]
  %v320 = vld [vmem:[%s1 + $0x494] sm:$0xf]
  %v321 = vld [vmem:[%s1 + $0x498] sm:$0xf]
  %v322 = vld [vmem:[%s1 + $0x49c] sm:$0xf]
  %v323 = vld [vmem:[%s1 + $0x4a0] sm:$0xf]
  %v324 = vld [vmem:[%s1 + $0x4a4] sm:$0xf]
  %v325 = vld [vmem:[%s1 + $0x4a8] sm:$0xf]
  %v326 = vld [vmem:[%s1 + $0x4ac] sm:$0xf]
  %v327 = vld [vmem:[%s1 + $0x4b0] sm:$0xf]
  %v328 = vld [vmem:[%s1 + $0x4b4] sm:$0xf]
  %v329 = vld [vmem:[%s1 + $0x4b8] sm:$0xf]
  %v330 = vld [vmem:[%s1 + $0x4bc] sm:$0xf]
  %v331 = vld [vmem:[%s1 + $0x4c0] sm:$0xf]
  %v332 = vld [vmem:[%s1 + $0x4c4] sm:$0xf]
  %v333 = vld [vmem:[%s1 + $0x4c8] sm:$0xf]
  %v334 = vld [vmem:[%s1 + $0x4cc] sm:$0xf]
  %v335 = vld [vmem:[%s1 + $0x4d0] sm:$0xf]
  %v336 = vld [vmem:[%s1 + $0x4d4] sm:$0xf]
  %v337 = vld [vmem:[%s1 + $0x4d8] sm:$0xf]
  %v338 = vld [vmem:[%s1 + $0x4dc] sm:$0xf]
  %v339 = vld [vmem:[%s1 + $0x4e0] sm:$0xf]
  %v340 = vld [vmem:[%s1 + $0x4e4] sm:$0xf]
  %v341 = vld [vmem:[%s1 + $0x4e8] sm:$0xf]
  %v342 = vld [vmem:[%s1 + $0x4ec] sm:$0xf]
  %v343 = vld [vmem:[%s1 + $0x4f0] sm:$0xf]
  %v344 = vld [vmem:[%s1 + $0x4f4] sm:$0xf]
  %v345 = vld [vmem:[%s1 + $0x4f8] sm:$0xf]
  %v346 = vld [vmem:[%s1 + $0x4fc] sm:$0xf]
  %v347 = vld [vmem:[%s1 + $0x500] sm:$0xf]
  %v348 = vld [vmem:[%s1 + $0x504] sm:$0xf]
  %v349 = vld [vmem:[%s1 + $0x508] sm:$0xf]
  %v350 = vld [vmem:[%s1 + $0x50c] sm:$0xf]
  %v351 = vld [vmem:[%s1 + $0x510] sm:$0xf]
  %v352 = vld [vmem:[%s1 + $0x514] sm:$0xf]
  %v353 = vld [vmem:[%s1 + $0x518] sm:$0xf]
  %v354 = vld [vmem:[%s1 + $0x51c] sm:$0xf]
  %v355 = vld [vmem:[%s1 + $0x520] sm:$0xf]
  %v356 = vld [vmem:[%s1 + $0x524] sm:$0xf]
  %v357 = vld [vmem:[%s1 + $0x528] sm:$0xf]
  %v358 = vld [vmem:[%s1 + $0x52c] sm:$0xf]
  %v359 = vld [vmem:[%s1 + $0x530] sm:$0xf]
  %v360 = vld [vmem:[%s1 + $0x534] sm:$0xf]
  %v361 = vld [vmem:[%s1 + $0x538] sm:$0xf]
  %v362 = vld [vmem:[%s1 + $0x53c] sm:$0xf]
  %v363 = vld [vmem:[%s1 + $0x540] sm:$0xf]
  %v364 = vld [vmem:[%s1 + $0x544] sm:$0xf]
  %v365 = vld [vmem:[%s1 + $0x548] sm:$0xf]
  %v366 = vld [vmem:[%s1 + $0x54c] sm:$0xf]
  %v367 = vld [vmem:[%s1 + $0x550] sm:$0xf]
  %v368 = vld [vmem:[%s1 + $0x554] sm:$0xf]
  %v369 = vld [vmem:[%s1 + $0x558] sm:$0xf]
  %v370 = vld [vmem:[%s1 + $0x55c] sm:$0xf]
  %v371 = vld [vmem:[%s1 + $0x560] sm:$0xf]
  %v372 = vld [vmem:[%s1 + $0x564] sm:$0xf]
  %v373 = vld [vmem:[%s1 + $0x568] sm:$0xf]
  %v374 = vld [vmem:[%s1 + $0x56c] sm:$0xf]
  %v375 = vld [vmem:[%s1 + $0x570] sm:$0xf]
  %v376 = vld [vmem:[%s1 + $0x574] sm:$0xf]
  %v377 = vld [vmem:[%s1 + $0x578] sm:$0xf]
  %v378 = vld [vmem:[%s1 + $0x57c] sm:$0xf]
  %v379 = vld [vmem:[%s1 + $0x580] sm:$0xf]
  %v380 = vld [vmem:[%s1 + $0x584] sm:$0xf]
  %v381 = vld [vmem:[%s1 + $0x588] sm:$0xf]
  %v382 = vld [vmem:[%s1 + $0x58c] sm:$0xf]
  %v383 = vld [vmem:[%s1 + $0x590] sm:$0xf]
  %v384 = vld [vmem:[%s1 + $0x594] sm:$0xf]
  %v385 = vld [vmem:[%s1 + $0x598] sm:$0xf]
  %v386 = vld [vmem:[%s1 + $0x59c] sm:$0xf]
  %v387 = vld [vmem:[%s1 + $0x5a0] sm:$0xf]
  %v388 = vld [vmem:[%s1 + $0x5a4] sm:$0xf]
  %v389 = vld [vmem:[%s1 + $0x5a8] sm:$0xf]
  %v390 = vld [vmem:[%s1 + $0x5ac] sm:$0xf]
  %v391 = vld [vmem:[%s1 + $0x5b0] sm:$0xf]
  %v392 = vld [vmem:[%s1 + $0x5b4] sm:$0xf]
  %v393 = vld [vmem:[%s1 + $0x5b8] sm:$0xf]
  %v394 = vld [vmem:[%s1 + $0x5bc] sm:$0xf]
  %v395 = vld [vmem:[%s1 + $0x5c0] sm:$0xf]
  %v396 = vld [vmem:[%s1 + $0x5c4] sm:$0xf]
  %v397 = vld [vmem:[%s1 + $0x5c8] sm:$0xf]
  %v398 = vld [vmem:[%s1 + $0x5cc] sm:$0xf]
  %v399 = vld [vmem:[%s1 + $0x5d0] sm:$0xf]
  %v400 = vld [vmem:[%s1 + $0x5d4] sm:$0xf]
  %v401 = vld [vmem:[%s1 + $0x5d8] sm:$0xf]
  %v402 = vld [vmem:[%s1 + $0x5dc] sm:$0xf]
  %v403 = vld [vmem:[%s1 + $0x5e0] sm:$0xf]
  %v404 = vld [vmem:[%s1 + $0x5e4] sm:$0xf]
  %v405 = vld [vmem:[%s1 + $0x5e8] sm:$0xf]
  %v406 = vld [vmem:[%s1 + $0x5ec] sm:$0xf]
  %v407 = vld [vmem:[%s1 + $0x5f0] sm:$0xf]
  %v408 = vld [vmem:[%s1 + $0x5f4] sm:$0xf]
  %v409 = vld [vmem:[%s1 + $0x5f8] sm:$0xf]
  %v410 = vld [vmem:[%s1 + $0x5fc] sm:$0xf]
  %v411 = vld [vmem:[%s1 + $0x600] sm:$0xf]
  %v412 = vld [vmem:[%s1 + $0x604] sm:$0xf]
  %v413 = vld [vmem:[%s1 + $0x608] sm:$0xf]
  %v414 = vld [vmem:[%s1 + $0x60c] sm:$0xf]
  %v415 = vld [vmem:[%s1 + $0x610] sm:$0xf]
  %v416 = vld [vmem:[%s1 + $0x614] sm:$0xf]
  %v417 = vld [vmem:[%s1 + $0x618] sm:$0xf]
  %v418 = vld [vmem:[%s1 + $0x61c] sm:$0xf]
  %v419 = vld [vmem:[%s1 + $0x620] sm:$0xf]
  %v420 = vld [vmem:[%s1 + $0x624] sm:$0xf]
  %v421 = vld [vmem:[%s1 + $0x628] sm:$0xf]
  %v422 = vld [vmem:[%s1 + $0x62c] sm:$0xf]
  %v423 = vld [vmem:[%s1 + $0x630] sm:$0xf]
  %v424 = vld [vmem:[%s1 + $0x634] sm:$0xf]
  %v425 = vld [vmem:[%s1 + $0x638] sm:$0xf]
  %v426 = vld [vmem:[%s1 + $0x63c] sm:$0xf]
  %v427 = vld [vmem:[%s1 + $0x640] sm:$0xf]
  %v428 = vld [vmem:[%s1 + $0x644] sm:$0xf]
  %v429 = vld [vmem:[%s1 + $0x648] sm:$0xf]
  %v430 = vld [vmem:[%s1 + $0x64c] sm:$0xf]
  %v431 = vld [vmem:[%s1 + $0x650] sm:$0xf]
  %v432 = vld [vmem:[%s1 + $0x654] sm:$0xf]
  %v433 = vld [vmem:[%s1 + $0x658] sm:$0xf]
  %v434 = vld [vmem:[%s1 + $0x65c] sm:$0xf]
  %v435 = vld [vmem:[%s1 + $0x660] sm:$0xf]
  %v436 = vld [vmem:[%s1 + $0x664] sm:$0xf]
  %v437 = vld [vmem:[%s1 + $0x668] sm:$0xf]
  %v438 = vld [vmem:[%s1 + $0x66c] sm:$0xf]
  %v439 = vld [vmem:[%s1 + $0x670] sm:$0xf]
  %v440 = vld [vmem:[%s1 + $0x674] sm:$0xf]
  %v441 = vld [vmem:[%s1 + $0x678] sm:$0xf]
  %v442 = vld [vmem:[%s1 + $0x67c] sm:$0xf]
  %v443 = vld [vmem:[%s1 + $0x680] sm:$0xf]
  %v444 = vld [vmem:[%s1 + $0x684] sm:$0xf]
  %v445 = vld [vmem:[%s1 + $0x688] sm:$0xf]
  %v446 = vld [vmem:[%s1 + $0x68c] sm:$0xf]
  %v447 = vld [vmem:[%s1 + $0x690] sm:$0xf]
  %v448 = vld [vmem:[%s1 + $0x694] sm:$0xf]
  %v449 = vld [vmem:[%s1 + $0x698] sm:$0xf]
  %v450 = vld [vmem:[%s1 + $0x69c] sm:$0xf]
  %v451 = vld [vmem:[%s1 + $0x6a0] sm:$0xf]
  %v452 = vld [vmem:[%s1 + $0x6a4] sm:$0xf]
  %v453 = vld [vmem:[%s1 + $0x6a8] sm:$0xf]
  %v454 = vld [vmem:[%s1 + $0x6ac] sm:$0xf]
  %v455 = vld [vmem:[%s1 + $0x6b0] sm:$0xf]
  %v456 = vld [vmem:[%s1 + $0x6b4] sm:$0xf]
  %v457 = vld [vmem:[%s1 + $0x6b8] sm:$0xf]
  %v458 = vld [vmem:[%s1 + $0x6bc] sm:$0xf]
  %v459 = vld [vmem:[%s1 + $0x6c0] sm:$0xf]
  %v460 = vld [vmem:[%s1 + $0x6c4] sm:$0xf]
  %v461 = vld [vmem:[%s1 + $0x6c8] sm:$0xf]
  %v462 = vld [vmem:[%s1 + $0x6cc] sm:$0xf]
  %v463 = vld [vmem:[%s1 + $0x6d0] sm:$0xf]
  %v464 = vld [vmem:[%s1 + $0x6d4] sm:$0xf]
  %v465 = vld [vmem:[%s1 + $0x6d8] sm:$0xf]
  %v466 = vld [vmem:[%s1 + $0x6dc] sm:$0xf]
  %v467 = vld [vmem:[%s1 + $0x6e0] sm:$0xf]
  %v468 = vld [vmem:[%s1 + $0x6e4] sm:$0xf]
  %v469 = vld [vmem:[%s1 + $0x6e8] sm:$0xf]
  %v470 = vld [vmem:[%s1 + $0x6ec] sm:$0xf]
  %v471 = vld [vmem:[%s1 + $0x6f0] sm:$0xf]
  %v472 = vld [vmem:[%s1 + $0x6f4] sm:$0xf]
  %v473 = vld [vmem:[%s1 + $0x6f8] sm:$0xf]
  %v474 = vld [vmem:[%s1 + $0x6fc] sm:$0xf]
  %v475 = vld [vmem:[%s1 + $0x700] sm:$0xf]
  %v476 = vld [vmem:[%s1 + $0x704] sm:$0xf]
  %v477 = vld [vmem:[%s1 + $0x708] sm:$0xf]
  %v478 = vld [vmem:[%s1 + $0x70c] sm:$0xf]
  %v479 = vld [vmem:[%s1 + $0x710] sm:$0xf]
  %v480 = vld [vmem:[%s1 + $0x714] sm:$0xf]
  %v481 = vld [vmem:[%s1 + $0x718] sm:$0xf]
  %v482 = vld [vmem:[%s1 + $0x71c] sm:$0xf]
  %v483 = vld [vmem:[%s1 + $0x720] sm:$0xf]
  %v484 = vld [vmem:[%s1 + $0x724] sm:$0xf]
  %v485 = vld [vmem:[%s1 + $0x728] sm:$0xf]
  %v486 = vld [vmem:[%s1 + $0x72c] sm:$0xf]
  %v487 = vld [vmem:[%s1 + $0x730] sm:$0xf]
  %v488 = vld [vmem:[%s1 + $0x734] sm:$0xf]
  %v489 = vld [vmem:[%s1 + $0x738] sm:$0xf]
  %v490 = vld [vmem:[%s1 + $0x73c] sm:$0xf]
  %v491 = vld [vmem:[%s1 + $0x740] sm:$0xf]
  %v492 = vld [vmem:[%s1 + $0x744] sm:$0xf]
  %v493 = vld [vmem:[%s1 + $0x748] sm:$0xf]
  %v494 = vld [vmem:[%s1 + $0x74c] sm:$0xf]
  %v495 = vld [vmem:[%s1 + $0x750] sm:$0xf]
  %v496 = vld [vmem:[%s1 + $0x754] sm:$0xf]
  %v497 = vld [vmem:[%s1 + $0x758] sm:$0xf]
  %v498 = vld [vmem:[%s1 + $0x75c] sm:$0xf]
  %v499 = vld [vmem:[%s1 + $0x760] sm:$0xf]
  %v500 = vld [vmem:[%s1 + $0x764] sm:$0xf]
  %v501 = vld [vmem:[%s1 + $0x768] sm:$0xf]
  %v502 = vld [vmem:[%s1 + $0x76c] sm:$0xf]
  %v503 = vld [vmem:[%s1 + $0x770] sm:$0xf]
  %v504 = vld [vmem:[%s1 + $0x774] sm:$0xf]
  %v505 = vld [vmem:[%s1 + $0x778] sm:$0xf]
  %v506 = vld [vmem:[%s1 + $0x77c] sm:$0xf]
  %v507 = vld [vmem:[%s1 + $0x780] sm:$0xf]
  %v508 = vld [vmem:[%s1 + $0x784] sm:$0xf]
  %v509 = vld [vmem:[%s1 + $0x788] sm:$0xf]
  %v510 = vld [vmem:[%s1 + $0x78c] sm:$0xf]
  %v511 = vld [vmem:[%s1 + $0x790] sm:$0xf]
  %v512 = vld [vmem:[%s1 + $0x794] sm:$0xf]
  %v513 = vld [vmem:[%s1 + $0x798] sm:$0xf]
  %v514 = vld [vmem:[%s1 + $0x79c] sm:$0xf]
  %v515 = vld [vmem:[%s1 + $0x7a0] sm:$0xf]
  %v516 = vld [vmem:[%s1 + $0x7a4] sm:$0xf]
  %v517 = vld [vmem:[%s1 + $0x7a8] sm:$0xf]
  %v518 = vld [vmem:[%s1 + $0x7ac] sm:$0xf]
  %v519 = vld [vmem:[%s1 + $0x7b0] sm:$0xf]
  %v520 = vld [vmem:[%s1 + $0x7b4] sm:$0xf]
  %v521 = vld [vmem:[%s1 + $0x7b8] sm:$0xf]
  %v522 = vld [vmem:[%s1 + $0x7bc] sm:$0xf]
  %v523 = vld [vmem:[%s1 + $0x7c0] sm:$0xf]
  %v524 = vld [vmem:[%s1 + $0x7c4] sm:$0xf]
  %v525 = vld [vmem:[%s1 + $0x7c8] sm:$0xf]
  %v526 = vld [vmem:[%s1 + $0x7cc] sm:$0xf]
  %v527 = vld [vmem:[%s1 + $0x7d0] sm:$0xf]
  %v528 = vld [vmem:[%s1 + $0x7d4] sm:$0xf]
  %v529 = vld [vmem:[%s1 + $0x7d8] sm:$0xf]
  %v530 = vld [vmem:[%s1 + $0x7dc] sm:$0xf]
  %v531 = vld [vmem:[%s1 + $0x7e0] sm:$0xf]
  %v532 = vld [vmem:[%s1 + $0x7e4] sm:$0xf]
  %v533 = vld [vmem:[%s1 + $0x7e8] sm:$0xf]
  %v534 = vld [vmem:[%s1 + $0x7ec] sm:$0xf]
  %v535 = vld [vmem:[%s1 + $0x7f0] sm:$0xf]
  %v536 = vld [vmem:[%s1 + $0x7f4] sm:$0xf]
  %v537 = vld [vmem:[%s1 + $0x7f8] sm:$0xf]
  %v538 = vld [vmem:[%s1 + $0x7fc] sm:$0xf]
  %v555 = vunpack.c.l.b16 %v11
  %v556 = vunpack.c.h.b16 %v11
  %v557 = vunpack.c.l.b16 %v12
  %v558 = vunpack.c.h.b16 %v12
  %v559 = vunpack.c.l.b16 %v13
  %v560 = vunpack.c.h.b16 %v13
  %v561 = vunpack.c.l.b16 %v14
  %v562 = vunpack.c.h.b16 %v14
  %v563 = vunpack.c.l.b16 %v15
  %v564 = vunpack.c.h.b16 %v15
  %v565 = vunpack.c.l.b16 %v16
  %v566 = vunpack.c.h.b16 %v16
  %v567 = vunpack.c.l.b16 %v17
  %v568 = vunpack.c.h.b16 %v17
  %v569 = vunpack.c.l.b16 %v18
  %v570 = vunpack.c.h.b16 %v18
  %v571 = vunpack.c.l.b16 %v19
  %v572 = vunpack.c.h.b16 %v19
  %v573 = vunpack.c.l.b16 %v20
  %v574 = vunpack.c.h.b16 %v20
  %v575 = vunpack.c.l.b16 %v21
  %v576 = vunpack.c.h.b16 %v21
  %v577 = vunpack.c.l.b16 %v22
  %v578 = vunpack.c.h.b16 %v22
  %v579 = vunpack.c.l.b16 %v23
  %v580 = vunpack.c.h.b16 %v23
  %v581 = vunpack.c.l.b16 %v24
  %v582 = vunpack.c.h.b16 %v24
  %v583 = vunpack.c.l.b16 %v25
  %v584 = vunpack.c.h.b16 %v25
  %v585 = vunpack.c.l.b16 %v26
  %v586 = vunpack.c.h.b16 %v26
  %v587 = vpack.c.b16 %v555, %v555
  %v588 = vpack.c.b16 %v556, %v556
  %v589 = vpack.c.b16 %v557, %v557
  %v590 = vpack.c.b16 %v558, %v558
  %v591 = vpack.c.b16 %v559, %v559
  %v592 = vpack.c.b16 %v560, %v560
  %v593 = vpack.c.b16 %v561, %v561
  %v594 = vpack.c.b16 %v562, %v562
  %v595 = vpack.c.b16 %v563, %v563
  %v596 = vpack.c.b16 %v564, %v564
  %v597 = vpack.c.b16 %v565, %v565
  %v598 = vpack.c.b16 %v566, %v566
  %v599 = vpack.c.b16 %v567, %v567
  %v600 = vpack.c.b16 %v568, %v568
  %v601 = vpack.c.b16 %v569, %v569
  %v602 = vpack.c.b16 %v570, %v570
  %v603 = vpack.c.b16 %v571, %v571
  %v604 = vpack.c.b16 %v572, %v572
  %v605 = vpack.c.b16 %v573, %v573
  %v606 = vpack.c.b16 %v574, %v574
  %v607 = vpack.c.b16 %v575, %v575
  %v608 = vpack.c.b16 %v576, %v576
  %v609 = vpack.c.b16 %v577, %v577
  %v610 = vpack.c.b16 %v578, %v578
  %v611 = vpack.c.b16 %v579, %v579
  %v612 = vpack.c.b16 %v580, %v580
  %v613 = vpack.c.b16 %v581, %v581
  %v614 = vpack.c.b16 %v582, %v582
  %v615 = vpack.c.b16 %v583, %v583
  %v616 = vpack.c.b16 %v584, %v584
  %v617 = vpack.c.b16 %v585, %v585
  %v618 = vpack.c.b16 %v586, %v586
  %v1163 = vunpack.c.l.b16 %v27
  %v1164 = vunpack.c.l.b16 %v28
  %v1165 = vunpack.c.l.b16 %v29
  %v1166 = vunpack.c.l.b16 %v30
  %v1167 = vunpack.c.l.b16 %v31
  %v1168 = vunpack.c.l.b16 %v32
  %v1169 = vunpack.c.l.b16 %v33
  %v1170 = vunpack.c.l.b16 %v34
  %v1171 = vunpack.c.l.b16 %v35
  %v1172 = vunpack.c.l.b16 %v36
  %v1173 = vunpack.c.l.b16 %v37
  %v1174 = vunpack.c.l.b16 %v38
  %v1175 = vunpack.c.l.b16 %v39
  %v1176 = vunpack.c.l.b16 %v40
  %v1177 = vunpack.c.l.b16 %v41
  %v1178 = vunpack.c.l.b16 %v42
  %v1179 = vunpack.c.l.b16 %v43
  %v1180 = vunpack.c.l.b16 %v44
  %v1181 = vunpack.c.l.b16 %v45
  %v1182 = vunpack.c.l.b16 %v46
  %v1183 = vunpack.c.l.b16 %v47
  %v1184 = vunpack.c.l.b16 %v48
  %v1185 = vunpack.c.l.b16 %v49
  %v1186 = vunpack.c.l.b16 %v50
  %v1187 = vunpack.c.l.b16 %v51
  %v1188 = vunpack.c.l.b16 %v52
  %v1189 = vunpack.c.l.b16 %v53
  %v1190 = vunpack.c.l.b16 %v54
  %v1191 = vunpack.c.l.b16 %v55
  %v1192 = vunpack.c.l.b16 %v56
  %v1193 = vunpack.c.l.b16 %v57
  %v1194 = vunpack.c.l.b16 %v58
  %v1195 = vunpack.c.l.b16 %v59
  %v1196 = vunpack.c.l.b16 %v60
  %v1197 = vunpack.c.l.b16 %v61
  %v1198 = vunpack.c.l.b16 %v62
  %v1199 = vunpack.c.l.b16 %v63
  %v1200 = vunpack.c.l.b16 %v64
  %v1201 = vunpack.c.l.b16 %v65
  %v1202 = vunpack.c.l.b16 %v66
  %v1203 = vunpack.c.l.b16 %v67
  %v1204 = vunpack.c.l.b16 %v68
  %v1205 = vunpack.c.l.b16 %v69
  %v1206 = vunpack.c.l.b16 %v70
  %v1207 = vunpack.c.l.b16 %v71
  %v1208 = vunpack.c.l.b16 %v72
  %v1209 = vunpack.c.l.b16 %v73
  %v1210 = vunpack.c.l.b16 %v74
  %v1211 = vunpack.c.l.b16 %v75
  %v1212 = vunpack.c.l.b16 %v76
  %v1213 = vunpack.c.l.b16 %v77
  %v1214 = vunpack.c.l.b16 %v78
  %v1215 = vunpack.c.l.b16 %v79
  %v1216 = vunpack.c.l.b16 %v80
  %v1217 = vunpack.c.l.b16 %v81
  %v1218 = vunpack.c.l.b16 %v82
  %v1219 = vunpack.c.l.b16 %v83
  %v1220 = vunpack.c.l.b16 %v84
  %v1221 = vunpack.c.l.b16 %v85
  %v1222 = vunpack.c.l.b16 %v86
  %v1223 = vunpack.c.l.b16 %v87
  %v1224 = vunpack.c.l.b16 %v88
  %v1225 = vunpack.c.l.b16 %v89
  %v1226 = vunpack.c.l.b16 %v90
  %v1227 = vunpack.c.l.b16 %v91
  %v1228 = vunpack.c.l.b16 %v92
  %v1229 = vunpack.c.l.b16 %v93
  %v1230 = vunpack.c.l.b16 %v94
  %v1231 = vunpack.c.l.b16 %v95
  %v1232 = vunpack.c.l.b16 %v96
  %v1233 = vunpack.c.l.b16 %v97
  %v1234 = vunpack.c.l.b16 %v98
  %v1235 = vunpack.c.l.b16 %v99
  %v1236 = vunpack.c.l.b16 %v100
  %v1237 = vunpack.c.l.b16 %v101
  %v1238 = vunpack.c.l.b16 %v102
  %v1239 = vunpack.c.l.b16 %v103
  %v1240 = vunpack.c.l.b16 %v104
  %v1241 = vunpack.c.l.b16 %v105
  %v1242 = vunpack.c.l.b16 %v106
  %v1243 = vunpack.c.l.b16 %v107
  %v1244 = vunpack.c.l.b16 %v108
  %v1245 = vunpack.c.l.b16 %v109
  %v1246 = vunpack.c.l.b16 %v110
  %v1247 = vunpack.c.l.b16 %v111
  %v1248 = vunpack.c.l.b16 %v112
  %v1249 = vunpack.c.l.b16 %v113
  %v1250 = vunpack.c.l.b16 %v114
  %v1251 = vunpack.c.l.b16 %v115
  %v1252 = vunpack.c.l.b16 %v116
  %v1253 = vunpack.c.l.b16 %v117
  %v1254 = vunpack.c.l.b16 %v118
  %v1255 = vunpack.c.l.b16 %v119
  %v1256 = vunpack.c.l.b16 %v120
  %v1257 = vunpack.c.l.b16 %v121
  %v1258 = vunpack.c.l.b16 %v122
  %v1259 = vunpack.c.l.b16 %v123
  %v1260 = vunpack.c.l.b16 %v124
  %v1261 = vunpack.c.l.b16 %v125
  %v1262 = vunpack.c.l.b16 %v126
  %v1263 = vunpack.c.l.b16 %v127
  %v1264 = vunpack.c.l.b16 %v128
  %v1265 = vunpack.c.l.b16 %v129
  %v1266 = vunpack.c.l.b16 %v130
  %v1267 = vunpack.c.l.b16 %v131
  %v1268 = vunpack.c.l.b16 %v132
  %v1269 = vunpack.c.l.b16 %v133
  %v1270 = vunpack.c.l.b16 %v134
  %v1271 = vunpack.c.l.b16 %v135
  %v1272 = vunpack.c.l.b16 %v136
  %v1273 = vunpack.c.l.b16 %v137
  %v1274 = vunpack.c.l.b16 %v138
  %v1275 = vunpack.c.l.b16 %v139
  %v1276 = vunpack.c.l.b16 %v140
  %v1277 = vunpack.c.l.b16 %v141
  %v1278 = vunpack.c.l.b16 %v142
  %v1279 = vunpack.c.l.b16 %v143
  %v1280 = vunpack.c.l.b16 %v144
  %v1281 = vunpack.c.l.b16 %v145
  %v1282 = vunpack.c.l.b16 %v146
  %v1283 = vunpack.c.l.b16 %v147
  %v1284 = vunpack.c.l.b16 %v148
  %v1285 = vunpack.c.l.b16 %v149
  %v1286 = vunpack.c.l.b16 %v150
  %v1287 = vunpack.c.l.b16 %v151
  %v1288 = vunpack.c.l.b16 %v152
  %v1289 = vunpack.c.l.b16 %v153
  %v1290 = vunpack.c.l.b16 %v154
  %v1291 = vunpack.c.l.b16 %v155
  %v1292 = vunpack.c.l.b16 %v156
  %v1293 = vunpack.c.l.b16 %v157
  %v1294 = vunpack.c.l.b16 %v158
  %v1295 = vunpack.c.l.b16 %v159
  %v1296 = vunpack.c.l.b16 %v160
  %v1297 = vunpack.c.l.b16 %v161
  %v1298 = vunpack.c.l.b16 %v162
  %v1299 = vunpack.c.l.b16 %v163
  %v1300 = vunpack.c.l.b16 %v164
  %v1301 = vunpack.c.l.b16 %v165
  %v1302 = vunpack.c.l.b16 %v166
  %v1303 = vunpack.c.l.b16 %v167
  %v1304 = vunpack.c.l.b16 %v168
  %v1305 = vunpack.c.l.b16 %v169
  %v1306 = vunpack.c.l.b16 %v170
  %v1307 = vunpack.c.l.b16 %v171
  %v1308 = vunpack.c.l.b16 %v172
  %v1309 = vunpack.c.l.b16 %v173
  %v1310 = vunpack.c.l.b16 %v174
  %v1311 = vunpack.c.l.b16 %v175
  %v1312 = vunpack.c.l.b16 %v176
  %v1313 = vunpack.c.l.b16 %v177
  %v1314 = vunpack.c.l.b16 %v178
  %v1315 = vunpack.c.l.b16 %v179
  %v1316 = vunpack.c.l.b16 %v180
  %v1317 = vunpack.c.l.b16 %v181
  %v1318 = vunpack.c.l.b16 %v182
  %v1319 = vunpack.c.l.b16 %v183
  %v1320 = vunpack.c.l.b16 %v184
  %v1321 = vunpack.c.l.b16 %v185
  %v1322 = vunpack.c.l.b16 %v186
  %v1323 = vunpack.c.l.b16 %v187
  %v1324 = vunpack.c.l.b16 %v188
  %v1325 = vunpack.c.l.b16 %v189
  %v1326 = vunpack.c.l.b16 %v190
  %v1327 = vunpack.c.l.b16 %v191
  %v1328 = vunpack.c.l.b16 %v192
  %v1329 = vunpack.c.l.b16 %v193
  %v1330 = vunpack.c.l.b16 %v194
  %v1331 = vunpack.c.l.b16 %v195
  %v1332 = vunpack.c.l.b16 %v196
  %v1333 = vunpack.c.l.b16 %v197
  %v1334 = vunpack.c.l.b16 %v198
  %v1335 = vunpack.c.l.b16 %v199
  %v1336 = vunpack.c.l.b16 %v200
  %v1337 = vunpack.c.l.b16 %v201
  %v1338 = vunpack.c.l.b16 %v202
  %v1339 = vunpack.c.l.b16 %v203
  %v1340 = vunpack.c.l.b16 %v204
  %v1341 = vunpack.c.l.b16 %v205
  %v1342 = vunpack.c.l.b16 %v206
  %v1343 = vunpack.c.l.b16 %v207
  %v1344 = vunpack.c.l.b16 %v208
  %v1345 = vunpack.c.l.b16 %v209
  %v1346 = vunpack.c.l.b16 %v210
  %v1347 = vunpack.c.l.b16 %v211
  %v1348 = vunpack.c.l.b16 %v212
  %v1349 = vunpack.c.l.b16 %v213
  %v1350 = vunpack.c.l.b16 %v214
  %v1351 = vunpack.c.l.b16 %v215
  %v1352 = vunpack.c.l.b16 %v216
  %v1353 = vunpack.c.l.b16 %v217
  %v1354 = vunpack.c.l.b16 %v218
  %v1355 = vunpack.c.l.b16 %v219
  %v1356 = vunpack.c.l.b16 %v220
  %v1357 = vunpack.c.l.b16 %v221
  %v1358 = vunpack.c.l.b16 %v222
  %v1359 = vunpack.c.l.b16 %v223
  %v1360 = vunpack.c.l.b16 %v224
  %v1361 = vunpack.c.l.b16 %v225
  %v1362 = vunpack.c.l.b16 %v226
  %v1363 = vunpack.c.l.b16 %v227
  %v1364 = vunpack.c.l.b16 %v228
  %v1365 = vunpack.c.l.b16 %v229
  %v1366 = vunpack.c.l.b16 %v230
  %v1367 = vunpack.c.l.b16 %v231
  %v1368 = vunpack.c.l.b16 %v232
  %v1369 = vunpack.c.l.b16 %v233
  %v1370 = vunpack.c.l.b16 %v234
  %v1371 = vunpack.c.l.b16 %v235
  %v1372 = vunpack.c.l.b16 %v236
  %v1373 = vunpack.c.l.b16 %v237
  %v1374 = vunpack.c.l.b16 %v238
  %v1375 = vunpack.c.l.b16 %v239
  %v1376 = vunpack.c.l.b16 %v240
  %v1377 = vunpack.c.l.b16 %v241
  %v1378 = vunpack.c.l.b16 %v242
  %v1379 = vunpack.c.l.b16 %v243
  %v1380 = vunpack.c.l.b16 %v244
  %v1381 = vunpack.c.l.b16 %v245
  %v1382 = vunpack.c.l.b16 %v246
  %v1383 = vunpack.c.l.b16 %v247
  %v1384 = vunpack.c.l.b16 %v248
  %v1385 = vunpack.c.l.b16 %v249
  %v1386 = vunpack.c.l.b16 %v250
  %v1387 = vunpack.c.l.b16 %v251
  %v1388 = vunpack.c.l.b16 %v252
  %v1389 = vunpack.c.l.b16 %v253
  %v1390 = vunpack.c.l.b16 %v254
  %v1391 = vunpack.c.l.b16 %v255
  %v1392 = vunpack.c.l.b16 %v256
  %v1393 = vunpack.c.l.b16 %v257
  %v1394 = vunpack.c.l.b16 %v258
  %v1395 = vunpack.c.l.b16 %v259
  %v1396 = vunpack.c.l.b16 %v260
  %v1397 = vunpack.c.l.b16 %v261
  %v1398 = vunpack.c.l.b16 %v262
  %v1399 = vunpack.c.l.b16 %v263
  %v1400 = vunpack.c.l.b16 %v264
  %v1401 = vunpack.c.l.b16 %v265
  %v1402 = vunpack.c.l.b16 %v266
  %v1403 = vunpack.c.l.b16 %v267
  %v1404 = vunpack.c.l.b16 %v268
  %v1405 = vunpack.c.l.b16 %v269
  %v1406 = vunpack.c.l.b16 %v270
  %v1407 = vunpack.c.l.b16 %v271
  %v1408 = vunpack.c.l.b16 %v272
  %v1409 = vunpack.c.l.b16 %v273
  %v1410 = vunpack.c.l.b16 %v274
  %v1411 = vunpack.c.l.b16 %v275
  %v1412 = vunpack.c.l.b16 %v276
  %v1413 = vunpack.c.l.b16 %v277
  %v1414 = vunpack.c.l.b16 %v278
  %v1415 = vunpack.c.l.b16 %v279
  %v1416 = vunpack.c.l.b16 %v280
  %v1417 = vunpack.c.l.b16 %v281
  %v1418 = vunpack.c.l.b16 %v282
  %v1419 = vunpack.c.l.b16 %v283
  %v1420 = vunpack.c.l.b16 %v284
  %v1421 = vunpack.c.l.b16 %v285
  %v1422 = vunpack.c.l.b16 %v286
  %v1423 = vunpack.c.l.b16 %v287
  %v1424 = vunpack.c.l.b16 %v288
  %v1425 = vunpack.c.l.b16 %v289
  %v1426 = vunpack.c.l.b16 %v290
  %v1427 = vunpack.c.l.b16 %v291
  %v1428 = vunpack.c.l.b16 %v292
  %v1429 = vunpack.c.l.b16 %v293
  %v1430 = vunpack.c.l.b16 %v294
  %v1431 = vunpack.c.l.b16 %v295
  %v1432 = vunpack.c.l.b16 %v296
  %v1433 = vunpack.c.l.b16 %v297
  %v1434 = vunpack.c.l.b16 %v298
  %v1435 = vunpack.c.l.b16 %v299
  %v1436 = vunpack.c.l.b16 %v300
  %v1437 = vunpack.c.l.b16 %v301
  %v1438 = vunpack.c.l.b16 %v302
  %v1439 = vunpack.c.l.b16 %v303
  %v1440 = vunpack.c.l.b16 %v304
  %v1441 = vunpack.c.l.b16 %v305
  %v1442 = vunpack.c.l.b16 %v306
  %v1443 = vunpack.c.l.b16 %v307
  %v1444 = vunpack.c.l.b16 %v308
  %v1445 = vunpack.c.l.b16 %v309
  %v1446 = vunpack.c.l.b16 %v310
  %v1447 = vunpack.c.l.b16 %v311
  %v1448 = vunpack.c.l.b16 %v312
  %v1449 = vunpack.c.l.b16 %v313
  %v1450 = vunpack.c.l.b16 %v314
  %v1451 = vunpack.c.l.b16 %v315
  %v1452 = vunpack.c.l.b16 %v316
  %v1453 = vunpack.c.l.b16 %v317
  %v1454 = vunpack.c.l.b16 %v318
  %v1455 = vunpack.c.l.b16 %v319
  %v1456 = vunpack.c.l.b16 %v320
  %v1457 = vunpack.c.l.b16 %v321
  %v1458 = vunpack.c.l.b16 %v322
  %v1459 = vunpack.c.l.b16 %v323
  %v1460 = vunpack.c.l.b16 %v324
  %v1461 = vunpack.c.l.b16 %v325
  %v1462 = vunpack.c.l.b16 %v326
  %v1463 = vunpack.c.l.b16 %v327
  %v1464 = vunpack.c.l.b16 %v328
  %v1465 = vunpack.c.l.b16 %v329
  %v1466 = vunpack.c.l.b16 %v330
  %v1467 = vunpack.c.l.b16 %v331
  %v1468 = vunpack.c.l.b16 %v332
  %v1469 = vunpack.c.l.b16 %v333
  %v1470 = vunpack.c.l.b16 %v334
  %v1471 = vunpack.c.l.b16 %v335
  %v1472 = vunpack.c.l.b16 %v336
  %v1473 = vunpack.c.l.b16 %v337
  %v1474 = vunpack.c.l.b16 %v338
  %v1475 = vunpack.c.l.b16 %v339
  %v1476 = vunpack.c.l.b16 %v340
  %v1477 = vunpack.c.l.b16 %v341
  %v1478 = vunpack.c.l.b16 %v342
  %v1479 = vunpack.c.l.b16 %v343
  %v1480 = vunpack.c.l.b16 %v344
  %v1481 = vunpack.c.l.b16 %v345
  %v1482 = vunpack.c.l.b16 %v346
  %v1483 = vunpack.c.l.b16 %v347
  %v1484 = vunpack.c.l.b16 %v348
  %v1485 = vunpack.c.l.b16 %v349
  %v1486 = vunpack.c.l.b16 %v350
  %v1487 = vunpack.c.l.b16 %v351
  %v1488 = vunpack.c.l.b16 %v352
  %v1489 = vunpack.c.l.b16 %v353
  %v1490 = vunpack.c.l.b16 %v354
  %v1491 = vunpack.c.l.b16 %v355
  %v1492 = vunpack.c.l.b16 %v356
  %v1493 = vunpack.c.l.b16 %v357
  %v1494 = vunpack.c.l.b16 %v358
  %v1495 = vunpack.c.l.b16 %v359
  %v1496 = vunpack.c.l.b16 %v360
  %v1497 = vunpack.c.l.b16 %v361
  %v1498 = vunpack.c.l.b16 %v362
  %v1499 = vunpack.c.l.b16 %v363
  %v1500 = vunpack.c.l.b16 %v364
  %v1501 = vunpack.c.l.b16 %v365
  %v1502 = vunpack.c.l.b16 %v366
  %v1503 = vunpack.c.l.b16 %v367
  %v1504 = vunpack.c.l.b16 %v368
  %v1505 = vunpack.c.l.b16 %v369
  %v1506 = vunpack.c.l.b16 %v370
  %v1507 = vunpack.c.l.b16 %v371
  %v1508 = vunpack.c.l.b16 %v372
  %v1509 = vunpack.c.l.b16 %v373
  %v1510 = vunpack.c.l.b16 %v374
  %v1511 = vunpack.c.l.b16 %v375
  %v1512 = vunpack.c.l.b16 %v376
  %v1513 = vunpack.c.l.b16 %v377
  %v1514 = vunpack.c.l.b16 %v378
  %v1515 = vunpack.c.l.b16 %v379
  %v1516 = vunpack.c.l.b16 %v380
  %v1517 = vunpack.c.l.b16 %v381
  %v1518 = vunpack.c.l.b16 %v382
  %v1519 = vunpack.c.l.b16 %v383
  %v1520 = vunpack.c.l.b16 %v384
  %v1521 = vunpack.c.l.b16 %v385
  %v1522 = vunpack.c.l.b16 %v386
  %v1523 = vunpack.c.l.b16 %v387
  %v1524 = vunpack.c.l.b16 %v388
  %v1525 = vunpack.c.l.b16 %v389
  %v1526 = vunpack.c.l.b16 %v390
  %v1527 = vunpack.c.l.b16 %v391
  %v1528 = vunpack.c.l.b16 %v392
  %v1529 = vunpack.c.l.b16 %v393
  %v1530 = vunpack.c.l.b16 %v394
  %v1531 = vunpack.c.l.b16 %v395
  %v1532 = vunpack.c.l.b16 %v396
  %v1533 = vunpack.c.l.b16 %v397
  %v1534 = vunpack.c.l.b16 %v398
  %v1535 = vunpack.c.l.b16 %v399
  %v1536 = vunpack.c.l.b16 %v400
  %v1537 = vunpack.c.l.b16 %v401
  %v1538 = vunpack.c.l.b16 %v402
  %v1539 = vunpack.c.l.b16 %v403
  %v1540 = vunpack.c.l.b16 %v404
  %v1541 = vunpack.c.l.b16 %v405
  %v1542 = vunpack.c.l.b16 %v406
  %v1543 = vunpack.c.l.b16 %v407
  %v1544 = vunpack.c.l.b16 %v408
  %v1545 = vunpack.c.l.b16 %v409
  %v1546 = vunpack.c.l.b16 %v410
  %v1547 = vunpack.c.l.b16 %v411
  %v1548 = vunpack.c.l.b16 %v412
  %v1549 = vunpack.c.l.b16 %v413
  %v1550 = vunpack.c.l.b16 %v414
  %v1551 = vunpack.c.l.b16 %v415
  %v1552 = vunpack.c.l.b16 %v416
  %v1553 = vunpack.c.l.b16 %v417
  %v1554 = vunpack.c.l.b16 %v418
  %v1555 = vunpack.c.l.b16 %v419
  %v1556 = vunpack.c.l.b16 %v420
  %v1557 = vunpack.c.l.b16 %v421
  %v1558 = vunpack.c.l.b16 %v422
  %v1559 = vunpack.c.l.b16 %v423
  %v1560 = vunpack.c.l.b16 %v424
  %v1561 = vunpack.c.l.b16 %v425
  %v1562 = vunpack.c.l.b16 %v426
  %v1563 = vunpack.c.l.b16 %v427
  %v1564 = vunpack.c.l.b16 %v428
  %v1565 = vunpack.c.l.b16 %v429
  %v1566 = vunpack.c.l.b16 %v430
  %v1567 = vunpack.c.l.b16 %v431
  %v1568 = vunpack.c.l.b16 %v432
  %v1569 = vunpack.c.l.b16 %v433
  %v1570 = vunpack.c.l.b16 %v434
  %v1571 = vunpack.c.l.b16 %v435
  %v1572 = vunpack.c.l.b16 %v436
  %v1573 = vunpack.c.l.b16 %v437
  %v1574 = vunpack.c.l.b16 %v438
  %v1575 = vunpack.c.l.b16 %v439
  %v1576 = vunpack.c.l.b16 %v440
  %v1577 = vunpack.c.l.b16 %v441
  %v1578 = vunpack.c.l.b16 %v442
  %v1579 = vunpack.c.l.b16 %v443
  %v1580 = vunpack.c.l.b16 %v444
  %v1581 = vunpack.c.l.b16 %v445
  %v1582 = vunpack.c.l.b16 %v446
  %v1583 = vunpack.c.l.b16 %v447
  %v1584 = vunpack.c.l.b16 %v448
  %v1585 = vunpack.c.l.b16 %v449
  %v1586 = vunpack.c.l.b16 %v450
  %v1587 = vunpack.c.l.b16 %v451
  %v1588 = vunpack.c.l.b16 %v452
  %v1589 = vunpack.c.l.b16 %v453
  %v1590 = vunpack.c.l.b16 %v454
  %v1591 = vunpack.c.l.b16 %v455
  %v1592 = vunpack.c.l.b16 %v456
  %v1593 = vunpack.c.l.b16 %v457
  %v1594 = vunpack.c.l.b16 %v458
  %v1595 = vunpack.c.l.b16 %v459
  %v1596 = vunpack.c.l.b16 %v460
  %v1597 = vunpack.c.l.b16 %v461
  %v1598 = vunpack.c.l.b16 %v462
  %v1599 = vunpack.c.l.b16 %v463
  %v1600 = vunpack.c.l.b16 %v464
  %v1601 = vunpack.c.l.b16 %v465
  %v1602 = vunpack.c.l.b16 %v466
  %v1603 = vunpack.c.l.b16 %v467
  %v1604 = vunpack.c.l.b16 %v468
  %v1605 = vunpack.c.l.b16 %v469
  %v1606 = vunpack.c.l.b16 %v470
  %v1607 = vunpack.c.l.b16 %v471
  %v1608 = vunpack.c.l.b16 %v472
  %v1609 = vunpack.c.l.b16 %v473
  %v1610 = vunpack.c.l.b16 %v474
  %v1611 = vunpack.c.l.b16 %v475
  %v1612 = vunpack.c.l.b16 %v476
  %v1613 = vunpack.c.l.b16 %v477
  %v1614 = vunpack.c.l.b16 %v478
  %v1615 = vunpack.c.l.b16 %v479
  %v1616 = vunpack.c.l.b16 %v480
  %v1617 = vunpack.c.l.b16 %v481
  %v1618 = vunpack.c.l.b16 %v482
  %v1619 = vunpack.c.l.b16 %v483
  %v1620 = vunpack.c.l.b16 %v484
  %v1621 = vunpack.c.l.b16 %v485
  %v1622 = vunpack.c.l.b16 %v486
  %v1623 = vunpack.c.l.b16 %v487
  %v1624 = vunpack.c.l.b16 %v488
  %v1625 = vunpack.c.l.b16 %v489
  %v1626 = vunpack.c.l.b16 %v490
  %v1627 = vunpack.c.l.b16 %v491
  %v1628 = vunpack.c.l.b16 %v492
  %v1629 = vunpack.c.l.b16 %v493
  %v1630 = vunpack.c.l.b16 %v494
  %v1631 = vunpack.c.l.b16 %v495
  %v1632 = vunpack.c.l.b16 %v496
  %v1633 = vunpack.c.l.b16 %v497
  %v1634 = vunpack.c.l.b16 %v498
  %v1635 = vunpack.c.l.b16 %v499
  %v1636 = vunpack.c.l.b16 %v500
  %v1637 = vunpack.c.l.b16 %v501
  %v1638 = vunpack.c.l.b16 %v502
  %v1639 = vunpack.c.l.b16 %v503
  %v1640 = vunpack.c.l.b16 %v504
  %v1641 = vunpack.c.l.b16 %v505
  %v1642 = vunpack.c.l.b16 %v506
  %v1643 = vunpack.c.l.b16 %v507
  %v1644 = vunpack.c.l.b16 %v508
  %v1645 = vunpack.c.l.b16 %v509
  %v1646 = vunpack.c.l.b16 %v510
  %v1647 = vunpack.c.l.b16 %v511
  %v1648 = vunpack.c.l.b16 %v512
  %v1649 = vunpack.c.l.b16 %v513
  %v1650 = vunpack.c.l.b16 %v514
  %v1651 = vunpack.c.l.b16 %v515
  %v1652 = vunpack.c.l.b16 %v516
  %v1653 = vunpack.c.l.b16 %v517
  %v1654 = vunpack.c.l.b16 %v518
  %v1655 = vunpack.c.l.b16 %v519
  %v1656 = vunpack.c.l.b16 %v520
  %v1657 = vunpack.c.l.b16 %v521
  %v1658 = vunpack.c.l.b16 %v522
  %v1659 = vunpack.c.l.b16 %v523
  %v1660 = vunpack.c.l.b16 %v524
  %v1661 = vunpack.c.l.b16 %v525
  %v1662 = vunpack.c.l.b16 %v526
  %v1663 = vunpack.c.l.b16 %v527
  %v1664 = vunpack.c.l.b16 %v528
  %v1665 = vunpack.c.l.b16 %v529
  %v1666 = vunpack.c.l.b16 %v530
  %v1667 = vunpack.c.l.b16 %v531
  %v1668 = vunpack.c.l.b16 %v532
  %v1669 = vunpack.c.l.b16 %v533
  %v1670 = vunpack.c.l.b16 %v534
  %v1671 = vunpack.c.l.b16 %v535
  %v1672 = vunpack.c.l.b16 %v536
  %v1673 = vunpack.c.l.b16 %v537
  %v1674 = vunpack.c.l.b16 %v538
  %v1675 = vpack.c.b16 %v1164, %v1163
  %v1676 = vpack.c.b16 %v1166, %v1165
  %v1677 = vpack.c.b16 %v1168, %v1167
  %v1678 = vpack.c.b16 %v1170, %v1169
  %v1679 = vpack.c.b16 %v1172, %v1171
  %v1680 = vpack.c.b16 %v1174, %v1173
  %v1681 = vpack.c.b16 %v1176, %v1175
  %v1682 = vpack.c.b16 %v1178, %v1177
  %v1683 = vpack.c.b16 %v1180, %v1179
  %v1684 = vpack.c.b16 %v1182, %v1181
  %v1685 = vpack.c.b16 %v1184, %v1183
  %v1686 = vpack.c.b16 %v1186, %v1185
  %v1687 = vpack.c.b16 %v1188, %v1187
  %v1688 = vpack.c.b16 %v1190, %v1189
  %v1689 = vpack.c.b16 %v1192, %v1191
  %v1690 = vpack.c.b16 %v1194, %v1193
  %v1691 = vpack.c.b16 %v1196, %v1195
  %v1692 = vpack.c.b16 %v1198, %v1197
  %v1693 = vpack.c.b16 %v1200, %v1199
  %v1694 = vpack.c.b16 %v1202, %v1201
  %v1695 = vpack.c.b16 %v1204, %v1203
  %v1696 = vpack.c.b16 %v1206, %v1205
  %v1697 = vpack.c.b16 %v1208, %v1207
  %v1698 = vpack.c.b16 %v1210, %v1209
  %v1699 = vpack.c.b16 %v1212, %v1211
  %v1700 = vpack.c.b16 %v1214, %v1213
  %v1701 = vpack.c.b16 %v1216, %v1215
  %v1702 = vpack.c.b16 %v1218, %v1217
  %v1703 = vpack.c.b16 %v1220, %v1219
  %v1704 = vpack.c.b16 %v1222, %v1221
  %v1705 = vpack.c.b16 %v1224, %v1223
  %v1706 = vpack.c.b16 %v1226, %v1225
  %v1707 = vpack.c.b16 %v1228, %v1227
  %v1708 = vpack.c.b16 %v1230, %v1229
  %v1709 = vpack.c.b16 %v1232, %v1231
  %v1710 = vpack.c.b16 %v1234, %v1233
  %v1711 = vpack.c.b16 %v1236, %v1235
  %v1712 = vpack.c.b16 %v1238, %v1237
  %v1713 = vpack.c.b16 %v1240, %v1239
  %v1714 = vpack.c.b16 %v1242, %v1241
  %v1715 = vpack.c.b16 %v1244, %v1243
  %v1716 = vpack.c.b16 %v1246, %v1245
  %v1717 = vpack.c.b16 %v1248, %v1247
  %v1718 = vpack.c.b16 %v1250, %v1249
  %v1719 = vpack.c.b16 %v1252, %v1251
  %v1720 = vpack.c.b16 %v1254, %v1253
  %v1721 = vpack.c.b16 %v1256, %v1255
  %v1722 = vpack.c.b16 %v1258, %v1257
  %v1723 = vpack.c.b16 %v1260, %v1259
  %v1724 = vpack.c.b16 %v1262, %v1261
  %v1725 = vpack.c.b16 %v1264, %v1263
  %v1726 = vpack.c.b16 %v1266, %v1265
  %v1727 = vpack.c.b16 %v1268, %v1267
  %v1728 = vpack.c.b16 %v1270, %v1269
  %v1729 = vpack.c.b16 %v1272, %v1271
  %v1730 = vpack.c.b16 %v1274, %v1273
  %v1731 = vpack.c.b16 %v1276, %v1275
  %v1732 = vpack.c.b16 %v1278, %v1277
  %v1733 = vpack.c.b16 %v1280, %v1279
  %v1734 = vpack.c.b16 %v1282, %v1281
  %v1735 = vpack.c.b16 %v1284, %v1283
  %v1736 = vpack.c.b16 %v1286, %v1285
  %v1737 = vpack.c.b16 %v1288, %v1287
  %v1738 = vpack.c.b16 %v1290, %v1289
  %v1739 = vpack.c.b16 %v1292, %v1291
  %v1740 = vpack.c.b16 %v1294, %v1293
  %v1741 = vpack.c.b16 %v1296, %v1295
  %v1742 = vpack.c.b16 %v1298, %v1297
  %v1743 = vpack.c.b16 %v1300, %v1299
  %v1744 = vpack.c.b16 %v1302, %v1301
  %v1745 = vpack.c.b16 %v1304, %v1303
  %v1746 = vpack.c.b16 %v1306, %v1305
  %v1747 = vpack.c.b16 %v1308, %v1307
  %v1748 = vpack.c.b16 %v1310, %v1309
  %v1749 = vpack.c.b16 %v1312, %v1311
  %v1750 = vpack.c.b16 %v1314, %v1313
  %v1751 = vpack.c.b16 %v1316, %v1315
  %v1752 = vpack.c.b16 %v1318, %v1317
  %v1753 = vpack.c.b16 %v1320, %v1319
  %v1754 = vpack.c.b16 %v1322, %v1321
  %v1755 = vpack.c.b16 %v1324, %v1323
  %v1756 = vpack.c.b16 %v1326, %v1325
  %v1757 = vpack.c.b16 %v1328, %v1327
  %v1758 = vpack.c.b16 %v1330, %v1329
  %v1759 = vpack.c.b16 %v1332, %v1331
  %v1760 = vpack.c.b16 %v1334, %v1333
  %v1761 = vpack.c.b16 %v1336, %v1335
  %v1762 = vpack.c.b16 %v1338, %v1337
  %v1763 = vpack.c.b16 %v1340, %v1339
  %v1764 = vpack.c.b16 %v1342, %v1341
  %v1765 = vpack.c.b16 %v1344, %v1343
  %v1766 = vpack.c.b16 %v1346, %v1345
  %v1767 = vpack.c.b16 %v1348, %v1347
  %v1768 = vpack.c.b16 %v1350, %v1349
  %v1769 = vpack.c.b16 %v1352, %v1351
  %v1770 = vpack.c.b16 %v1354, %v1353
  %v1771 = vpack.c.b16 %v1356, %v1355
  %v1772 = vpack.c.b16 %v1358, %v1357
  %v1773 = vpack.c.b16 %v1360, %v1359
  %v1774 = vpack.c.b16 %v1362, %v1361
  %v1775 = vpack.c.b16 %v1364, %v1363
  %v1776 = vpack.c.b16 %v1366, %v1365
  %v1777 = vpack.c.b16 %v1368, %v1367
  %v1778 = vpack.c.b16 %v1370, %v1369
  %v1779 = vpack.c.b16 %v1372, %v1371
  %v1780 = vpack.c.b16 %v1374, %v1373
  %v1781 = vpack.c.b16 %v1376, %v1375
  %v1782 = vpack.c.b16 %v1378, %v1377
  %v1783 = vpack.c.b16 %v1380, %v1379
  %v1784 = vpack.c.b16 %v1382, %v1381
  %v1785 = vpack.c.b16 %v1384, %v1383
  %v1786 = vpack.c.b16 %v1386, %v1385
  %v1787 = vpack.c.b16 %v1388, %v1387
  %v1788 = vpack.c.b16 %v1390, %v1389
  %v1789 = vpack.c.b16 %v1392, %v1391
  %v1790 = vpack.c.b16 %v1394, %v1393
  %v1791 = vpack.c.b16 %v1396, %v1395
  %v1792 = vpack.c.b16 %v1398, %v1397
  %v1793 = vpack.c.b16 %v1400, %v1399
  %v1794 = vpack.c.b16 %v1402, %v1401
  %v1795 = vpack.c.b16 %v1404, %v1403
  %v1796 = vpack.c.b16 %v1406, %v1405
  %v1797 = vpack.c.b16 %v1408, %v1407
  %v1798 = vpack.c.b16 %v1410, %v1409
  %v1799 = vpack.c.b16 %v1412, %v1411
  %v1800 = vpack.c.b16 %v1414, %v1413
  %v1801 = vpack.c.b16 %v1416, %v1415
  %v1802 = vpack.c.b16 %v1418, %v1417
  %v1803 = vpack.c.b16 %v1420, %v1419
  %v1804 = vpack.c.b16 %v1422, %v1421
  %v1805 = vpack.c.b16 %v1424, %v1423
  %v1806 = vpack.c.b16 %v1426, %v1425
  %v1807 = vpack.c.b16 %v1428, %v1427
  %v1808 = vpack.c.b16 %v1430, %v1429
  %v1809 = vpack.c.b16 %v1432, %v1431
  %v1810 = vpack.c.b16 %v1434, %v1433
  %v1811 = vpack.c.b16 %v1436, %v1435
  %v1812 = vpack.c.b16 %v1438, %v1437
  %v1813 = vpack.c.b16 %v1440, %v1439
  %v1814 = vpack.c.b16 %v1442, %v1441
  %v1815 = vpack.c.b16 %v1444, %v1443
  %v1816 = vpack.c.b16 %v1446, %v1445
  %v1817 = vpack.c.b16 %v1448, %v1447
  %v1818 = vpack.c.b16 %v1450, %v1449
  %v1819 = vpack.c.b16 %v1452, %v1451
  %v1820 = vpack.c.b16 %v1454, %v1453
  %v1821 = vpack.c.b16 %v1456, %v1455
  %v1822 = vpack.c.b16 %v1458, %v1457
  %v1823 = vpack.c.b16 %v1460, %v1459
  %v1824 = vpack.c.b16 %v1462, %v1461
  %v1825 = vpack.c.b16 %v1464, %v1463
  %v1826 = vpack.c.b16 %v1466, %v1465
  %v1827 = vpack.c.b16 %v1468, %v1467
  %v1828 = vpack.c.b16 %v1470, %v1469
  %v1829 = vpack.c.b16 %v1472, %v1471
  %v1830 = vpack.c.b16 %v1474, %v1473
  %v1831 = vpack.c.b16 %v1476, %v1475
  %v1832 = vpack.c.b16 %v1478, %v1477
  %v1833 = vpack.c.b16 %v1480, %v1479
  %v1834 = vpack.c.b16 %v1482, %v1481
  %v1835 = vpack.c.b16 %v1484, %v1483
  %v1836 = vpack.c.b16 %v1486, %v1485
  %v1837 = vpack.c.b16 %v1488, %v1487
  %v1838 = vpack.c.b16 %v1490, %v1489
  %v1839 = vpack.c.b16 %v1492, %v1491
  %v1840 = vpack.c.b16 %v1494, %v1493
  %v1841 = vpack.c.b16 %v1496, %v1495
  %v1842 = vpack.c.b16 %v1498, %v1497
  %v1843 = vpack.c.b16 %v1500, %v1499
  %v1844 = vpack.c.b16 %v1502, %v1501
  %v1845 = vpack.c.b16 %v1504, %v1503
  %v1846 = vpack.c.b16 %v1506, %v1505
  %v1847 = vpack.c.b16 %v1508, %v1507
  %v1848 = vpack.c.b16 %v1510, %v1509
  %v1849 = vpack.c.b16 %v1512, %v1511
  %v1850 = vpack.c.b16 %v1514, %v1513
  %v1851 = vpack.c.b16 %v1516, %v1515
  %v1852 = vpack.c.b16 %v1518, %v1517
  %v1853 = vpack.c.b16 %v1520, %v1519
  %v1854 = vpack.c.b16 %v1522, %v1521
  %v1855 = vpack.c.b16 %v1524, %v1523
  %v1856 = vpack.c.b16 %v1526, %v1525
  %v1857 = vpack.c.b16 %v1528, %v1527
  %v1858 = vpack.c.b16 %v1530, %v1529
  %v1859 = vpack.c.b16 %v1532, %v1531
  %v1860 = vpack.c.b16 %v1534, %v1533
  %v1861 = vpack.c.b16 %v1536, %v1535
  %v1862 = vpack.c.b16 %v1538, %v1537
  %v1863 = vpack.c.b16 %v1540, %v1539
  %v1864 = vpack.c.b16 %v1542, %v1541
  %v1865 = vpack.c.b16 %v1544, %v1543
  %v1866 = vpack.c.b16 %v1546, %v1545
  %v1867 = vpack.c.b16 %v1548, %v1547
  %v1868 = vpack.c.b16 %v1550, %v1549
  %v1869 = vpack.c.b16 %v1552, %v1551
  %v1870 = vpack.c.b16 %v1554, %v1553
  %v1871 = vpack.c.b16 %v1556, %v1555
  %v1872 = vpack.c.b16 %v1558, %v1557
  %v1873 = vpack.c.b16 %v1560, %v1559
  %v1874 = vpack.c.b16 %v1562, %v1561
  %v1875 = vpack.c.b16 %v1564, %v1563
  %v1876 = vpack.c.b16 %v1566, %v1565
  %v1877 = vpack.c.b16 %v1568, %v1567
  %v1878 = vpack.c.b16 %v1570, %v1569
  %v1879 = vpack.c.b16 %v1572, %v1571
  %v1880 = vpack.c.b16 %v1574, %v1573
  %v1881 = vpack.c.b16 %v1576, %v1575
  %v1882 = vpack.c.b16 %v1578, %v1577
  %v1883 = vpack.c.b16 %v1580, %v1579
  %v1884 = vpack.c.b16 %v1582, %v1581
  %v1885 = vpack.c.b16 %v1584, %v1583
  %v1886 = vpack.c.b16 %v1586, %v1585
  %v1887 = vpack.c.b16 %v1588, %v1587
  %v1888 = vpack.c.b16 %v1590, %v1589
  %v1889 = vpack.c.b16 %v1592, %v1591
  %v1890 = vpack.c.b16 %v1594, %v1593
  %v1891 = vpack.c.b16 %v1596, %v1595
  %v1892 = vpack.c.b16 %v1598, %v1597
  %v1893 = vpack.c.b16 %v1600, %v1599
  %v1894 = vpack.c.b16 %v1602, %v1601
  %v1895 = vpack.c.b16 %v1604, %v1603
  %v1896 = vpack.c.b16 %v1606, %v1605
  %v1897 = vpack.c.b16 %v1608, %v1607
  %v1898 = vpack.c.b16 %v1610, %v1609
  %v1899 = vpack.c.b16 %v1612, %v1611
  %v1900 = vpack.c.b16 %v1614, %v1613
  %v1901 = vpack.c.b16 %v1616, %v1615
  %v1902 = vpack.c.b16 %v1618, %v1617
  %v1903 = vpack.c.b16 %v1620, %v1619
  %v1904 = vpack.c.b16 %v1622, %v1621
  %v1905 = vpack.c.b16 %v1624, %v1623
  %v1906 = vpack.c.b16 %v1626, %v1625
  %v1907 = vpack.c.b16 %v1628, %v1627
  %v1908 = vpack.c.b16 %v1630, %v1629
  %v1909 = vpack.c.b16 %v1632, %v1631
  %v1910 = vpack.c.b16 %v1634, %v1633
  %v1911 = vpack.c.b16 %v1636, %v1635
  %v1912 = vpack.c.b16 %v1638, %v1637
  %v1913 = vpack.c.b16 %v1640, %v1639
  %v1914 = vpack.c.b16 %v1642, %v1641
  %v1915 = vpack.c.b16 %v1644, %v1643
  %v1916 = vpack.c.b16 %v1646, %v1645
  %v1917 = vpack.c.b16 %v1648, %v1647
  %v1918 = vpack.c.b16 %v1650, %v1649
  %v1919 = vpack.c.b16 %v1652, %v1651
  %v1920 = vpack.c.b16 %v1654, %v1653
  %v1921 = vpack.c.b16 %v1656, %v1655
  %v1922 = vpack.c.b16 %v1658, %v1657
  %v1923 = vpack.c.b16 %v1660, %v1659
  %v1924 = vpack.c.b16 %v1662, %v1661
  %v1925 = vpack.c.b16 %v1664, %v1663
  %v1926 = vpack.c.b16 %v1666, %v1665
  %v1927 = vpack.c.b16 %v1668, %v1667
  %v1928 = vpack.c.b16 %v1670, %v1669
  %v1929 = vpack.c.b16 %v1672, %v1671
  %v1930 = vpack.c.b16 %v1674, %v1673
  %2187 = vmatpush.bf16.msra.mxu0 %v1682
  %2188 = vmatpush.bf16.msra.mxu0 %v1681
  %2189 = vmatpush.bf16.msra.mxu0 %v1680
  %2190 = vmatpush.bf16.msra.mxu0 %v1679
  %2191 = vmatpush.bf16.msra.mxu0 %v1678
  %2192 = vmatpush.bf16.msra.mxu0 %v1677
  %2193 = vmatpush.bf16.msra.mxu0 %v1676
  %2194 = vmatpush.bf16.msra.mxu0 %v1675
  %2195 = vmatmul.bf16.gmra.mxu0 %v587
  %v2196 = vpop.f32.mrf.mxu0
  %v2197 = vadd.f32 0.0, %v2196
  %v2198 = vpop.f32.mrf.mxu0
  %2199 = vdwg.mxu0
  %2200 = vmatpush.bf16.msra.mxu0 %v1690
  %2201 = vmatpush.bf16.msra.mxu0 %v1689
  %2202 = vmatpush.bf16.msra.mxu0 %v1688
  %2203 = vmatpush.bf16.msra.mxu0 %v1687
  %2204 = vmatpush.bf16.msra.mxu0 %v1686
  %2205 = vmatpush.bf16.msra.mxu0 %v1685
  %2206 = vmatpush.bf16.msra.mxu0 %v1684
  %2207 = vmatpush.bf16.msra.mxu0 %v1683
  %2208 = vmatmul.bf16.gmra.mxu0 %v588
  %v2209 = vpop.f32.mrf.mxu0
  %v2210 = vadd.f32 %v2197, %v2209
  %v2211 = vpop.f32.mrf.mxu0
  %2212 = vdwg.mxu0
  %2213 = vmatpush.bf16.msra.mxu0 %v1698
  %2214 = vmatpush.bf16.msra.mxu0 %v1697
  %2215 = vmatpush.bf16.msra.mxu0 %v1696
  %2216 = vmatpush.bf16.msra.mxu0 %v1695
  %2217 = vmatpush.bf16.msra.mxu0 %v1694
  %2218 = vmatpush.bf16.msra.mxu0 %v1693
  %2219 = vmatpush.bf16.msra.mxu0 %v1692
  %2220 = vmatpush.bf16.msra.mxu0 %v1691
  %2221 = vmatmul.bf16.gmra.mxu0 %v589
  %v2222 = vpop.f32.mrf.mxu0
  %v2223 = vadd.f32 %v2210, %v2222
  %v2224 = vpop.f32.mrf.mxu0
  %2225 = vdwg.mxu0
  %2226 = vmatpush.bf16.msra.mxu0 %v1706
  %2227 = vmatpush.bf16.msra.mxu0 %v1705
  %2228 = vmatpush.bf16.msra.mxu0 %v1704
  %2229 = vmatpush.bf16.msra.mxu0 %v1703
  %2230 = vmatpush.bf16.msra.mxu0 %v1702
  %2231 = vmatpush.bf16.msra.mxu0 %v1701
  %2232 = vmatpush.bf16.msra.mxu0 %v1700
  %2233 = vmatpush.bf16.msra.mxu0 %v1699
  %2234 = vmatmul.bf16.gmra.mxu0 %v590
  %v2235 = vpop.f32.mrf.mxu0
  %v2236 = vadd.f32 %v2223, %v2235
  %v2237 = vpop.f32.mrf.mxu0
  %2238 = vdwg.mxu0
  %2239 = vmatpush.bf16.msra.mxu0 %v1714
  %2240 = vmatpush.bf16.msra.mxu0 %v1713
  %2241 = vmatpush.bf16.msra.mxu0 %v1712
  %2242 = vmatpush.bf16.msra.mxu0 %v1711
  %2243 = vmatpush.bf16.msra.mxu0 %v1710
  %2244 = vmatpush.bf16.msra.mxu0 %v1709
  %2245 = vmatpush.bf16.msra.mxu0 %v1708
  %2246 = vmatpush.bf16.msra.mxu0 %v1707
  %2247 = vmatmul.bf16.gmra.mxu0 %v591
  %v2248 = vpop.f32.mrf.mxu0
  %v2249 = vadd.f32 %v2236, %v2248
  %v2250 = vpop.f32.mrf.mxu0
  %2251 = vdwg.mxu0
  %2252 = vmatpush.bf16.msra.mxu0 %v1722
  %2253 = vmatpush.bf16.msra.mxu0 %v1721
  %2254 = vmatpush.bf16.msra.mxu0 %v1720
  %2255 = vmatpush.bf16.msra.mxu0 %v1719
  %2256 = vmatpush.bf16.msra.mxu0 %v1718
  %2257 = vmatpush.bf16.msra.mxu0 %v1717
  %2258 = vmatpush.bf16.msra.mxu0 %v1716
  %2259 = vmatpush.bf16.msra.mxu0 %v1715
  %2260 = vmatmul.bf16.gmra.mxu0 %v592
  %v2261 = vpop.f32.mrf.mxu0
  %v2262 = vadd.f32 %v2249, %v2261
  %v2263 = vpop.f32.mrf.mxu0
  %2264 = vdwg.mxu0
  %2265 = vmatpush.bf16.msra.mxu0 %v1730
  %2266 = vmatpush.bf16.msra.mxu0 %v1729
  %2267 = vmatpush.bf16.msra.mxu0 %v1728
  %2268 = vmatpush.bf16.msra.mxu0 %v1727
  %2269 = vmatpush.bf16.msra.mxu0 %v1726
  %2270 = vmatpush.bf16.msra.mxu0 %v1725
  %2271 = vmatpush.bf16.msra.mxu0 %v1724
  %2272 = vmatpush.bf16.msra.mxu0 %v1723
  %2273 = vmatmul.bf16.gmra.mxu0 %v593
  %v2274 = vpop.f32.mrf.mxu0
  %v2275 = vadd.f32 %v2262, %v2274
  %v2276 = vpop.f32.mrf.mxu0
  %2277 = vdwg.mxu0
  %2278 = vmatpush.bf16.msra.mxu0 %v1738
  %2279 = vmatpush.bf16.msra.mxu0 %v1737
  %2280 = vmatpush.bf16.msra.mxu0 %v1736
  %2281 = vmatpush.bf16.msra.mxu0 %v1735
  %2282 = vmatpush.bf16.msra.mxu0 %v1734
  %2283 = vmatpush.bf16.msra.mxu0 %v1733
  %2284 = vmatpush.bf16.msra.mxu0 %v1732
  %2285 = vmatpush.bf16.msra.mxu0 %v1731
  %2286 = vmatmul.bf16.gmra.mxu0 %v594
  %v2287 = vpop.f32.mrf.mxu0
  %v2288 = vadd.f32 %v2275, %v2287
  %v2289 = vpop.f32.mrf.mxu0
  %2290 = vdwg.mxu0
  %2291 = vmatpush.bf16.msra.mxu0 %v1746
  %2292 = vmatpush.bf16.msra.mxu0 %v1745
  %2293 = vmatpush.bf16.msra.mxu0 %v1744
  %2294 = vmatpush.bf16.msra.mxu0 %v1743
  %2295 = vmatpush.bf16.msra.mxu0 %v1742
  %2296 = vmatpush.bf16.msra.mxu0 %v1741
  %2297 = vmatpush.bf16.msra.mxu0 %v1740
  %2298 = vmatpush.bf16.msra.mxu0 %v1739
  %2299 = vmatmul.bf16.gmra.mxu0 %v595
  %v2300 = vpop.f32.mrf.mxu0
  %v2301 = vadd.f32 %v2288, %v2300
  %v2302 = vpop.f32.mrf.mxu0
  %2303 = vdwg.mxu0
  %2304 = vmatpush.bf16.msra.mxu0 %v1754
  %2305 = vmatpush.bf16.msra.mxu0 %v1753
  %2306 = vmatpush.bf16.msra.mxu0 %v1752
  %2307 = vmatpush.bf16.msra.mxu0 %v1751
  %2308 = vmatpush.bf16.msra.mxu0 %v1750
  %2309 = vmatpush.bf16.msra.mxu0 %v1749
  %2310 = vmatpush.bf16.msra.mxu0 %v1748
  %2311 = vmatpush.bf16.msra.mxu0 %v1747
  %2312 = vmatmul.bf16.gmra.mxu0 %v596
  %v2313 = vpop.f32.mrf.mxu0
  %v2314 = vadd.f32 %v2301, %v2313
  %v2315 = vpop.f32.mrf.mxu0
  %2316 = vdwg.mxu0
  %2317 = vmatpush.bf16.msra.mxu0 %v1762
  %2318 = vmatpush.bf16.msra.mxu0 %v1761
  %2319 = vmatpush.bf16.msra.mxu0 %v1760
  %2320 = vmatpush.bf16.msra.mxu0 %v1759
  %2321 = vmatpush.bf16.msra.mxu0 %v1758
  %2322 = vmatpush.bf16.msra.mxu0 %v1757
  %2323 = vmatpush.bf16.msra.mxu0 %v1756
  %2324 = vmatpush.bf16.msra.mxu0 %v1755
  %2325 = vmatmul.bf16.gmra.mxu0 %v597
  %v2326 = vpop.f32.mrf.mxu0
  %v2327 = vadd.f32 %v2314, %v2326
  %v2328 = vpop.f32.mrf.mxu0
  %2329 = vdwg.mxu0
  %2330 = vmatpush.bf16.msra.mxu0 %v1770
  %2331 = vmatpush.bf16.msra.mxu0 %v1769
  %2332 = vmatpush.bf16.msra.mxu0 %v1768
  %2333 = vmatpush.bf16.msra.mxu0 %v1767
  %2334 = vmatpush.bf16.msra.mxu0 %v1766
  %2335 = vmatpush.bf16.msra.mxu0 %v1765
  %2336 = vmatpush.bf16.msra.mxu0 %v1764
  %2337 = vmatpush.bf16.msra.mxu0 %v1763
  %2338 = vmatmul.bf16.gmra.mxu0 %v598
  %v2339 = vpop.f32.mrf.mxu0
  %v2340 = vadd.f32 %v2327, %v2339
  %v2341 = vpop.f32.mrf.mxu0
  %2342 = vdwg.mxu0
  %2343 = vmatpush.bf16.msra.mxu0 %v1778
  %2344 = vmatpush.bf16.msra.mxu0 %v1777
  %2345 = vmatpush.bf16.msra.mxu0 %v1776
  %2346 = vmatpush.bf16.msra.mxu0 %v1775
  %2347 = vmatpush.bf16.msra.mxu0 %v1774
  %2348 = vmatpush.bf16.msra.mxu0 %v1773
  %2349 = vmatpush.bf16.msra.mxu0 %v1772
  %2350 = vmatpush.bf16.msra.mxu0 %v1771
  %2351 = vmatmul.bf16.gmra.mxu0 %v599
  %v2352 = vpop.f32.mrf.mxu0
  %v2353 = vadd.f32 %v2340, %v2352
  %v2354 = vpop.f32.mrf.mxu0
  %2355 = vdwg.mxu0
  %2356 = vmatpush.bf16.msra.mxu0 %v1786
  %2357 = vmatpush.bf16.msra.mxu0 %v1785
  %2358 = vmatpush.bf16.msra.mxu0 %v1784
  %2359 = vmatpush.bf16.msra.mxu0 %v1783
  %2360 = vmatpush.bf16.msra.mxu0 %v1782
  %2361 = vmatpush.bf16.msra.mxu0 %v1781
  %2362 = vmatpush.bf16.msra.mxu0 %v1780
  %2363 = vmatpush.bf16.msra.mxu0 %v1779
  %2364 = vmatmul.bf16.gmra.mxu0 %v600
  %v2365 = vpop.f32.mrf.mxu0
  %v2366 = vadd.f32 %v2353, %v2365
  %v2367 = vpop.f32.mrf.mxu0
  %2368 = vdwg.mxu0
  %2369 = vmatpush.bf16.msra.mxu0 %v1794
  %2370 = vmatpush.bf16.msra.mxu0 %v1793
  %2371 = vmatpush.bf16.msra.mxu0 %v1792
  %2372 = vmatpush.bf16.msra.mxu0 %v1791
  %2373 = vmatpush.bf16.msra.mxu0 %v1790
  %2374 = vmatpush.bf16.msra.mxu0 %v1789
  %2375 = vmatpush.bf16.msra.mxu0 %v1788
  %2376 = vmatpush.bf16.msra.mxu0 %v1787
  %2377 = vmatmul.bf16.gmra.mxu0 %v601
  %v2378 = vpop.f32.mrf.mxu0
  %v2379 = vadd.f32 %v2366, %v2378
  %v2380 = vpop.f32.mrf.mxu0
  %2381 = vdwg.mxu0
  %2382 = vmatpush.bf16.msra.mxu0 %v1802
  %2383 = vmatpush.bf16.msra.mxu0 %v1801
  %2384 = vmatpush.bf16.msra.mxu0 %v1800
  %2385 = vmatpush.bf16.msra.mxu0 %v1799
  %2386 = vmatpush.bf16.msra.mxu0 %v1798
  %2387 = vmatpush.bf16.msra.mxu0 %v1797
  %2388 = vmatpush.bf16.msra.mxu0 %v1796
  %2389 = vmatpush.bf16.msra.mxu0 %v1795
  %2390 = vmatmul.bf16.gmra.mxu0 %v602
  %v2391 = vpop.f32.mrf.mxu0
  %v2392 = vadd.f32 %v2379, %v2391
  %v2393 = vpop.f32.mrf.mxu0
  %2394 = vdwg.mxu0
  %2395 = vmatpush.bf16.msra.mxu0 %v1810
  %2396 = vmatpush.bf16.msra.mxu0 %v1809
  %2397 = vmatpush.bf16.msra.mxu0 %v1808
  %2398 = vmatpush.bf16.msra.mxu0 %v1807
  %2399 = vmatpush.bf16.msra.mxu0 %v1806
  %2400 = vmatpush.bf16.msra.mxu0 %v1805
  %2401 = vmatpush.bf16.msra.mxu0 %v1804
  %2402 = vmatpush.bf16.msra.mxu0 %v1803
  %2403 = vmatmul.bf16.gmra.mxu0 %v603
  %v2404 = vpop.f32.mrf.mxu0
  %v2405 = vadd.f32 %v2392, %v2404
  %v2406 = vpop.f32.mrf.mxu0
  %2407 = vdwg.mxu0
  %2408 = vmatpush.bf16.msra.mxu0 %v1818
  %2409 = vmatpush.bf16.msra.mxu0 %v1817
  %2410 = vmatpush.bf16.msra.mxu0 %v1816
  %2411 = vmatpush.bf16.msra.mxu0 %v1815
  %2412 = vmatpush.bf16.msra.mxu0 %v1814
  %2413 = vmatpush.bf16.msra.mxu0 %v1813
  %2414 = vmatpush.bf16.msra.mxu0 %v1812
  %2415 = vmatpush.bf16.msra.mxu0 %v1811
  %2416 = vmatmul.bf16.gmra.mxu0 %v604
  %v2417 = vpop.f32.mrf.mxu0
  %v2418 = vadd.f32 %v2405, %v2417
  %v2419 = vpop.f32.mrf.mxu0
  %2420 = vdwg.mxu0
  %2421 = vmatpush.bf16.msra.mxu0 %v1826
  %2422 = vmatpush.bf16.msra.mxu0 %v1825
  %2423 = vmatpush.bf16.msra.mxu0 %v1824
  %2424 = vmatpush.bf16.msra.mxu0 %v1823
  %2425 = vmatpush.bf16.msra.mxu0 %v1822
  %2426 = vmatpush.bf16.msra.mxu0 %v1821
  %2427 = vmatpush.bf16.msra.mxu0 %v1820
  %2428 = vmatpush.bf16.msra.mxu0 %v1819
  %2429 = vmatmul.bf16.gmra.mxu0 %v605
  %v2430 = vpop.f32.mrf.mxu0
  %v2431 = vadd.f32 %v2418, %v2430
  %v2432 = vpop.f32.mrf.mxu0
  %2433 = vdwg.mxu0
  %2434 = vmatpush.bf16.msra.mxu0 %v1834
  %2435 = vmatpush.bf16.msra.mxu0 %v1833
  %2436 = vmatpush.bf16.msra.mxu0 %v1832
  %2437 = vmatpush.bf16.msra.mxu0 %v1831
  %2438 = vmatpush.bf16.msra.mxu0 %v1830
  %2439 = vmatpush.bf16.msra.mxu0 %v1829
  %2440 = vmatpush.bf16.msra.mxu0 %v1828
  %2441 = vmatpush.bf16.msra.mxu0 %v1827
  %2442 = vmatmul.bf16.gmra.mxu0 %v606
  %v2443 = vpop.f32.mrf.mxu0
  %v2444 = vadd.f32 %v2431, %v2443
  %v2445 = vpop.f32.mrf.mxu0
  %2446 = vdwg.mxu0
  %2447 = vmatpush.bf16.msra.mxu0 %v1842
  %2448 = vmatpush.bf16.msra.mxu0 %v1841
  %2449 = vmatpush.bf16.msra.mxu0 %v1840
  %2450 = vmatpush.bf16.msra.mxu0 %v1839
  %2451 = vmatpush.bf16.msra.mxu0 %v1838
  %2452 = vmatpush.bf16.msra.mxu0 %v1837
  %2453 = vmatpush.bf16.msra.mxu0 %v1836
  %2454 = vmatpush.bf16.msra.mxu0 %v1835
  %2455 = vmatmul.bf16.gmra.mxu0 %v607
  %v2456 = vpop.f32.mrf.mxu0
  %v2457 = vadd.f32 %v2444, %v2456
  %v2458 = vpop.f32.mrf.mxu0
  %2459 = vdwg.mxu0
  %2460 = vmatpush.bf16.msra.mxu0 %v1850
  %2461 = vmatpush.bf16.msra.mxu0 %v1849
  %2462 = vmatpush.bf16.msra.mxu0 %v1848
  %2463 = vmatpush.bf16.msra.mxu0 %v1847
  %2464 = vmatpush.bf16.msra.mxu0 %v1846
  %2465 = vmatpush.bf16.msra.mxu0 %v1845
  %2466 = vmatpush.bf16.msra.mxu0 %v1844
  %2467 = vmatpush.bf16.msra.mxu0 %v1843
  %2468 = vmatmul.bf16.gmra.mxu0 %v608
  %v2469 = vpop.f32.mrf.mxu0
  %v2470 = vadd.f32 %v2457, %v2469
  %v2471 = vpop.f32.mrf.mxu0
  %2472 = vdwg.mxu0
  %2473 = vmatpush.bf16.msra.mxu0 %v1858
  %2474 = vmatpush.bf16.msra.mxu0 %v1857
  %2475 = vmatpush.bf16.msra.mxu0 %v1856
  %2476 = vmatpush.bf16.msra.mxu0 %v1855
  %2477 = vmatpush.bf16.msra.mxu0 %v1854
  %2478 = vmatpush.bf16.msra.mxu0 %v1853
  %2479 = vmatpush.bf16.msra.mxu0 %v1852
  %2480 = vmatpush.bf16.msra.mxu0 %v1851
  %2481 = vmatmul.bf16.gmra.mxu0 %v609
  %v2482 = vpop.f32.mrf.mxu0
  %v2483 = vadd.f32 %v2470, %v2482
  %v2484 = vpop.f32.mrf.mxu0
  %2485 = vdwg.mxu0
  %2486 = vmatpush.bf16.msra.mxu0 %v1866
  %2487 = vmatpush.bf16.msra.mxu0 %v1865
  %2488 = vmatpush.bf16.msra.mxu0 %v1864
  %2489 = vmatpush.bf16.msra.mxu0 %v1863
  %2490 = vmatpush.bf16.msra.mxu0 %v1862
  %2491 = vmatpush.bf16.msra.mxu0 %v1861
  %2492 = vmatpush.bf16.msra.mxu0 %v1860
  %2493 = vmatpush.bf16.msra.mxu0 %v1859
  %2494 = vmatmul.bf16.gmra.mxu0 %v610
  %v2495 = vpop.f32.mrf.mxu0
  %v2496 = vadd.f32 %v2483, %v2495
  %v2497 = vpop.f32.mrf.mxu0
  %2498 = vdwg.mxu0
  %2499 = vmatpush.bf16.msra.mxu0 %v1874
  %2500 = vmatpush.bf16.msra.mxu0 %v1873
  %2501 = vmatpush.bf16.msra.mxu0 %v1872
  %2502 = vmatpush.bf16.msra.mxu0 %v1871
  %2503 = vmatpush.bf16.msra.mxu0 %v1870
  %2504 = vmatpush.bf16.msra.mxu0 %v1869
  %2505 = vmatpush.bf16.msra.mxu0 %v1868
  %2506 = vmatpush.bf16.msra.mxu0 %v1867
  %2507 = vmatmul.bf16.gmra.mxu0 %v611
  %v2508 = vpop.f32.mrf.mxu0
  %v2509 = vadd.f32 %v2496, %v2508
  %v2510 = vpop.f32.mrf.mxu0
  %2511 = vdwg.mxu0
  %2512 = vmatpush.bf16.msra.mxu0 %v1882
  %2513 = vmatpush.bf16.msra.mxu0 %v1881
  %2514 = vmatpush.bf16.msra.mxu0 %v1880
  %2515 = vmatpush.bf16.msra.mxu0 %v1879
  %2516 = vmatpush.bf16.msra.mxu0 %v1878
  %2517 = vmatpush.bf16.msra.mxu0 %v1877
  %2518 = vmatpush.bf16.msra.mxu0 %v1876
  %2519 = vmatpush.bf16.msra.mxu0 %v1875
  %2520 = vmatmul.bf16.gmra.mxu0 %v612
  %v2521 = vpop.f32.mrf.mxu0
  %v2522 = vadd.f32 %v2509, %v2521
  %v2523 = vpop.f32.mrf.mxu0
  %2524 = vdwg.mxu0
  %2525 = vmatpush.bf16.msra.mxu0 %v1890
  %2526 = vmatpush.bf16.msra.mxu0 %v1889
  %2527 = vmatpush.bf16.msra.mxu0 %v1888
  %2528 = vmatpush.bf16.msra.mxu0 %v1887
  %2529 = vmatpush.bf16.msra.mxu0 %v1886
  %2530 = vmatpush.bf16.msra.mxu0 %v1885
  %2531 = vmatpush.bf16.msra.mxu0 %v1884
  %2532 = vmatpush.bf16.msra.mxu0 %v1883
  %2533 = vmatmul.bf16.gmra.mxu0 %v613
  %v2534 = vpop.f32.mrf.mxu0
  %v2535 = vadd.f32 %v2522, %v2534
  %v2536 = vpop.f32.mrf.mxu0
  %2537 = vdwg.mxu0
  %2538 = vmatpush.bf16.msra.mxu0 %v1898
  %2539 = vmatpush.bf16.msra.mxu0 %v1897
  %2540 = vmatpush.bf16.msra.mxu0 %v1896
  %2541 = vmatpush.bf16.msra.mxu0 %v1895
  %2542 = vmatpush.bf16.msra.mxu0 %v1894
  %2543 = vmatpush.bf16.msra.mxu0 %v1893
  %2544 = vmatpush.bf16.msra.mxu0 %v1892
  %2545 = vmatpush.bf16.msra.mxu0 %v1891
  %2546 = vmatmul.bf16.gmra.mxu0 %v614
  %v2547 = vpop.f32.mrf.mxu0
  %v2548 = vadd.f32 %v2535, %v2547
  %v2549 = vpop.f32.mrf.mxu0
  %2550 = vdwg.mxu0
  %2551 = vmatpush.bf16.msra.mxu0 %v1906
  %2552 = vmatpush.bf16.msra.mxu0 %v1905
  %2553 = vmatpush.bf16.msra.mxu0 %v1904
  %2554 = vmatpush.bf16.msra.mxu0 %v1903
  %2555 = vmatpush.bf16.msra.mxu0 %v1902
  %2556 = vmatpush.bf16.msra.mxu0 %v1901
  %2557 = vmatpush.bf16.msra.mxu0 %v1900
  %2558 = vmatpush.bf16.msra.mxu0 %v1899
  %2559 = vmatmul.bf16.gmra.mxu0 %v615
  %v2560 = vpop.f32.mrf.mxu0
  %v2561 = vadd.f32 %v2548, %v2560
  %v2562 = vpop.f32.mrf.mxu0
  %2563 = vdwg.mxu0
  %2564 = vmatpush.bf16.msra.mxu0 %v1914
  %2565 = vmatpush.bf16.msra.mxu0 %v1913
  %2566 = vmatpush.bf16.msra.mxu0 %v1912
  %2567 = vmatpush.bf16.msra.mxu0 %v1911
  %2568 = vmatpush.bf16.msra.mxu0 %v1910
  %2569 = vmatpush.bf16.msra.mxu0 %v1909
  %2570 = vmatpush.bf16.msra.mxu0 %v1908
  %2571 = vmatpush.bf16.msra.mxu0 %v1907
  %2572 = vmatmul.bf16.gmra.mxu0 %v616
  %v2573 = vpop.f32.mrf.mxu0
  %v2574 = vadd.f32 %v2561, %v2573
  %v2575 = vpop.f32.mrf.mxu0
  %2576 = vdwg.mxu0
  %2577 = vmatpush.bf16.msra.mxu0 %v1922
  %2578 = vmatpush.bf16.msra.mxu0 %v1921
  %2579 = vmatpush.bf16.msra.mxu0 %v1920
  %2580 = vmatpush.bf16.msra.mxu0 %v1919
  %2581 = vmatpush.bf16.msra.mxu0 %v1918
  %2582 = vmatpush.bf16.msra.mxu0 %v1917
  %2583 = vmatpush.bf16.msra.mxu0 %v1916
  %2584 = vmatpush.bf16.msra.mxu0 %v1915
  %2585 = vmatmul.bf16.gmra.mxu0 %v617
  %v2586 = vpop.f32.mrf.mxu0
  %v2587 = vadd.f32 %v2574, %v2586
  %v2588 = vpop.f32.mrf.mxu0
  %2589 = vdwg.mxu0
  %2590 = vmatpush.bf16.msra.mxu0 %v1930
  %2591 = vmatpush.bf16.msra.mxu0 %v1929
  %2592 = vmatpush.bf16.msra.mxu0 %v1928
  %2593 = vmatpush.bf16.msra.mxu0 %v1927
  %2594 = vmatpush.bf16.msra.mxu0 %v1926
  %2595 = vmatpush.bf16.msra.mxu0 %v1925
  %2596 = vmatpush.bf16.msra.mxu0 %v1924
  %2597 = vmatpush.bf16.msra.mxu0 %v1923
  %2598 = vmatmul.bf16.gmra.mxu0 %v618
  %v2599 = vpop.f32.mrf.mxu0
  %v2600 = vadd.f32 %v2587, %v2599
  %v2601 = vpop.f32.mrf.mxu0
  %2602 = vdwg.mxu0
  %2603 = vst [vmem:[%s2] sm:$0xff] %v2600
  // Predicated region
  $region10: #{discriminator_forward.7} parent=0 // pred_check
    _
  $region11: #{discriminator_forward.7} parent=0 // pred_check_branch
    %2605 = sbr.rel (0) target = $region13
  $region12: #{discriminator_forward.7} parent=0 // pred_region
    _
  $region13: #{discriminator_forward.7} parent=0 // pred_fallthru
    _
  // Predicated region
  $region14: #{discriminator_forward.7} parent=0 // pred_check
    _
  $region15: #{discriminator_forward.7} parent=0 // pred_check_branch
    %2607 = sbr.rel (0) target = $region17
  $region16: #{discriminator_forward.7} parent=0 // pred_region
    _
  $region17: #{discriminator_forward.7} parent=0 // pred_fallthru
    _

</llo_original>
